<compile_context>
chip_gen: v6e
topology: v6e:2x2x1
jax: 0.10.0
libtpu: 0.0.40
codegen_flags: <defaults>
</compile_context>

<pallas_src>
import math

import jax
import jax.numpy as jnp
from jax.experimental import pallas as pl
from jax.experimental.pallas import tpu as pltpu

_EPS = 1e-12          # F.normalize default eps
_LEAKY = 0.01         # nn.LeakyReLU default negative_slope


# ----------------------------------------------------------------------------
# Fused, batch-tiled H_ATT kernel (TB batch elements per grid step)
# ----------------------------------------------------------------------------
def _h_att_kernel(hist_ref, ques_ref, wh_ref, bh_ref, wq_ref, bq_ref,
                  watt_ref, o_ref):
    tb, nr, in_dim = hist_ref.shape
    hidden = watt_ref.shape[-1]

    # HBM IO may be bf16; compute in f32 (accumulation + tanh/exp/rsqrt).
    hist = hist_ref[...].astype(jnp.float32)                  # (TB, R, 2H)
    ques = ques_ref[...].astype(jnp.float32)

    # --- GatedTrans: one tall matmul per input, fused [Wy | Wg] weights ------
    hist2 = hist.reshape(tb * nr, in_dim)                     # (TB*R, 2H)
    ques2 = ques.reshape(tb * nr, in_dim)

    hz = jnp.dot(hist2, wh_ref[...],
                 preferred_element_type=jnp.float32) + bh_ref[...]
    hg = hz[:, hidden:]
    h_e = jnp.tanh(hz[:, :hidden]) * jnp.where(hg >= 0, hg, _LEAKY * hg)

    qz = jnp.dot(ques2, wq_ref[...],
                 preferred_element_type=jnp.float32) + bq_ref[...]
    qg = qz[:, hidden:]
    q_e = jnp.tanh(qz[:, :hidden]) * jnp.where(qg >= 0, qg, _LEAKY * qg)

    # --- attention logits via two batched matmuls ----------------------------
    #   logit[b,i,j] = ((q⊙w)·h) * rsqrt(max((q²)·(h²), eps²))
    qw = (q_e * watt_ref[...]).reshape(tb, nr, hidden)
    q2 = (q_e * q_e).reshape(tb, nr, hidden)
    h3 = h_e.reshape(tb, nr, hidden)
    h2 = (h_e * h_e).reshape(tb, nr, hidden)

    num = jnp.einsum('xrh,xsh->xrs', qw, h3,
                     preferred_element_type=jnp.float32)      # (TB, R, R)
    sq = jnp.einsum('xrh,xsh->xrs', q2, h2,
                    preferred_element_type=jnp.float32)       # (TB, R, R)
    logits = num * jax.lax.rsqrt(jnp.maximum(sq, _EPS * _EPS))
    # (scalar att bias omitted: softmax is shift-invariant)

    # --- masked softmax (== softmax -> tril mask -> renormalize) -------------
    row = jax.lax.broadcasted_iota(jnp.int32, (nr, nr), 0)
    col = jax.lax.broadcasted_iota(jnp.int32, (nr, nr), 1)
    keep = col <= row                                         # (R, R) tril

    m = jnp.max(logits, axis=-1, keepdims=True)
    e = jnp.where(keep, jnp.exp(logits - m), 0.0)             # (TB, R, R)
    denom = jnp.sum(e, axis=-1, keepdims=True)                # > 0 (diagonal)
    # EUP approximate reciprocal + one Newton step (full f32 accuracy, no vdiv)
    r = pl.reciprocal(denom, approx=True)
    r = r * (2.0 - denom * r)
    att = e * r

    # --- feat = att_masked @ hist --------------------------------------------
    feat = jnp.einsum('xrs,xsd->xrd', att, hist,
                      preferred_element_type=jnp.float32)     # (TB, R, 2H)
    o_ref[...] = feat.astype(o_ref.dtype)


# ----------------------------------------------------------------------------
# Wrapper
# ----------------------------------------------------------------------------
def _pick_batch_tile(bsz, max_tile=128):
    """Batch examples per grid step.

    * <= ceil(B/2): keeps the parallel batch grid >= 2 steps so v7x's two
      TensorCores both get work (v5e/v6e have one TC, so this never hurts).
    * <= max_tile (128): ~0.75 MB f32 of IO per step, comfortably inside the
      32 MiB default scoped-VMEM (64 MiB physical on v7x) with double
      buffering; v5e/v6e (128 MiB VMEM) could go larger.
    * rounded to a multiple of 32 / 16 / 8 so TB*R (R=8) is a multiple of
      256 / 128 (v6e-v7x / v5e MXU height) for clean vmatmul cadence.
    """
    tb = min(max_tile, pl.cdiv(bsz, 2))
    for align in (32, 16, 8):
        if tb >= align:
            return (tb // align) * align
    return max(tb, 1)


def h_att_forward(hist, ques, params, *, batch_tile=None):
    """hist, ques: (B, R, 2H) in f32 or bf16 -> feat: (B, R, 2H), same dtype."""
    bsz, num_rounds, in_dim = hist.shape
    hidden = params["att_w"].shape[1]

    def fuse(wy, by, wg, bg):
        # torch layout (out, in) -> fused (in, 2*out), bias (1, 2*out)
        w = jnp.concatenate([wy, wg], axis=0).T.astype(jnp.float32)
        b = jnp.concatenate([by, bg], axis=0).reshape(1, 2 * hidden)
        return w, b.astype(jnp.float32)

    wh, bh = fuse(*params["H"])
    wq, bq = fuse(*params["Q"])
    watt = params["att_w"].reshape(1, hidden).astype(jnp.float32)

    tb = batch_tile if batch_tile is not None else _pick_batch_tile(bsz)
    tb = max(1, min(tb, bsz))
    n_tiles = pl.cdiv(bsz, tb)
    padded = n_tiles * tb
    if padded != bsz:
        # Zero-padded examples are harmless: logits are 0, the masked softmax
        # denominator stays positive, their feat rows are 0 and sliced off.
        pad = ((0, padded - bsz), (0, 0), (0, 0))
        hist_p = jnp.pad(hist, pad)
        ques_p = jnp.pad(ques, pad)
    else:
        hist_p, ques_p = hist, ques

    out = pl.pallas_call(
        _h_att_kernel,
        out_shape=jax.ShapeDtypeStruct((padded, num_rounds, in_dim), hist.dtype),
        grid=(n_tiles,),
        in_specs=[
            pl.BlockSpec((tb, num_rounds, in_dim), lambda i: (i, 0, 0)),
            pl.BlockSpec((tb, num_rounds, in_dim), lambda i: (i, 0, 0)),
            pl.BlockSpec((in_dim, 2 * hidden), lambda i: (0, 0)),
            pl.BlockSpec((1, 2 * hidden), lambda i: (0, 0)),
            pl.BlockSpec((in_dim, 2 * hidden), lambda i: (0, 0)),
            pl.BlockSpec((1, 2 * hidden), lambda i: (0, 0)),
            pl.BlockSpec((1, hidden), lambda i: (0, 0)),
        ],
        out_specs=pl.BlockSpec((tb, num_rounds, in_dim), lambda i: (i, 0, 0)),
        compiler_params=pltpu.CompilerParams(
            dimension_semantics=("parallel",)),
    )(hist_p, ques_p, wh, bh, wq, bq, watt)

    return out[:bsz] if padded != bsz else out


# ----------------------------------------------------------------------------
# Pure-JAX reference (mirrors the PyTorch forward exactly, eval mode)
# ----------------------------------------------------------------------------
def h_att_reference(hist, ques, params):
    def gated(x, wy, by, wg, bg):
        y = jnp.tanh(x @ wy.T + by)
        g = x @ wg.T + bg
        g = jnp.where(g >= 0, g, _LEAKY * g)
        return y * g

    h_e = gated(hist, *params["H"])                           # (B, R, H)
    q_e = gated(ques, *params["Q"])                           # (B, R, H)
    prod = q_e[:, :, None, :] * h_e[:, None, :, :]            # (B, R, R, H)
    norm = jnp.sqrt(jnp.sum(prod * prod, axis=-1, keepdims=True))
    normed = prod / jnp.maximum(norm, _EPS)
    logits = jnp.einsum("bijh,h->bij", normed, params["att_w"][0]) \
        + params["att_b"][0]
    att = jax.nn.softmax(logits, axis=-1)
    r = hist.shape[1]
    mask = jnp.tril(jnp.ones((r, r), jnp.float32))
    am = att * mask
    am = am / jnp.sum(am, axis=-1, keepdims=True)
    return jnp.einsum("bij,bjd->bid", am, hist)


# ----------------------------------------------------------------------------
# Deterministic parameter init (kaiming_uniform weights, zero biases)
# ----------------------------------------------------------------------------
def _ku(key, out_dim, in_dim):
    bound = math.sqrt(6.0 / in_dim)
    return jax.random.uniform(key, (out_dim, in_dim), jnp.float32, -bound, bound)


def make_params(key, hidden):
    in_dim = 2 * hidden
    ks = jax.random.split(key, 5)
    return {
        "H": (_ku(ks[0], hidden, in_dim), jnp.zeros((hidden,), jnp.float32),
              _ku(ks[1], hidden, in_dim), jnp.zeros((hidden,), jnp.float32)),
        "Q": (_ku(ks[2], hidden, in_dim), jnp.zeros((hidden,), jnp.float32),
              _ku(ks[3], hidden, in_dim), jnp.zeros((hidden,), jnp.float32)),
        "att_w": _ku(ks[4], 1, hidden),
        "att_b": jnp.zeros((1,), jnp.float32),
    }


if __name__ == "__main__":
    # hparams: lstm_hidden_size=32  ->  hist/ques feature dim = 64
    B, R, HID = 64, 8, 32          # B=64 -> batch tile 32, grid of 2 steps
    IN = 2 * HID

    key = jax.random.PRNGKey(0)
    kp, kh, kq = jax.random.split(key, 3)
    params = make_params(kp, HID)
    hist = jax.random.normal(kh, (B, R, IN), jnp.float32)
    ques = jax.random.normal(kq, (B, R, IN), jnp.float32)

    fwd = jax.jit(h_att_forward)

    # f32 IO: strict check against the PyTorch-equivalent reference.
    feat = fwd(hist, ques, params)
    jax.block_until_ready(feat)
    ref = h_att_reference(hist, ques, params)
    assert feat.shape == (B, R, IN)
    assert bool(jnp.all(jnp.isfinite(feat)))
    assert bool(jnp.allclose(feat, ref, atol=5e-4, rtol=5e-4)), (
        float(jnp.max(jnp.abs(feat - ref))))

    # bf16 HBM IO (halves memory traffic for this HBM-bound kernel); compare
    # against the reference run on the same bf16-rounded inputs.
    hist_bf = hist.astype(jnp.bfloat16)
    ques_bf = ques.astype(jnp.bfloat16)
    feat_bf = fwd(hist_bf, ques_bf, params)
    jax.block_until_ready(feat_bf)
    assert feat_bf.dtype == jnp.bfloat16
    ref_bf = h_att_reference(hist_bf.astype(jnp.float32),
                             ques_bf.astype(jnp.float32), params)
    feat_bf32 = feat_bf.astype(jnp.float32)
    assert bool(jnp.all(jnp.isfinite(feat_bf32)))
    assert bool(jnp.allclose(feat_bf32, ref_bf, atol=2e-2, rtol=2e-2)), (
        float(jnp.max(jnp.abs(feat_bf32 - ref_bf))))

    # TODO(synk): nn.Dropout train-mode masking is not reproduced (eval-mode
    # identity only), matching the inference semantics of the module.
    print("KERNEL_OK")
</pallas_src>

<mosaic_0001>
module attributes {stable_mosaic.version = 11 : i64} {
  func.func @_h_att_kernel(%arg0: i32, %arg1: memref<32x8x64xf32, #tpu.memory_space<vmem>>, %arg2: memref<32x8x64xf32, #tpu.memory_space<vmem>>, %arg3: memref<64x64xf32, #tpu.memory_space<vmem>>, %arg4: memref<1x64xf32, #tpu.memory_space<vmem>>, %arg5: memref<64x64xf32, #tpu.memory_space<vmem>>, %arg6: memref<1x64xf32, #tpu.memory_space<vmem>>, %arg7: memref<1x32xf32, #tpu.memory_space<vmem>>, %arg8: memref<32x8x64xf32, #tpu.memory_space<vmem>>) attributes {dimension_semantics = [#tpu.dimension_semantics<parallel>], iteration_bounds = array<i64: 2>, scalar_prefetch = 0 : i64, scratch_operands = 0 : i64, tpu.core_type = #tpu.core_type<tc>, window_params = [{transform_indices = @transform_0, window_bounds = array<i64: 32, 8, 64>}, {transform_indices = @transform_1, window_bounds = array<i64: 32, 8, 64>}, {pipeline_mode = #tpu.pipeline_mode<synchronous>, transform_indices = @transform_2, window_bounds = array<i64: 64, 64>}, {pipeline_mode = #tpu.pipeline_mode<synchronous>, transform_indices = @transform_3, window_bounds = array<i64: 1, 64>}, {pipeline_mode = #tpu.pipeline_mode<synchronous>, transform_indices = @transform_4, window_bounds = array<i64: 64, 64>}, {pipeline_mode = #tpu.pipeline_mode<synchronous>, transform_indices = @transform_5, window_bounds = array<i64: 1, 64>}, {pipeline_mode = #tpu.pipeline_mode<synchronous>, transform_indices = @transform_6, window_bounds = array<i64: 1, 32>}, {transform_indices = @transform_7, window_bounds = array<i64: 32, 8, 64>}]} {
    %c0 = arith.constant 0 : index
    %c0_0 = arith.constant 0 : index
    %c0_1 = arith.constant 0 : index
    %0 = vector.load %arg1[%c0, %c0_0, %c0_1] : memref<32x8x64xf32, #tpu.memory_space<vmem>>, vector<32x8x64xf32>
    %c0_2 = arith.constant 0 : index
    %c0_3 = arith.constant 0 : index
    %c0_4 = arith.constant 0 : index
    %1 = vector.load %arg2[%c0_2, %c0_3, %c0_4] : memref<32x8x64xf32, #tpu.memory_space<vmem>>, vector<32x8x64xf32>
    %2 = vector.shape_cast %0 : vector<32x8x64xf32> to vector<256x64xf32>
    %3 = vector.shape_cast %1 : vector<32x8x64xf32> to vector<256x64xf32>
    %c0_5 = arith.constant 0 : index
    %c0_6 = arith.constant 0 : index
    %4 = vector.load %arg3[%c0_5, %c0_6] : memref<64x64xf32, #tpu.memory_space<vmem>>, vector<64x64xf32>
    %cst = arith.constant dense<0.000000e+00> : vector<256x64xf32>
    %5 = tpu.matmul %2, %4, %cst {dimension_numbers = #tpu.dot_dimension_numbers<[1], [0], [0], [1], [0, 0, 1, 1], [], []>} : vector<256x64xf32>, vector<64x64xf32>, vector<256x64xf32> -> vector<256x64xf32>
    %c0_7 = arith.constant 0 : index
    %c0_8 = arith.constant 0 : index
    %6 = vector.load %arg4[%c0_7, %c0_8] : memref<1x64xf32, #tpu.memory_space<vmem>>, vector<1x64xf32>
    %7 = vector.broadcast %6 : vector<1x64xf32> to vector<256x64xf32>
    %8 = arith.addf %5, %7 : vector<256x64xf32>
    %9 = vector.extract_strided_slice %8 {offsets = [0, 32], sizes = [256, 32], strides = [1, 1]} : vector<256x64xf32> to vector<256x32xf32>
    %10 = vector.extract_strided_slice %8 {offsets = [0, 0], sizes = [256, 32], strides = [1, 1]} : vector<256x64xf32> to vector<256x32xf32>
    %11 = math.tanh %10 : vector<256x32xf32>
    %cst_9 = arith.constant 0.000000e+00 : f32
    %12 = vector.broadcast %cst_9 : f32 to vector<256x32xf32>
    %13 = arith.cmpf oge, %9, %12 : vector<256x32xf32>
    %cst_10 = arith.constant 0.00999999977 : f32
    %14 = vector.broadcast %cst_10 : f32 to vector<256x32xf32>
    %15 = arith.mulf %14, %9 : vector<256x32xf32>
    %16 = arith.select %13, %9, %15 : vector<256x32xi1>, vector<256x32xf32>
    %17 = arith.mulf %11, %16 : vector<256x32xf32>
    %c0_11 = arith.constant 0 : index
    %c0_12 = arith.constant 0 : index
    %18 = vector.load %arg5[%c0_11, %c0_12] : memref<64x64xf32, #tpu.memory_space<vmem>>, vector<64x64xf32>
    %cst_13 = arith.constant dense<0.000000e+00> : vector<256x64xf32>
    %19 = tpu.matmul %3, %18, %cst_13 {dimension_numbers = #tpu.dot_dimension_numbers<[1], [0], [0], [1], [0, 0, 1, 1], [], []>} : vector<256x64xf32>, vector<64x64xf32>, vector<256x64xf32> -> vector<256x64xf32>
    %c0_14 = arith.constant 0 : index
    %c0_15 = arith.constant 0 : index
    %20 = vector.load %arg6[%c0_14, %c0_15] : memref<1x64xf32, #tpu.memory_space<vmem>>, vector<1x64xf32>
    %21 = vector.broadcast %20 : vector<1x64xf32> to vector<256x64xf32>
    %22 = arith.addf %19, %21 : vector<256x64xf32>
    %23 = vector.extract_strided_slice %22 {offsets = [0, 32], sizes = [256, 32], strides = [1, 1]} : vector<256x64xf32> to vector<256x32xf32>
    %24 = vector.extract_strided_slice %22 {offsets = [0, 0], sizes = [256, 32], strides = [1, 1]} : vector<256x64xf32> to vector<256x32xf32>
    %25 = math.tanh %24 : vector<256x32xf32>
    %cst_16 = arith.constant 0.000000e+00 : f32
    %26 = vector.broadcast %cst_16 : f32 to vector<256x32xf32>
    %27 = arith.cmpf oge, %23, %26 : vector<256x32xf32>
    %cst_17 = arith.constant 0.00999999977 : f32
    %28 = vector.broadcast %cst_17 : f32 to vector<256x32xf32>
    %29 = arith.mulf %28, %23 : vector<256x32xf32>
    %30 = arith.select %27, %23, %29 : vector<256x32xi1>, vector<256x32xf32>
    %31 = arith.mulf %25, %30 : vector<256x32xf32>
    %c0_18 = arith.constant 0 : index
    %c0_19 = arith.constant 0 : index
    %32 = vector.load %arg7[%c0_18, %c0_19] : memref<1x32xf32, #tpu.memory_space<vmem>>, vector<1x32xf32>
    %33 = vector.broadcast %32 : vector<1x32xf32> to vector<256x32xf32>
    %34 = arith.mulf %31, %33 : vector<256x32xf32>
    %35 = vector.shape_cast %34 : vector<256x32xf32> to vector<32x8x32xf32>
    %36 = arith.mulf %31, %31 : vector<256x32xf32>
    %37 = vector.shape_cast %36 : vector<256x32xf32> to vector<32x8x32xf32>
    %38 = vector.shape_cast %17 : vector<256x32xf32> to vector<32x8x32xf32>
    %39 = arith.mulf %17, %17 : vector<256x32xf32>
    %40 = vector.shape_cast %39 : vector<256x32xf32> to vector<32x8x32xf32>
    "tpu.trace_start"() <{level = 10 : i32, message = "xrh,xsh->xrs"}> : () -> ()
    %cst_20 = arith.constant dense<0.000000e+00> : vector<32x8x8xf32>
    %41 = tpu.matmul %35, %38, %cst_20 {dimension_numbers = #tpu.dot_dimension_numbers<[2], [2], [1], [1], [0, 0, 0, 1, 1, 1], [0], [0]>} : vector<32x8x32xf32>, vector<32x8x32xf32>, vector<32x8x8xf32> -> vector<32x8x8xf32>
    %cst_21 = arith.constant dense<0.000000e+00> : vector<32x8x8xf32>
    %42 = tpu.matmul %37, %40, %cst_21 {dimension_numbers = #tpu.dot_dimension_numbers<[2], [2], [1], [1], [0, 0, 0, 1, 1, 1], [0], [0]>} : vector<32x8x32xf32>, vector<32x8x32xf32>, vector<32x8x8xf32> -> vector<32x8x8xf32>
    "tpu.trace_stop"() : () -> ()
    %cst_22 = arith.constant 1.000000e-24 : f32
    %43 = vector.broadcast %cst_22 : f32 to vector<32x8x8xf32>
    %44 = arith.maximumf %42, %43 : vector<32x8x8xf32>
    %45 = math.rsqrt %44 : vector<32x8x8xf32>
    %46 = arith.mulf %41, %45 : vector<32x8x8xf32>
    %47 = tpu.iota {dimensions = array<i32: 0>} : vector<8x8xi32>
    %48 = tpu.iota {dimensions = array<i32: 1>} : vector<8x8xi32>
    %49 = arith.cmpi sle, %48, %47 : vector<8x8xi32>
    %cst_23 = arith.constant dense<0xFF800000> : vector<32x8xf32>
    %50 = vector.multi_reduction <maximumf>, %46, %cst_23 [2] : vector<32x8x8xf32> to vector<32x8xf32>
    %51 = vector.shape_cast %50 : vector<32x8xf32> to vector<32x8x1xf32>
    %52 = vector.broadcast %51 : vector<32x8x1xf32> to vector<32x8x8xf32>
    %53 = arith.subf %46, %52 : vector<32x8x8xf32>
    %54 = math.exp %53 : vector<32x8x8xf32>
    %cst_24 = arith.constant 0.000000e+00 : f32
    %55 = vector.shape_cast %49 : vector<8x8xi1> to vector<1x8x8xi1>
    %56 = vector.broadcast %55 : vector<1x8x8xi1> to vector<32x8x8xi1>
    %57 = vector.broadcast %cst_24 : f32 to vector<32x8x8xf32>
    %58 = arith.select %56, %54, %57 : vector<32x8x8xi1>, vector<32x8x8xf32>
    %cst_25 = arith.constant dense<0.000000e+00> : vector<32x8xf32>
    %59 = vector.multi_reduction <add>, %58, %cst_25 [2] : vector<32x8x8xf32> to vector<32x8xf32>
    %60 = vector.shape_cast %59 : vector<32x8xf32> to vector<32x8x1xf32>
    %61 = tpu.reciprocal %60 {approx = true} : vector<32x8x1xf32> -> vector<32x8x1xf32>
    %62 = arith.mulf %60, %61 : vector<32x8x1xf32>
    %cst_26 = arith.constant 2.000000e+00 : f32
    %63 = vector.broadcast %cst_26 : f32 to vector<32x8x1xf32>
    %64 = arith.subf %63, %62 : vector<32x8x1xf32>
    %65 = arith.mulf %61, %64 : vector<32x8x1xf32>
    %66 = vector.broadcast %65 : vector<32x8x1xf32> to vector<32x8x8xf32>
    %67 = arith.mulf %58, %66 : vector<32x8x8xf32>
    "tpu.trace_start"() <{level = 10 : i32, message = "xrs,xsd->xrd"}> : () -> ()
    %cst_27 = arith.constant dense<0.000000e+00> : vector<32x8x64xf32>
    %68 = tpu.matmul %67, %0, %cst_27 {dimension_numbers = #tpu.dot_dimension_numbers<[2], [1], [1], [2], [0, 0, 0, 1, 1, 2], [0], [0]>} : vector<32x8x8xf32>, vector<32x8x64xf32>, vector<32x8x64xf32> -> vector<32x8x64xf32>
    "tpu.trace_stop"() : () -> ()
    %c0_28 = arith.constant 0 : index
    %c0_29 = arith.constant 0 : index
    %c0_30 = arith.constant 0 : index
    %69 = vector.load %arg8[%c0_28, %c0_29, %c0_30] : memref<32x8x64xf32, #tpu.memory_space<vmem>>, vector<32x8x64xf32>
    tpu.vector_store %arg8[%c0_28, %c0_29, %c0_30], %68 {strides = array<i32>} : memref<32x8x64xf32, #tpu.memory_space<vmem>>, vector<32x8x64xf32>,
    return
  }
  func.func @transform_0(%arg0: i32) -> (i32, i32, i32) {
    %c0_i32 = arith.constant 0 : i32
    %c0_i32_0 = arith.constant 0 : i32
    %c0_i32_1 = arith.constant 0 : i32
    return %arg0, %c0_i32, %c0_i32_0 : i32, i32, i32
  }
  func.func @transform_1(%arg0: i32) -> (i32, i32, i32) {
    %c0_i32 = arith.constant 0 : i32
    %c0_i32_0 = arith.constant 0 : i32
    %c0_i32_1 = arith.constant 0 : i32
    return %arg0, %c0_i32, %c0_i32_0 : i32, i32, i32
  }
  func.func @transform_2(%arg0: i32) -> (i32, i32) {
    %c0_i32 = arith.constant 0 : i32
    %c0_i32_0 = arith.constant 0 : i32
    %c0_i32_1 = arith.constant 0 : i32
    return %c0_i32, %c0_i32_0 : i32, i32
  }
  func.func @transform_3(%arg0: i32) -> (i32, i32) {
    %c0_i32 = arith.constant 0 : i32
    %c0_i32_0 = arith.constant 0 : i32
    %c0_i32_1 = arith.constant 0 : i32
    return %c0_i32, %c0_i32_0 : i32, i32
  }
  func.func @transform_4(%arg0: i32) -> (i32, i32) {
    %c0_i32 = arith.constant 0 : i32
    %c0_i32_0 = arith.constant 0 : i32
    %c0_i32_1 = arith.constant 0 : i32
    return %c0_i32, %c0_i32_0 : i32, i32
  }
  func.func @transform_5(%arg0: i32) -> (i32, i32) {
    %c0_i32 = arith.constant 0 : i32
    %c0_i32_0 = arith.constant 0 : i32
    %c0_i32_1 = arith.constant 0 : i32
    return %c0_i32, %c0_i32_0 : i32, i32
  }
  func.func @transform_6(%arg0: i32) -> (i32, i32) {
    %c0_i32 = arith.constant 0 : i32
    %c0_i32_0 = arith.constant 0 : i32
    %c0_i32_1 = arith.constant 0 : i32
    return %c0_i32, %c0_i32_0 : i32, i32
  }
  func.func @transform_7(%arg0: i32) -> (i32, i32, i32) {
    %c0_i32 = arith.constant 0 : i32
    %c0_i32_0 = arith.constant 0 : i32
    %c0_i32_1 = arith.constant 0 : i32
    return %arg0, %c0_i32, %c0_i32_0 : i32, i32, i32
  }
}

</mosaic_0001>

<llo_original>
// kernel: h_att_forward.1
$region0: #{h_att_forward.1}
  #allocation0 [shape = 'u32[]', space=smem, size = 0x4, offset = 0x4, fixed_abs, tag = 'smem constant byte address 0x4 - core index']
  #allocation1 [shape = 'u32[144,128]{1,0:T(1,128)}', space=vmem, size = 0x12000, scoped, tag = 'internal scratch']
  %s0 = inlined_call_operand.vmem [shape: f32[64,8,64], index: 0, kind: input, shape index: {}]
  %s1 = inlined_call_operand.hbm [shape: f32[64,8,64], index: 1, kind: input, shape index: {}]
  %s2 = inlined_call_operand.vmem [shape: f32[64,64], index: 2, kind: input, shape index: {}]
  %s3 = inlined_call_operand.vmem [shape: f32[1,64], index: 3, kind: input, shape index: {}]
  %s4 = inlined_call_operand.vmem [shape: f32[64,64], index: 4, kind: input, shape index: {}]
  %s5 = inlined_call_operand.vmem [shape: f32[1,64], index: 5, kind: input, shape index: {}]
  %s6 = inlined_call_operand.vmem [shape: f32[1,32], index: 6, kind: input, shape index: {}]
  %s7 = inlined_call_operand.hbm [shape: f32[64,8,64], index: 7, kind: output, shape index: {}]
  %s8 = sld [smem:[#allocation0]]
  $region65: #{h_att_forward.1} parent=0
    _
  %s10 = ssub.s32 1, %s8
  %s11 = scalar_select 0, %s10, %s8
  $region1: #{h_att_forward.1} parent=0
    #allocation2 [shape = 'u8[262144]{0}', space=vmem, size = 0x40000, scoped, tag = 'input window, operand 1']
    #allocation3 [shape = 's32[2]{0}', space=sflag, size = 0x8, scoped, tag = 'scoped memory for h_att_forward.1']
    #allocation4 [shape = 's32[2]{0}', space=sflag, size = 0x8, scoped, tag = 'scoped memory for h_att_forward.1']
    #allocation5 [shape = 'u8[262144]{0}', space=vmem, size = 0x40000, scoped, tag = 'output window, operand 0']
    %12 = vsyncpa [#allocation3], 0
    %s13 = scalar_lea.sflag [#allocation3], 1
    %14 = vsyncpa %s13, 0
    %15 = vsyncpa [#allocation4], 0
    %s16 = scalar_lea.sflag [#allocation4], 1
    %17 = vsyncpa %s16, 0
    loop: start=0, step=1, limit=4
    $region2: #{h_att_forward.1} parent=1 // loop_pre_header
      _
    $region3: #{h_att_forward.1} parent=1 // loop_header
      %s19 = sphi 0, %s23
      %p20 = scmp.ge.s32.totalorder %s19, 4
      %s29 = sphi 0, %s31
      %s32 = sphi 0, %s29
      %s33 = sphi 0, %s32
      %s49 = sphi 0, %s33
      %s55 = sphi 0, %s57
      %s58 = sphi 0, %s55
      %s59 = sphi 0, %s58
      %s75 = sphi 0, %s59
      %s79 = sphi 0, %s79
      %s81 = sphi 0, %s79
      %s82 = sphi 0, %s81
      %s96 = sphi 0, %s82
      %s100 = sphi 0, %s100
      %s102 = sphi 0, %s100
      %s103 = sphi 0, %s102
      %s117 = sphi 0, %s103
      %s121 = sphi 0, %s121
      %s123 = sphi 0, %s121
      %s124 = sphi 0, %s123
      %s138 = sphi 0, %s124
      %s142 = sphi 0, %s142
      %s144 = sphi 0, %s142
      %s145 = sphi 0, %s144
      %s159 = sphi 0, %s145
      %s163 = sphi 0, %s163
      %s165 = sphi 0, %s163
      %s166 = sphi 0, %s165
      %s180 = sphi 0, %s166
      %s186 = sphi 0, %s188
      %s189 = sphi 0, %s186
      %s190 = sphi 0, %s189
      %s206 = sphi 0, %s190
    $region4: #{h_att_forward.1} parent=1 // loop_header_branch
      %22 = sbr.rel (%p20) target = $region8
    $region5: #{h_att_forward.1} parent=1 // loop_body
      %s24 = ssub.s32 %s19, 1
      %s25 = ssub.s32 %s19, 2
      %s26 = sadd.s32 %s19, 1
      %s27 = ssub.s32 %s19, %s26
      %p28 = scmp.eq.s32.totalorder %s27, 0
      %s30 = sadd.s32 %s29, 1
      %s31 = scalar_select %p28, %s29, %s30
      %p34 = pneg %p28
      %p35 = scmp.eq.s32.totalorder %s19, 1
      %p36 = por %p34, %p35
      %p37 = scmp.ne.s32.totalorder %s29, %s32
      %p38 = scmp.eq.s32.totalorder %s19, 0
      %p39 = por %p37, %p38
      %p40 = scmp.ne.s32.totalorder %s29, %s32
      %p41 = scmp.eq.s32.totalorder %s24, 1
      %p42 = por %p40, %p41
      %p43 = scmp.ne.s32.totalorder %s32, %s33
      %p44 = scmp.eq.s32.totalorder %s24, 0
      %p45 = por %p43, %p44
      %p46 = scmp.ne.s32.totalorder %s32, %s33
      %p47 = scmp.eq.s32.totalorder %s25, 1
      %p48 = por %p46, %p47
      %p50 = scmp.ne.s32.totalorder %s33, %s49
      %p51 = scmp.eq.s32.totalorder %s25, 0
      %p52 = por %p50, %p51
      %s53 = ssub.s32 %s19, %s26
      %p54 = scmp.eq.s32.totalorder %s53, 0
      %s56 = sadd.s32 %s55, 1
      %s57 = scalar_select %p54, %s55, %s56
      %p60 = pneg %p54
      %p61 = scmp.eq.s32.totalorder %s19, 1
      %p62 = por %p60, %p61
      %p63 = scmp.ne.s32.totalorder %s55, %s58
      %p64 = scmp.eq.s32.totalorder %s19, 0
      %p65 = por %p63, %p64
      %p66 = scmp.ne.s32.totalorder %s55, %s58
      %p67 = scmp.eq.s32.totalorder %s24, 1
      %p68 = por %p66, %p67
      %p69 = scmp.ne.s32.totalorder %s58, %s59
      %p70 = scmp.eq.s32.totalorder %s24, 0
      %p71 = por %p69, %p70
      %p72 = scmp.ne.s32.totalorder %s58, %s59
      %p73 = scmp.eq.s32.totalorder %s25, 1
      %p74 = por %p72, %p73
      %p76 = scmp.ne.s32.totalorder %s59, %s75
      %p77 = scmp.eq.s32.totalorder %s25, 0
      %p78 = por %p76, %p77
      %s80 = sadd.s32 %s79, 1
      %p83 = scmp.eq.s32.totalorder %s19, 1
      %p84 = scmp.ne.s32.totalorder %s79, %s81
      %p85 = scmp.eq.s32.totalorder %s19, 0
      %p86 = por %p84, %p85
      %p87 = scmp.ne.s32.totalorder %s79, %s81
      %p88 = scmp.eq.s32.totalorder %s24, 1
      %p89 = por %p87, %p88
      %p90 = scmp.ne.s32.totalorder %s81, %s82
      %p91 = scmp.eq.s32.totalorder %s24, 0
      %p92 = por %p90, %p91
      %p93 = scmp.ne.s32.totalorder %s81, %s82
      %p94 = scmp.eq.s32.totalorder %s25, 1
      %p95 = por %p93, %p94
      %p97 = scmp.ne.s32.totalorder %s82, %s96
      %p98 = scmp.eq.s32.totalorder %s25, 0
      %p99 = por %p97, %p98
      %s101 = sadd.s32 %s100, 1
      %p104 = scmp.eq.s32.totalorder %s19, 1
      %p105 = scmp.ne.s32.totalorder %s100, %s102
      %p106 = scmp.eq.s32.totalorder %s19, 0
      %p107 = por %p105, %p106
      %p108 = scmp.ne.s32.totalorder %s100, %s102
      %p109 = scmp.eq.s32.totalorder %s24, 1
      %p110 = por %p108, %p109
      %p111 = scmp.ne.s32.totalorder %s102, %s103
      %p112 = scmp.eq.s32.totalorder %s24, 0
      %p113 = por %p111, %p112
      %p114 = scmp.ne.s32.totalorder %s102, %s103
      %p115 = scmp.eq.s32.totalorder %s25, 1
      %p116 = por %p114, %p115
      %p118 = scmp.ne.s32.totalorder %s103, %s117
      %p119 = scmp.eq.s32.totalorder %s25, 0
      %p120 = por %p118, %p119
      %s122 = sadd.s32 %s121, 1
      %p125 = scmp.eq.s32.totalorder %s19, 1
      %p126 = scmp.ne.s32.totalorder %s121, %s123
      %p127 = scmp.eq.s32.totalorder %s19, 0
      %p128 = por %p126, %p127
      %p129 = scmp.ne.s32.totalorder %s121, %s123
      %p130 = scmp.eq.s32.totalorder %s24, 1
      %p131 = por %p129, %p130
      %p132 = scmp.ne.s32.totalorder %s123, %s124
      %p133 = scmp.eq.s32.totalorder %s24, 0
      %p134 = por %p132, %p133
      %p135 = scmp.ne.s32.totalorder %s123, %s124
      %p136 = scmp.eq.s32.totalorder %s25, 1
      %p137 = por %p135, %p136
      %p139 = scmp.ne.s32.totalorder %s124, %s138
      %p140 = scmp.eq.s32.totalorder %s25, 0
      %p141 = por %p139, %p140
      %s143 = sadd.s32 %s142, 1
      %p146 = scmp.eq.s32.totalorder %s19, 1
      %p147 = scmp.ne.s32.totalorder %s142, %s144
      %p148 = scmp.eq.s32.totalorder %s19, 0
      %p149 = por %p147, %p148
      %p150 = scmp.ne.s32.totalorder %s142, %s144
      %p151 = scmp.eq.s32.totalorder %s24, 1
      %p152 = por %p150, %p151
      %p153 = scmp.ne.s32.totalorder %s144, %s145
      %p154 = scmp.eq.s32.totalorder %s24, 0
      %p155 = por %p153, %p154
      %p156 = scmp.ne.s32.totalorder %s144, %s145
      %p157 = scmp.eq.s32.totalorder %s25, 1
      %p158 = por %p156, %p157
      %p160 = scmp.ne.s32.totalorder %s145, %s159
      %p161 = scmp.eq.s32.totalorder %s25, 0
      %p162 = por %p160, %p161
      %s164 = sadd.s32 %s163, 1
      %p167 = scmp.eq.s32.totalorder %s19, 1
      %p168 = scmp.ne.s32.totalorder %s163, %s165
      %p169 = scmp.eq.s32.totalorder %s19, 0
      %p170 = por %p168, %p169
      %p171 = scmp.ne.s32.totalorder %s163, %s165
      %p172 = scmp.eq.s32.totalorder %s24, 1
      %p173 = por %p171, %p172
      %p174 = scmp.ne.s32.totalorder %s165, %s166
      %p175 = scmp.eq.s32.totalorder %s24, 0
      %p176 = por %p174, %p175
      %p177 = scmp.ne.s32.totalorder %s165, %s166
      %p178 = scmp.eq.s32.totalorder %s25, 1
      %p179 = por %p177, %p178
      %p181 = scmp.ne.s32.totalorder %s166, %s180
      %p182 = scmp.eq.s32.totalorder %s25, 0
      %p183 = por %p181, %p182
      %s184 = ssub.s32 %s19, %s26
      %p185 = scmp.eq.s32.totalorder %s184, 0
      %s187 = sadd.s32 %s186, 1
      %s188 = scalar_select %p185, %s186, %s187
      %p191 = pneg %p185
      %p192 = scmp.eq.s32.totalorder %s19, 1
      %p193 = por %p191, %p192
      %p194 = scmp.ne.s32.totalorder %s186, %s189
      %p195 = scmp.eq.s32.totalorder %s19, 0
      %p196 = por %p194, %p195
      %p197 = scmp.ne.s32.totalorder %s186, %s189
      %p198 = scmp.eq.s32.totalorder %s24, 1
      %p199 = por %p197, %p198
      %p200 = scmp.ne.s32.totalorder %s189, %s190
      %p201 = scmp.eq.s32.totalorder %s24, 0
      %p202 = por %p200, %p201
      %p203 = scmp.ne.s32.totalorder %s189, %s190
      %p204 = scmp.eq.s32.totalorder %s25, 1
      %p205 = por %p203, %p204
      %p207 = scmp.ne.s32.totalorder %s190, %s206
      %p208 = scmp.eq.s32.totalorder %s25, 0
      %p209 = por %p207, %p208
      %p210 = scmp.le.s32.totalorder 1, %s19
      %p211 = scmp.lt.s32.totalorder %s19, 3
      %p212 = pnand %p210, %p211
      %p213 = pneg %p212
      // Predicated region
      $region9: #{h_att_forward.1} parent=5 // pred_check
        _
      $region10: #{h_att_forward.1} parent=5 // pred_check_branch
        %215 = sbr.rel (%p212) target = $region12
      $region11: #{h_att_forward.1} parent=5 // pred_region
        %s216 = ssub.s32 %s19, 1
        // Predicated region
        $region13: #{h_att_forward.1} parent=11 // pred_check
          %p217 = pneg %p92
        $region14: #{h_att_forward.1} parent=11 // pred_check_branch
          %219 = sbr.rel (%p217) target = $region16
        $region15: #{h_att_forward.1} parent=11 // pred_region
          _
        $region16: #{h_att_forward.1} parent=11 // pred_fallthru
          _
        // Predicated region
        $region17: #{h_att_forward.1} parent=11 // pred_check
          %p220 = pneg %p113
        $region18: #{h_att_forward.1} parent=11 // pred_check_branch
          %222 = sbr.rel (%p220) target = $region20
        $region19: #{h_att_forward.1} parent=11 // pred_region
          _
        $region20: #{h_att_forward.1} parent=11 // pred_fallthru
          _
        // Predicated region
        $region21: #{h_att_forward.1} parent=11 // pred_check
          %p223 = pneg %p134
        $region22: #{h_att_forward.1} parent=11 // pred_check_branch
          %225 = sbr.rel (%p223) target = $region24
        $region23: #{h_att_forward.1} parent=11 // pred_region
          _
        $region24: #{h_att_forward.1} parent=11 // pred_fallthru
          _
        // Predicated region
        $region25: #{h_att_forward.1} parent=11 // pred_check
          %p226 = pneg %p155
        $region26: #{h_att_forward.1} parent=11 // pred_check_branch
          %228 = sbr.rel (%p226) target = $region28
        $region27: #{h_att_forward.1} parent=11 // pred_region
          _
        $region28: #{h_att_forward.1} parent=11 // pred_fallthru
          _
        // Predicated region
        $region29: #{h_att_forward.1} parent=11 // pred_check
          %p229 = pneg %p176
        $region30: #{h_att_forward.1} parent=11 // pred_check_branch
          %231 = sbr.rel (%p229) target = $region32
        $region31: #{h_att_forward.1} parent=11 // pred_region
          _
        $region32: #{h_att_forward.1} parent=11 // pred_fallthru
          _
      $region12: #{h_att_forward.1} parent=5 // pred_fallthru
        _
      %p232 = scmp.lt.s32.totalorder %s19, 2
      // Predicated region
      $region33: #{h_att_forward.1} parent=5 // pred_check
        %p233 = pneg %p232
      $region34: #{h_att_forward.1} parent=5 // pred_check_branch
        %235 = sbr.rel (%p233) target = $region36
      $region35: #{h_att_forward.1} parent=5 // pred_region
        // Predicated region
        $region37: #{h_att_forward.1} parent=35 // pred_check
          %p236 = pneg %p39
        $region38: #{h_att_forward.1} parent=35 // pred_check_branch
          %238 = sbr.rel (%p236) target = $region40
        $region39: #{h_att_forward.1} parent=35 // pred_region
          %s239 = smul.u32 32, %s19
          %p240 = scmp.lt.s32.totalorder %s239, 63
          %s241 = scalar_select %p240, %s239, 63
          %s242 = smul.addr %s241, 8
          %s243 = scalar_lea.vmem %s0, %s242
          %s244 = smul.u32 32, %s19
        $region40: #{h_att_forward.1} parent=35 // pred_fallthru
          _
        // Predicated region
        $region41: #{h_att_forward.1} parent=35 // pred_check
          %p245 = pneg %p65
        $region42: #{h_att_forward.1} parent=35 // pred_check_branch
          %247 = sbr.rel (%p245) target = $region44
        $region43: #{h_att_forward.1} parent=35 // pred_region
          %s248 = sand.u32 %s55, 1
          %s249 = scalar_lea.sflag [#allocation3], %s248
          %s250 = sand.u32 %s55, 1
          %s251 = smul.addr %s250, 256
          %s252 = scalar_lea.vmem [#allocation2], %s251
          %s253 = smul.u32 32, %s19
          %s255 = ssub.s32 4096, 4096
          %256 = vsyncadd %s249, %s255
          %s257 = smul.addr %s253, 128
          %s258 = scalar_lea.hbm %s1, %s257
          %s259 = sshll.u32 %s252, 4
          %s260 = int_to_ptr.vmem [resolvable:$true] %s259
          %265 = dma.hbm_to_vmem [thread:$0]  %s258, 4096, %s260, %s249, 128, 128, 8
        $region44: #{h_att_forward.1} parent=35 // pred_fallthru
          _
      $region36: #{h_att_forward.1} parent=5 // pred_fallthru
        _
      %p266 = scmp.le.s32.totalorder 1, %s19
      %p267 = scmp.lt.s32.totalorder %s19, 3
      %p268 = pnand %p266, %p267
      %p269 = pneg %p268
      // Predicated region
      $region45: #{h_att_forward.1} parent=5 // pred_check
        _
      $region46: #{h_att_forward.1} parent=5 // pred_check_branch
        %271 = sbr.rel (%p268) target = $region48
      $region47: #{h_att_forward.1} parent=5 // pred_region
        %s272 = ssub.s32 %s19, 1
        %s273 = sand.u32 %s58, 1
        %s274 = scalar_lea.sflag [#allocation3], %s273
        %s275 = sand.u32 %s58, 1
        %s276 = smul.addr %s275, 256
        %s277 = scalar_lea.vmem [#allocation2], %s276
        // Predicated region
        $region49: #{h_att_forward.1} parent=47 // pred_check
          %p278 = pneg %p71
        $region50: #{h_att_forward.1} parent=47 // pred_check_branch
          %280 = sbr.rel (%p278) target = $region52
        $region51: #{h_att_forward.1} parent=47 // pred_region
          %281 = dma.done %s274, 4096
        $region52: #{h_att_forward.1} parent=47 // pred_fallthru
          _
        %s282 = smul.u32 32, %s24
        %p283 = scmp.lt.s32.totalorder %s282, 63
        %s284 = scalar_select %p283, %s282, 63
        %s285 = smul.addr %s284, 8
        %s286 = scalar_lea.vmem %s0, %s285
        %p287 = pneg %p45
        %p288 = pneg %p42
        %s289 = sand.u32 %s58, 1
        %s290 = scalar_lea.sflag [#allocation3], %s289
        %s291 = sand.u32 %s58, 1
        %s292 = smul.addr %s291, 256
        %s293 = scalar_lea.vmem [#allocation2], %s292
        %p294 = pneg %p71
        %p295 = pneg %p68
        %p296 = pneg %p92
        %p297 = pneg %p89
        %p298 = pneg %p113
        %p299 = pneg %p110
        %p300 = pneg %p134
        %p301 = pneg %p131
        %p302 = pneg %p155
        %p303 = pneg %p152
        %p304 = pneg %p176
        %p305 = pneg %p173
        %p306 = pneg %p202
        %p307 = pneg %p199
        %s308 = sand.u32 %s189, 1
        %s309 = scalar_lea.sflag [#allocation4], %s308
        %s310 = sand.u32 %s189, 1
        %s311 = smul.addr %s310, 256
        %s312 = scalar_lea.vmem [#allocation5], %s311
        %s313 = smul.u32 32, %s24
        %p314 = scmp.lt.s32.totalorder %s313, 63
        %s315 = scalar_select %p314, %s313, 63
        %s316 = smul.addr %s315, 8
        %s317 = scalar_lea.vmem %s0, %s316
        %s318 = smul.u32 32, %s24
        %s319 = smul.u32 32, %s24
        %s320 = smul.u32 32, %s24
        %v321 = vld [vmem:[%s317] sm:$0xff]
        %v322 = vld [vmem:[%s317 + $0x8] sm:$0xff]
        %v323 = vld [vmem:[%s317 + $0x10] sm:$0xff]
        %v324 = vld [vmem:[%s317 + $0x18] sm:$0xff]
        %v325 = vld [vmem:[%s317 + $0x20] sm:$0xff]
        %v326 = vld [vmem:[%s317 + $0x28] sm:$0xff]
        %v327 = vld [vmem:[%s317 + $0x30] sm:$0xff]
        %v328 = vld [vmem:[%s317 + $0x38] sm:$0xff]
        %v329 = vld [vmem:[%s317 + $0x40] sm:$0xff]
        %v330 = vld [vmem:[%s317 + $0x48] sm:$0xff]
        %v331 = vld [vmem:[%s317 + $0x50] sm:$0xff]
        %v332 = vld [vmem:[%s317 + $0x58] sm:$0xff]
        %v333 = vld [vmem:[%s317 + $0x60] sm:$0xff]
        %v334 = vld [vmem:[%s317 + $0x68] sm:$0xff]
        %v335 = vld [vmem:[%s317 + $0x70] sm:$0xff]
        %v336 = vld [vmem:[%s317 + $0x78] sm:$0xff]
        %v337 = vld [vmem:[%s317 + $0x80] sm:$0xff]
        %v338 = vld [vmem:[%s317 + $0x88] sm:$0xff]
        %v339 = vld [vmem:[%s317 + $0x90] sm:$0xff]
        %v340 = vld [vmem:[%s317 + $0x98] sm:$0xff]
        %v341 = vld [vmem:[%s317 + $0xa0] sm:$0xff]
        %v342 = vld [vmem:[%s317 + $0xa8] sm:$0xff]
        %v343 = vld [vmem:[%s317 + $0xb0] sm:$0xff]
        %v344 = vld [vmem:[%s317 + $0xb8] sm:$0xff]
        %v345 = vld [vmem:[%s317 + $0xc0] sm:$0xff]
        %v346 = vld [vmem:[%s317 + $0xc8] sm:$0xff]
        %v347 = vld [vmem:[%s317 + $0xd0] sm:$0xff]
        %v348 = vld [vmem:[%s317 + $0xd8] sm:$0xff]
        %v349 = vld [vmem:[%s317 + $0xe0] sm:$0xff]
        %v350 = vld [vmem:[%s317 + $0xe8] sm:$0xff]
        %v351 = vld [vmem:[%s317 + $0xf0] sm:$0xff]
        %v352 = vld [vmem:[%s317 + $0xf8] sm:$0xff]
        %v353 = vld [vmem:[%s277] sm:$0xff]
        %v354 = vld [vmem:[%s277 + $0x8] sm:$0xff]
        %v355 = vld [vmem:[%s277 + $0x10] sm:$0xff]
        %v356 = vld [vmem:[%s277 + $0x18] sm:$0xff]
        %v357 = vld [vmem:[%s277 + $0x20] sm:$0xff]
        %v358 = vld [vmem:[%s277 + $0x28] sm:$0xff]
        %v359 = vld [vmem:[%s277 + $0x30] sm:$0xff]
        %v360 = vld [vmem:[%s277 + $0x38] sm:$0xff]
        %v361 = vld [vmem:[%s277 + $0x40] sm:$0xff]
        %v362 = vld [vmem:[%s277 + $0x48] sm:$0xff]
        %v363 = vld [vmem:[%s277 + $0x50] sm:$0xff]
        %v364 = vld [vmem:[%s277 + $0x58] sm:$0xff]
        %v365 = vld [vmem:[%s277 + $0x60] sm:$0xff]
        %v366 = vld [vmem:[%s277 + $0x68] sm:$0xff]
        %v367 = vld [vmem:[%s277 + $0x70] sm:$0xff]
        %v368 = vld [vmem:[%s277 + $0x78] sm:$0xff]
        %v369 = vld [vmem:[%s277 + $0x80] sm:$0xff]
        %v370 = vld [vmem:[%s277 + $0x88] sm:$0xff]
        %v371 = vld [vmem:[%s277 + $0x90] sm:$0xff]
        %v372 = vld [vmem:[%s277 + $0x98] sm:$0xff]
        %v373 = vld [vmem:[%s277 + $0xa0] sm:$0xff]
        %v374 = vld [vmem:[%s277 + $0xa8] sm:$0xff]
        %v375 = vld [vmem:[%s277 + $0xb0] sm:$0xff]
        %v376 = vld [vmem:[%s277 + $0xb8] sm:$0xff]
        %v377 = vld [vmem:[%s277 + $0xc0] sm:$0xff]
        %v378 = vld [vmem:[%s277 + $0xc8] sm:$0xff]
        %v379 = vld [vmem:[%s277 + $0xd0] sm:$0xff]
        %v380 = vld [vmem:[%s277 + $0xd8] sm:$0xff]
        %v381 = vld [vmem:[%s277 + $0xe0] sm:$0xff]
        %v382 = vld [vmem:[%s277 + $0xe8] sm:$0xff]
        %v383 = vld [vmem:[%s277 + $0xf0] sm:$0xff]
        %v384 = vld [vmem:[%s277 + $0xf8] sm:$0xff]
        %v385 = vld [vmem:[%s2] sm:$0xff]
        %v386 = vld [vmem:[%s2 + $0x8] sm:$0xff]
        %v387 = vld [vmem:[%s2 + $0x10] sm:$0xff]
        %v388 = vld [vmem:[%s2 + $0x18] sm:$0xff]
        %v389 = vld [vmem:[%s2 + $0x20] sm:$0xff]
        %v390 = vld [vmem:[%s2 + $0x28] sm:$0xff]
        %v391 = vld [vmem:[%s2 + $0x30] sm:$0xff]
        %v392 = vld [vmem:[%s2 + $0x38] sm:$0xff]
        %v393 = vld [vmem:[%s3] sm:$0x1]
        %v395 = vlaneseq
        %v396 = vshrl.u32 %v395, 7
        %v397 = vsub.s32 0, %v396
        %v398 = vrot.slane %v393, %v397
        %vm400 = vcmask 523264
        %v402 = vsel %vm400, %v321, 0
        %v405 = vsel %vm400, %v322, 0
        %v408 = vsel %vm400, %v323, 0
        %v411 = vsel %vm400, %v324, 0
        %v414 = vsel %vm400, %v325, 0
        %v417 = vsel %vm400, %v326, 0
        %v420 = vsel %vm400, %v327, 0
        %v423 = vsel %vm400, %v328, 0
        %v426 = vsel %vm400, %v329, 0
        %v429 = vsel %vm400, %v330, 0
        %v432 = vsel %vm400, %v331, 0
        %v435 = vsel %vm400, %v332, 0
        %v438 = vsel %vm400, %v333, 0
        %v441 = vsel %vm400, %v334, 0
        %v444 = vsel %vm400, %v335, 0
        %v447 = vsel %vm400, %v336, 0
        %v450 = vsel %vm400, %v337, 0
        %v453 = vsel %vm400, %v338, 0
        %v456 = vsel %vm400, %v339, 0
        %v459 = vsel %vm400, %v340, 0
        %v462 = vsel %vm400, %v341, 0
        %v465 = vsel %vm400, %v342, 0
        %v468 = vsel %vm400, %v343, 0
        %v471 = vsel %vm400, %v344, 0
        %v474 = vsel %vm400, %v345, 0
        %v477 = vsel %vm400, %v346, 0
        %v480 = vsel %vm400, %v347, 0
        %v483 = vsel %vm400, %v348, 0
        %v486 = vsel %vm400, %v349, 0
        %v489 = vsel %vm400, %v350, 0
        %v492 = vsel %vm400, %v351, 0
        %v495 = vsel %vm400, %v352, 0
        %497 = vmatprep.subr.mxu0 0.0
        %498 = vmatpush1.msra.mxu0 0.0
        %499 = vmatprep.subr.mxu0 0.0
        %500 = vmatpush1.msra.mxu0 0.0
        %501 = vmatprep.subr.mxu0 0.0
        %502 = vmatpush1.msra.mxu0 0.0
        %503 = vmatprep.subr.mxu0 0.0
        %504 = vmatpush1.msra.mxu0 0.0
        %505 = vmatprep.subr.mxu0 0.0
        %506 = vmatpush1.msra.mxu0 0.0
        %507 = vmatprep.subr.mxu0 0.0
        %508 = vmatpush1.msra.mxu0 0.0
        %509 = vmatprep.subr.mxu0 0.0
        %510 = vmatpush1.msra.mxu0 0.0
        %511 = vmatprep.subr.mxu0 0.0
        %512 = vmatpush1.msra.mxu0 0.0
        %513 = vmatprep.subr.mxu0 0.0
        %514 = vmatpush1.msra.mxu0 %v392
        %515 = vmatprep.subr.mxu0 0.0
        %516 = vmatpush1.msra.mxu0 %v391
        %517 = vmatprep.subr.mxu0 0.0
        %518 = vmatpush1.msra.mxu0 %v390
        %519 = vmatprep.subr.mxu0 0.0
        %520 = vmatpush1.msra.mxu0 %v389
        %521 = vmatprep.subr.mxu0 0.0
        %522 = vmatpush1.msra.mxu0 %v388
        %523 = vmatprep.subr.mxu0 0.0
        %524 = vmatpush1.msra.mxu0 %v387
        %525 = vmatprep.subr.mxu0 0.0
        %526 = vmatpush1.msra.mxu0 %v386
        %527 = vmatprep.subr.mxu0 0.0
        %528 = vmatpush1.msra.mxu0 %v385
        %529 = vmatprep.subr.mxu0 0.0
        %530 = vmatpush2.msra.mxu0 0.0
        %531 = vmatprep.subr.mxu0 0.0
        %532 = vmatpush2.msra.mxu0 0.0
        %533 = vmatprep.subr.mxu0 0.0
        %534 = vmatpush2.msra.mxu0 0.0
        %535 = vmatprep.subr.mxu0 0.0
        %536 = vmatpush2.msra.mxu0 0.0
        %537 = vmatprep.subr.mxu0 0.0
        %538 = vmatpush2.msra.mxu0 0.0
        %539 = vmatprep.subr.mxu0 0.0
        %540 = vmatpush2.msra.mxu0 0.0
        %541 = vmatprep.subr.mxu0 0.0
        %542 = vmatpush2.msra.mxu0 0.0
        %543 = vmatprep.subr.mxu0 0.0
        %544 = vmatpush2.msra.mxu0 0.0
        %545 = vmatprep.subr.mxu0 0.0
        %546 = vmatpush2.msra.mxu0 0.0
        %547 = vmatprep.subr.mxu0 0.0
        %548 = vmatpush2.msra.mxu0 0.0
        %549 = vmatprep.subr.mxu0 0.0
        %550 = vmatpush2.msra.mxu0 0.0
        %551 = vmatprep.subr.mxu0 0.0
        %552 = vmatpush2.msra.mxu0 0.0
        %553 = vmatprep.subr.mxu0 0.0
        %554 = vmatpush2.msra.mxu0 0.0
        %555 = vmatprep.subr.mxu0 0.0
        %556 = vmatpush2.msra.mxu0 0.0
        %557 = vmatprep.subr.mxu0 0.0
        %558 = vmatpush2.msra.mxu0 0.0
        %559 = vmatprep.subr.mxu0 0.0
        %560 = vmatpush2.msra.mxu0 0.0
        %561 = vmatprep.mubr.f32.mxu0 0.0
        %562 = vmatmul.mubr.f32.gmra.mxu0 %v402
        %v563 = vpop.f32.mrf.mxu0
        %v564 = vadd.f32 %v398, %v563
        %v565 = vpop.f32.mrf.mxu0
        %566 = vmatprep.mubr.f32.mxu0 0.0
        %567 = vmatmul.mubr.f32.gmra.mxu0 %v405
        %v568 = vpop.f32.mrf.mxu0
        %v569 = vadd.f32 %v398, %v568
        %v570 = vpop.f32.mrf.mxu0
        %571 = vmatprep.mubr.f32.mxu0 0.0
        %572 = vmatmul.mubr.f32.gmra.mxu0 %v408
        %v573 = vpop.f32.mrf.mxu0
        %v574 = vadd.f32 %v398, %v573
        %v575 = vpop.f32.mrf.mxu0
        %576 = vmatprep.mubr.f32.mxu0 0.0
        %577 = vmatmul.mubr.f32.gmra.mxu0 %v411
        %v578 = vpop.f32.mrf.mxu0
        %v579 = vadd.f32 %v398, %v578
        %v580 = vpop.f32.mrf.mxu0
        %581 = vmatprep.mubr.f32.mxu0 0.0
        %582 = vmatmul.mubr.f32.gmra.mxu0 %v414
        %v583 = vpop.f32.mrf.mxu0
        %v584 = vadd.f32 %v398, %v583
        %v585 = vpop.f32.mrf.mxu0
        %586 = vmatprep.mubr.f32.mxu0 0.0
        %587 = vmatmul.mubr.f32.gmra.mxu0 %v417
        %v588 = vpop.f32.mrf.mxu0
        %v589 = vadd.f32 %v398, %v588
        %v590 = vpop.f32.mrf.mxu0
        %591 = vmatprep.mubr.f32.mxu0 0.0
        %592 = vmatmul.mubr.f32.gmra.mxu0 %v420
        %v593 = vpop.f32.mrf.mxu0
        %v594 = vadd.f32 %v398, %v593
        %v595 = vpop.f32.mrf.mxu0
        %596 = vmatprep.mubr.f32.mxu0 0.0
        %597 = vmatmul.mubr.f32.gmra.mxu0 %v423
        %v598 = vpop.f32.mrf.mxu0
        %v599 = vadd.f32 %v398, %v598
        %v600 = vpop.f32.mrf.mxu0
        %601 = vmatprep.mubr.f32.mxu0 0.0
        %602 = vmatmul.mubr.f32.gmra.mxu0 %v426
        %v603 = vpop.f32.mrf.mxu0
        %v604 = vadd.f32 %v398, %v603
        %v605 = vpop.f32.mrf.mxu0
        %606 = vmatprep.mubr.f32.mxu0 0.0
        %607 = vmatmul.mubr.f32.gmra.mxu0 %v429
        %v608 = vpop.f32.mrf.mxu0
        %v609 = vadd.f32 %v398, %v608
        %v610 = vpop.f32.mrf.mxu0
        %611 = vmatprep.mubr.f32.mxu0 0.0
        %612 = vmatmul.mubr.f32.gmra.mxu0 %v432
        %v613 = vpop.f32.mrf.mxu0
        %v614 = vadd.f32 %v398, %v613
        %v615 = vpop.f32.mrf.mxu0
        %616 = vmatprep.mubr.f32.mxu0 0.0
        %617 = vmatmul.mubr.f32.gmra.mxu0 %v435
        %v618 = vpop.f32.mrf.mxu0
        %v619 = vadd.f32 %v398, %v618
        %v620 = vpop.f32.mrf.mxu0
        %621 = vmatprep.mubr.f32.mxu0 0.0
        %622 = vmatmul.mubr.f32.gmra.mxu0 %v438
        %v623 = vpop.f32.mrf.mxu0
        %v624 = vadd.f32 %v398, %v623
        %v625 = vpop.f32.mrf.mxu0
        %626 = vmatprep.mubr.f32.mxu0 0.0
        %627 = vmatmul.mubr.f32.gmra.mxu0 %v441
        %v628 = vpop.f32.mrf.mxu0
        %v629 = vadd.f32 %v398, %v628
        %v630 = vpop.f32.mrf.mxu0
        %631 = vmatprep.mubr.f32.mxu0 0.0
        %632 = vmatmul.mubr.f32.gmra.mxu0 %v444
        %v633 = vpop.f32.mrf.mxu0
        %v634 = vadd.f32 %v398, %v633
        %v635 = vpop.f32.mrf.mxu0
        %636 = vmatprep.mubr.f32.mxu0 0.0
        %637 = vmatmul.mubr.f32.gmra.mxu0 %v447
        %v638 = vpop.f32.mrf.mxu0
        %v639 = vadd.f32 %v398, %v638
        %v640 = vpop.f32.mrf.mxu0
        %641 = vmatprep.mubr.f32.mxu0 0.0
        %642 = vmatmul.mubr.f32.gmra.mxu0 %v450
        %v643 = vpop.f32.mrf.mxu0
        %v644 = vadd.f32 %v398, %v643
        %v645 = vpop.f32.mrf.mxu0
        %646 = vmatprep.mubr.f32.mxu0 0.0
        %647 = vmatmul.mubr.f32.gmra.mxu0 %v453
        %v648 = vpop.f32.mrf.mxu0
        %v649 = vadd.f32 %v398, %v648
        %v650 = vpop.f32.mrf.mxu0
        %651 = vmatprep.mubr.f32.mxu0 0.0
        %652 = vmatmul.mubr.f32.gmra.mxu0 %v456
        %v653 = vpop.f32.mrf.mxu0
        %v654 = vadd.f32 %v398, %v653
        %v655 = vpop.f32.mrf.mxu0
        %656 = vmatprep.mubr.f32.mxu0 0.0
        %657 = vmatmul.mubr.f32.gmra.mxu0 %v459
        %v658 = vpop.f32.mrf.mxu0
        %v659 = vadd.f32 %v398, %v658
        %v660 = vpop.f32.mrf.mxu0
        %661 = vmatprep.mubr.f32.mxu0 0.0
        %662 = vmatmul.mubr.f32.gmra.mxu0 %v462
        %v663 = vpop.f32.mrf.mxu0
        %v664 = vadd.f32 %v398, %v663
        %v665 = vpop.f32.mrf.mxu0
        %666 = vmatprep.mubr.f32.mxu0 0.0
        %667 = vmatmul.mubr.f32.gmra.mxu0 %v465
        %v668 = vpop.f32.mrf.mxu0
        %v669 = vadd.f32 %v398, %v668
        %v670 = vpop.f32.mrf.mxu0
        %671 = vmatprep.mubr.f32.mxu0 0.0
        %672 = vmatmul.mubr.f32.gmra.mxu0 %v468
        %v673 = vpop.f32.mrf.mxu0
        %v674 = vadd.f32 %v398, %v673
        %v675 = vpop.f32.mrf.mxu0
        %676 = vmatprep.mubr.f32.mxu0 0.0
        %677 = vmatmul.mubr.f32.gmra.mxu0 %v471
        %v678 = vpop.f32.mrf.mxu0
        %v679 = vadd.f32 %v398, %v678
        %v680 = vpop.f32.mrf.mxu0
        %681 = vmatprep.mubr.f32.mxu0 0.0
        %682 = vmatmul.mubr.f32.gmra.mxu0 %v474
        %v683 = vpop.f32.mrf.mxu0
        %v684 = vadd.f32 %v398, %v683
        %v685 = vpop.f32.mrf.mxu0
        %686 = vmatprep.mubr.f32.mxu0 0.0
        %687 = vmatmul.mubr.f32.gmra.mxu0 %v477
        %v688 = vpop.f32.mrf.mxu0
        %v689 = vadd.f32 %v398, %v688
        %v690 = vpop.f32.mrf.mxu0
        %691 = vmatprep.mubr.f32.mxu0 0.0
        %692 = vmatmul.mubr.f32.gmra.mxu0 %v480
        %v693 = vpop.f32.mrf.mxu0
        %v694 = vadd.f32 %v398, %v693
        %v695 = vpop.f32.mrf.mxu0
        %696 = vmatprep.mubr.f32.mxu0 0.0
        %697 = vmatmul.mubr.f32.gmra.mxu0 %v483
        %v698 = vpop.f32.mrf.mxu0
        %v699 = vadd.f32 %v398, %v698
        %v700 = vpop.f32.mrf.mxu0
        %701 = vmatprep.mubr.f32.mxu0 0.0
        %702 = vmatmul.mubr.f32.gmra.mxu0 %v486
        %v703 = vpop.f32.mrf.mxu0
        %v704 = vadd.f32 %v398, %v703
        %v705 = vpop.f32.mrf.mxu0
        %706 = vmatprep.mubr.f32.mxu0 0.0
        %707 = vmatmul.mubr.f32.gmra.mxu0 %v489
        %v708 = vpop.f32.mrf.mxu0
        %v709 = vadd.f32 %v398, %v708
        %v710 = vpop.f32.mrf.mxu0
        %711 = vmatprep.mubr.f32.mxu0 0.0
        %712 = vmatmul.mubr.f32.gmra.mxu0 %v492
        %v713 = vpop.f32.mrf.mxu0
        %v714 = vadd.f32 %v398, %v713
        %v715 = vpop.f32.mrf.mxu0
        %716 = vmatprep.mubr.f32.mxu0 0.0
        %717 = vmatmul.mubr.f32.gmra.mxu0 %v495
        %v718 = vpop.f32.mrf.mxu0
        %v719 = vadd.f32 %v398, %v718
        %v720 = vpop.f32.mrf.mxu0
        %721 = vdwg.mxu0
        %v722 = vtanh.pop %v564
        %v723 = vtanh.pop %v569
        %v724 = vtanh.pop %v574
        %v725 = vtanh.pop %v579
        %v726 = vtanh.pop %v584
        %v727 = vtanh.pop %v589
        %v728 = vtanh.pop %v594
        %v729 = vtanh.pop %v599
        %v730 = vtanh.pop %v604
        %v731 = vtanh.pop %v609
        %v732 = vtanh.pop %v614
        %v733 = vtanh.pop %v619
        %v734 = vtanh.pop %v624
        %v735 = vtanh.pop %v629
        %v736 = vtanh.pop %v634
        %v737 = vtanh.pop %v639
        %v738 = vtanh.pop %v644
        %v739 = vtanh.pop %v649
        %v740 = vtanh.pop %v654
        %v741 = vtanh.pop %v659
        %v742 = vtanh.pop %v664
        %v743 = vtanh.pop %v669
        %v744 = vtanh.pop %v674
        %v745 = vtanh.pop %v679
        %v746 = vtanh.pop %v684
        %v747 = vtanh.pop %v689
        %v748 = vtanh.pop %v694
        %v749 = vtanh.pop %v699
        %v750 = vtanh.pop %v704
        %v751 = vtanh.pop %v709
        %v752 = vtanh.pop %v714
        %v753 = vtanh.pop %v719
        %vm754 = vcmp.ge.f32.partialorder %v564, 0.0
        %vm755 = vcmp.ge.f32.partialorder %v569, 0.0
        %vm756 = vcmp.ge.f32.partialorder %v574, 0.0
        %vm757 = vcmp.ge.f32.partialorder %v579, 0.0
        %vm758 = vcmp.ge.f32.partialorder %v584, 0.0
        %vm759 = vcmp.ge.f32.partialorder %v589, 0.0
        %vm760 = vcmp.ge.f32.partialorder %v594, 0.0
        %vm761 = vcmp.ge.f32.partialorder %v599, 0.0
        %vm762 = vcmp.ge.f32.partialorder %v604, 0.0
        %vm763 = vcmp.ge.f32.partialorder %v609, 0.0
        %vm764 = vcmp.ge.f32.partialorder %v614, 0.0
        %vm765 = vcmp.ge.f32.partialorder %v619, 0.0
        %vm766 = vcmp.ge.f32.partialorder %v624, 0.0
        %vm767 = vcmp.ge.f32.partialorder %v629, 0.0
        %vm768 = vcmp.ge.f32.partialorder %v634, 0.0
        %vm769 = vcmp.ge.f32.partialorder %v639, 0.0
        %vm770 = vcmp.ge.f32.partialorder %v644, 0.0
        %vm771 = vcmp.ge.f32.partialorder %v649, 0.0
        %vm772 = vcmp.ge.f32.partialorder %v654, 0.0
        %vm773 = vcmp.ge.f32.partialorder %v659, 0.0
        %vm774 = vcmp.ge.f32.partialorder %v664, 0.0
        %vm775 = vcmp.ge.f32.partialorder %v669, 0.0
        %vm776 = vcmp.ge.f32.partialorder %v674, 0.0
        %vm777 = vcmp.ge.f32.partialorder %v679, 0.0
        %vm778 = vcmp.ge.f32.partialorder %v684, 0.0
        %vm779 = vcmp.ge.f32.partialorder %v689, 0.0
        %vm780 = vcmp.ge.f32.partialorder %v694, 0.0
        %vm781 = vcmp.ge.f32.partialorder %v699, 0.0
        %vm782 = vcmp.ge.f32.partialorder %v704, 0.0
        %vm783 = vcmp.ge.f32.partialorder %v709, 0.0
        %vm784 = vcmp.ge.f32.partialorder %v714, 0.0
        %vm785 = vcmp.ge.f32.partialorder %v719, 0.0
        %v786 = vmul.f32 %v564, 0.01
        %v787 = vmul.f32 %v569, 0.01
        %v788 = vmul.f32 %v574, 0.01
        %v789 = vmul.f32 %v579, 0.01
        %v790 = vmul.f32 %v584, 0.01
        %v791 = vmul.f32 %v589, 0.01
        %v792 = vmul.f32 %v594, 0.01
        %v793 = vmul.f32 %v599, 0.01
        %v794 = vmul.f32 %v604, 0.01
        %v795 = vmul.f32 %v609, 0.01
        %v796 = vmul.f32 %v614, 0.01
        %v797 = vmul.f32 %v619, 0.01
        %v798 = vmul.f32 %v624, 0.01
        %v799 = vmul.f32 %v629, 0.01
        %v800 = vmul.f32 %v634, 0.01
        %v801 = vmul.f32 %v639, 0.01
        %v802 = vmul.f32 %v644, 0.01
        %v803 = vmul.f32 %v649, 0.01
        %v804 = vmul.f32 %v654, 0.01
        %v805 = vmul.f32 %v659, 0.01
        %v806 = vmul.f32 %v664, 0.01
        %v807 = vmul.f32 %v669, 0.01
        %v808 = vmul.f32 %v674, 0.01
        %v809 = vmul.f32 %v679, 0.01
        %v810 = vmul.f32 %v684, 0.01
        %v811 = vmul.f32 %v689, 0.01
        %v812 = vmul.f32 %v694, 0.01
        %v813 = vmul.f32 %v699, 0.01
        %v814 = vmul.f32 %v704, 0.01
        %v815 = vmul.f32 %v709, 0.01
        %v816 = vmul.f32 %v714, 0.01
        %v817 = vmul.f32 %v719, 0.01
        %v818 = vsel %vm754, %v564, %v786
        %v819 = vsel %vm755, %v569, %v787
        %v820 = vsel %vm756, %v574, %v788
        %v821 = vsel %vm757, %v579, %v789
        %v822 = vsel %vm758, %v584, %v790
        %v823 = vsel %vm759, %v589, %v791
        %v824 = vsel %vm760, %v594, %v792
        %v825 = vsel %vm761, %v599, %v793
        %v826 = vsel %vm762, %v604, %v794
        %v827 = vsel %vm763, %v609, %v795
        %v828 = vsel %vm764, %v614, %v796
        %v829 = vsel %vm765, %v619, %v797
        %v830 = vsel %vm766, %v624, %v798
        %v831 = vsel %vm767, %v629, %v799
        %v832 = vsel %vm768, %v634, %v800
        %v833 = vsel %vm769, %v639, %v801
        %v834 = vsel %vm770, %v644, %v802
        %v835 = vsel %vm771, %v649, %v803
        %v836 = vsel %vm772, %v654, %v804
        %v837 = vsel %vm773, %v659, %v805
        %v838 = vsel %vm774, %v664, %v806
        %v839 = vsel %vm775, %v669, %v807
        %v840 = vsel %vm776, %v674, %v808
        %v841 = vsel %vm777, %v679, %v809
        %v842 = vsel %vm778, %v684, %v810
        %v843 = vsel %vm779, %v689, %v811
        %v844 = vsel %vm780, %v694, %v812
        %v845 = vsel %vm781, %v699, %v813
        %v846 = vsel %vm782, %v704, %v814
        %v847 = vsel %vm783, %v709, %v815
        %v848 = vsel %vm784, %v714, %v816
        %v849 = vsel %vm785, %v719, %v817
        %882 = vrot.lane.b32.xlu0 %v818, 96
        %v883 = vpop.permute.xlu0 %882
        %884 = vrot.lane.b32.xlu0 %v819, 96
        %v885 = vpop.permute.xlu0 %884
        %886 = vrot.lane.b32.xlu0 %v820, 96
        %v887 = vpop.permute.xlu0 %886
        %888 = vrot.lane.b32.xlu0 %v821, 96
        %v889 = vpop.permute.xlu0 %888
        %890 = vrot.lane.b32.xlu0 %v822, 96
        %v891 = vpop.permute.xlu0 %890
        %892 = vrot.lane.b32.xlu0 %v823, 96
        %v893 = vpop.permute.xlu0 %892
        %894 = vrot.lane.b32.xlu0 %v824, 96
        %v895 = vpop.permute.xlu0 %894
        %896 = vrot.lane.b32.xlu0 %v825, 96
        %v897 = vpop.permute.xlu0 %896
        %898 = vrot.lane.b32.xlu0 %v826, 96
        %v899 = vpop.permute.xlu0 %898
        %900 = vrot.lane.b32.xlu0 %v827, 96
        %v901 = vpop.permute.xlu0 %900
        %902 = vrot.lane.b32.xlu0 %v828, 96
        %v903 = vpop.permute.xlu0 %902
        %904 = vrot.lane.b32.xlu0 %v829, 96
        %v905 = vpop.permute.xlu0 %904
        %906 = vrot.lane.b32.xlu0 %v830, 96
        %v907 = vpop.permute.xlu0 %906
        %908 = vrot.lane.b32.xlu0 %v831, 96
        %v909 = vpop.permute.xlu0 %908
        %910 = vrot.lane.b32.xlu0 %v832, 96
        %v911 = vpop.permute.xlu0 %910
        %912 = vrot.lane.b32.xlu0 %v833, 96
        %v913 = vpop.permute.xlu0 %912
        %914 = vrot.lane.b32.xlu0 %v834, 96
        %v915 = vpop.permute.xlu0 %914
        %916 = vrot.lane.b32.xlu0 %v835, 96
        %v917 = vpop.permute.xlu0 %916
        %918 = vrot.lane.b32.xlu0 %v836, 96
        %v919 = vpop.permute.xlu0 %918
        %920 = vrot.lane.b32.xlu0 %v837, 96
        %v921 = vpop.permute.xlu0 %920
        %922 = vrot.lane.b32.xlu0 %v838, 96
        %v923 = vpop.permute.xlu0 %922
        %924 = vrot.lane.b32.xlu0 %v839, 96
        %v925 = vpop.permute.xlu0 %924
        %926 = vrot.lane.b32.xlu0 %v840, 96
        %v927 = vpop.permute.xlu0 %926
        %928 = vrot.lane.b32.xlu0 %v841, 96
        %v929 = vpop.permute.xlu0 %928
        %930 = vrot.lane.b32.xlu0 %v842, 96
        %v931 = vpop.permute.xlu0 %930
        %932 = vrot.lane.b32.xlu0 %v843, 96
        %v933 = vpop.permute.xlu0 %932
        %934 = vrot.lane.b32.xlu0 %v844, 96
        %v935 = vpop.permute.xlu0 %934
        %936 = vrot.lane.b32.xlu0 %v845, 96
        %v937 = vpop.permute.xlu0 %936
        %938 = vrot.lane.b32.xlu0 %v846, 96
        %v939 = vpop.permute.xlu0 %938
        %940 = vrot.lane.b32.xlu0 %v847, 96
        %v941 = vpop.permute.xlu0 %940
        %942 = vrot.lane.b32.xlu0 %v848, 96
        %v943 = vpop.permute.xlu0 %942
        %944 = vrot.lane.b32.xlu0 %v849, 96
        %v945 = vpop.permute.xlu0 %944
        %v978 = vmul.f32 %v722, %v883
        %v979 = vmul.f32 %v723, %v885
        %v980 = vmul.f32 %v724, %v887
        %v981 = vmul.f32 %v725, %v889
        %v982 = vmul.f32 %v726, %v891
        %v983 = vmul.f32 %v727, %v893
        %v984 = vmul.f32 %v728, %v895
        %v985 = vmul.f32 %v729, %v897
        %v986 = vmul.f32 %v730, %v899
        %v987 = vmul.f32 %v731, %v901
        %v988 = vmul.f32 %v732, %v903
        %v989 = vmul.f32 %v733, %v905
        %v990 = vmul.f32 %v734, %v907
        %v991 = vmul.f32 %v735, %v909
        %v992 = vmul.f32 %v736, %v911
        %v993 = vmul.f32 %v737, %v913
        %v994 = vmul.f32 %v738, %v915
        %v995 = vmul.f32 %v739, %v917
        %v996 = vmul.f32 %v740, %v919
        %v997 = vmul.f32 %v741, %v921
        %v998 = vmul.f32 %v742, %v923
        %v999 = vmul.f32 %v743, %v925
        %v1000 = vmul.f32 %v744, %v927
        %v1001 = vmul.f32 %v745, %v929
        %v1002 = vmul.f32 %v746, %v931
        %v1003 = vmul.f32 %v747, %v933
        %v1004 = vmul.f32 %v748, %v935
        %v1005 = vmul.f32 %v749, %v937
        %v1006 = vmul.f32 %v750, %v939
        %v1007 = vmul.f32 %v751, %v941
        %v1008 = vmul.f32 %v752, %v943
        %v1009 = vmul.f32 %v753, %v945
        %v1010 = vld [vmem:[%s4] sm:$0xff]
        %v1011 = vld [vmem:[%s4 + $0x8] sm:$0xff]
        %v1012 = vld [vmem:[%s4 + $0x10] sm:$0xff]
        %v1013 = vld [vmem:[%s4 + $0x18] sm:$0xff]
        %v1014 = vld [vmem:[%s4 + $0x20] sm:$0xff]
        %v1015 = vld [vmem:[%s4 + $0x28] sm:$0xff]
        %v1016 = vld [vmem:[%s4 + $0x30] sm:$0xff]
        %v1017 = vld [vmem:[%s4 + $0x38] sm:$0xff]
        %v1018 = vld [vmem:[%s5] sm:$0x1]
        %v1020 = vlaneseq
        %v1021 = vshrl.u32 %v1020, 7
        %v1022 = vsub.s32 0, %v1021
        %v1023 = vrot.slane %v1018, %v1022
        %v1026 = vsel %vm400, %v353, 0
        %v1029 = vsel %vm400, %v354, 0
        %v1032 = vsel %vm400, %v355, 0
        %v1035 = vsel %vm400, %v356, 0
        %v1038 = vsel %vm400, %v357, 0
        %v1041 = vsel %vm400, %v358, 0
        %v1044 = vsel %vm400, %v359, 0
        %v1047 = vsel %vm400, %v360, 0
        %v1050 = vsel %vm400, %v361, 0
        %v1053 = vsel %vm400, %v362, 0
        %v1056 = vsel %vm400, %v363, 0
        %v1059 = vsel %vm400, %v364, 0
        %v1062 = vsel %vm400, %v365, 0
        %v1065 = vsel %vm400, %v366, 0
        %v1068 = vsel %vm400, %v367, 0
        %v1071 = vsel %vm400, %v368, 0
        %v1074 = vsel %vm400, %v369, 0
        %v1077 = vsel %vm400, %v370, 0
        %v1080 = vsel %vm400, %v371, 0
        %v1083 = vsel %vm400, %v372, 0
        %v1086 = vsel %vm400, %v373, 0
        %v1089 = vsel %vm400, %v374, 0
        %v1092 = vsel %vm400, %v375, 0
        %v1095 = vsel %vm400, %v376, 0
        %v1098 = vsel %vm400, %v377, 0
        %v1101 = vsel %vm400, %v378, 0
        %v1104 = vsel %vm400, %v379, 0
        %v1107 = vsel %vm400, %v380, 0
        %v1110 = vsel %vm400, %v381, 0
        %v1113 = vsel %vm400, %v382, 0
        %v1116 = vsel %vm400, %v383, 0
        %v1119 = vsel %vm400, %v384, 0
        %1121 = vmatprep.subr.mxu0 0.0
        %1122 = vmatpush1.msra.mxu0 0.0
        %1123 = vmatprep.subr.mxu0 0.0
        %1124 = vmatpush1.msra.mxu0 0.0
        %1125 = vmatprep.subr.mxu0 0.0
        %1126 = vmatpush1.msra.mxu0 0.0
        %1127 = vmatprep.subr.mxu0 0.0
        %1128 = vmatpush1.msra.mxu0 0.0
        %1129 = vmatprep.subr.mxu0 0.0
        %1130 = vmatpush1.msra.mxu0 0.0
        %1131 = vmatprep.subr.mxu0 0.0
        %1132 = vmatpush1.msra.mxu0 0.0
        %1133 = vmatprep.subr.mxu0 0.0
        %1134 = vmatpush1.msra.mxu0 0.0
        %1135 = vmatprep.subr.mxu0 0.0
        %1136 = vmatpush1.msra.mxu0 0.0
        %1137 = vmatprep.subr.mxu0 0.0
        %1138 = vmatpush1.msra.mxu0 %v1017
        %1139 = vmatprep.subr.mxu0 0.0
        %1140 = vmatpush1.msra.mxu0 %v1016
        %1141 = vmatprep.subr.mxu0 0.0
        %1142 = vmatpush1.msra.mxu0 %v1015
        %1143 = vmatprep.subr.mxu0 0.0
        %1144 = vmatpush1.msra.mxu0 %v1014
        %1145 = vmatprep.subr.mxu0 0.0
        %1146 = vmatpush1.msra.mxu0 %v1013
        %1147 = vmatprep.subr.mxu0 0.0
        %1148 = vmatpush1.msra.mxu0 %v1012
        %1149 = vmatprep.subr.mxu0 0.0
        %1150 = vmatpush1.msra.mxu0 %v1011
        %1151 = vmatprep.subr.mxu0 0.0
        %1152 = vmatpush1.msra.mxu0 %v1010
        %1153 = vmatprep.subr.mxu0 0.0
        %1154 = vmatpush2.msra.mxu0 0.0
        %1155 = vmatprep.subr.mxu0 0.0
        %1156 = vmatpush2.msra.mxu0 0.0
        %1157 = vmatprep.subr.mxu0 0.0
        %1158 = vmatpush2.msra.mxu0 0.0
        %1159 = vmatprep.subr.mxu0 0.0
        %1160 = vmatpush2.msra.mxu0 0.0
        %1161 = vmatprep.subr.mxu0 0.0
        %1162 = vmatpush2.msra.mxu0 0.0
        %1163 = vmatprep.subr.mxu0 0.0
        %1164 = vmatpush2.msra.mxu0 0.0
        %1165 = vmatprep.subr.mxu0 0.0
        %1166 = vmatpush2.msra.mxu0 0.0
        %1167 = vmatprep.subr.mxu0 0.0
        %1168 = vmatpush2.msra.mxu0 0.0
        %1169 = vmatprep.subr.mxu0 0.0
        %1170 = vmatpush2.msra.mxu0 0.0
        %1171 = vmatprep.subr.mxu0 0.0
        %1172 = vmatpush2.msra.mxu0 0.0
        %1173 = vmatprep.subr.mxu0 0.0
        %1174 = vmatpush2.msra.mxu0 0.0
        %1175 = vmatprep.subr.mxu0 0.0
        %1176 = vmatpush2.msra.mxu0 0.0
        %1177 = vmatprep.subr.mxu0 0.0
        %1178 = vmatpush2.msra.mxu0 0.0
        %1179 = vmatprep.subr.mxu0 0.0
        %1180 = vmatpush2.msra.mxu0 0.0
        %1181 = vmatprep.subr.mxu0 0.0
        %1182 = vmatpush2.msra.mxu0 0.0
        %1183 = vmatprep.subr.mxu0 0.0
        %1184 = vmatpush2.msra.mxu0 0.0
        %1185 = vmatprep.mubr.f32.mxu0 0.0
        %1186 = vmatmul.mubr.f32.gmra.mxu0 %v1026
        %v1187 = vpop.f32.mrf.mxu0
        %v1188 = vadd.f32 %v1023, %v1187
        %v1189 = vpop.f32.mrf.mxu0
        %1190 = vmatprep.mubr.f32.mxu0 0.0
        %1191 = vmatmul.mubr.f32.gmra.mxu0 %v1029
        %v1192 = vpop.f32.mrf.mxu0
        %v1193 = vadd.f32 %v1023, %v1192
        %v1194 = vpop.f32.mrf.mxu0
        %1195 = vmatprep.mubr.f32.mxu0 0.0
        %1196 = vmatmul.mubr.f32.gmra.mxu0 %v1032
        %v1197 = vpop.f32.mrf.mxu0
        %v1198 = vadd.f32 %v1023, %v1197
        %v1199 = vpop.f32.mrf.mxu0
        %1200 = vmatprep.mubr.f32.mxu0 0.0
        %1201 = vmatmul.mubr.f32.gmra.mxu0 %v1035
        %v1202 = vpop.f32.mrf.mxu0
        %v1203 = vadd.f32 %v1023, %v1202
        %v1204 = vpop.f32.mrf.mxu0
        %1205 = vmatprep.mubr.f32.mxu0 0.0
        %1206 = vmatmul.mubr.f32.gmra.mxu0 %v1038
        %v1207 = vpop.f32.mrf.mxu0
        %v1208 = vadd.f32 %v1023, %v1207
        %v1209 = vpop.f32.mrf.mxu0
        %1210 = vmatprep.mubr.f32.mxu0 0.0
        %1211 = vmatmul.mubr.f32.gmra.mxu0 %v1041
        %v1212 = vpop.f32.mrf.mxu0
        %v1213 = vadd.f32 %v1023, %v1212
        %v1214 = vpop.f32.mrf.mxu0
        %1215 = vmatprep.mubr.f32.mxu0 0.0
        %1216 = vmatmul.mubr.f32.gmra.mxu0 %v1044
        %v1217 = vpop.f32.mrf.mxu0
        %v1218 = vadd.f32 %v1023, %v1217
        %v1219 = vpop.f32.mrf.mxu0
        %1220 = vmatprep.mubr.f32.mxu0 0.0
        %1221 = vmatmul.mubr.f32.gmra.mxu0 %v1047
        %v1222 = vpop.f32.mrf.mxu0
        %v1223 = vadd.f32 %v1023, %v1222
        %v1224 = vpop.f32.mrf.mxu0
        %1225 = vmatprep.mubr.f32.mxu0 0.0
        %1226 = vmatmul.mubr.f32.gmra.mxu0 %v1050
        %v1227 = vpop.f32.mrf.mxu0
        %v1228 = vadd.f32 %v1023, %v1227
        %v1229 = vpop.f32.mrf.mxu0
        %1230 = vmatprep.mubr.f32.mxu0 0.0
        %1231 = vmatmul.mubr.f32.gmra.mxu0 %v1053
        %v1232 = vpop.f32.mrf.mxu0
        %v1233 = vadd.f32 %v1023, %v1232
        %v1234 = vpop.f32.mrf.mxu0
        %1235 = vmatprep.mubr.f32.mxu0 0.0
        %1236 = vmatmul.mubr.f32.gmra.mxu0 %v1056
        %v1237 = vpop.f32.mrf.mxu0
        %v1238 = vadd.f32 %v1023, %v1237
        %v1239 = vpop.f32.mrf.mxu0
        %1240 = vmatprep.mubr.f32.mxu0 0.0
        %1241 = vmatmul.mubr.f32.gmra.mxu0 %v1059
        %v1242 = vpop.f32.mrf.mxu0
        %v1243 = vadd.f32 %v1023, %v1242
        %v1244 = vpop.f32.mrf.mxu0
        %1245 = vmatprep.mubr.f32.mxu0 0.0
        %1246 = vmatmul.mubr.f32.gmra.mxu0 %v1062
        %v1247 = vpop.f32.mrf.mxu0
        %v1248 = vadd.f32 %v1023, %v1247
        %v1249 = vpop.f32.mrf.mxu0
        %1250 = vmatprep.mubr.f32.mxu0 0.0
        %1251 = vmatmul.mubr.f32.gmra.mxu0 %v1065
        %v1252 = vpop.f32.mrf.mxu0
        %v1253 = vadd.f32 %v1023, %v1252
        %v1254 = vpop.f32.mrf.mxu0
        %1255 = vmatprep.mubr.f32.mxu0 0.0
        %1256 = vmatmul.mubr.f32.gmra.mxu0 %v1068
        %v1257 = vpop.f32.mrf.mxu0
        %v1258 = vadd.f32 %v1023, %v1257
        %v1259 = vpop.f32.mrf.mxu0
        %1260 = vmatprep.mubr.f32.mxu0 0.0
        %1261 = vmatmul.mubr.f32.gmra.mxu0 %v1071
        %v1262 = vpop.f32.mrf.mxu0
        %v1263 = vadd.f32 %v1023, %v1262
        %v1264 = vpop.f32.mrf.mxu0
        %1265 = vmatprep.mubr.f32.mxu0 0.0
        %1266 = vmatmul.mubr.f32.gmra.mxu0 %v1074
        %v1267 = vpop.f32.mrf.mxu0
        %v1268 = vadd.f32 %v1023, %v1267
        %v1269 = vpop.f32.mrf.mxu0
        %1270 = vmatprep.mubr.f32.mxu0 0.0
        %1271 = vmatmul.mubr.f32.gmra.mxu0 %v1077
        %v1272 = vpop.f32.mrf.mxu0
        %v1273 = vadd.f32 %v1023, %v1272
        %v1274 = vpop.f32.mrf.mxu0
        %1275 = vmatprep.mubr.f32.mxu0 0.0
        %1276 = vmatmul.mubr.f32.gmra.mxu0 %v1080
        %v1277 = vpop.f32.mrf.mxu0
        %v1278 = vadd.f32 %v1023, %v1277
        %v1279 = vpop.f32.mrf.mxu0
        %1280 = vmatprep.mubr.f32.mxu0 0.0
        %1281 = vmatmul.mubr.f32.gmra.mxu0 %v1083
        %v1282 = vpop.f32.mrf.mxu0
        %v1283 = vadd.f32 %v1023, %v1282
        %v1284 = vpop.f32.mrf.mxu0
        %1285 = vmatprep.mubr.f32.mxu0 0.0
        %1286 = vmatmul.mubr.f32.gmra.mxu0 %v1086
        %v1287 = vpop.f32.mrf.mxu0
        %v1288 = vadd.f32 %v1023, %v1287
        %v1289 = vpop.f32.mrf.mxu0
        %1290 = vmatprep.mubr.f32.mxu0 0.0
        %1291 = vmatmul.mubr.f32.gmra.mxu0 %v1089
        %v1292 = vpop.f32.mrf.mxu0
        %v1293 = vadd.f32 %v1023, %v1292
        %v1294 = vpop.f32.mrf.mxu0
        %1295 = vmatprep.mubr.f32.mxu0 0.0
        %1296 = vmatmul.mubr.f32.gmra.mxu0 %v1092
        %v1297 = vpop.f32.mrf.mxu0
        %v1298 = vadd.f32 %v1023, %v1297
        %v1299 = vpop.f32.mrf.mxu0
        %1300 = vmatprep.mubr.f32.mxu0 0.0
        %1301 = vmatmul.mubr.f32.gmra.mxu0 %v1095
        %v1302 = vpop.f32.mrf.mxu0
        %v1303 = vadd.f32 %v1023, %v1302
        %v1304 = vpop.f32.mrf.mxu0
        %1305 = vmatprep.mubr.f32.mxu0 0.0
        %1306 = vmatmul.mubr.f32.gmra.mxu0 %v1098
        %v1307 = vpop.f32.mrf.mxu0
        %v1308 = vadd.f32 %v1023, %v1307
        %v1309 = vpop.f32.mrf.mxu0
        %1310 = vmatprep.mubr.f32.mxu0 0.0
        %1311 = vmatmul.mubr.f32.gmra.mxu0 %v1101
        %v1312 = vpop.f32.mrf.mxu0
        %v1313 = vadd.f32 %v1023, %v1312
        %v1314 = vpop.f32.mrf.mxu0
        %1315 = vmatprep.mubr.f32.mxu0 0.0
        %1316 = vmatmul.mubr.f32.gmra.mxu0 %v1104
        %v1317 = vpop.f32.mrf.mxu0
        %v1318 = vadd.f32 %v1023, %v1317
        %v1319 = vpop.f32.mrf.mxu0
        %1320 = vmatprep.mubr.f32.mxu0 0.0
        %1321 = vmatmul.mubr.f32.gmra.mxu0 %v1107
        %v1322 = vpop.f32.mrf.mxu0
        %v1323 = vadd.f32 %v1023, %v1322
        %v1324 = vpop.f32.mrf.mxu0
        %1325 = vmatprep.mubr.f32.mxu0 0.0
        %1326 = vmatmul.mubr.f32.gmra.mxu0 %v1110
        %v1327 = vpop.f32.mrf.mxu0
        %v1328 = vadd.f32 %v1023, %v1327
        %v1329 = vpop.f32.mrf.mxu0
        %1330 = vmatprep.mubr.f32.mxu0 0.0
        %1331 = vmatmul.mubr.f32.gmra.mxu0 %v1113
        %v1332 = vpop.f32.mrf.mxu0
        %v1333 = vadd.f32 %v1023, %v1332
        %v1334 = vpop.f32.mrf.mxu0
        %1335 = vmatprep.mubr.f32.mxu0 0.0
        %1336 = vmatmul.mubr.f32.gmra.mxu0 %v1116
        %v1337 = vpop.f32.mrf.mxu0
        %v1338 = vadd.f32 %v1023, %v1337
        %v1339 = vpop.f32.mrf.mxu0
        %1340 = vmatprep.mubr.f32.mxu0 0.0
        %1341 = vmatmul.mubr.f32.gmra.mxu0 %v1119
        %v1342 = vpop.f32.mrf.mxu0
        %v1343 = vadd.f32 %v1023, %v1342
        %v1344 = vpop.f32.mrf.mxu0
        %1345 = vdwg.mxu0
        %v1346 = vtanh.pop %v1188
        %v1347 = vtanh.pop %v1193
        %v1348 = vtanh.pop %v1198
        %v1349 = vtanh.pop %v1203
        %v1350 = vtanh.pop %v1208
        %v1351 = vtanh.pop %v1213
        %v1352 = vtanh.pop %v1218
        %v1353 = vtanh.pop %v1223
        %v1354 = vtanh.pop %v1228
        %v1355 = vtanh.pop %v1233
        %v1356 = vtanh.pop %v1238
        %v1357 = vtanh.pop %v1243
        %v1358 = vtanh.pop %v1248
        %v1359 = vtanh.pop %v1253
        %v1360 = vtanh.pop %v1258
        %v1361 = vtanh.pop %v1263
        %v1362 = vtanh.pop %v1268
        %v1363 = vtanh.pop %v1273
        %v1364 = vtanh.pop %v1278
        %v1365 = vtanh.pop %v1283
        %v1366 = vtanh.pop %v1288
        %v1367 = vtanh.pop %v1293
        %v1368 = vtanh.pop %v1298
        %v1369 = vtanh.pop %v1303
        %v1370 = vtanh.pop %v1308
        %v1371 = vtanh.pop %v1313
        %v1372 = vtanh.pop %v1318
        %v1373 = vtanh.pop %v1323
        %v1374 = vtanh.pop %v1328
        %v1375 = vtanh.pop %v1333
        %v1376 = vtanh.pop %v1338
        %v1377 = vtanh.pop %v1343
        %vm1378 = vcmp.ge.f32.partialorder %v1188, 0.0
        %vm1379 = vcmp.ge.f32.partialorder %v1193, 0.0
        %vm1380 = vcmp.ge.f32.partialorder %v1198, 0.0
        %vm1381 = vcmp.ge.f32.partialorder %v1203, 0.0
        %vm1382 = vcmp.ge.f32.partialorder %v1208, 0.0
        %vm1383 = vcmp.ge.f32.partialorder %v1213, 0.0
        %vm1384 = vcmp.ge.f32.partialorder %v1218, 0.0
        %vm1385 = vcmp.ge.f32.partialorder %v1223, 0.0
        %vm1386 = vcmp.ge.f32.partialorder %v1228, 0.0
        %vm1387 = vcmp.ge.f32.partialorder %v1233, 0.0
        %vm1388 = vcmp.ge.f32.partialorder %v1238, 0.0
        %vm1389 = vcmp.ge.f32.partialorder %v1243, 0.0
        %vm1390 = vcmp.ge.f32.partialorder %v1248, 0.0
        %vm1391 = vcmp.ge.f32.partialorder %v1253, 0.0
        %vm1392 = vcmp.ge.f32.partialorder %v1258, 0.0
        %vm1393 = vcmp.ge.f32.partialorder %v1263, 0.0
        %vm1394 = vcmp.ge.f32.partialorder %v1268, 0.0
        %vm1395 = vcmp.ge.f32.partialorder %v1273, 0.0
        %vm1396 = vcmp.ge.f32.partialorder %v1278, 0.0
        %vm1397 = vcmp.ge.f32.partialorder %v1283, 0.0
        %vm1398 = vcmp.ge.f32.partialorder %v1288, 0.0
        %vm1399 = vcmp.ge.f32.partialorder %v1293, 0.0
        %vm1400 = vcmp.ge.f32.partialorder %v1298, 0.0
        %vm1401 = vcmp.ge.f32.partialorder %v1303, 0.0
        %vm1402 = vcmp.ge.f32.partialorder %v1308, 0.0
        %vm1403 = vcmp.ge.f32.partialorder %v1313, 0.0
        %vm1404 = vcmp.ge.f32.partialorder %v1318, 0.0
        %vm1405 = vcmp.ge.f32.partialorder %v1323, 0.0
        %vm1406 = vcmp.ge.f32.partialorder %v1328, 0.0
        %vm1407 = vcmp.ge.f32.partialorder %v1333, 0.0
        %vm1408 = vcmp.ge.f32.partialorder %v1338, 0.0
        %vm1409 = vcmp.ge.f32.partialorder %v1343, 0.0
        %v1410 = vmul.f32 %v1188, 0.01
        %v1411 = vmul.f32 %v1193, 0.01
        %v1412 = vmul.f32 %v1198, 0.01
        %v1413 = vmul.f32 %v1203, 0.01
        %v1414 = vmul.f32 %v1208, 0.01
        %v1415 = vmul.f32 %v1213, 0.01
        %v1416 = vmul.f32 %v1218, 0.01
        %v1417 = vmul.f32 %v1223, 0.01
        %v1418 = vmul.f32 %v1228, 0.01
        %v1419 = vmul.f32 %v1233, 0.01
        %v1420 = vmul.f32 %v1238, 0.01
        %v1421 = vmul.f32 %v1243, 0.01
        %v1422 = vmul.f32 %v1248, 0.01
        %v1423 = vmul.f32 %v1253, 0.01
        %v1424 = vmul.f32 %v1258, 0.01
        %v1425 = vmul.f32 %v1263, 0.01
        %v1426 = vmul.f32 %v1268, 0.01
        %v1427 = vmul.f32 %v1273, 0.01
        %v1428 = vmul.f32 %v1278, 0.01
        %v1429 = vmul.f32 %v1283, 0.01
        %v1430 = vmul.f32 %v1288, 0.01
        %v1431 = vmul.f32 %v1293, 0.01
        %v1432 = vmul.f32 %v1298, 0.01
        %v1433 = vmul.f32 %v1303, 0.01
        %v1434 = vmul.f32 %v1308, 0.01
        %v1435 = vmul.f32 %v1313, 0.01
        %v1436 = vmul.f32 %v1318, 0.01
        %v1437 = vmul.f32 %v1323, 0.01
        %v1438 = vmul.f32 %v1328, 0.01
        %v1439 = vmul.f32 %v1333, 0.01
        %v1440 = vmul.f32 %v1338, 0.01
        %v1441 = vmul.f32 %v1343, 0.01
        %v1442 = vsel %vm1378, %v1188, %v1410
        %v1443 = vsel %vm1379, %v1193, %v1411
        %v1444 = vsel %vm1380, %v1198, %v1412
        %v1445 = vsel %vm1381, %v1203, %v1413
        %v1446 = vsel %vm1382, %v1208, %v1414
        %v1447 = vsel %vm1383, %v1213, %v1415
        %v1448 = vsel %vm1384, %v1218, %v1416
        %v1449 = vsel %vm1385, %v1223, %v1417
        %v1450 = vsel %vm1386, %v1228, %v1418
        %v1451 = vsel %vm1387, %v1233, %v1419
        %v1452 = vsel %vm1388, %v1238, %v1420
        %v1453 = vsel %vm1389, %v1243, %v1421
        %v1454 = vsel %vm1390, %v1248, %v1422
        %v1455 = vsel %vm1391, %v1253, %v1423
        %v1456 = vsel %vm1392, %v1258, %v1424
        %v1457 = vsel %vm1393, %v1263, %v1425
        %v1458 = vsel %vm1394, %v1268, %v1426
        %v1459 = vsel %vm1395, %v1273, %v1427
        %v1460 = vsel %vm1396, %v1278, %v1428
        %v1461 = vsel %vm1397, %v1283, %v1429
        %v1462 = vsel %vm1398, %v1288, %v1430
        %v1463 = vsel %vm1399, %v1293, %v1431
        %v1464 = vsel %vm1400, %v1298, %v1432
        %v1465 = vsel %vm1401, %v1303, %v1433
        %v1466 = vsel %vm1402, %v1308, %v1434
        %v1467 = vsel %vm1403, %v1313, %v1435
        %v1468 = vsel %vm1404, %v1318, %v1436
        %v1469 = vsel %vm1405, %v1323, %v1437
        %v1470 = vsel %vm1406, %v1328, %v1438
        %v1471 = vsel %vm1407, %v1333, %v1439
        %v1472 = vsel %vm1408, %v1338, %v1440
        %v1473 = vsel %vm1409, %v1343, %v1441
        %1506 = vrot.lane.b32.xlu0 %v1442, 96
        %v1507 = vpop.permute.xlu0 %1506
        %1508 = vrot.lane.b32.xlu0 %v1443, 96
        %v1509 = vpop.permute.xlu0 %1508
        %1510 = vrot.lane.b32.xlu0 %v1444, 96
        %v1511 = vpop.permute.xlu0 %1510
        %1512 = vrot.lane.b32.xlu0 %v1445, 96
        %v1513 = vpop.permute.xlu0 %1512
        %1514 = vrot.lane.b32.xlu0 %v1446, 96
        %v1515 = vpop.permute.xlu0 %1514
        %1516 = vrot.lane.b32.xlu0 %v1447, 96
        %v1517 = vpop.permute.xlu0 %1516
        %1518 = vrot.lane.b32.xlu0 %v1448, 96
        %v1519 = vpop.permute.xlu0 %1518
        %1520 = vrot.lane.b32.xlu0 %v1449, 96
        %v1521 = vpop.permute.xlu0 %1520
        %1522 = vrot.lane.b32.xlu0 %v1450, 96
        %v1523 = vpop.permute.xlu0 %1522
        %1524 = vrot.lane.b32.xlu0 %v1451, 96
        %v1525 = vpop.permute.xlu0 %1524
        %1526 = vrot.lane.b32.xlu0 %v1452, 96
        %v1527 = vpop.permute.xlu0 %1526
        %1528 = vrot.lane.b32.xlu0 %v1453, 96
        %v1529 = vpop.permute.xlu0 %1528
        %1530 = vrot.lane.b32.xlu0 %v1454, 96
        %v1531 = vpop.permute.xlu0 %1530
        %1532 = vrot.lane.b32.xlu0 %v1455, 96
        %v1533 = vpop.permute.xlu0 %1532
        %1534 = vrot.lane.b32.xlu0 %v1456, 96
        %v1535 = vpop.permute.xlu0 %1534
        %1536 = vrot.lane.b32.xlu0 %v1457, 96
        %v1537 = vpop.permute.xlu0 %1536
        %1538 = vrot.lane.b32.xlu0 %v1458, 96
        %v1539 = vpop.permute.xlu0 %1538
        %1540 = vrot.lane.b32.xlu0 %v1459, 96
        %v1541 = vpop.permute.xlu0 %1540
        %1542 = vrot.lane.b32.xlu0 %v1460, 96
        %v1543 = vpop.permute.xlu0 %1542
        %1544 = vrot.lane.b32.xlu0 %v1461, 96
        %v1545 = vpop.permute.xlu0 %1544
        %1546 = vrot.lane.b32.xlu0 %v1462, 96
        %v1547 = vpop.permute.xlu0 %1546
        %1548 = vrot.lane.b32.xlu0 %v1463, 96
        %v1549 = vpop.permute.xlu0 %1548
        %1550 = vrot.lane.b32.xlu0 %v1464, 96
        %v1551 = vpop.permute.xlu0 %1550
        %1552 = vrot.lane.b32.xlu0 %v1465, 96
        %v1553 = vpop.permute.xlu0 %1552
        %1554 = vrot.lane.b32.xlu0 %v1466, 96
        %v1555 = vpop.permute.xlu0 %1554
        %1556 = vrot.lane.b32.xlu0 %v1467, 96
        %v1557 = vpop.permute.xlu0 %1556
        %1558 = vrot.lane.b32.xlu0 %v1468, 96
        %v1559 = vpop.permute.xlu0 %1558
        %1560 = vrot.lane.b32.xlu0 %v1469, 96
        %v1561 = vpop.permute.xlu0 %1560
        %1562 = vrot.lane.b32.xlu0 %v1470, 96
        %v1563 = vpop.permute.xlu0 %1562
        %1564 = vrot.lane.b32.xlu0 %v1471, 96
        %v1565 = vpop.permute.xlu0 %1564
        %1566 = vrot.lane.b32.xlu0 %v1472, 96
        %v1567 = vpop.permute.xlu0 %1566
        %1568 = vrot.lane.b32.xlu0 %v1473, 96
        %v1569 = vpop.permute.xlu0 %1568
        %v1602 = vmul.f32 %v1346, %v1507
        %v1603 = vmul.f32 %v1347, %v1509
        %v1604 = vmul.f32 %v1348, %v1511
        %v1605 = vmul.f32 %v1349, %v1513
        %v1606 = vmul.f32 %v1350, %v1515
        %v1607 = vmul.f32 %v1351, %v1517
        %v1608 = vmul.f32 %v1352, %v1519
        %v1609 = vmul.f32 %v1353, %v1521
        %v1610 = vmul.f32 %v1354, %v1523
        %v1611 = vmul.f32 %v1355, %v1525
        %v1612 = vmul.f32 %v1356, %v1527
        %v1613 = vmul.f32 %v1357, %v1529
        %v1614 = vmul.f32 %v1358, %v1531
        %v1615 = vmul.f32 %v1359, %v1533
        %v1616 = vmul.f32 %v1360, %v1535
        %v1617 = vmul.f32 %v1361, %v1537
        %v1618 = vmul.f32 %v1362, %v1539
        %v1619 = vmul.f32 %v1363, %v1541
        %v1620 = vmul.f32 %v1364, %v1543
        %v1621 = vmul.f32 %v1365, %v1545
        %v1622 = vmul.f32 %v1366, %v1547
        %v1623 = vmul.f32 %v1367, %v1549
        %v1624 = vmul.f32 %v1368, %v1551
        %v1625 = vmul.f32 %v1369, %v1553
        %v1626 = vmul.f32 %v1370, %v1555
        %v1627 = vmul.f32 %v1371, %v1557
        %v1628 = vmul.f32 %v1372, %v1559
        %v1629 = vmul.f32 %v1373, %v1561
        %v1630 = vmul.f32 %v1374, %v1563
        %v1631 = vmul.f32 %v1375, %v1565
        %v1632 = vmul.f32 %v1376, %v1567
        %v1633 = vmul.f32 %v1377, %v1569
        %v1634 = vld [vmem:[%s6] sm:$0x1]
        %v1636 = vlaneseq
        %v1637 = vshrl.u32 %v1636, 7
        %v1638 = vsub.s32 0, %v1637
        %v1639 = vrot.slane %v1634, %v1638
        %v1641 = vmul.f32 %v1602, %v1639
        %v1642 = vmul.f32 %v1603, %v1639
        %v1643 = vmul.f32 %v1604, %v1639
        %v1644 = vmul.f32 %v1605, %v1639
        %v1645 = vmul.f32 %v1606, %v1639
        %v1646 = vmul.f32 %v1607, %v1639
        %v1647 = vmul.f32 %v1608, %v1639
        %v1648 = vmul.f32 %v1609, %v1639
        %v1649 = vmul.f32 %v1610, %v1639
        %v1650 = vmul.f32 %v1611, %v1639
        %v1651 = vmul.f32 %v1612, %v1639
        %v1652 = vmul.f32 %v1613, %v1639
        %v1653 = vmul.f32 %v1614, %v1639
        %v1654 = vmul.f32 %v1615, %v1639
        %v1655 = vmul.f32 %v1616, %v1639
        %v1656 = vmul.f32 %v1617, %v1639
        %v1657 = vmul.f32 %v1618, %v1639
        %v1658 = vmul.f32 %v1619, %v1639
        %v1659 = vmul.f32 %v1620, %v1639
        %v1660 = vmul.f32 %v1621, %v1639
        %v1661 = vmul.f32 %v1622, %v1639
        %v1662 = vmul.f32 %v1623, %v1639
        %v1663 = vmul.f32 %v1624, %v1639
        %v1664 = vmul.f32 %v1625, %v1639
        %v1665 = vmul.f32 %v1626, %v1639
        %v1666 = vmul.f32 %v1627, %v1639
        %v1667 = vmul.f32 %v1628, %v1639
        %v1668 = vmul.f32 %v1629, %v1639
        %v1669 = vmul.f32 %v1630, %v1639
        %v1670 = vmul.f32 %v1631, %v1639
        %v1671 = vmul.f32 %v1632, %v1639
        %v1672 = vmul.f32 %v1633, %v1639
        %v1673 = vmul.f32 %v1602, %v1602
        %v1674 = vmul.f32 %v1603, %v1603
        %v1675 = vmul.f32 %v1604, %v1604
        %v1676 = vmul.f32 %v1605, %v1605
        %v1677 = vmul.f32 %v1606, %v1606
        %v1678 = vmul.f32 %v1607, %v1607
        %v1679 = vmul.f32 %v1608, %v1608
        %v1680 = vmul.f32 %v1609, %v1609
        %v1681 = vmul.f32 %v1610, %v1610
        %v1682 = vmul.f32 %v1611, %v1611
        %v1683 = vmul.f32 %v1612, %v1612
        %v1684 = vmul.f32 %v1613, %v1613
        %v1685 = vmul.f32 %v1614, %v1614
        %v1686 = vmul.f32 %v1615, %v1615
        %v1687 = vmul.f32 %v1616, %v1616
        %v1688 = vmul.f32 %v1617, %v1617
        %v1689 = vmul.f32 %v1618, %v1618
        %v1690 = vmul.f32 %v1619, %v1619
        %v1691 = vmul.f32 %v1620, %v1620
        %v1692 = vmul.f32 %v1621, %v1621
        %v1693 = vmul.f32 %v1622, %v1622
        %v1694 = vmul.f32 %v1623, %v1623
        %v1695 = vmul.f32 %v1624, %v1624
        %v1696 = vmul.f32 %v1625, %v1625
        %v1697 = vmul.f32 %v1626, %v1626
        %v1698 = vmul.f32 %v1627, %v1627
        %v1699 = vmul.f32 %v1628, %v1628
        %v1700 = vmul.f32 %v1629, %v1629
        %v1701 = vmul.f32 %v1630, %v1630
        %v1702 = vmul.f32 %v1631, %v1631
        %v1703 = vmul.f32 %v1632, %v1632
        %v1704 = vmul.f32 %v1633, %v1633
        %v1705 = vmul.f32 %v978, %v978
        %v1706 = vmul.f32 %v979, %v979
        %v1707 = vmul.f32 %v980, %v980
        %v1708 = vmul.f32 %v981, %v981
        %v1709 = vmul.f32 %v982, %v982
        %v1710 = vmul.f32 %v983, %v983
        %v1711 = vmul.f32 %v984, %v984
        %v1712 = vmul.f32 %v985, %v985
        %v1713 = vmul.f32 %v986, %v986
        %v1714 = vmul.f32 %v987, %v987
        %v1715 = vmul.f32 %v988, %v988
        %v1716 = vmul.f32 %v989, %v989
        %v1717 = vmul.f32 %v990, %v990
        %v1718 = vmul.f32 %v991, %v991
        %v1719 = vmul.f32 %v992, %v992
        %v1720 = vmul.f32 %v993, %v993
        %v1721 = vmul.f32 %v994, %v994
        %v1722 = vmul.f32 %v995, %v995
        %v1723 = vmul.f32 %v996, %v996
        %v1724 = vmul.f32 %v997, %v997
        %v1725 = vmul.f32 %v998, %v998
        %v1726 = vmul.f32 %v999, %v999
        %v1727 = vmul.f32 %v1000, %v1000
        %v1728 = vmul.f32 %v1001, %v1001
        %v1729 = vmul.f32 %v1002, %v1002
        %v1730 = vmul.f32 %v1003, %v1003
        %v1731 = vmul.f32 %v1004, %v1004
        %v1732 = vmul.f32 %v1005, %v1005
        %v1733 = vmul.f32 %v1006, %v1006
        %v1734 = vmul.f32 %v1007, %v1007
        %v1735 = vmul.f32 %v1008, %v1008
        %v1736 = vmul.f32 %v1009, %v1009
        %vm1737 = vcmask 261120
        %v1739 = vsel %vm1737, %v1641, 0
        %v1742 = vsel %vm1737, %v978, 0
        %1744 = vmatprep.subr.mxu0 0.0
        %1745 = vmatpush1.xpose.msra.mxu0 0.0
        %1746 = vmatprep.subr.mxu0 0.0
        %1747 = vmatpush1.xpose.msra.mxu0 0.0
        %1748 = vmatprep.subr.mxu0 0.0
        %1749 = vmatpush1.xpose.msra.mxu0 0.0
        %1750 = vmatprep.subr.mxu0 0.0
        %1751 = vmatpush1.xpose.msra.mxu0 0.0
        %1752 = vmatprep.subr.mxu0 0.0
        %1753 = vmatpush1.xpose.msra.mxu0 0.0
        %1754 = vmatprep.subr.mxu0 0.0
        %1755 = vmatpush1.xpose.msra.mxu0 0.0
        %1756 = vmatprep.subr.mxu0 0.0
        %1757 = vmatpush1.xpose.msra.mxu0 0.0
        %1758 = vmatprep.subr.mxu0 0.0
        %1759 = vmatpush1.xpose.msra.mxu0 0.0
        %1760 = vmatprep.subr.mxu0 0.0
        %1761 = vmatpush1.xpose.msra.mxu0 0.0
        %1762 = vmatprep.subr.mxu0 0.0
        %1763 = vmatpush1.xpose.msra.mxu0 0.0
        %1764 = vmatprep.subr.mxu0 0.0
        %1765 = vmatpush1.xpose.msra.mxu0 0.0
        %1766 = vmatprep.subr.mxu0 0.0
        %1767 = vmatpush1.xpose.msra.mxu0 0.0
        %1768 = vmatprep.subr.mxu0 0.0
        %1769 = vmatpush1.xpose.msra.mxu0 0.0
        %1770 = vmatprep.subr.mxu0 0.0
        %1771 = vmatpush1.xpose.msra.mxu0 0.0
        %1772 = vmatprep.subr.mxu0 0.0
        %1773 = vmatpush1.xpose.msra.mxu0 0.0
        %1774 = vmatprep.subr.mxu0 0.0
        %1775 = vmatpush1.xpose.msra.mxu0 %v1742
        %1776 = vmatprep.subr.mxu0 0.0
        %1777 = vmatpush2.xpose.msra.mxu0 0.0
        %1778 = vmatprep.subr.mxu0 0.0
        %1779 = vmatpush2.xpose.msra.mxu0 0.0
        %1780 = vmatprep.subr.mxu0 0.0
        %1781 = vmatpush2.xpose.msra.mxu0 0.0
        %1782 = vmatprep.subr.mxu0 0.0
        %1783 = vmatpush2.xpose.msra.mxu0 0.0
        %1784 = vmatprep.subr.mxu0 0.0
        %1785 = vmatpush2.xpose.msra.mxu0 0.0
        %1786 = vmatprep.subr.mxu0 0.0
        %1787 = vmatpush2.xpose.msra.mxu0 0.0
        %1788 = vmatprep.subr.mxu0 0.0
        %1789 = vmatpush2.xpose.msra.mxu0 0.0
        %1790 = vmatprep.subr.mxu0 0.0
        %1791 = vmatpush2.xpose.msra.mxu0 0.0
        %1792 = vmatprep.subr.mxu0 0.0
        %1793 = vmatpush2.xpose.msra.mxu0 0.0
        %1794 = vmatprep.subr.mxu0 0.0
        %1795 = vmatpush2.xpose.msra.mxu0 0.0
        %1796 = vmatprep.subr.mxu0 0.0
        %1797 = vmatpush2.xpose.msra.mxu0 0.0
        %1798 = vmatprep.subr.mxu0 0.0
        %1799 = vmatpush2.xpose.msra.mxu0 0.0
        %1800 = vmatprep.subr.mxu0 0.0
        %1801 = vmatpush2.xpose.msra.mxu0 0.0
        %1802 = vmatprep.subr.mxu0 0.0
        %1803 = vmatpush2.xpose.msra.mxu0 0.0
        %1804 = vmatprep.subr.mxu0 0.0
        %1805 = vmatpush2.xpose.msra.mxu0 0.0
        %1806 = vmatprep.subr.mxu0 0.0
        %1807 = vmatpush2.xpose.msra.mxu0 0.0
        %1808 = vmatprep.mubr.f32.mxu0 0.0
        %1809 = vmatmul.mubr.f32.gmra.mxu0 %v1739
        %v1810 = vpop.f32.mrf.mxu0
        %v1811 = vadd.f32 0.0, %v1810
        %v1812 = vpop.f32.mrf.mxu0
        %1813 = vdwg.mxu0
        %v1815 = vsel %vm1737, %v1642, 0
        %v1818 = vsel %vm1737, %v979, 0
        %1820 = vmatprep.subr.mxu0 0.0
        %1821 = vmatpush1.xpose.msra.mxu0 0.0
        %1822 = vmatprep.subr.mxu0 0.0
        %1823 = vmatpush1.xpose.msra.mxu0 0.0
        %1824 = vmatprep.subr.mxu0 0.0
        %1825 = vmatpush1.xpose.msra.mxu0 0.0
        %1826 = vmatprep.subr.mxu0 0.0
        %1827 = vmatpush1.xpose.msra.mxu0 0.0
        %1828 = vmatprep.subr.mxu0 0.0
        %1829 = vmatpush1.xpose.msra.mxu0 0.0
        %1830 = vmatprep.subr.mxu0 0.0
        %1831 = vmatpush1.xpose.msra.mxu0 0.0
        %1832 = vmatprep.subr.mxu0 0.0
        %1833 = vmatpush1.xpose.msra.mxu0 0.0
        %1834 = vmatprep.subr.mxu0 0.0
        %1835 = vmatpush1.xpose.msra.mxu0 0.0
        %1836 = vmatprep.subr.mxu0 0.0
        %1837 = vmatpush1.xpose.msra.mxu0 0.0
        %1838 = vmatprep.subr.mxu0 0.0
        %1839 = vmatpush1.xpose.msra.mxu0 0.0
        %1840 = vmatprep.subr.mxu0 0.0
        %1841 = vmatpush1.xpose.msra.mxu0 0.0
        %1842 = vmatprep.subr.mxu0 0.0
        %1843 = vmatpush1.xpose.msra.mxu0 0.0
        %1844 = vmatprep.subr.mxu0 0.0
        %1845 = vmatpush1.xpose.msra.mxu0 0.0
        %1846 = vmatprep.subr.mxu0 0.0
        %1847 = vmatpush1.xpose.msra.mxu0 0.0
        %1848 = vmatprep.subr.mxu0 0.0
        %1849 = vmatpush1.xpose.msra.mxu0 0.0
        %1850 = vmatprep.subr.mxu0 0.0
        %1851 = vmatpush1.xpose.msra.mxu0 %v1818
        %1852 = vmatprep.subr.mxu0 0.0
        %1853 = vmatpush2.xpose.msra.mxu0 0.0
        %1854 = vmatprep.subr.mxu0 0.0
        %1855 = vmatpush2.xpose.msra.mxu0 0.0
        %1856 = vmatprep.subr.mxu0 0.0
        %1857 = vmatpush2.xpose.msra.mxu0 0.0
        %1858 = vmatprep.subr.mxu0 0.0
        %1859 = vmatpush2.xpose.msra.mxu0 0.0
        %1860 = vmatprep.subr.mxu0 0.0
        %1861 = vmatpush2.xpose.msra.mxu0 0.0
        %1862 = vmatprep.subr.mxu0 0.0
        %1863 = vmatpush2.xpose.msra.mxu0 0.0
        %1864 = vmatprep.subr.mxu0 0.0
        %1865 = vmatpush2.xpose.msra.mxu0 0.0
        %1866 = vmatprep.subr.mxu0 0.0
        %1867 = vmatpush2.xpose.msra.mxu0 0.0
        %1868 = vmatprep.subr.mxu0 0.0
        %1869 = vmatpush2.xpose.msra.mxu0 0.0
        %1870 = vmatprep.subr.mxu0 0.0
        %1871 = vmatpush2.xpose.msra.mxu0 0.0
        %1872 = vmatprep.subr.mxu0 0.0
        %1873 = vmatpush2.xpose.msra.mxu0 0.0
        %1874 = vmatprep.subr.mxu0 0.0
        %1875 = vmatpush2.xpose.msra.mxu0 0.0
        %1876 = vmatprep.subr.mxu0 0.0
        %1877 = vmatpush2.xpose.msra.mxu0 0.0
        %1878 = vmatprep.subr.mxu0 0.0
        %1879 = vmatpush2.xpose.msra.mxu0 0.0
        %1880 = vmatprep.subr.mxu0 0.0
        %1881 = vmatpush2.xpose.msra.mxu0 0.0
        %1882 = vmatprep.subr.mxu0 0.0
        %1883 = vmatpush2.xpose.msra.mxu0 0.0
        %1884 = vmatprep.mubr.f32.mxu0 0.0
        %1885 = vmatmul.mubr.f32.gmra.mxu0 %v1815
        %v1886 = vpop.f32.mrf.mxu0
        %v1887 = vadd.f32 0.0, %v1886
        %v1888 = vpop.f32.mrf.mxu0
        %1889 = vdwg.mxu0
        %v1891 = vsel %vm1737, %v1643, 0
        %v1894 = vsel %vm1737, %v980, 0
        %1896 = vmatprep.subr.mxu0 0.0
        %1897 = vmatpush1.xpose.msra.mxu0 0.0
        %1898 = vmatprep.subr.mxu0 0.0
        %1899 = vmatpush1.xpose.msra.mxu0 0.0
        %1900 = vmatprep.subr.mxu0 0.0
        %1901 = vmatpush1.xpose.msra.mxu0 0.0
        %1902 = vmatprep.subr.mxu0 0.0
        %1903 = vmatpush1.xpose.msra.mxu0 0.0
        %1904 = vmatprep.subr.mxu0 0.0
        %1905 = vmatpush1.xpose.msra.mxu0 0.0
        %1906 = vmatprep.subr.mxu0 0.0
        %1907 = vmatpush1.xpose.msra.mxu0 0.0
        %1908 = vmatprep.subr.mxu0 0.0
        %1909 = vmatpush1.xpose.msra.mxu0 0.0
        %1910 = vmatprep.subr.mxu0 0.0
        %1911 = vmatpush1.xpose.msra.mxu0 0.0
        %1912 = vmatprep.subr.mxu0 0.0
        %1913 = vmatpush1.xpose.msra.mxu0 0.0
        %1914 = vmatprep.subr.mxu0 0.0
        %1915 = vmatpush1.xpose.msra.mxu0 0.0
        %1916 = vmatprep.subr.mxu0 0.0
        %1917 = vmatpush1.xpose.msra.mxu0 0.0
        %1918 = vmatprep.subr.mxu0 0.0
        %1919 = vmatpush1.xpose.msra.mxu0 0.0
        %1920 = vmatprep.subr.mxu0 0.0
        %1921 = vmatpush1.xpose.msra.mxu0 0.0
        %1922 = vmatprep.subr.mxu0 0.0
        %1923 = vmatpush1.xpose.msra.mxu0 0.0
        %1924 = vmatprep.subr.mxu0 0.0
        %1925 = vmatpush1.xpose.msra.mxu0 0.0
        %1926 = vmatprep.subr.mxu0 0.0
        %1927 = vmatpush1.xpose.msra.mxu0 %v1894
        %1928 = vmatprep.subr.mxu0 0.0
        %1929 = vmatpush2.xpose.msra.mxu0 0.0
        %1930 = vmatprep.subr.mxu0 0.0
        %1931 = vmatpush2.xpose.msra.mxu0 0.0
        %1932 = vmatprep.subr.mxu0 0.0
        %1933 = vmatpush2.xpose.msra.mxu0 0.0
        %1934 = vmatprep.subr.mxu0 0.0
        %1935 = vmatpush2.xpose.msra.mxu0 0.0
        %1936 = vmatprep.subr.mxu0 0.0
        %1937 = vmatpush2.xpose.msra.mxu0 0.0
        %1938 = vmatprep.subr.mxu0 0.0
        %1939 = vmatpush2.xpose.msra.mxu0 0.0
        %1940 = vmatprep.subr.mxu0 0.0
        %1941 = vmatpush2.xpose.msra.mxu0 0.0
        %1942 = vmatprep.subr.mxu0 0.0
        %1943 = vmatpush2.xpose.msra.mxu0 0.0
        %1944 = vmatprep.subr.mxu0 0.0
        %1945 = vmatpush2.xpose.msra.mxu0 0.0
        %1946 = vmatprep.subr.mxu0 0.0
        %1947 = vmatpush2.xpose.msra.mxu0 0.0
        %1948 = vmatprep.subr.mxu0 0.0
        %1949 = vmatpush2.xpose.msra.mxu0 0.0
        %1950 = vmatprep.subr.mxu0 0.0
        %1951 = vmatpush2.xpose.msra.mxu0 0.0
        %1952 = vmatprep.subr.mxu0 0.0
        %1953 = vmatpush2.xpose.msra.mxu0 0.0
        %1954 = vmatprep.subr.mxu0 0.0
        %1955 = vmatpush2.xpose.msra.mxu0 0.0
        %1956 = vmatprep.subr.mxu0 0.0
        %1957 = vmatpush2.xpose.msra.mxu0 0.0
        %1958 = vmatprep.subr.mxu0 0.0
        %1959 = vmatpush2.xpose.msra.mxu0 0.0
        %1960 = vmatprep.mubr.f32.mxu0 0.0
        %1961 = vmatmul.mubr.f32.gmra.mxu0 %v1891
        %v1962 = vpop.f32.mrf.mxu0
        %v1963 = vadd.f32 0.0, %v1962
        %v1964 = vpop.f32.mrf.mxu0
        %1965 = vdwg.mxu0
        %v1967 = vsel %vm1737, %v1644, 0
        %v1970 = vsel %vm1737, %v981, 0
        %1972 = vmatprep.subr.mxu0 0.0
        %1973 = vmatpush1.xpose.msra.mxu0 0.0
        %1974 = vmatprep.subr.mxu0 0.0
        %1975 = vmatpush1.xpose.msra.mxu0 0.0
        %1976 = vmatprep.subr.mxu0 0.0
        %1977 = vmatpush1.xpose.msra.mxu0 0.0
        %1978 = vmatprep.subr.mxu0 0.0
        %1979 = vmatpush1.xpose.msra.mxu0 0.0
        %1980 = vmatprep.subr.mxu0 0.0
        %1981 = vmatpush1.xpose.msra.mxu0 0.0
        %1982 = vmatprep.subr.mxu0 0.0
        %1983 = vmatpush1.xpose.msra.mxu0 0.0
        %1984 = vmatprep.subr.mxu0 0.0
        %1985 = vmatpush1.xpose.msra.mxu0 0.0
        %1986 = vmatprep.subr.mxu0 0.0
        %1987 = vmatpush1.xpose.msra.mxu0 0.0
        %1988 = vmatprep.subr.mxu0 0.0
        %1989 = vmatpush1.xpose.msra.mxu0 0.0
        %1990 = vmatprep.subr.mxu0 0.0
        %1991 = vmatpush1.xpose.msra.mxu0 0.0
        %1992 = vmatprep.subr.mxu0 0.0
        %1993 = vmatpush1.xpose.msra.mxu0 0.0
        %1994 = vmatprep.subr.mxu0 0.0
        %1995 = vmatpush1.xpose.msra.mxu0 0.0
        %1996 = vmatprep.subr.mxu0 0.0
        %1997 = vmatpush1.xpose.msra.mxu0 0.0
        %1998 = vmatprep.subr.mxu0 0.0
        %1999 = vmatpush1.xpose.msra.mxu0 0.0
        %2000 = vmatprep.subr.mxu0 0.0
        %2001 = vmatpush1.xpose.msra.mxu0 0.0
        %2002 = vmatprep.subr.mxu0 0.0
        %2003 = vmatpush1.xpose.msra.mxu0 %v1970
        %2004 = vmatprep.subr.mxu0 0.0
        %2005 = vmatpush2.xpose.msra.mxu0 0.0
        %2006 = vmatprep.subr.mxu0 0.0
        %2007 = vmatpush2.xpose.msra.mxu0 0.0
        %2008 = vmatprep.subr.mxu0 0.0
        %2009 = vmatpush2.xpose.msra.mxu0 0.0
        %2010 = vmatprep.subr.mxu0 0.0
        %2011 = vmatpush2.xpose.msra.mxu0 0.0
        %2012 = vmatprep.subr.mxu0 0.0
        %2013 = vmatpush2.xpose.msra.mxu0 0.0
        %2014 = vmatprep.subr.mxu0 0.0
        %2015 = vmatpush2.xpose.msra.mxu0 0.0
        %2016 = vmatprep.subr.mxu0 0.0
        %2017 = vmatpush2.xpose.msra.mxu0 0.0
        %2018 = vmatprep.subr.mxu0 0.0
        %2019 = vmatpush2.xpose.msra.mxu0 0.0
        %2020 = vmatprep.subr.mxu0 0.0
        %2021 = vmatpush2.xpose.msra.mxu0 0.0
        %2022 = vmatprep.subr.mxu0 0.0
        %2023 = vmatpush2.xpose.msra.mxu0 0.0
        %2024 = vmatprep.subr.mxu0 0.0
        %2025 = vmatpush2.xpose.msra.mxu0 0.0
        %2026 = vmatprep.subr.mxu0 0.0
        %2027 = vmatpush2.xpose.msra.mxu0 0.0
        %2028 = vmatprep.subr.mxu0 0.0
        %2029 = vmatpush2.xpose.msra.mxu0 0.0
        %2030 = vmatprep.subr.mxu0 0.0
        %2031 = vmatpush2.xpose.msra.mxu0 0.0
        %2032 = vmatprep.subr.mxu0 0.0
        %2033 = vmatpush2.xpose.msra.mxu0 0.0
        %2034 = vmatprep.subr.mxu0 0.0
        %2035 = vmatpush2.xpose.msra.mxu0 0.0
        %2036 = vmatprep.mubr.f32.mxu0 0.0
        %2037 = vmatmul.mubr.f32.gmra.mxu0 %v1967
        %v2038 = vpop.f32.mrf.mxu0
        %v2039 = vadd.f32 0.0, %v2038
        %v2040 = vpop.f32.mrf.mxu0
        %2041 = vdwg.mxu0
        %v2043 = vsel %vm1737, %v1645, 0
        %v2046 = vsel %vm1737, %v982, 0
        %2048 = vmatprep.subr.mxu0 0.0
        %2049 = vmatpush1.xpose.msra.mxu0 0.0
        %2050 = vmatprep.subr.mxu0 0.0
        %2051 = vmatpush1.xpose.msra.mxu0 0.0
        %2052 = vmatprep.subr.mxu0 0.0
        %2053 = vmatpush1.xpose.msra.mxu0 0.0
        %2054 = vmatprep.subr.mxu0 0.0
        %2055 = vmatpush1.xpose.msra.mxu0 0.0
        %2056 = vmatprep.subr.mxu0 0.0
        %2057 = vmatpush1.xpose.msra.mxu0 0.0
        %2058 = vmatprep.subr.mxu0 0.0
        %2059 = vmatpush1.xpose.msra.mxu0 0.0
        %2060 = vmatprep.subr.mxu0 0.0
        %2061 = vmatpush1.xpose.msra.mxu0 0.0
        %2062 = vmatprep.subr.mxu0 0.0
        %2063 = vmatpush1.xpose.msra.mxu0 0.0
        %2064 = vmatprep.subr.mxu0 0.0
        %2065 = vmatpush1.xpose.msra.mxu0 0.0
        %2066 = vmatprep.subr.mxu0 0.0
        %2067 = vmatpush1.xpose.msra.mxu0 0.0
        %2068 = vmatprep.subr.mxu0 0.0
        %2069 = vmatpush1.xpose.msra.mxu0 0.0
        %2070 = vmatprep.subr.mxu0 0.0
        %2071 = vmatpush1.xpose.msra.mxu0 0.0
        %2072 = vmatprep.subr.mxu0 0.0
        %2073 = vmatpush1.xpose.msra.mxu0 0.0
        %2074 = vmatprep.subr.mxu0 0.0
        %2075 = vmatpush1.xpose.msra.mxu0 0.0
        %2076 = vmatprep.subr.mxu0 0.0
        %2077 = vmatpush1.xpose.msra.mxu0 0.0
        %2078 = vmatprep.subr.mxu0 0.0
        %2079 = vmatpush1.xpose.msra.mxu0 %v2046
        %2080 = vmatprep.subr.mxu0 0.0
        %2081 = vmatpush2.xpose.msra.mxu0 0.0
        %2082 = vmatprep.subr.mxu0 0.0
        %2083 = vmatpush2.xpose.msra.mxu0 0.0
        %2084 = vmatprep.subr.mxu0 0.0
        %2085 = vmatpush2.xpose.msra.mxu0 0.0
        %2086 = vmatprep.subr.mxu0 0.0
        %2087 = vmatpush2.xpose.msra.mxu0 0.0
        %2088 = vmatprep.subr.mxu0 0.0
        %2089 = vmatpush2.xpose.msra.mxu0 0.0
        %2090 = vmatprep.subr.mxu0 0.0
        %2091 = vmatpush2.xpose.msra.mxu0 0.0
        %2092 = vmatprep.subr.mxu0 0.0
        %2093 = vmatpush2.xpose.msra.mxu0 0.0
        %2094 = vmatprep.subr.mxu0 0.0
        %2095 = vmatpush2.xpose.msra.mxu0 0.0
        %2096 = vmatprep.subr.mxu0 0.0
        %2097 = vmatpush2.xpose.msra.mxu0 0.0
        %2098 = vmatprep.subr.mxu0 0.0
        %2099 = vmatpush2.xpose.msra.mxu0 0.0
        %2100 = vmatprep.subr.mxu0 0.0
        %2101 = vmatpush2.xpose.msra.mxu0 0.0
        %2102 = vmatprep.subr.mxu0 0.0
        %2103 = vmatpush2.xpose.msra.mxu0 0.0
        %2104 = vmatprep.subr.mxu0 0.0
        %2105 = vmatpush2.xpose.msra.mxu0 0.0
        %2106 = vmatprep.subr.mxu0 0.0
        %2107 = vmatpush2.xpose.msra.mxu0 0.0
        %2108 = vmatprep.subr.mxu0 0.0
        %2109 = vmatpush2.xpose.msra.mxu0 0.0
        %2110 = vmatprep.subr.mxu0 0.0
        %2111 = vmatpush2.xpose.msra.mxu0 0.0
        %2112 = vmatprep.mubr.f32.mxu0 0.0
        %2113 = vmatmul.mubr.f32.gmra.mxu0 %v2043
        %v2114 = vpop.f32.mrf.mxu0
        %v2115 = vadd.f32 0.0, %v2114
        %v2116 = vpop.f32.mrf.mxu0
        %2117 = vdwg.mxu0
        %v2119 = vsel %vm1737, %v1646, 0
        %v2122 = vsel %vm1737, %v983, 0
        %2124 = vmatprep.subr.mxu0 0.0
        %2125 = vmatpush1.xpose.msra.mxu0 0.0
        %2126 = vmatprep.subr.mxu0 0.0
        %2127 = vmatpush1.xpose.msra.mxu0 0.0
        %2128 = vmatprep.subr.mxu0 0.0
        %2129 = vmatpush1.xpose.msra.mxu0 0.0
        %2130 = vmatprep.subr.mxu0 0.0
        %2131 = vmatpush1.xpose.msra.mxu0 0.0
        %2132 = vmatprep.subr.mxu0 0.0
        %2133 = vmatpush1.xpose.msra.mxu0 0.0
        %2134 = vmatprep.subr.mxu0 0.0
        %2135 = vmatpush1.xpose.msra.mxu0 0.0
        %2136 = vmatprep.subr.mxu0 0.0
        %2137 = vmatpush1.xpose.msra.mxu0 0.0
        %2138 = vmatprep.subr.mxu0 0.0
        %2139 = vmatpush1.xpose.msra.mxu0 0.0
        %2140 = vmatprep.subr.mxu0 0.0
        %2141 = vmatpush1.xpose.msra.mxu0 0.0
        %2142 = vmatprep.subr.mxu0 0.0
        %2143 = vmatpush1.xpose.msra.mxu0 0.0
        %2144 = vmatprep.subr.mxu0 0.0
        %2145 = vmatpush1.xpose.msra.mxu0 0.0
        %2146 = vmatprep.subr.mxu0 0.0
        %2147 = vmatpush1.xpose.msra.mxu0 0.0
        %2148 = vmatprep.subr.mxu0 0.0
        %2149 = vmatpush1.xpose.msra.mxu0 0.0
        %2150 = vmatprep.subr.mxu0 0.0
        %2151 = vmatpush1.xpose.msra.mxu0 0.0
        %2152 = vmatprep.subr.mxu0 0.0
        %2153 = vmatpush1.xpose.msra.mxu0 0.0
        %2154 = vmatprep.subr.mxu0 0.0
        %2155 = vmatpush1.xpose.msra.mxu0 %v2122
        %2156 = vmatprep.subr.mxu0 0.0
        %2157 = vmatpush2.xpose.msra.mxu0 0.0
        %2158 = vmatprep.subr.mxu0 0.0
        %2159 = vmatpush2.xpose.msra.mxu0 0.0
        %2160 = vmatprep.subr.mxu0 0.0
        %2161 = vmatpush2.xpose.msra.mxu0 0.0
        %2162 = vmatprep.subr.mxu0 0.0
        %2163 = vmatpush2.xpose.msra.mxu0 0.0
        %2164 = vmatprep.subr.mxu0 0.0
        %2165 = vmatpush2.xpose.msra.mxu0 0.0
        %2166 = vmatprep.subr.mxu0 0.0
        %2167 = vmatpush2.xpose.msra.mxu0 0.0
        %2168 = vmatprep.subr.mxu0 0.0
        %2169 = vmatpush2.xpose.msra.mxu0 0.0
        %2170 = vmatprep.subr.mxu0 0.0
        %2171 = vmatpush2.xpose.msra.mxu0 0.0
        %2172 = vmatprep.subr.mxu0 0.0
        %2173 = vmatpush2.xpose.msra.mxu0 0.0
        %2174 = vmatprep.subr.mxu0 0.0
        %2175 = vmatpush2.xpose.msra.mxu0 0.0
        %2176 = vmatprep.subr.mxu0 0.0
        %2177 = vmatpush2.xpose.msra.mxu0 0.0
        %2178 = vmatprep.subr.mxu0 0.0
        %2179 = vmatpush2.xpose.msra.mxu0 0.0
        %2180 = vmatprep.subr.mxu0 0.0
        %2181 = vmatpush2.xpose.msra.mxu0 0.0
        %2182 = vmatprep.subr.mxu0 0.0
        %2183 = vmatpush2.xpose.msra.mxu0 0.0
        %2184 = vmatprep.subr.mxu0 0.0
        %2185 = vmatpush2.xpose.msra.mxu0 0.0
        %2186 = vmatprep.subr.mxu0 0.0
        %2187 = vmatpush2.xpose.msra.mxu0 0.0
        %2188 = vmatprep.mubr.f32.mxu0 0.0
        %2189 = vmatmul.mubr.f32.gmra.mxu0 %v2119
        %v2190 = vpop.f32.mrf.mxu0
        %v2191 = vadd.f32 0.0, %v2190
        %v2192 = vpop.f32.mrf.mxu0
        %2193 = vdwg.mxu0
        %v2195 = vsel %vm1737, %v1647, 0
        %v2198 = vsel %vm1737, %v984, 0
        %2200 = vmatprep.subr.mxu0 0.0
        %2201 = vmatpush1.xpose.msra.mxu0 0.0
        %2202 = vmatprep.subr.mxu0 0.0
        %2203 = vmatpush1.xpose.msra.mxu0 0.0
        %2204 = vmatprep.subr.mxu0 0.0
        %2205 = vmatpush1.xpose.msra.mxu0 0.0
        %2206 = vmatprep.subr.mxu0 0.0
        %2207 = vmatpush1.xpose.msra.mxu0 0.0
        %2208 = vmatprep.subr.mxu0 0.0
        %2209 = vmatpush1.xpose.msra.mxu0 0.0
        %2210 = vmatprep.subr.mxu0 0.0
        %2211 = vmatpush1.xpose.msra.mxu0 0.0
        %2212 = vmatprep.subr.mxu0 0.0
        %2213 = vmatpush1.xpose.msra.mxu0 0.0
        %2214 = vmatprep.subr.mxu0 0.0
        %2215 = vmatpush1.xpose.msra.mxu0 0.0
        %2216 = vmatprep.subr.mxu0 0.0
        %2217 = vmatpush1.xpose.msra.mxu0 0.0
        %2218 = vmatprep.subr.mxu0 0.0
        %2219 = vmatpush1.xpose.msra.mxu0 0.0
        %2220 = vmatprep.subr.mxu0 0.0
        %2221 = vmatpush1.xpose.msra.mxu0 0.0
        %2222 = vmatprep.subr.mxu0 0.0
        %2223 = vmatpush1.xpose.msra.mxu0 0.0
        %2224 = vmatprep.subr.mxu0 0.0
        %2225 = vmatpush1.xpose.msra.mxu0 0.0
        %2226 = vmatprep.subr.mxu0 0.0
        %2227 = vmatpush1.xpose.msra.mxu0 0.0
        %2228 = vmatprep.subr.mxu0 0.0
        %2229 = vmatpush1.xpose.msra.mxu0 0.0
        %2230 = vmatprep.subr.mxu0 0.0
        %2231 = vmatpush1.xpose.msra.mxu0 %v2198
        %2232 = vmatprep.subr.mxu0 0.0
        %2233 = vmatpush2.xpose.msra.mxu0 0.0
        %2234 = vmatprep.subr.mxu0 0.0
        %2235 = vmatpush2.xpose.msra.mxu0 0.0
        %2236 = vmatprep.subr.mxu0 0.0
        %2237 = vmatpush2.xpose.msra.mxu0 0.0
        %2238 = vmatprep.subr.mxu0 0.0
        %2239 = vmatpush2.xpose.msra.mxu0 0.0
        %2240 = vmatprep.subr.mxu0 0.0
        %2241 = vmatpush2.xpose.msra.mxu0 0.0
        %2242 = vmatprep.subr.mxu0 0.0
        %2243 = vmatpush2.xpose.msra.mxu0 0.0
        %2244 = vmatprep.subr.mxu0 0.0
        %2245 = vmatpush2.xpose.msra.mxu0 0.0
        %2246 = vmatprep.subr.mxu0 0.0
        %2247 = vmatpush2.xpose.msra.mxu0 0.0
        %2248 = vmatprep.subr.mxu0 0.0
        %2249 = vmatpush2.xpose.msra.mxu0 0.0
        %2250 = vmatprep.subr.mxu0 0.0
        %2251 = vmatpush2.xpose.msra.mxu0 0.0
        %2252 = vmatprep.subr.mxu0 0.0
        %2253 = vmatpush2.xpose.msra.mxu0 0.0
        %2254 = vmatprep.subr.mxu0 0.0
        %2255 = vmatpush2.xpose.msra.mxu0 0.0
        %2256 = vmatprep.subr.mxu0 0.0
        %2257 = vmatpush2.xpose.msra.mxu0 0.0
        %2258 = vmatprep.subr.mxu0 0.0
        %2259 = vmatpush2.xpose.msra.mxu0 0.0
        %2260 = vmatprep.subr.mxu0 0.0
        %2261 = vmatpush2.xpose.msra.mxu0 0.0
        %2262 = vmatprep.subr.mxu0 0.0
        %2263 = vmatpush2.xpose.msra.mxu0 0.0
        %2264 = vmatprep.mubr.f32.mxu0 0.0
        %2265 = vmatmul.mubr.f32.gmra.mxu0 %v2195
        %v2266 = vpop.f32.mrf.mxu0
        %v2267 = vadd.f32 0.0, %v2266
        %v2268 = vpop.f32.mrf.mxu0
        %2269 = vdwg.mxu0
        %v2271 = vsel %vm1737, %v1648, 0
        %v2274 = vsel %vm1737, %v985, 0
        %2276 = vmatprep.subr.mxu0 0.0
        %2277 = vmatpush1.xpose.msra.mxu0 0.0
        %2278 = vmatprep.subr.mxu0 0.0
        %2279 = vmatpush1.xpose.msra.mxu0 0.0
        %2280 = vmatprep.subr.mxu0 0.0
        %2281 = vmatpush1.xpose.msra.mxu0 0.0
        %2282 = vmatprep.subr.mxu0 0.0
        %2283 = vmatpush1.xpose.msra.mxu0 0.0
        %2284 = vmatprep.subr.mxu0 0.0
        %2285 = vmatpush1.xpose.msra.mxu0 0.0
        %2286 = vmatprep.subr.mxu0 0.0
        %2287 = vmatpush1.xpose.msra.mxu0 0.0
        %2288 = vmatprep.subr.mxu0 0.0
        %2289 = vmatpush1.xpose.msra.mxu0 0.0
        %2290 = vmatprep.subr.mxu0 0.0
        %2291 = vmatpush1.xpose.msra.mxu0 0.0
        %2292 = vmatprep.subr.mxu0 0.0
        %2293 = vmatpush1.xpose.msra.mxu0 0.0
        %2294 = vmatprep.subr.mxu0 0.0
        %2295 = vmatpush1.xpose.msra.mxu0 0.0
        %2296 = vmatprep.subr.mxu0 0.0
        %2297 = vmatpush1.xpose.msra.mxu0 0.0
        %2298 = vmatprep.subr.mxu0 0.0
        %2299 = vmatpush1.xpose.msra.mxu0 0.0
        %2300 = vmatprep.subr.mxu0 0.0
        %2301 = vmatpush1.xpose.msra.mxu0 0.0
        %2302 = vmatprep.subr.mxu0 0.0
        %2303 = vmatpush1.xpose.msra.mxu0 0.0
        %2304 = vmatprep.subr.mxu0 0.0
        %2305 = vmatpush1.xpose.msra.mxu0 0.0
        %2306 = vmatprep.subr.mxu0 0.0
        %2307 = vmatpush1.xpose.msra.mxu0 %v2274
        %2308 = vmatprep.subr.mxu0 0.0
        %2309 = vmatpush2.xpose.msra.mxu0 0.0
        %2310 = vmatprep.subr.mxu0 0.0
        %2311 = vmatpush2.xpose.msra.mxu0 0.0
        %2312 = vmatprep.subr.mxu0 0.0
        %2313 = vmatpush2.xpose.msra.mxu0 0.0
        %2314 = vmatprep.subr.mxu0 0.0
        %2315 = vmatpush2.xpose.msra.mxu0 0.0
        %2316 = vmatprep.subr.mxu0 0.0
        %2317 = vmatpush2.xpose.msra.mxu0 0.0
        %2318 = vmatprep.subr.mxu0 0.0
        %2319 = vmatpush2.xpose.msra.mxu0 0.0
        %2320 = vmatprep.subr.mxu0 0.0
        %2321 = vmatpush2.xpose.msra.mxu0 0.0
        %2322 = vmatprep.subr.mxu0 0.0
        %2323 = vmatpush2.xpose.msra.mxu0 0.0
        %2324 = vmatprep.subr.mxu0 0.0
        %2325 = vmatpush2.xpose.msra.mxu0 0.0
        %2326 = vmatprep.subr.mxu0 0.0
        %2327 = vmatpush2.xpose.msra.mxu0 0.0
        %2328 = vmatprep.subr.mxu0 0.0
        %2329 = vmatpush2.xpose.msra.mxu0 0.0
        %2330 = vmatprep.subr.mxu0 0.0
        %2331 = vmatpush2.xpose.msra.mxu0 0.0
        %2332 = vmatprep.subr.mxu0 0.0
        %2333 = vmatpush2.xpose.msra.mxu0 0.0
        %2334 = vmatprep.subr.mxu0 0.0
        %2335 = vmatpush2.xpose.msra.mxu0 0.0
        %2336 = vmatprep.subr.mxu0 0.0
        %2337 = vmatpush2.xpose.msra.mxu0 0.0
        %2338 = vmatprep.subr.mxu0 0.0
        %2339 = vmatpush2.xpose.msra.mxu0 0.0
        %2340 = vmatprep.mubr.f32.mxu0 0.0
        %2341 = vmatmul.mubr.f32.gmra.mxu0 %v2271
        %v2342 = vpop.f32.mrf.mxu0
        %v2343 = vadd.f32 0.0, %v2342
        %v2344 = vpop.f32.mrf.mxu0
        %2345 = vdwg.mxu0
        %v2347 = vsel %vm1737, %v1649, 0
        %v2350 = vsel %vm1737, %v986, 0
        %2352 = vmatprep.subr.mxu0 0.0
        %2353 = vmatpush1.xpose.msra.mxu0 0.0
        %2354 = vmatprep.subr.mxu0 0.0
        %2355 = vmatpush1.xpose.msra.mxu0 0.0
        %2356 = vmatprep.subr.mxu0 0.0
        %2357 = vmatpush1.xpose.msra.mxu0 0.0
        %2358 = vmatprep.subr.mxu0 0.0
        %2359 = vmatpush1.xpose.msra.mxu0 0.0
        %2360 = vmatprep.subr.mxu0 0.0
        %2361 = vmatpush1.xpose.msra.mxu0 0.0
        %2362 = vmatprep.subr.mxu0 0.0
        %2363 = vmatpush1.xpose.msra.mxu0 0.0
        %2364 = vmatprep.subr.mxu0 0.0
        %2365 = vmatpush1.xpose.msra.mxu0 0.0
        %2366 = vmatprep.subr.mxu0 0.0
        %2367 = vmatpush1.xpose.msra.mxu0 0.0
        %2368 = vmatprep.subr.mxu0 0.0
        %2369 = vmatpush1.xpose.msra.mxu0 0.0
        %2370 = vmatprep.subr.mxu0 0.0
        %2371 = vmatpush1.xpose.msra.mxu0 0.0
        %2372 = vmatprep.subr.mxu0 0.0
        %2373 = vmatpush1.xpose.msra.mxu0 0.0
        %2374 = vmatprep.subr.mxu0 0.0
        %2375 = vmatpush1.xpose.msra.mxu0 0.0
        %2376 = vmatprep.subr.mxu0 0.0
        %2377 = vmatpush1.xpose.msra.mxu0 0.0
        %2378 = vmatprep.subr.mxu0 0.0
        %2379 = vmatpush1.xpose.msra.mxu0 0.0
        %2380 = vmatprep.subr.mxu0 0.0
        %2381 = vmatpush1.xpose.msra.mxu0 0.0
        %2382 = vmatprep.subr.mxu0 0.0
        %2383 = vmatpush1.xpose.msra.mxu0 %v2350
        %2384 = vmatprep.subr.mxu0 0.0
        %2385 = vmatpush2.xpose.msra.mxu0 0.0
        %2386 = vmatprep.subr.mxu0 0.0
        %2387 = vmatpush2.xpose.msra.mxu0 0.0
        %2388 = vmatprep.subr.mxu0 0.0
        %2389 = vmatpush2.xpose.msra.mxu0 0.0
        %2390 = vmatprep.subr.mxu0 0.0
        %2391 = vmatpush2.xpose.msra.mxu0 0.0
        %2392 = vmatprep.subr.mxu0 0.0
        %2393 = vmatpush2.xpose.msra.mxu0 0.0
        %2394 = vmatprep.subr.mxu0 0.0
        %2395 = vmatpush2.xpose.msra.mxu0 0.0
        %2396 = vmatprep.subr.mxu0 0.0
        %2397 = vmatpush2.xpose.msra.mxu0 0.0
        %2398 = vmatprep.subr.mxu0 0.0
        %2399 = vmatpush2.xpose.msra.mxu0 0.0
        %2400 = vmatprep.subr.mxu0 0.0
        %2401 = vmatpush2.xpose.msra.mxu0 0.0
        %2402 = vmatprep.subr.mxu0 0.0
        %2403 = vmatpush2.xpose.msra.mxu0 0.0
        %2404 = vmatprep.subr.mxu0 0.0
        %2405 = vmatpush2.xpose.msra.mxu0 0.0
        %2406 = vmatprep.subr.mxu0 0.0
        %2407 = vmatpush2.xpose.msra.mxu0 0.0
        %2408 = vmatprep.subr.mxu0 0.0
        %2409 = vmatpush2.xpose.msra.mxu0 0.0
        %2410 = vmatprep.subr.mxu0 0.0
        %2411 = vmatpush2.xpose.msra.mxu0 0.0
        %2412 = vmatprep.subr.mxu0 0.0
        %2413 = vmatpush2.xpose.msra.mxu0 0.0
        %2414 = vmatprep.subr.mxu0 0.0
        %2415 = vmatpush2.xpose.msra.mxu0 0.0
        %2416 = vmatprep.mubr.f32.mxu0 0.0
        %2417 = vmatmul.mubr.f32.gmra.mxu0 %v2347
        %v2418 = vpop.f32.mrf.mxu0
        %v2419 = vadd.f32 0.0, %v2418
        %v2420 = vpop.f32.mrf.mxu0
        %2421 = vdwg.mxu0
        %v2423 = vsel %vm1737, %v1650, 0
        %v2426 = vsel %vm1737, %v987, 0
        %2428 = vmatprep.subr.mxu0 0.0
        %2429 = vmatpush1.xpose.msra.mxu0 0.0
        %2430 = vmatprep.subr.mxu0 0.0
        %2431 = vmatpush1.xpose.msra.mxu0 0.0
        %2432 = vmatprep.subr.mxu0 0.0
        %2433 = vmatpush1.xpose.msra.mxu0 0.0
        %2434 = vmatprep.subr.mxu0 0.0
        %2435 = vmatpush1.xpose.msra.mxu0 0.0
        %2436 = vmatprep.subr.mxu0 0.0
        %2437 = vmatpush1.xpose.msra.mxu0 0.0
        %2438 = vmatprep.subr.mxu0 0.0
        %2439 = vmatpush1.xpose.msra.mxu0 0.0
        %2440 = vmatprep.subr.mxu0 0.0
        %2441 = vmatpush1.xpose.msra.mxu0 0.0
        %2442 = vmatprep.subr.mxu0 0.0
        %2443 = vmatpush1.xpose.msra.mxu0 0.0
        %2444 = vmatprep.subr.mxu0 0.0
        %2445 = vmatpush1.xpose.msra.mxu0 0.0
        %2446 = vmatprep.subr.mxu0 0.0
        %2447 = vmatpush1.xpose.msra.mxu0 0.0
        %2448 = vmatprep.subr.mxu0 0.0
        %2449 = vmatpush1.xpose.msra.mxu0 0.0
        %2450 = vmatprep.subr.mxu0 0.0
        %2451 = vmatpush1.xpose.msra.mxu0 0.0
        %2452 = vmatprep.subr.mxu0 0.0
        %2453 = vmatpush1.xpose.msra.mxu0 0.0
        %2454 = vmatprep.subr.mxu0 0.0
        %2455 = vmatpush1.xpose.msra.mxu0 0.0
        %2456 = vmatprep.subr.mxu0 0.0
        %2457 = vmatpush1.xpose.msra.mxu0 0.0
        %2458 = vmatprep.subr.mxu0 0.0
        %2459 = vmatpush1.xpose.msra.mxu0 %v2426
        %2460 = vmatprep.subr.mxu0 0.0
        %2461 = vmatpush2.xpose.msra.mxu0 0.0
        %2462 = vmatprep.subr.mxu0 0.0
        %2463 = vmatpush2.xpose.msra.mxu0 0.0
        %2464 = vmatprep.subr.mxu0 0.0
        %2465 = vmatpush2.xpose.msra.mxu0 0.0
        %2466 = vmatprep.subr.mxu0 0.0
        %2467 = vmatpush2.xpose.msra.mxu0 0.0
        %2468 = vmatprep.subr.mxu0 0.0
        %2469 = vmatpush2.xpose.msra.mxu0 0.0
        %2470 = vmatprep.subr.mxu0 0.0
        %2471 = vmatpush2.xpose.msra.mxu0 0.0
        %2472 = vmatprep.subr.mxu0 0.0
        %2473 = vmatpush2.xpose.msra.mxu0 0.0
        %2474 = vmatprep.subr.mxu0 0.0
        %2475 = vmatpush2.xpose.msra.mxu0 0.0
        %2476 = vmatprep.subr.mxu0 0.0
        %2477 = vmatpush2.xpose.msra.mxu0 0.0
        %2478 = vmatprep.subr.mxu0 0.0
        %2479 = vmatpush2.xpose.msra.mxu0 0.0
        %2480 = vmatprep.subr.mxu0 0.0
        %2481 = vmatpush2.xpose.msra.mxu0 0.0
        %2482 = vmatprep.subr.mxu0 0.0
        %2483 = vmatpush2.xpose.msra.mxu0 0.0
        %2484 = vmatprep.subr.mxu0 0.0
        %2485 = vmatpush2.xpose.msra.mxu0 0.0
        %2486 = vmatprep.subr.mxu0 0.0
        %2487 = vmatpush2.xpose.msra.mxu0 0.0
        %2488 = vmatprep.subr.mxu0 0.0
        %2489 = vmatpush2.xpose.msra.mxu0 0.0
        %2490 = vmatprep.subr.mxu0 0.0
        %2491 = vmatpush2.xpose.msra.mxu0 0.0
        %2492 = vmatprep.mubr.f32.mxu0 0.0
        %2493 = vmatmul.mubr.f32.gmra.mxu0 %v2423
        %v2494 = vpop.f32.mrf.mxu0
        %v2495 = vadd.f32 0.0, %v2494
        %v2496 = vpop.f32.mrf.mxu0
        %2497 = vdwg.mxu0
        %v2499 = vsel %vm1737, %v1651, 0
        %v2502 = vsel %vm1737, %v988, 0
        %2504 = vmatprep.subr.mxu0 0.0
        %2505 = vmatpush1.xpose.msra.mxu0 0.0
        %2506 = vmatprep.subr.mxu0 0.0
        %2507 = vmatpush1.xpose.msra.mxu0 0.0
        %2508 = vmatprep.subr.mxu0 0.0
        %2509 = vmatpush1.xpose.msra.mxu0 0.0
        %2510 = vmatprep.subr.mxu0 0.0
        %2511 = vmatpush1.xpose.msra.mxu0 0.0
        %2512 = vmatprep.subr.mxu0 0.0
        %2513 = vmatpush1.xpose.msra.mxu0 0.0
        %2514 = vmatprep.subr.mxu0 0.0
        %2515 = vmatpush1.xpose.msra.mxu0 0.0
        %2516 = vmatprep.subr.mxu0 0.0
        %2517 = vmatpush1.xpose.msra.mxu0 0.0
        %2518 = vmatprep.subr.mxu0 0.0
        %2519 = vmatpush1.xpose.msra.mxu0 0.0
        %2520 = vmatprep.subr.mxu0 0.0
        %2521 = vmatpush1.xpose.msra.mxu0 0.0
        %2522 = vmatprep.subr.mxu0 0.0
        %2523 = vmatpush1.xpose.msra.mxu0 0.0
        %2524 = vmatprep.subr.mxu0 0.0
        %2525 = vmatpush1.xpose.msra.mxu0 0.0
        %2526 = vmatprep.subr.mxu0 0.0
        %2527 = vmatpush1.xpose.msra.mxu0 0.0
        %2528 = vmatprep.subr.mxu0 0.0
        %2529 = vmatpush1.xpose.msra.mxu0 0.0
        %2530 = vmatprep.subr.mxu0 0.0
        %2531 = vmatpush1.xpose.msra.mxu0 0.0
        %2532 = vmatprep.subr.mxu0 0.0
        %2533 = vmatpush1.xpose.msra.mxu0 0.0
        %2534 = vmatprep.subr.mxu0 0.0
        %2535 = vmatpush1.xpose.msra.mxu0 %v2502
        %2536 = vmatprep.subr.mxu0 0.0
        %2537 = vmatpush2.xpose.msra.mxu0 0.0
        %2538 = vmatprep.subr.mxu0 0.0
        %2539 = vmatpush2.xpose.msra.mxu0 0.0
        %2540 = vmatprep.subr.mxu0 0.0
        %2541 = vmatpush2.xpose.msra.mxu0 0.0
        %2542 = vmatprep.subr.mxu0 0.0
        %2543 = vmatpush2.xpose.msra.mxu0 0.0
        %2544 = vmatprep.subr.mxu0 0.0
        %2545 = vmatpush2.xpose.msra.mxu0 0.0
        %2546 = vmatprep.subr.mxu0 0.0
        %2547 = vmatpush2.xpose.msra.mxu0 0.0
        %2548 = vmatprep.subr.mxu0 0.0
        %2549 = vmatpush2.xpose.msra.mxu0 0.0
        %2550 = vmatprep.subr.mxu0 0.0
        %2551 = vmatpush2.xpose.msra.mxu0 0.0
        %2552 = vmatprep.subr.mxu0 0.0
        %2553 = vmatpush2.xpose.msra.mxu0 0.0
        %2554 = vmatprep.subr.mxu0 0.0
        %2555 = vmatpush2.xpose.msra.mxu0 0.0
        %2556 = vmatprep.subr.mxu0 0.0
        %2557 = vmatpush2.xpose.msra.mxu0 0.0
        %2558 = vmatprep.subr.mxu0 0.0
        %2559 = vmatpush2.xpose.msra.mxu0 0.0
        %2560 = vmatprep.subr.mxu0 0.0
        %2561 = vmatpush2.xpose.msra.mxu0 0.0
        %2562 = vmatprep.subr.mxu0 0.0
        %2563 = vmatpush2.xpose.msra.mxu0 0.0
        %2564 = vmatprep.subr.mxu0 0.0
        %2565 = vmatpush2.xpose.msra.mxu0 0.0
        %2566 = vmatprep.subr.mxu0 0.0
        %2567 = vmatpush2.xpose.msra.mxu0 0.0
        %2568 = vmatprep.mubr.f32.mxu0 0.0
        %2569 = vmatmul.mubr.f32.gmra.mxu0 %v2499
        %v2570 = vpop.f32.mrf.mxu0
        %v2571 = vadd.f32 0.0, %v2570
        %v2572 = vpop.f32.mrf.mxu0
        %2573 = vdwg.mxu0
        %v2575 = vsel %vm1737, %v1652, 0
        %v2578 = vsel %vm1737, %v989, 0
        %2580 = vmatprep.subr.mxu0 0.0
        %2581 = vmatpush1.xpose.msra.mxu0 0.0
        %2582 = vmatprep.subr.mxu0 0.0
        %2583 = vmatpush1.xpose.msra.mxu0 0.0
        %2584 = vmatprep.subr.mxu0 0.0
        %2585 = vmatpush1.xpose.msra.mxu0 0.0
        %2586 = vmatprep.subr.mxu0 0.0
        %2587 = vmatpush1.xpose.msra.mxu0 0.0
        %2588 = vmatprep.subr.mxu0 0.0
        %2589 = vmatpush1.xpose.msra.mxu0 0.0
        %2590 = vmatprep.subr.mxu0 0.0
        %2591 = vmatpush1.xpose.msra.mxu0 0.0
        %2592 = vmatprep.subr.mxu0 0.0
        %2593 = vmatpush1.xpose.msra.mxu0 0.0
        %2594 = vmatprep.subr.mxu0 0.0
        %2595 = vmatpush1.xpose.msra.mxu0 0.0
        %2596 = vmatprep.subr.mxu0 0.0
        %2597 = vmatpush1.xpose.msra.mxu0 0.0
        %2598 = vmatprep.subr.mxu0 0.0
        %2599 = vmatpush1.xpose.msra.mxu0 0.0
        %2600 = vmatprep.subr.mxu0 0.0
        %2601 = vmatpush1.xpose.msra.mxu0 0.0
        %2602 = vmatprep.subr.mxu0 0.0
        %2603 = vmatpush1.xpose.msra.mxu0 0.0
        %2604 = vmatprep.subr.mxu0 0.0
        %2605 = vmatpush1.xpose.msra.mxu0 0.0
        %2606 = vmatprep.subr.mxu0 0.0
        %2607 = vmatpush1.xpose.msra.mxu0 0.0
        %2608 = vmatprep.subr.mxu0 0.0
        %2609 = vmatpush1.xpose.msra.mxu0 0.0
        %2610 = vmatprep.subr.mxu0 0.0
        %2611 = vmatpush1.xpose.msra.mxu0 %v2578
        %2612 = vmatprep.subr.mxu0 0.0
        %2613 = vmatpush2.xpose.msra.mxu0 0.0
        %2614 = vmatprep.subr.mxu0 0.0
        %2615 = vmatpush2.xpose.msra.mxu0 0.0
        %2616 = vmatprep.subr.mxu0 0.0
        %2617 = vmatpush2.xpose.msra.mxu0 0.0
        %2618 = vmatprep.subr.mxu0 0.0
        %2619 = vmatpush2.xpose.msra.mxu0 0.0
        %2620 = vmatprep.subr.mxu0 0.0
        %2621 = vmatpush2.xpose.msra.mxu0 0.0
        %2622 = vmatprep.subr.mxu0 0.0
        %2623 = vmatpush2.xpose.msra.mxu0 0.0
        %2624 = vmatprep.subr.mxu0 0.0
        %2625 = vmatpush2.xpose.msra.mxu0 0.0
        %2626 = vmatprep.subr.mxu0 0.0
        %2627 = vmatpush2.xpose.msra.mxu0 0.0
        %2628 = vmatprep.subr.mxu0 0.0
        %2629 = vmatpush2.xpose.msra.mxu0 0.0
        %2630 = vmatprep.subr.mxu0 0.0
        %2631 = vmatpush2.xpose.msra.mxu0 0.0
        %2632 = vmatprep.subr.mxu0 0.0
        %2633 = vmatpush2.xpose.msra.mxu0 0.0
        %2634 = vmatprep.subr.mxu0 0.0
        %2635 = vmatpush2.xpose.msra.mxu0 0.0
        %2636 = vmatprep.subr.mxu0 0.0
        %2637 = vmatpush2.xpose.msra.mxu0 0.0
        %2638 = vmatprep.subr.mxu0 0.0
        %2639 = vmatpush2.xpose.msra.mxu0 0.0
        %2640 = vmatprep.subr.mxu0 0.0
        %2641 = vmatpush2.xpose.msra.mxu0 0.0
        %2642 = vmatprep.subr.mxu0 0.0
        %2643 = vmatpush2.xpose.msra.mxu0 0.0
        %2644 = vmatprep.mubr.f32.mxu0 0.0
        %2645 = vmatmul.mubr.f32.gmra.mxu0 %v2575
        %v2646 = vpop.f32.mrf.mxu0
        %v2647 = vadd.f32 0.0, %v2646
        %v2648 = vpop.f32.mrf.mxu0
        %2649 = vdwg.mxu0
        %v2651 = vsel %vm1737, %v1653, 0
        %v2654 = vsel %vm1737, %v990, 0
        %2656 = vmatprep.subr.mxu0 0.0
        %2657 = vmatpush1.xpose.msra.mxu0 0.0
        %2658 = vmatprep.subr.mxu0 0.0
        %2659 = vmatpush1.xpose.msra.mxu0 0.0
        %2660 = vmatprep.subr.mxu0 0.0
        %2661 = vmatpush1.xpose.msra.mxu0 0.0
        %2662 = vmatprep.subr.mxu0 0.0
        %2663 = vmatpush1.xpose.msra.mxu0 0.0
        %2664 = vmatprep.subr.mxu0 0.0
        %2665 = vmatpush1.xpose.msra.mxu0 0.0
        %2666 = vmatprep.subr.mxu0 0.0
        %2667 = vmatpush1.xpose.msra.mxu0 0.0
        %2668 = vmatprep.subr.mxu0 0.0
        %2669 = vmatpush1.xpose.msra.mxu0 0.0
        %2670 = vmatprep.subr.mxu0 0.0
        %2671 = vmatpush1.xpose.msra.mxu0 0.0
        %2672 = vmatprep.subr.mxu0 0.0
        %2673 = vmatpush1.xpose.msra.mxu0 0.0
        %2674 = vmatprep.subr.mxu0 0.0
        %2675 = vmatpush1.xpose.msra.mxu0 0.0
        %2676 = vmatprep.subr.mxu0 0.0
        %2677 = vmatpush1.xpose.msra.mxu0 0.0
        %2678 = vmatprep.subr.mxu0 0.0
        %2679 = vmatpush1.xpose.msra.mxu0 0.0
        %2680 = vmatprep.subr.mxu0 0.0
        %2681 = vmatpush1.xpose.msra.mxu0 0.0
        %2682 = vmatprep.subr.mxu0 0.0
        %2683 = vmatpush1.xpose.msra.mxu0 0.0
        %2684 = vmatprep.subr.mxu0 0.0
        %2685 = vmatpush1.xpose.msra.mxu0 0.0
        %2686 = vmatprep.subr.mxu0 0.0
        %2687 = vmatpush1.xpose.msra.mxu0 %v2654
        %2688 = vmatprep.subr.mxu0 0.0
        %2689 = vmatpush2.xpose.msra.mxu0 0.0
        %2690 = vmatprep.subr.mxu0 0.0
        %2691 = vmatpush2.xpose.msra.mxu0 0.0
        %2692 = vmatprep.subr.mxu0 0.0
        %2693 = vmatpush2.xpose.msra.mxu0 0.0
        %2694 = vmatprep.subr.mxu0 0.0
        %2695 = vmatpush2.xpose.msra.mxu0 0.0
        %2696 = vmatprep.subr.mxu0 0.0
        %2697 = vmatpush2.xpose.msra.mxu0 0.0
        %2698 = vmatprep.subr.mxu0 0.0
        %2699 = vmatpush2.xpose.msra.mxu0 0.0
        %2700 = vmatprep.subr.mxu0 0.0
        %2701 = vmatpush2.xpose.msra.mxu0 0.0
        %2702 = vmatprep.subr.mxu0 0.0
        %2703 = vmatpush2.xpose.msra.mxu0 0.0
        %2704 = vmatprep.subr.mxu0 0.0
        %2705 = vmatpush2.xpose.msra.mxu0 0.0
        %2706 = vmatprep.subr.mxu0 0.0
        %2707 = vmatpush2.xpose.msra.mxu0 0.0
        %2708 = vmatprep.subr.mxu0 0.0
        %2709 = vmatpush2.xpose.msra.mxu0 0.0
        %2710 = vmatprep.subr.mxu0 0.0
        %2711 = vmatpush2.xpose.msra.mxu0 0.0
        %2712 = vmatprep.subr.mxu0 0.0
        %2713 = vmatpush2.xpose.msra.mxu0 0.0
        %2714 = vmatprep.subr.mxu0 0.0
        %2715 = vmatpush2.xpose.msra.mxu0 0.0
        %2716 = vmatprep.subr.mxu0 0.0
        %2717 = vmatpush2.xpose.msra.mxu0 0.0
        %2718 = vmatprep.subr.mxu0 0.0
        %2719 = vmatpush2.xpose.msra.mxu0 0.0
        %2720 = vmatprep.mubr.f32.mxu0 0.0
        %2721 = vmatmul.mubr.f32.gmra.mxu0 %v2651
        %v2722 = vpop.f32.mrf.mxu0
        %v2723 = vadd.f32 0.0, %v2722
        %v2724 = vpop.f32.mrf.mxu0
        %2725 = vdwg.mxu0
        %v2727 = vsel %vm1737, %v1654, 0
        %v2730 = vsel %vm1737, %v991, 0
        %2732 = vmatprep.subr.mxu0 0.0
        %2733 = vmatpush1.xpose.msra.mxu0 0.0
        %2734 = vmatprep.subr.mxu0 0.0
        %2735 = vmatpush1.xpose.msra.mxu0 0.0
        %2736 = vmatprep.subr.mxu0 0.0
        %2737 = vmatpush1.xpose.msra.mxu0 0.0
        %2738 = vmatprep.subr.mxu0 0.0
        %2739 = vmatpush1.xpose.msra.mxu0 0.0
        %2740 = vmatprep.subr.mxu0 0.0
        %2741 = vmatpush1.xpose.msra.mxu0 0.0
        %2742 = vmatprep.subr.mxu0 0.0
        %2743 = vmatpush1.xpose.msra.mxu0 0.0
        %2744 = vmatprep.subr.mxu0 0.0
        %2745 = vmatpush1.xpose.msra.mxu0 0.0
        %2746 = vmatprep.subr.mxu0 0.0
        %2747 = vmatpush1.xpose.msra.mxu0 0.0
        %2748 = vmatprep.subr.mxu0 0.0
        %2749 = vmatpush1.xpose.msra.mxu0 0.0
        %2750 = vmatprep.subr.mxu0 0.0
        %2751 = vmatpush1.xpose.msra.mxu0 0.0
        %2752 = vmatprep.subr.mxu0 0.0
        %2753 = vmatpush1.xpose.msra.mxu0 0.0
        %2754 = vmatprep.subr.mxu0 0.0
        %2755 = vmatpush1.xpose.msra.mxu0 0.0
        %2756 = vmatprep.subr.mxu0 0.0
        %2757 = vmatpush1.xpose.msra.mxu0 0.0
        %2758 = vmatprep.subr.mxu0 0.0
        %2759 = vmatpush1.xpose.msra.mxu0 0.0
        %2760 = vmatprep.subr.mxu0 0.0
        %2761 = vmatpush1.xpose.msra.mxu0 0.0
        %2762 = vmatprep.subr.mxu0 0.0
        %2763 = vmatpush1.xpose.msra.mxu0 %v2730
        %2764 = vmatprep.subr.mxu0 0.0
        %2765 = vmatpush2.xpose.msra.mxu0 0.0
        %2766 = vmatprep.subr.mxu0 0.0
        %2767 = vmatpush2.xpose.msra.mxu0 0.0
        %2768 = vmatprep.subr.mxu0 0.0
        %2769 = vmatpush2.xpose.msra.mxu0 0.0
        %2770 = vmatprep.subr.mxu0 0.0
        %2771 = vmatpush2.xpose.msra.mxu0 0.0
        %2772 = vmatprep.subr.mxu0 0.0
        %2773 = vmatpush2.xpose.msra.mxu0 0.0
        %2774 = vmatprep.subr.mxu0 0.0
        %2775 = vmatpush2.xpose.msra.mxu0 0.0
        %2776 = vmatprep.subr.mxu0 0.0
        %2777 = vmatpush2.xpose.msra.mxu0 0.0
        %2778 = vmatprep.subr.mxu0 0.0
        %2779 = vmatpush2.xpose.msra.mxu0 0.0
        %2780 = vmatprep.subr.mxu0 0.0
        %2781 = vmatpush2.xpose.msra.mxu0 0.0
        %2782 = vmatprep.subr.mxu0 0.0
        %2783 = vmatpush2.xpose.msra.mxu0 0.0
        %2784 = vmatprep.subr.mxu0 0.0
        %2785 = vmatpush2.xpose.msra.mxu0 0.0
        %2786 = vmatprep.subr.mxu0 0.0
        %2787 = vmatpush2.xpose.msra.mxu0 0.0
        %2788 = vmatprep.subr.mxu0 0.0
        %2789 = vmatpush2.xpose.msra.mxu0 0.0
        %2790 = vmatprep.subr.mxu0 0.0
        %2791 = vmatpush2.xpose.msra.mxu0 0.0
        %2792 = vmatprep.subr.mxu0 0.0
        %2793 = vmatpush2.xpose.msra.mxu0 0.0
        %2794 = vmatprep.subr.mxu0 0.0
        %2795 = vmatpush2.xpose.msra.mxu0 0.0
        %2796 = vmatprep.mubr.f32.mxu0 0.0
        %2797 = vmatmul.mubr.f32.gmra.mxu0 %v2727
        %v2798 = vpop.f32.mrf.mxu0
        %v2799 = vadd.f32 0.0, %v2798
        %v2800 = vpop.f32.mrf.mxu0
        %2801 = vdwg.mxu0
        %v2803 = vsel %vm1737, %v1655, 0
        %v2806 = vsel %vm1737, %v992, 0
        %2808 = vmatprep.subr.mxu0 0.0
        %2809 = vmatpush1.xpose.msra.mxu0 0.0
        %2810 = vmatprep.subr.mxu0 0.0
        %2811 = vmatpush1.xpose.msra.mxu0 0.0
        %2812 = vmatprep.subr.mxu0 0.0
        %2813 = vmatpush1.xpose.msra.mxu0 0.0
        %2814 = vmatprep.subr.mxu0 0.0
        %2815 = vmatpush1.xpose.msra.mxu0 0.0
        %2816 = vmatprep.subr.mxu0 0.0
        %2817 = vmatpush1.xpose.msra.mxu0 0.0
        %2818 = vmatprep.subr.mxu0 0.0
        %2819 = vmatpush1.xpose.msra.mxu0 0.0
        %2820 = vmatprep.subr.mxu0 0.0
        %2821 = vmatpush1.xpose.msra.mxu0 0.0
        %2822 = vmatprep.subr.mxu0 0.0
        %2823 = vmatpush1.xpose.msra.mxu0 0.0
        %2824 = vmatprep.subr.mxu0 0.0
        %2825 = vmatpush1.xpose.msra.mxu0 0.0
        %2826 = vmatprep.subr.mxu0 0.0
        %2827 = vmatpush1.xpose.msra.mxu0 0.0
        %2828 = vmatprep.subr.mxu0 0.0
        %2829 = vmatpush1.xpose.msra.mxu0 0.0
        %2830 = vmatprep.subr.mxu0 0.0
        %2831 = vmatpush1.xpose.msra.mxu0 0.0
        %2832 = vmatprep.subr.mxu0 0.0
        %2833 = vmatpush1.xpose.msra.mxu0 0.0
        %2834 = vmatprep.subr.mxu0 0.0
        %2835 = vmatpush1.xpose.msra.mxu0 0.0
        %2836 = vmatprep.subr.mxu0 0.0
        %2837 = vmatpush1.xpose.msra.mxu0 0.0
        %2838 = vmatprep.subr.mxu0 0.0
        %2839 = vmatpush1.xpose.msra.mxu0 %v2806
        %2840 = vmatprep.subr.mxu0 0.0
        %2841 = vmatpush2.xpose.msra.mxu0 0.0
        %2842 = vmatprep.subr.mxu0 0.0
        %2843 = vmatpush2.xpose.msra.mxu0 0.0
        %2844 = vmatprep.subr.mxu0 0.0
        %2845 = vmatpush2.xpose.msra.mxu0 0.0
        %2846 = vmatprep.subr.mxu0 0.0
        %2847 = vmatpush2.xpose.msra.mxu0 0.0
        %2848 = vmatprep.subr.mxu0 0.0
        %2849 = vmatpush2.xpose.msra.mxu0 0.0
        %2850 = vmatprep.subr.mxu0 0.0
        %2851 = vmatpush2.xpose.msra.mxu0 0.0
        %2852 = vmatprep.subr.mxu0 0.0
        %2853 = vmatpush2.xpose.msra.mxu0 0.0
        %2854 = vmatprep.subr.mxu0 0.0
        %2855 = vmatpush2.xpose.msra.mxu0 0.0
        %2856 = vmatprep.subr.mxu0 0.0
        %2857 = vmatpush2.xpose.msra.mxu0 0.0
        %2858 = vmatprep.subr.mxu0 0.0
        %2859 = vmatpush2.xpose.msra.mxu0 0.0
        %2860 = vmatprep.subr.mxu0 0.0
        %2861 = vmatpush2.xpose.msra.mxu0 0.0
        %2862 = vmatprep.subr.mxu0 0.0
        %2863 = vmatpush2.xpose.msra.mxu0 0.0
        %2864 = vmatprep.subr.mxu0 0.0
        %2865 = vmatpush2.xpose.msra.mxu0 0.0
        %2866 = vmatprep.subr.mxu0 0.0
        %2867 = vmatpush2.xpose.msra.mxu0 0.0
        %2868 = vmatprep.subr.mxu0 0.0
        %2869 = vmatpush2.xpose.msra.mxu0 0.0
        %2870 = vmatprep.subr.mxu0 0.0
        %2871 = vmatpush2.xpose.msra.mxu0 0.0
        %2872 = vmatprep.mubr.f32.mxu0 0.0
        %2873 = vmatmul.mubr.f32.gmra.mxu0 %v2803
        %v2874 = vpop.f32.mrf.mxu0
        %v2875 = vadd.f32 0.0, %v2874
        %v2876 = vpop.f32.mrf.mxu0
        %2877 = vdwg.mxu0
        %v2879 = vsel %vm1737, %v1656, 0
        %v2882 = vsel %vm1737, %v993, 0
        %2884 = vmatprep.subr.mxu0 0.0
        %2885 = vmatpush1.xpose.msra.mxu0 0.0
        %2886 = vmatprep.subr.mxu0 0.0
        %2887 = vmatpush1.xpose.msra.mxu0 0.0
        %2888 = vmatprep.subr.mxu0 0.0
        %2889 = vmatpush1.xpose.msra.mxu0 0.0
        %2890 = vmatprep.subr.mxu0 0.0
        %2891 = vmatpush1.xpose.msra.mxu0 0.0
        %2892 = vmatprep.subr.mxu0 0.0
        %2893 = vmatpush1.xpose.msra.mxu0 0.0
        %2894 = vmatprep.subr.mxu0 0.0
        %2895 = vmatpush1.xpose.msra.mxu0 0.0
        %2896 = vmatprep.subr.mxu0 0.0
        %2897 = vmatpush1.xpose.msra.mxu0 0.0
        %2898 = vmatprep.subr.mxu0 0.0
        %2899 = vmatpush1.xpose.msra.mxu0 0.0
        %2900 = vmatprep.subr.mxu0 0.0
        %2901 = vmatpush1.xpose.msra.mxu0 0.0
        %2902 = vmatprep.subr.mxu0 0.0
        %2903 = vmatpush1.xpose.msra.mxu0 0.0
        %2904 = vmatprep.subr.mxu0 0.0
        %2905 = vmatpush1.xpose.msra.mxu0 0.0
        %2906 = vmatprep.subr.mxu0 0.0
        %2907 = vmatpush1.xpose.msra.mxu0 0.0
        %2908 = vmatprep.subr.mxu0 0.0
        %2909 = vmatpush1.xpose.msra.mxu0 0.0
        %2910 = vmatprep.subr.mxu0 0.0
        %2911 = vmatpush1.xpose.msra.mxu0 0.0
        %2912 = vmatprep.subr.mxu0 0.0
        %2913 = vmatpush1.xpose.msra.mxu0 0.0
        %2914 = vmatprep.subr.mxu0 0.0
        %2915 = vmatpush1.xpose.msra.mxu0 %v2882
        %2916 = vmatprep.subr.mxu0 0.0
        %2917 = vmatpush2.xpose.msra.mxu0 0.0
        %2918 = vmatprep.subr.mxu0 0.0
        %2919 = vmatpush2.xpose.msra.mxu0 0.0
        %2920 = vmatprep.subr.mxu0 0.0
        %2921 = vmatpush2.xpose.msra.mxu0 0.0
        %2922 = vmatprep.subr.mxu0 0.0
        %2923 = vmatpush2.xpose.msra.mxu0 0.0
        %2924 = vmatprep.subr.mxu0 0.0
        %2925 = vmatpush2.xpose.msra.mxu0 0.0
        %2926 = vmatprep.subr.mxu0 0.0
        %2927 = vmatpush2.xpose.msra.mxu0 0.0
        %2928 = vmatprep.subr.mxu0 0.0
        %2929 = vmatpush2.xpose.msra.mxu0 0.0
        %2930 = vmatprep.subr.mxu0 0.0
        %2931 = vmatpush2.xpose.msra.mxu0 0.0
        %2932 = vmatprep.subr.mxu0 0.0
        %2933 = vmatpush2.xpose.msra.mxu0 0.0
        %2934 = vmatprep.subr.mxu0 0.0
        %2935 = vmatpush2.xpose.msra.mxu0 0.0
        %2936 = vmatprep.subr.mxu0 0.0
        %2937 = vmatpush2.xpose.msra.mxu0 0.0
        %2938 = vmatprep.subr.mxu0 0.0
        %2939 = vmatpush2.xpose.msra.mxu0 0.0
        %2940 = vmatprep.subr.mxu0 0.0
        %2941 = vmatpush2.xpose.msra.mxu0 0.0
        %2942 = vmatprep.subr.mxu0 0.0
        %2943 = vmatpush2.xpose.msra.mxu0 0.0
        %2944 = vmatprep.subr.mxu0 0.0
        %2945 = vmatpush2.xpose.msra.mxu0 0.0
        %2946 = vmatprep.subr.mxu0 0.0
        %2947 = vmatpush2.xpose.msra.mxu0 0.0
        %2948 = vmatprep.mubr.f32.mxu0 0.0
        %2949 = vmatmul.mubr.f32.gmra.mxu0 %v2879
        %v2950 = vpop.f32.mrf.mxu0
        %v2951 = vadd.f32 0.0, %v2950
        %v2952 = vpop.f32.mrf.mxu0
        %2953 = vdwg.mxu0
        %v2955 = vsel %vm1737, %v1657, 0
        %v2958 = vsel %vm1737, %v994, 0
        %2960 = vmatprep.subr.mxu0 0.0
        %2961 = vmatpush1.xpose.msra.mxu0 0.0
        %2962 = vmatprep.subr.mxu0 0.0
        %2963 = vmatpush1.xpose.msra.mxu0 0.0
        %2964 = vmatprep.subr.mxu0 0.0
        %2965 = vmatpush1.xpose.msra.mxu0 0.0
        %2966 = vmatprep.subr.mxu0 0.0
        %2967 = vmatpush1.xpose.msra.mxu0 0.0
        %2968 = vmatprep.subr.mxu0 0.0
        %2969 = vmatpush1.xpose.msra.mxu0 0.0
        %2970 = vmatprep.subr.mxu0 0.0
        %2971 = vmatpush1.xpose.msra.mxu0 0.0
        %2972 = vmatprep.subr.mxu0 0.0
        %2973 = vmatpush1.xpose.msra.mxu0 0.0
        %2974 = vmatprep.subr.mxu0 0.0
        %2975 = vmatpush1.xpose.msra.mxu0 0.0
        %2976 = vmatprep.subr.mxu0 0.0
        %2977 = vmatpush1.xpose.msra.mxu0 0.0
        %2978 = vmatprep.subr.mxu0 0.0
        %2979 = vmatpush1.xpose.msra.mxu0 0.0
        %2980 = vmatprep.subr.mxu0 0.0
        %2981 = vmatpush1.xpose.msra.mxu0 0.0
        %2982 = vmatprep.subr.mxu0 0.0
        %2983 = vmatpush1.xpose.msra.mxu0 0.0
        %2984 = vmatprep.subr.mxu0 0.0
        %2985 = vmatpush1.xpose.msra.mxu0 0.0
        %2986 = vmatprep.subr.mxu0 0.0
        %2987 = vmatpush1.xpose.msra.mxu0 0.0
        %2988 = vmatprep.subr.mxu0 0.0
        %2989 = vmatpush1.xpose.msra.mxu0 0.0
        %2990 = vmatprep.subr.mxu0 0.0
        %2991 = vmatpush1.xpose.msra.mxu0 %v2958
        %2992 = vmatprep.subr.mxu0 0.0
        %2993 = vmatpush2.xpose.msra.mxu0 0.0
        %2994 = vmatprep.subr.mxu0 0.0
        %2995 = vmatpush2.xpose.msra.mxu0 0.0
        %2996 = vmatprep.subr.mxu0 0.0
        %2997 = vmatpush2.xpose.msra.mxu0 0.0
        %2998 = vmatprep.subr.mxu0 0.0
        %2999 = vmatpush2.xpose.msra.mxu0 0.0
        %3000 = vmatprep.subr.mxu0 0.0
        %3001 = vmatpush2.xpose.msra.mxu0 0.0
        %3002 = vmatprep.subr.mxu0 0.0
        %3003 = vmatpush2.xpose.msra.mxu0 0.0
        %3004 = vmatprep.subr.mxu0 0.0
        %3005 = vmatpush2.xpose.msra.mxu0 0.0
        %3006 = vmatprep.subr.mxu0 0.0
        %3007 = vmatpush2.xpose.msra.mxu0 0.0
        %3008 = vmatprep.subr.mxu0 0.0
        %3009 = vmatpush2.xpose.msra.mxu0 0.0
        %3010 = vmatprep.subr.mxu0 0.0
        %3011 = vmatpush2.xpose.msra.mxu0 0.0
        %3012 = vmatprep.subr.mxu0 0.0
        %3013 = vmatpush2.xpose.msra.mxu0 0.0
        %3014 = vmatprep.subr.mxu0 0.0
        %3015 = vmatpush2.xpose.msra.mxu0 0.0
        %3016 = vmatprep.subr.mxu0 0.0
        %3017 = vmatpush2.xpose.msra.mxu0 0.0
        %3018 = vmatprep.subr.mxu0 0.0
        %3019 = vmatpush2.xpose.msra.mxu0 0.0
        %3020 = vmatprep.subr.mxu0 0.0
        %3021 = vmatpush2.xpose.msra.mxu0 0.0
        %3022 = vmatprep.subr.mxu0 0.0
        %3023 = vmatpush2.xpose.msra.mxu0 0.0
        %3024 = vmatprep.mubr.f32.mxu0 0.0
        %3025 = vmatmul.mubr.f32.gmra.mxu0 %v2955
        %v3026 = vpop.f32.mrf.mxu0
        %v3027 = vadd.f32 0.0, %v3026
        %v3028 = vpop.f32.mrf.mxu0
        %3029 = vdwg.mxu0
        %v3031 = vsel %vm1737, %v1658, 0
        %v3034 = vsel %vm1737, %v995, 0
        %3036 = vmatprep.subr.mxu0 0.0
        %3037 = vmatpush1.xpose.msra.mxu0 0.0
        %3038 = vmatprep.subr.mxu0 0.0
        %3039 = vmatpush1.xpose.msra.mxu0 0.0
        %3040 = vmatprep.subr.mxu0 0.0
        %3041 = vmatpush1.xpose.msra.mxu0 0.0
        %3042 = vmatprep.subr.mxu0 0.0
        %3043 = vmatpush1.xpose.msra.mxu0 0.0
        %3044 = vmatprep.subr.mxu0 0.0
        %3045 = vmatpush1.xpose.msra.mxu0 0.0
        %3046 = vmatprep.subr.mxu0 0.0
        %3047 = vmatpush1.xpose.msra.mxu0 0.0
        %3048 = vmatprep.subr.mxu0 0.0
        %3049 = vmatpush1.xpose.msra.mxu0 0.0
        %3050 = vmatprep.subr.mxu0 0.0
        %3051 = vmatpush1.xpose.msra.mxu0 0.0
        %3052 = vmatprep.subr.mxu0 0.0
        %3053 = vmatpush1.xpose.msra.mxu0 0.0
        %3054 = vmatprep.subr.mxu0 0.0
        %3055 = vmatpush1.xpose.msra.mxu0 0.0
        %3056 = vmatprep.subr.mxu0 0.0
        %3057 = vmatpush1.xpose.msra.mxu0 0.0
        %3058 = vmatprep.subr.mxu0 0.0
        %3059 = vmatpush1.xpose.msra.mxu0 0.0
        %3060 = vmatprep.subr.mxu0 0.0
        %3061 = vmatpush1.xpose.msra.mxu0 0.0
        %3062 = vmatprep.subr.mxu0 0.0
        %3063 = vmatpush1.xpose.msra.mxu0 0.0
        %3064 = vmatprep.subr.mxu0 0.0
        %3065 = vmatpush1.xpose.msra.mxu0 0.0
        %3066 = vmatprep.subr.mxu0 0.0
        %3067 = vmatpush1.xpose.msra.mxu0 %v3034
        %3068 = vmatprep.subr.mxu0 0.0
        %3069 = vmatpush2.xpose.msra.mxu0 0.0
        %3070 = vmatprep.subr.mxu0 0.0
        %3071 = vmatpush2.xpose.msra.mxu0 0.0
        %3072 = vmatprep.subr.mxu0 0.0
        %3073 = vmatpush2.xpose.msra.mxu0 0.0
        %3074 = vmatprep.subr.mxu0 0.0
        %3075 = vmatpush2.xpose.msra.mxu0 0.0
        %3076 = vmatprep.subr.mxu0 0.0
        %3077 = vmatpush2.xpose.msra.mxu0 0.0
        %3078 = vmatprep.subr.mxu0 0.0
        %3079 = vmatpush2.xpose.msra.mxu0 0.0
        %3080 = vmatprep.subr.mxu0 0.0
        %3081 = vmatpush2.xpose.msra.mxu0 0.0
        %3082 = vmatprep.subr.mxu0 0.0
        %3083 = vmatpush2.xpose.msra.mxu0 0.0
        %3084 = vmatprep.subr.mxu0 0.0
        %3085 = vmatpush2.xpose.msra.mxu0 0.0
        %3086 = vmatprep.subr.mxu0 0.0
        %3087 = vmatpush2.xpose.msra.mxu0 0.0
        %3088 = vmatprep.subr.mxu0 0.0
        %3089 = vmatpush2.xpose.msra.mxu0 0.0
        %3090 = vmatprep.subr.mxu0 0.0
        %3091 = vmatpush2.xpose.msra.mxu0 0.0
        %3092 = vmatprep.subr.mxu0 0.0
        %3093 = vmatpush2.xpose.msra.mxu0 0.0
        %3094 = vmatprep.subr.mxu0 0.0
        %3095 = vmatpush2.xpose.msra.mxu0 0.0
        %3096 = vmatprep.subr.mxu0 0.0
        %3097 = vmatpush2.xpose.msra.mxu0 0.0
        %3098 = vmatprep.subr.mxu0 0.0
        %3099 = vmatpush2.xpose.msra.mxu0 0.0
        %3100 = vmatprep.mubr.f32.mxu0 0.0
        %3101 = vmatmul.mubr.f32.gmra.mxu0 %v3031
        %v3102 = vpop.f32.mrf.mxu0
        %v3103 = vadd.f32 0.0, %v3102
        %v3104 = vpop.f32.mrf.mxu0
        %3105 = vdwg.mxu0
        %v3107 = vsel %vm1737, %v1659, 0
        %v3110 = vsel %vm1737, %v996, 0
        %3112 = vmatprep.subr.mxu0 0.0
        %3113 = vmatpush1.xpose.msra.mxu0 0.0
        %3114 = vmatprep.subr.mxu0 0.0
        %3115 = vmatpush1.xpose.msra.mxu0 0.0
        %3116 = vmatprep.subr.mxu0 0.0
        %3117 = vmatpush1.xpose.msra.mxu0 0.0
        %3118 = vmatprep.subr.mxu0 0.0
        %3119 = vmatpush1.xpose.msra.mxu0 0.0
        %3120 = vmatprep.subr.mxu0 0.0
        %3121 = vmatpush1.xpose.msra.mxu0 0.0
        %3122 = vmatprep.subr.mxu0 0.0
        %3123 = vmatpush1.xpose.msra.mxu0 0.0
        %3124 = vmatprep.subr.mxu0 0.0
        %3125 = vmatpush1.xpose.msra.mxu0 0.0
        %3126 = vmatprep.subr.mxu0 0.0
        %3127 = vmatpush1.xpose.msra.mxu0 0.0
        %3128 = vmatprep.subr.mxu0 0.0
        %3129 = vmatpush1.xpose.msra.mxu0 0.0
        %3130 = vmatprep.subr.mxu0 0.0
        %3131 = vmatpush1.xpose.msra.mxu0 0.0
        %3132 = vmatprep.subr.mxu0 0.0
        %3133 = vmatpush1.xpose.msra.mxu0 0.0
        %3134 = vmatprep.subr.mxu0 0.0
        %3135 = vmatpush1.xpose.msra.mxu0 0.0
        %3136 = vmatprep.subr.mxu0 0.0
        %3137 = vmatpush1.xpose.msra.mxu0 0.0
        %3138 = vmatprep.subr.mxu0 0.0
        %3139 = vmatpush1.xpose.msra.mxu0 0.0
        %3140 = vmatprep.subr.mxu0 0.0
        %3141 = vmatpush1.xpose.msra.mxu0 0.0
        %3142 = vmatprep.subr.mxu0 0.0
        %3143 = vmatpush1.xpose.msra.mxu0 %v3110
        %3144 = vmatprep.subr.mxu0 0.0
        %3145 = vmatpush2.xpose.msra.mxu0 0.0
        %3146 = vmatprep.subr.mxu0 0.0
        %3147 = vmatpush2.xpose.msra.mxu0 0.0
        %3148 = vmatprep.subr.mxu0 0.0
        %3149 = vmatpush2.xpose.msra.mxu0 0.0
        %3150 = vmatprep.subr.mxu0 0.0
        %3151 = vmatpush2.xpose.msra.mxu0 0.0
        %3152 = vmatprep.subr.mxu0 0.0
        %3153 = vmatpush2.xpose.msra.mxu0 0.0
        %3154 = vmatprep.subr.mxu0 0.0
        %3155 = vmatpush2.xpose.msra.mxu0 0.0
        %3156 = vmatprep.subr.mxu0 0.0
        %3157 = vmatpush2.xpose.msra.mxu0 0.0
        %3158 = vmatprep.subr.mxu0 0.0
        %3159 = vmatpush2.xpose.msra.mxu0 0.0
        %3160 = vmatprep.subr.mxu0 0.0
        %3161 = vmatpush2.xpose.msra.mxu0 0.0
        %3162 = vmatprep.subr.mxu0 0.0
        %3163 = vmatpush2.xpose.msra.mxu0 0.0
        %3164 = vmatprep.subr.mxu0 0.0
        %3165 = vmatpush2.xpose.msra.mxu0 0.0
        %3166 = vmatprep.subr.mxu0 0.0
        %3167 = vmatpush2.xpose.msra.mxu0 0.0
        %3168 = vmatprep.subr.mxu0 0.0
        %3169 = vmatpush2.xpose.msra.mxu0 0.0
        %3170 = vmatprep.subr.mxu0 0.0
        %3171 = vmatpush2.xpose.msra.mxu0 0.0
        %3172 = vmatprep.subr.mxu0 0.0
        %3173 = vmatpush2.xpose.msra.mxu0 0.0
        %3174 = vmatprep.subr.mxu0 0.0
        %3175 = vmatpush2.xpose.msra.mxu0 0.0
        %3176 = vmatprep.mubr.f32.mxu0 0.0
        %3177 = vmatmul.mubr.f32.gmra.mxu0 %v3107
        %v3178 = vpop.f32.mrf.mxu0
        %v3179 = vadd.f32 0.0, %v3178
        %v3180 = vpop.f32.mrf.mxu0
        %3181 = vdwg.mxu0
        %v3183 = vsel %vm1737, %v1660, 0
        %v3186 = vsel %vm1737, %v997, 0
        %3188 = vmatprep.subr.mxu0 0.0
        %3189 = vmatpush1.xpose.msra.mxu0 0.0
        %3190 = vmatprep.subr.mxu0 0.0
        %3191 = vmatpush1.xpose.msra.mxu0 0.0
        %3192 = vmatprep.subr.mxu0 0.0
        %3193 = vmatpush1.xpose.msra.mxu0 0.0
        %3194 = vmatprep.subr.mxu0 0.0
        %3195 = vmatpush1.xpose.msra.mxu0 0.0
        %3196 = vmatprep.subr.mxu0 0.0
        %3197 = vmatpush1.xpose.msra.mxu0 0.0
        %3198 = vmatprep.subr.mxu0 0.0
        %3199 = vmatpush1.xpose.msra.mxu0 0.0
        %3200 = vmatprep.subr.mxu0 0.0
        %3201 = vmatpush1.xpose.msra.mxu0 0.0
        %3202 = vmatprep.subr.mxu0 0.0
        %3203 = vmatpush1.xpose.msra.mxu0 0.0
        %3204 = vmatprep.subr.mxu0 0.0
        %3205 = vmatpush1.xpose.msra.mxu0 0.0
        %3206 = vmatprep.subr.mxu0 0.0
        %3207 = vmatpush1.xpose.msra.mxu0 0.0
        %3208 = vmatprep.subr.mxu0 0.0
        %3209 = vmatpush1.xpose.msra.mxu0 0.0
        %3210 = vmatprep.subr.mxu0 0.0
        %3211 = vmatpush1.xpose.msra.mxu0 0.0
        %3212 = vmatprep.subr.mxu0 0.0
        %3213 = vmatpush1.xpose.msra.mxu0 0.0
        %3214 = vmatprep.subr.mxu0 0.0
        %3215 = vmatpush1.xpose.msra.mxu0 0.0
        %3216 = vmatprep.subr.mxu0 0.0
        %3217 = vmatpush1.xpose.msra.mxu0 0.0
        %3218 = vmatprep.subr.mxu0 0.0
        %3219 = vmatpush1.xpose.msra.mxu0 %v3186
        %3220 = vmatprep.subr.mxu0 0.0
        %3221 = vmatpush2.xpose.msra.mxu0 0.0
        %3222 = vmatprep.subr.mxu0 0.0
        %3223 = vmatpush2.xpose.msra.mxu0 0.0
        %3224 = vmatprep.subr.mxu0 0.0
        %3225 = vmatpush2.xpose.msra.mxu0 0.0
        %3226 = vmatprep.subr.mxu0 0.0
        %3227 = vmatpush2.xpose.msra.mxu0 0.0
        %3228 = vmatprep.subr.mxu0 0.0
        %3229 = vmatpush2.xpose.msra.mxu0 0.0
        %3230 = vmatprep.subr.mxu0 0.0
        %3231 = vmatpush2.xpose.msra.mxu0 0.0
        %3232 = vmatprep.subr.mxu0 0.0
        %3233 = vmatpush2.xpose.msra.mxu0 0.0
        %3234 = vmatprep.subr.mxu0 0.0
        %3235 = vmatpush2.xpose.msra.mxu0 0.0
        %3236 = vmatprep.subr.mxu0 0.0
        %3237 = vmatpush2.xpose.msra.mxu0 0.0
        %3238 = vmatprep.subr.mxu0 0.0
        %3239 = vmatpush2.xpose.msra.mxu0 0.0
        %3240 = vmatprep.subr.mxu0 0.0
        %3241 = vmatpush2.xpose.msra.mxu0 0.0
        %3242 = vmatprep.subr.mxu0 0.0
        %3243 = vmatpush2.xpose.msra.mxu0 0.0
        %3244 = vmatprep.subr.mxu0 0.0
        %3245 = vmatpush2.xpose.msra.mxu0 0.0
        %3246 = vmatprep.subr.mxu0 0.0
        %3247 = vmatpush2.xpose.msra.mxu0 0.0
        %3248 = vmatprep.subr.mxu0 0.0
        %3249 = vmatpush2.xpose.msra.mxu0 0.0
        %3250 = vmatprep.subr.mxu0 0.0
        %3251 = vmatpush2.xpose.msra.mxu0 0.0
        %3252 = vmatprep.mubr.f32.mxu0 0.0
        %3253 = vmatmul.mubr.f32.gmra.mxu0 %v3183
        %v3254 = vpop.f32.mrf.mxu0
        %v3255 = vadd.f32 0.0, %v3254
        %v3256 = vpop.f32.mrf.mxu0
        %3257 = vdwg.mxu0
        %v3259 = vsel %vm1737, %v1661, 0
        %v3262 = vsel %vm1737, %v998, 0
        %3264 = vmatprep.subr.mxu0 0.0
        %3265 = vmatpush1.xpose.msra.mxu0 0.0
        %3266 = vmatprep.subr.mxu0 0.0
        %3267 = vmatpush1.xpose.msra.mxu0 0.0
        %3268 = vmatprep.subr.mxu0 0.0
        %3269 = vmatpush1.xpose.msra.mxu0 0.0
        %3270 = vmatprep.subr.mxu0 0.0
        %3271 = vmatpush1.xpose.msra.mxu0 0.0
        %3272 = vmatprep.subr.mxu0 0.0
        %3273 = vmatpush1.xpose.msra.mxu0 0.0
        %3274 = vmatprep.subr.mxu0 0.0
        %3275 = vmatpush1.xpose.msra.mxu0 0.0
        %3276 = vmatprep.subr.mxu0 0.0
        %3277 = vmatpush1.xpose.msra.mxu0 0.0
        %3278 = vmatprep.subr.mxu0 0.0
        %3279 = vmatpush1.xpose.msra.mxu0 0.0
        %3280 = vmatprep.subr.mxu0 0.0
        %3281 = vmatpush1.xpose.msra.mxu0 0.0
        %3282 = vmatprep.subr.mxu0 0.0
        %3283 = vmatpush1.xpose.msra.mxu0 0.0
        %3284 = vmatprep.subr.mxu0 0.0
        %3285 = vmatpush1.xpose.msra.mxu0 0.0
        %3286 = vmatprep.subr.mxu0 0.0
        %3287 = vmatpush1.xpose.msra.mxu0 0.0
        %3288 = vmatprep.subr.mxu0 0.0
        %3289 = vmatpush1.xpose.msra.mxu0 0.0
        %3290 = vmatprep.subr.mxu0 0.0
        %3291 = vmatpush1.xpose.msra.mxu0 0.0
        %3292 = vmatprep.subr.mxu0 0.0
        %3293 = vmatpush1.xpose.msra.mxu0 0.0
        %3294 = vmatprep.subr.mxu0 0.0
        %3295 = vmatpush1.xpose.msra.mxu0 %v3262
        %3296 = vmatprep.subr.mxu0 0.0
        %3297 = vmatpush2.xpose.msra.mxu0 0.0
        %3298 = vmatprep.subr.mxu0 0.0
        %3299 = vmatpush2.xpose.msra.mxu0 0.0
        %3300 = vmatprep.subr.mxu0 0.0
        %3301 = vmatpush2.xpose.msra.mxu0 0.0
        %3302 = vmatprep.subr.mxu0 0.0
        %3303 = vmatpush2.xpose.msra.mxu0 0.0
        %3304 = vmatprep.subr.mxu0 0.0
        %3305 = vmatpush2.xpose.msra.mxu0 0.0
        %3306 = vmatprep.subr.mxu0 0.0
        %3307 = vmatpush2.xpose.msra.mxu0 0.0
        %3308 = vmatprep.subr.mxu0 0.0
        %3309 = vmatpush2.xpose.msra.mxu0 0.0
        %3310 = vmatprep.subr.mxu0 0.0
        %3311 = vmatpush2.xpose.msra.mxu0 0.0
        %3312 = vmatprep.subr.mxu0 0.0
        %3313 = vmatpush2.xpose.msra.mxu0 0.0
        %3314 = vmatprep.subr.mxu0 0.0
        %3315 = vmatpush2.xpose.msra.mxu0 0.0
        %3316 = vmatprep.subr.mxu0 0.0
        %3317 = vmatpush2.xpose.msra.mxu0 0.0
        %3318 = vmatprep.subr.mxu0 0.0
        %3319 = vmatpush2.xpose.msra.mxu0 0.0
        %3320 = vmatprep.subr.mxu0 0.0
        %3321 = vmatpush2.xpose.msra.mxu0 0.0
        %3322 = vmatprep.subr.mxu0 0.0
        %3323 = vmatpush2.xpose.msra.mxu0 0.0
        %3324 = vmatprep.subr.mxu0 0.0
        %3325 = vmatpush2.xpose.msra.mxu0 0.0
        %3326 = vmatprep.subr.mxu0 0.0
        %3327 = vmatpush2.xpose.msra.mxu0 0.0
        %3328 = vmatprep.mubr.f32.mxu0 0.0
        %3329 = vmatmul.mubr.f32.gmra.mxu0 %v3259
        %v3330 = vpop.f32.mrf.mxu0
        %v3331 = vadd.f32 0.0, %v3330
        %v3332 = vpop.f32.mrf.mxu0
        %3333 = vdwg.mxu0
        %v3335 = vsel %vm1737, %v1662, 0
        %v3338 = vsel %vm1737, %v999, 0
        %3340 = vmatprep.subr.mxu0 0.0
        %3341 = vmatpush1.xpose.msra.mxu0 0.0
        %3342 = vmatprep.subr.mxu0 0.0
        %3343 = vmatpush1.xpose.msra.mxu0 0.0
        %3344 = vmatprep.subr.mxu0 0.0
        %3345 = vmatpush1.xpose.msra.mxu0 0.0
        %3346 = vmatprep.subr.mxu0 0.0
        %3347 = vmatpush1.xpose.msra.mxu0 0.0
        %3348 = vmatprep.subr.mxu0 0.0
        %3349 = vmatpush1.xpose.msra.mxu0 0.0
        %3350 = vmatprep.subr.mxu0 0.0
        %3351 = vmatpush1.xpose.msra.mxu0 0.0
        %3352 = vmatprep.subr.mxu0 0.0
        %3353 = vmatpush1.xpose.msra.mxu0 0.0
        %3354 = vmatprep.subr.mxu0 0.0
        %3355 = vmatpush1.xpose.msra.mxu0 0.0
        %3356 = vmatprep.subr.mxu0 0.0
        %3357 = vmatpush1.xpose.msra.mxu0 0.0
        %3358 = vmatprep.subr.mxu0 0.0
        %3359 = vmatpush1.xpose.msra.mxu0 0.0
        %3360 = vmatprep.subr.mxu0 0.0
        %3361 = vmatpush1.xpose.msra.mxu0 0.0
        %3362 = vmatprep.subr.mxu0 0.0
        %3363 = vmatpush1.xpose.msra.mxu0 0.0
        %3364 = vmatprep.subr.mxu0 0.0
        %3365 = vmatpush1.xpose.msra.mxu0 0.0
        %3366 = vmatprep.subr.mxu0 0.0
        %3367 = vmatpush1.xpose.msra.mxu0 0.0
        %3368 = vmatprep.subr.mxu0 0.0
        %3369 = vmatpush1.xpose.msra.mxu0 0.0
        %3370 = vmatprep.subr.mxu0 0.0
        %3371 = vmatpush1.xpose.msra.mxu0 %v3338
        %3372 = vmatprep.subr.mxu0 0.0
        %3373 = vmatpush2.xpose.msra.mxu0 0.0
        %3374 = vmatprep.subr.mxu0 0.0
        %3375 = vmatpush2.xpose.msra.mxu0 0.0
        %3376 = vmatprep.subr.mxu0 0.0
        %3377 = vmatpush2.xpose.msra.mxu0 0.0
        %3378 = vmatprep.subr.mxu0 0.0
        %3379 = vmatpush2.xpose.msra.mxu0 0.0
        %3380 = vmatprep.subr.mxu0 0.0
        %3381 = vmatpush2.xpose.msra.mxu0 0.0
        %3382 = vmatprep.subr.mxu0 0.0
        %3383 = vmatpush2.xpose.msra.mxu0 0.0
        %3384 = vmatprep.subr.mxu0 0.0
        %3385 = vmatpush2.xpose.msra.mxu0 0.0
        %3386 = vmatprep.subr.mxu0 0.0
        %3387 = vmatpush2.xpose.msra.mxu0 0.0
        %3388 = vmatprep.subr.mxu0 0.0
        %3389 = vmatpush2.xpose.msra.mxu0 0.0
        %3390 = vmatprep.subr.mxu0 0.0
        %3391 = vmatpush2.xpose.msra.mxu0 0.0
        %3392 = vmatprep.subr.mxu0 0.0
        %3393 = vmatpush2.xpose.msra.mxu0 0.0
        %3394 = vmatprep.subr.mxu0 0.0
        %3395 = vmatpush2.xpose.msra.mxu0 0.0
        %3396 = vmatprep.subr.mxu0 0.0
        %3397 = vmatpush2.xpose.msra.mxu0 0.0
        %3398 = vmatprep.subr.mxu0 0.0
        %3399 = vmatpush2.xpose.msra.mxu0 0.0
        %3400 = vmatprep.subr.mxu0 0.0
        %3401 = vmatpush2.xpose.msra.mxu0 0.0
        %3402 = vmatprep.subr.mxu0 0.0
        %3403 = vmatpush2.xpose.msra.mxu0 0.0
        %3404 = vmatprep.mubr.f32.mxu0 0.0
        %3405 = vmatmul.mubr.f32.gmra.mxu0 %v3335
        %v3406 = vpop.f32.mrf.mxu0
        %v3407 = vadd.f32 0.0, %v3406
        %v3408 = vpop.f32.mrf.mxu0
        %3409 = vdwg.mxu0
        %v3411 = vsel %vm1737, %v1663, 0
        %v3414 = vsel %vm1737, %v1000, 0
        %3416 = vmatprep.subr.mxu0 0.0
        %3417 = vmatpush1.xpose.msra.mxu0 0.0
        %3418 = vmatprep.subr.mxu0 0.0
        %3419 = vmatpush1.xpose.msra.mxu0 0.0
        %3420 = vmatprep.subr.mxu0 0.0
        %3421 = vmatpush1.xpose.msra.mxu0 0.0
        %3422 = vmatprep.subr.mxu0 0.0
        %3423 = vmatpush1.xpose.msra.mxu0 0.0
        %3424 = vmatprep.subr.mxu0 0.0
        %3425 = vmatpush1.xpose.msra.mxu0 0.0
        %3426 = vmatprep.subr.mxu0 0.0
        %3427 = vmatpush1.xpose.msra.mxu0 0.0
        %3428 = vmatprep.subr.mxu0 0.0
        %3429 = vmatpush1.xpose.msra.mxu0 0.0
        %3430 = vmatprep.subr.mxu0 0.0
        %3431 = vmatpush1.xpose.msra.mxu0 0.0
        %3432 = vmatprep.subr.mxu0 0.0
        %3433 = vmatpush1.xpose.msra.mxu0 0.0
        %3434 = vmatprep.subr.mxu0 0.0
        %3435 = vmatpush1.xpose.msra.mxu0 0.0
        %3436 = vmatprep.subr.mxu0 0.0
        %3437 = vmatpush1.xpose.msra.mxu0 0.0
        %3438 = vmatprep.subr.mxu0 0.0
        %3439 = vmatpush1.xpose.msra.mxu0 0.0
        %3440 = vmatprep.subr.mxu0 0.0
        %3441 = vmatpush1.xpose.msra.mxu0 0.0
        %3442 = vmatprep.subr.mxu0 0.0
        %3443 = vmatpush1.xpose.msra.mxu0 0.0
        %3444 = vmatprep.subr.mxu0 0.0
        %3445 = vmatpush1.xpose.msra.mxu0 0.0
        %3446 = vmatprep.subr.mxu0 0.0
        %3447 = vmatpush1.xpose.msra.mxu0 %v3414
        %3448 = vmatprep.subr.mxu0 0.0
        %3449 = vmatpush2.xpose.msra.mxu0 0.0
        %3450 = vmatprep.subr.mxu0 0.0
        %3451 = vmatpush2.xpose.msra.mxu0 0.0
        %3452 = vmatprep.subr.mxu0 0.0
        %3453 = vmatpush2.xpose.msra.mxu0 0.0
        %3454 = vmatprep.subr.mxu0 0.0
        %3455 = vmatpush2.xpose.msra.mxu0 0.0
        %3456 = vmatprep.subr.mxu0 0.0
        %3457 = vmatpush2.xpose.msra.mxu0 0.0
        %3458 = vmatprep.subr.mxu0 0.0
        %3459 = vmatpush2.xpose.msra.mxu0 0.0
        %3460 = vmatprep.subr.mxu0 0.0
        %3461 = vmatpush2.xpose.msra.mxu0 0.0
        %3462 = vmatprep.subr.mxu0 0.0
        %3463 = vmatpush2.xpose.msra.mxu0 0.0
        %3464 = vmatprep.subr.mxu0 0.0
        %3465 = vmatpush2.xpose.msra.mxu0 0.0
        %3466 = vmatprep.subr.mxu0 0.0
        %3467 = vmatpush2.xpose.msra.mxu0 0.0
        %3468 = vmatprep.subr.mxu0 0.0
        %3469 = vmatpush2.xpose.msra.mxu0 0.0
        %3470 = vmatprep.subr.mxu0 0.0
        %3471 = vmatpush2.xpose.msra.mxu0 0.0
        %3472 = vmatprep.subr.mxu0 0.0
        %3473 = vmatpush2.xpose.msra.mxu0 0.0
        %3474 = vmatprep.subr.mxu0 0.0
        %3475 = vmatpush2.xpose.msra.mxu0 0.0
        %3476 = vmatprep.subr.mxu0 0.0
        %3477 = vmatpush2.xpose.msra.mxu0 0.0
        %3478 = vmatprep.subr.mxu0 0.0
        %3479 = vmatpush2.xpose.msra.mxu0 0.0
        %3480 = vmatprep.mubr.f32.mxu0 0.0
        %3481 = vmatmul.mubr.f32.gmra.mxu0 %v3411
        %v3482 = vpop.f32.mrf.mxu0
        %v3483 = vadd.f32 0.0, %v3482
        %v3484 = vpop.f32.mrf.mxu0
        %3485 = vdwg.mxu0
        %v3487 = vsel %vm1737, %v1664, 0
        %v3490 = vsel %vm1737, %v1001, 0
        %3492 = vmatprep.subr.mxu0 0.0
        %3493 = vmatpush1.xpose.msra.mxu0 0.0
        %3494 = vmatprep.subr.mxu0 0.0
        %3495 = vmatpush1.xpose.msra.mxu0 0.0
        %3496 = vmatprep.subr.mxu0 0.0
        %3497 = vmatpush1.xpose.msra.mxu0 0.0
        %3498 = vmatprep.subr.mxu0 0.0
        %3499 = vmatpush1.xpose.msra.mxu0 0.0
        %3500 = vmatprep.subr.mxu0 0.0
        %3501 = vmatpush1.xpose.msra.mxu0 0.0
        %3502 = vmatprep.subr.mxu0 0.0
        %3503 = vmatpush1.xpose.msra.mxu0 0.0
        %3504 = vmatprep.subr.mxu0 0.0
        %3505 = vmatpush1.xpose.msra.mxu0 0.0
        %3506 = vmatprep.subr.mxu0 0.0
        %3507 = vmatpush1.xpose.msra.mxu0 0.0
        %3508 = vmatprep.subr.mxu0 0.0
        %3509 = vmatpush1.xpose.msra.mxu0 0.0
        %3510 = vmatprep.subr.mxu0 0.0
        %3511 = vmatpush1.xpose.msra.mxu0 0.0
        %3512 = vmatprep.subr.mxu0 0.0
        %3513 = vmatpush1.xpose.msra.mxu0 0.0
        %3514 = vmatprep.subr.mxu0 0.0
        %3515 = vmatpush1.xpose.msra.mxu0 0.0
        %3516 = vmatprep.subr.mxu0 0.0
        %3517 = vmatpush1.xpose.msra.mxu0 0.0
        %3518 = vmatprep.subr.mxu0 0.0
        %3519 = vmatpush1.xpose.msra.mxu0 0.0
        %3520 = vmatprep.subr.mxu0 0.0
        %3521 = vmatpush1.xpose.msra.mxu0 0.0
        %3522 = vmatprep.subr.mxu0 0.0
        %3523 = vmatpush1.xpose.msra.mxu0 %v3490
        %3524 = vmatprep.subr.mxu0 0.0
        %3525 = vmatpush2.xpose.msra.mxu0 0.0
        %3526 = vmatprep.subr.mxu0 0.0
        %3527 = vmatpush2.xpose.msra.mxu0 0.0
        %3528 = vmatprep.subr.mxu0 0.0
        %3529 = vmatpush2.xpose.msra.mxu0 0.0
        %3530 = vmatprep.subr.mxu0 0.0
        %3531 = vmatpush2.xpose.msra.mxu0 0.0
        %3532 = vmatprep.subr.mxu0 0.0
        %3533 = vmatpush2.xpose.msra.mxu0 0.0
        %3534 = vmatprep.subr.mxu0 0.0
        %3535 = vmatpush2.xpose.msra.mxu0 0.0
        %3536 = vmatprep.subr.mxu0 0.0
        %3537 = vmatpush2.xpose.msra.mxu0 0.0
        %3538 = vmatprep.subr.mxu0 0.0
        %3539 = vmatpush2.xpose.msra.mxu0 0.0
        %3540 = vmatprep.subr.mxu0 0.0
        %3541 = vmatpush2.xpose.msra.mxu0 0.0
        %3542 = vmatprep.subr.mxu0 0.0
        %3543 = vmatpush2.xpose.msra.mxu0 0.0
        %3544 = vmatprep.subr.mxu0 0.0
        %3545 = vmatpush2.xpose.msra.mxu0 0.0
        %3546 = vmatprep.subr.mxu0 0.0
        %3547 = vmatpush2.xpose.msra.mxu0 0.0
        %3548 = vmatprep.subr.mxu0 0.0
        %3549 = vmatpush2.xpose.msra.mxu0 0.0
        %3550 = vmatprep.subr.mxu0 0.0
        %3551 = vmatpush2.xpose.msra.mxu0 0.0
        %3552 = vmatprep.subr.mxu0 0.0
        %3553 = vmatpush2.xpose.msra.mxu0 0.0
        %3554 = vmatprep.subr.mxu0 0.0
        %3555 = vmatpush2.xpose.msra.mxu0 0.0
        %3556 = vmatprep.mubr.f32.mxu0 0.0
        %3557 = vmatmul.mubr.f32.gmra.mxu0 %v3487
        %v3558 = vpop.f32.mrf.mxu0
        %v3559 = vadd.f32 0.0, %v3558
        %v3560 = vpop.f32.mrf.mxu0
        %3561 = vdwg.mxu0
        %v3563 = vsel %vm1737, %v1665, 0
        %v3566 = vsel %vm1737, %v1002, 0
        %3568 = vmatprep.subr.mxu0 0.0
        %3569 = vmatpush1.xpose.msra.mxu0 0.0
        %3570 = vmatprep.subr.mxu0 0.0
        %3571 = vmatpush1.xpose.msra.mxu0 0.0
        %3572 = vmatprep.subr.mxu0 0.0
        %3573 = vmatpush1.xpose.msra.mxu0 0.0
        %3574 = vmatprep.subr.mxu0 0.0
        %3575 = vmatpush1.xpose.msra.mxu0 0.0
        %3576 = vmatprep.subr.mxu0 0.0
        %3577 = vmatpush1.xpose.msra.mxu0 0.0
        %3578 = vmatprep.subr.mxu0 0.0
        %3579 = vmatpush1.xpose.msra.mxu0 0.0
        %3580 = vmatprep.subr.mxu0 0.0
        %3581 = vmatpush1.xpose.msra.mxu0 0.0
        %3582 = vmatprep.subr.mxu0 0.0
        %3583 = vmatpush1.xpose.msra.mxu0 0.0
        %3584 = vmatprep.subr.mxu0 0.0
        %3585 = vmatpush1.xpose.msra.mxu0 0.0
        %3586 = vmatprep.subr.mxu0 0.0
        %3587 = vmatpush1.xpose.msra.mxu0 0.0
        %3588 = vmatprep.subr.mxu0 0.0
        %3589 = vmatpush1.xpose.msra.mxu0 0.0
        %3590 = vmatprep.subr.mxu0 0.0
        %3591 = vmatpush1.xpose.msra.mxu0 0.0
        %3592 = vmatprep.subr.mxu0 0.0
        %3593 = vmatpush1.xpose.msra.mxu0 0.0
        %3594 = vmatprep.subr.mxu0 0.0
        %3595 = vmatpush1.xpose.msra.mxu0 0.0
        %3596 = vmatprep.subr.mxu0 0.0
        %3597 = vmatpush1.xpose.msra.mxu0 0.0
        %3598 = vmatprep.subr.mxu0 0.0
        %3599 = vmatpush1.xpose.msra.mxu0 %v3566
        %3600 = vmatprep.subr.mxu0 0.0
        %3601 = vmatpush2.xpose.msra.mxu0 0.0
        %3602 = vmatprep.subr.mxu0 0.0
        %3603 = vmatpush2.xpose.msra.mxu0 0.0
        %3604 = vmatprep.subr.mxu0 0.0
        %3605 = vmatpush2.xpose.msra.mxu0 0.0
        %3606 = vmatprep.subr.mxu0 0.0
        %3607 = vmatpush2.xpose.msra.mxu0 0.0
        %3608 = vmatprep.subr.mxu0 0.0
        %3609 = vmatpush2.xpose.msra.mxu0 0.0
        %3610 = vmatprep.subr.mxu0 0.0
        %3611 = vmatpush2.xpose.msra.mxu0 0.0
        %3612 = vmatprep.subr.mxu0 0.0
        %3613 = vmatpush2.xpose.msra.mxu0 0.0
        %3614 = vmatprep.subr.mxu0 0.0
        %3615 = vmatpush2.xpose.msra.mxu0 0.0
        %3616 = vmatprep.subr.mxu0 0.0
        %3617 = vmatpush2.xpose.msra.mxu0 0.0
        %3618 = vmatprep.subr.mxu0 0.0
        %3619 = vmatpush2.xpose.msra.mxu0 0.0
        %3620 = vmatprep.subr.mxu0 0.0
        %3621 = vmatpush2.xpose.msra.mxu0 0.0
        %3622 = vmatprep.subr.mxu0 0.0
        %3623 = vmatpush2.xpose.msra.mxu0 0.0
        %3624 = vmatprep.subr.mxu0 0.0
        %3625 = vmatpush2.xpose.msra.mxu0 0.0
        %3626 = vmatprep.subr.mxu0 0.0
        %3627 = vmatpush2.xpose.msra.mxu0 0.0
        %3628 = vmatprep.subr.mxu0 0.0
        %3629 = vmatpush2.xpose.msra.mxu0 0.0
        %3630 = vmatprep.subr.mxu0 0.0
        %3631 = vmatpush2.xpose.msra.mxu0 0.0
        %3632 = vmatprep.mubr.f32.mxu0 0.0
        %3633 = vmatmul.mubr.f32.gmra.mxu0 %v3563
        %v3634 = vpop.f32.mrf.mxu0
        %v3635 = vadd.f32 0.0, %v3634
        %v3636 = vpop.f32.mrf.mxu0
        %3637 = vdwg.mxu0
        %v3639 = vsel %vm1737, %v1666, 0
        %v3642 = vsel %vm1737, %v1003, 0
        %3644 = vmatprep.subr.mxu0 0.0
        %3645 = vmatpush1.xpose.msra.mxu0 0.0
        %3646 = vmatprep.subr.mxu0 0.0
        %3647 = vmatpush1.xpose.msra.mxu0 0.0
        %3648 = vmatprep.subr.mxu0 0.0
        %3649 = vmatpush1.xpose.msra.mxu0 0.0
        %3650 = vmatprep.subr.mxu0 0.0
        %3651 = vmatpush1.xpose.msra.mxu0 0.0
        %3652 = vmatprep.subr.mxu0 0.0
        %3653 = vmatpush1.xpose.msra.mxu0 0.0
        %3654 = vmatprep.subr.mxu0 0.0
        %3655 = vmatpush1.xpose.msra.mxu0 0.0
        %3656 = vmatprep.subr.mxu0 0.0
        %3657 = vmatpush1.xpose.msra.mxu0 0.0
        %3658 = vmatprep.subr.mxu0 0.0
        %3659 = vmatpush1.xpose.msra.mxu0 0.0
        %3660 = vmatprep.subr.mxu0 0.0
        %3661 = vmatpush1.xpose.msra.mxu0 0.0
        %3662 = vmatprep.subr.mxu0 0.0
        %3663 = vmatpush1.xpose.msra.mxu0 0.0
        %3664 = vmatprep.subr.mxu0 0.0
        %3665 = vmatpush1.xpose.msra.mxu0 0.0
        %3666 = vmatprep.subr.mxu0 0.0
        %3667 = vmatpush1.xpose.msra.mxu0 0.0
        %3668 = vmatprep.subr.mxu0 0.0
        %3669 = vmatpush1.xpose.msra.mxu0 0.0
        %3670 = vmatprep.subr.mxu0 0.0
        %3671 = vmatpush1.xpose.msra.mxu0 0.0
        %3672 = vmatprep.subr.mxu0 0.0
        %3673 = vmatpush1.xpose.msra.mxu0 0.0
        %3674 = vmatprep.subr.mxu0 0.0
        %3675 = vmatpush1.xpose.msra.mxu0 %v3642
        %3676 = vmatprep.subr.mxu0 0.0
        %3677 = vmatpush2.xpose.msra.mxu0 0.0
        %3678 = vmatprep.subr.mxu0 0.0
        %3679 = vmatpush2.xpose.msra.mxu0 0.0
        %3680 = vmatprep.subr.mxu0 0.0
        %3681 = vmatpush2.xpose.msra.mxu0 0.0
        %3682 = vmatprep.subr.mxu0 0.0
        %3683 = vmatpush2.xpose.msra.mxu0 0.0
        %3684 = vmatprep.subr.mxu0 0.0
        %3685 = vmatpush2.xpose.msra.mxu0 0.0
        %3686 = vmatprep.subr.mxu0 0.0
        %3687 = vmatpush2.xpose.msra.mxu0 0.0
        %3688 = vmatprep.subr.mxu0 0.0
        %3689 = vmatpush2.xpose.msra.mxu0 0.0
        %3690 = vmatprep.subr.mxu0 0.0
        %3691 = vmatpush2.xpose.msra.mxu0 0.0
        %3692 = vmatprep.subr.mxu0 0.0
        %3693 = vmatpush2.xpose.msra.mxu0 0.0
        %3694 = vmatprep.subr.mxu0 0.0
        %3695 = vmatpush2.xpose.msra.mxu0 0.0
        %3696 = vmatprep.subr.mxu0 0.0
        %3697 = vmatpush2.xpose.msra.mxu0 0.0
        %3698 = vmatprep.subr.mxu0 0.0
        %3699 = vmatpush2.xpose.msra.mxu0 0.0
        %3700 = vmatprep.subr.mxu0 0.0
        %3701 = vmatpush2.xpose.msra.mxu0 0.0
        %3702 = vmatprep.subr.mxu0 0.0
        %3703 = vmatpush2.xpose.msra.mxu0 0.0
        %3704 = vmatprep.subr.mxu0 0.0
        %3705 = vmatpush2.xpose.msra.mxu0 0.0
        %3706 = vmatprep.subr.mxu0 0.0
        %3707 = vmatpush2.xpose.msra.mxu0 0.0
        %3708 = vmatprep.mubr.f32.mxu0 0.0
        %3709 = vmatmul.mubr.f32.gmra.mxu0 %v3639
        %v3710 = vpop.f32.mrf.mxu0
        %v3711 = vadd.f32 0.0, %v3710
        %v3712 = vpop.f32.mrf.mxu0
        %3713 = vdwg.mxu0
        %v3715 = vsel %vm1737, %v1667, 0
        %v3718 = vsel %vm1737, %v1004, 0
        %3720 = vmatprep.subr.mxu0 0.0
        %3721 = vmatpush1.xpose.msra.mxu0 0.0
        %3722 = vmatprep.subr.mxu0 0.0
        %3723 = vmatpush1.xpose.msra.mxu0 0.0
        %3724 = vmatprep.subr.mxu0 0.0
        %3725 = vmatpush1.xpose.msra.mxu0 0.0
        %3726 = vmatprep.subr.mxu0 0.0
        %3727 = vmatpush1.xpose.msra.mxu0 0.0
        %3728 = vmatprep.subr.mxu0 0.0
        %3729 = vmatpush1.xpose.msra.mxu0 0.0
        %3730 = vmatprep.subr.mxu0 0.0
        %3731 = vmatpush1.xpose.msra.mxu0 0.0
        %3732 = vmatprep.subr.mxu0 0.0
        %3733 = vmatpush1.xpose.msra.mxu0 0.0
        %3734 = vmatprep.subr.mxu0 0.0
        %3735 = vmatpush1.xpose.msra.mxu0 0.0
        %3736 = vmatprep.subr.mxu0 0.0
        %3737 = vmatpush1.xpose.msra.mxu0 0.0
        %3738 = vmatprep.subr.mxu0 0.0
        %3739 = vmatpush1.xpose.msra.mxu0 0.0
        %3740 = vmatprep.subr.mxu0 0.0
        %3741 = vmatpush1.xpose.msra.mxu0 0.0
        %3742 = vmatprep.subr.mxu0 0.0
        %3743 = vmatpush1.xpose.msra.mxu0 0.0
        %3744 = vmatprep.subr.mxu0 0.0
        %3745 = vmatpush1.xpose.msra.mxu0 0.0
        %3746 = vmatprep.subr.mxu0 0.0
        %3747 = vmatpush1.xpose.msra.mxu0 0.0
        %3748 = vmatprep.subr.mxu0 0.0
        %3749 = vmatpush1.xpose.msra.mxu0 0.0
        %3750 = vmatprep.subr.mxu0 0.0
        %3751 = vmatpush1.xpose.msra.mxu0 %v3718
        %3752 = vmatprep.subr.mxu0 0.0
        %3753 = vmatpush2.xpose.msra.mxu0 0.0
        %3754 = vmatprep.subr.mxu0 0.0
        %3755 = vmatpush2.xpose.msra.mxu0 0.0
        %3756 = vmatprep.subr.mxu0 0.0
        %3757 = vmatpush2.xpose.msra.mxu0 0.0
        %3758 = vmatprep.subr.mxu0 0.0
        %3759 = vmatpush2.xpose.msra.mxu0 0.0
        %3760 = vmatprep.subr.mxu0 0.0
        %3761 = vmatpush2.xpose.msra.mxu0 0.0
        %3762 = vmatprep.subr.mxu0 0.0
        %3763 = vmatpush2.xpose.msra.mxu0 0.0
        %3764 = vmatprep.subr.mxu0 0.0
        %3765 = vmatpush2.xpose.msra.mxu0 0.0
        %3766 = vmatprep.subr.mxu0 0.0
        %3767 = vmatpush2.xpose.msra.mxu0 0.0
        %3768 = vmatprep.subr.mxu0 0.0
        %3769 = vmatpush2.xpose.msra.mxu0 0.0
        %3770 = vmatprep.subr.mxu0 0.0
        %3771 = vmatpush2.xpose.msra.mxu0 0.0
        %3772 = vmatprep.subr.mxu0 0.0
        %3773 = vmatpush2.xpose.msra.mxu0 0.0
        %3774 = vmatprep.subr.mxu0 0.0
        %3775 = vmatpush2.xpose.msra.mxu0 0.0
        %3776 = vmatprep.subr.mxu0 0.0
        %3777 = vmatpush2.xpose.msra.mxu0 0.0
        %3778 = vmatprep.subr.mxu0 0.0
        %3779 = vmatpush2.xpose.msra.mxu0 0.0
        %3780 = vmatprep.subr.mxu0 0.0
        %3781 = vmatpush2.xpose.msra.mxu0 0.0
        %3782 = vmatprep.subr.mxu0 0.0
        %3783 = vmatpush2.xpose.msra.mxu0 0.0
        %3784 = vmatprep.mubr.f32.mxu0 0.0
        %3785 = vmatmul.mubr.f32.gmra.mxu0 %v3715
        %v3786 = vpop.f32.mrf.mxu0
        %v3787 = vadd.f32 0.0, %v3786
        %v3788 = vpop.f32.mrf.mxu0
        %3789 = vdwg.mxu0
        %v3791 = vsel %vm1737, %v1668, 0
        %v3794 = vsel %vm1737, %v1005, 0
        %3796 = vmatprep.subr.mxu0 0.0
        %3797 = vmatpush1.xpose.msra.mxu0 0.0
        %3798 = vmatprep.subr.mxu0 0.0
        %3799 = vmatpush1.xpose.msra.mxu0 0.0
        %3800 = vmatprep.subr.mxu0 0.0
        %3801 = vmatpush1.xpose.msra.mxu0 0.0
        %3802 = vmatprep.subr.mxu0 0.0
        %3803 = vmatpush1.xpose.msra.mxu0 0.0
        %3804 = vmatprep.subr.mxu0 0.0
        %3805 = vmatpush1.xpose.msra.mxu0 0.0
        %3806 = vmatprep.subr.mxu0 0.0
        %3807 = vmatpush1.xpose.msra.mxu0 0.0
        %3808 = vmatprep.subr.mxu0 0.0
        %3809 = vmatpush1.xpose.msra.mxu0 0.0
        %3810 = vmatprep.subr.mxu0 0.0
        %3811 = vmatpush1.xpose.msra.mxu0 0.0
        %3812 = vmatprep.subr.mxu0 0.0
        %3813 = vmatpush1.xpose.msra.mxu0 0.0
        %3814 = vmatprep.subr.mxu0 0.0
        %3815 = vmatpush1.xpose.msra.mxu0 0.0
        %3816 = vmatprep.subr.mxu0 0.0
        %3817 = vmatpush1.xpose.msra.mxu0 0.0
        %3818 = vmatprep.subr.mxu0 0.0
        %3819 = vmatpush1.xpose.msra.mxu0 0.0
        %3820 = vmatprep.subr.mxu0 0.0
        %3821 = vmatpush1.xpose.msra.mxu0 0.0
        %3822 = vmatprep.subr.mxu0 0.0
        %3823 = vmatpush1.xpose.msra.mxu0 0.0
        %3824 = vmatprep.subr.mxu0 0.0
        %3825 = vmatpush1.xpose.msra.mxu0 0.0
        %3826 = vmatprep.subr.mxu0 0.0
        %3827 = vmatpush1.xpose.msra.mxu0 %v3794
        %3828 = vmatprep.subr.mxu0 0.0
        %3829 = vmatpush2.xpose.msra.mxu0 0.0
        %3830 = vmatprep.subr.mxu0 0.0
        %3831 = vmatpush2.xpose.msra.mxu0 0.0
        %3832 = vmatprep.subr.mxu0 0.0
        %3833 = vmatpush2.xpose.msra.mxu0 0.0
        %3834 = vmatprep.subr.mxu0 0.0
        %3835 = vmatpush2.xpose.msra.mxu0 0.0
        %3836 = vmatprep.subr.mxu0 0.0
        %3837 = vmatpush2.xpose.msra.mxu0 0.0
        %3838 = vmatprep.subr.mxu0 0.0
        %3839 = vmatpush2.xpose.msra.mxu0 0.0
        %3840 = vmatprep.subr.mxu0 0.0
        %3841 = vmatpush2.xpose.msra.mxu0 0.0
        %3842 = vmatprep.subr.mxu0 0.0
        %3843 = vmatpush2.xpose.msra.mxu0 0.0
        %3844 = vmatprep.subr.mxu0 0.0
        %3845 = vmatpush2.xpose.msra.mxu0 0.0
        %3846 = vmatprep.subr.mxu0 0.0
        %3847 = vmatpush2.xpose.msra.mxu0 0.0
        %3848 = vmatprep.subr.mxu0 0.0
        %3849 = vmatpush2.xpose.msra.mxu0 0.0
        %3850 = vmatprep.subr.mxu0 0.0
        %3851 = vmatpush2.xpose.msra.mxu0 0.0
        %3852 = vmatprep.subr.mxu0 0.0
        %3853 = vmatpush2.xpose.msra.mxu0 0.0
        %3854 = vmatprep.subr.mxu0 0.0
        %3855 = vmatpush2.xpose.msra.mxu0 0.0
        %3856 = vmatprep.subr.mxu0 0.0
        %3857 = vmatpush2.xpose.msra.mxu0 0.0
        %3858 = vmatprep.subr.mxu0 0.0
        %3859 = vmatpush2.xpose.msra.mxu0 0.0
        %3860 = vmatprep.mubr.f32.mxu0 0.0
        %3861 = vmatmul.mubr.f32.gmra.mxu0 %v3791
        %v3862 = vpop.f32.mrf.mxu0
        %v3863 = vadd.f32 0.0, %v3862
        %v3864 = vpop.f32.mrf.mxu0
        %3865 = vdwg.mxu0
        %v3867 = vsel %vm1737, %v1669, 0
        %v3870 = vsel %vm1737, %v1006, 0
        %3872 = vmatprep.subr.mxu0 0.0
        %3873 = vmatpush1.xpose.msra.mxu0 0.0
        %3874 = vmatprep.subr.mxu0 0.0
        %3875 = vmatpush1.xpose.msra.mxu0 0.0
        %3876 = vmatprep.subr.mxu0 0.0
        %3877 = vmatpush1.xpose.msra.mxu0 0.0
        %3878 = vmatprep.subr.mxu0 0.0
        %3879 = vmatpush1.xpose.msra.mxu0 0.0
        %3880 = vmatprep.subr.mxu0 0.0
        %3881 = vmatpush1.xpose.msra.mxu0 0.0
        %3882 = vmatprep.subr.mxu0 0.0
        %3883 = vmatpush1.xpose.msra.mxu0 0.0
        %3884 = vmatprep.subr.mxu0 0.0
        %3885 = vmatpush1.xpose.msra.mxu0 0.0
        %3886 = vmatprep.subr.mxu0 0.0
        %3887 = vmatpush1.xpose.msra.mxu0 0.0
        %3888 = vmatprep.subr.mxu0 0.0
        %3889 = vmatpush1.xpose.msra.mxu0 0.0
        %3890 = vmatprep.subr.mxu0 0.0
        %3891 = vmatpush1.xpose.msra.mxu0 0.0
        %3892 = vmatprep.subr.mxu0 0.0
        %3893 = vmatpush1.xpose.msra.mxu0 0.0
        %3894 = vmatprep.subr.mxu0 0.0
        %3895 = vmatpush1.xpose.msra.mxu0 0.0
        %3896 = vmatprep.subr.mxu0 0.0
        %3897 = vmatpush1.xpose.msra.mxu0 0.0
        %3898 = vmatprep.subr.mxu0 0.0
        %3899 = vmatpush1.xpose.msra.mxu0 0.0
        %3900 = vmatprep.subr.mxu0 0.0
        %3901 = vmatpush1.xpose.msra.mxu0 0.0
        %3902 = vmatprep.subr.mxu0 0.0
        %3903 = vmatpush1.xpose.msra.mxu0 %v3870
        %3904 = vmatprep.subr.mxu0 0.0
        %3905 = vmatpush2.xpose.msra.mxu0 0.0
        %3906 = vmatprep.subr.mxu0 0.0
        %3907 = vmatpush2.xpose.msra.mxu0 0.0
        %3908 = vmatprep.subr.mxu0 0.0
        %3909 = vmatpush2.xpose.msra.mxu0 0.0
        %3910 = vmatprep.subr.mxu0 0.0
        %3911 = vmatpush2.xpose.msra.mxu0 0.0
        %3912 = vmatprep.subr.mxu0 0.0
        %3913 = vmatpush2.xpose.msra.mxu0 0.0
        %3914 = vmatprep.subr.mxu0 0.0
        %3915 = vmatpush2.xpose.msra.mxu0 0.0
        %3916 = vmatprep.subr.mxu0 0.0
        %3917 = vmatpush2.xpose.msra.mxu0 0.0
        %3918 = vmatprep.subr.mxu0 0.0
        %3919 = vmatpush2.xpose.msra.mxu0 0.0
        %3920 = vmatprep.subr.mxu0 0.0
        %3921 = vmatpush2.xpose.msra.mxu0 0.0
        %3922 = vmatprep.subr.mxu0 0.0
        %3923 = vmatpush2.xpose.msra.mxu0 0.0
        %3924 = vmatprep.subr.mxu0 0.0
        %3925 = vmatpush2.xpose.msra.mxu0 0.0
        %3926 = vmatprep.subr.mxu0 0.0
        %3927 = vmatpush2.xpose.msra.mxu0 0.0
        %3928 = vmatprep.subr.mxu0 0.0
        %3929 = vmatpush2.xpose.msra.mxu0 0.0
        %3930 = vmatprep.subr.mxu0 0.0
        %3931 = vmatpush2.xpose.msra.mxu0 0.0
        %3932 = vmatprep.subr.mxu0 0.0
        %3933 = vmatpush2.xpose.msra.mxu0 0.0
        %3934 = vmatprep.subr.mxu0 0.0
        %3935 = vmatpush2.xpose.msra.mxu0 0.0
        %3936 = vmatprep.mubr.f32.mxu0 0.0
        %3937 = vmatmul.mubr.f32.gmra.mxu0 %v3867
        %v3938 = vpop.f32.mrf.mxu0
        %v3939 = vadd.f32 0.0, %v3938
        %v3940 = vpop.f32.mrf.mxu0
        %3941 = vdwg.mxu0
        %v3943 = vsel %vm1737, %v1670, 0
        %v3946 = vsel %vm1737, %v1007, 0
        %3948 = vmatprep.subr.mxu0 0.0
        %3949 = vmatpush1.xpose.msra.mxu0 0.0
        %3950 = vmatprep.subr.mxu0 0.0
        %3951 = vmatpush1.xpose.msra.mxu0 0.0
        %3952 = vmatprep.subr.mxu0 0.0
        %3953 = vmatpush1.xpose.msra.mxu0 0.0
        %3954 = vmatprep.subr.mxu0 0.0
        %3955 = vmatpush1.xpose.msra.mxu0 0.0
        %3956 = vmatprep.subr.mxu0 0.0
        %3957 = vmatpush1.xpose.msra.mxu0 0.0
        %3958 = vmatprep.subr.mxu0 0.0
        %3959 = vmatpush1.xpose.msra.mxu0 0.0
        %3960 = vmatprep.subr.mxu0 0.0
        %3961 = vmatpush1.xpose.msra.mxu0 0.0
        %3962 = vmatprep.subr.mxu0 0.0
        %3963 = vmatpush1.xpose.msra.mxu0 0.0
        %3964 = vmatprep.subr.mxu0 0.0
        %3965 = vmatpush1.xpose.msra.mxu0 0.0
        %3966 = vmatprep.subr.mxu0 0.0
        %3967 = vmatpush1.xpose.msra.mxu0 0.0
        %3968 = vmatprep.subr.mxu0 0.0
        %3969 = vmatpush1.xpose.msra.mxu0 0.0
        %3970 = vmatprep.subr.mxu0 0.0
        %3971 = vmatpush1.xpose.msra.mxu0 0.0
        %3972 = vmatprep.subr.mxu0 0.0
        %3973 = vmatpush1.xpose.msra.mxu0 0.0
        %3974 = vmatprep.subr.mxu0 0.0
        %3975 = vmatpush1.xpose.msra.mxu0 0.0
        %3976 = vmatprep.subr.mxu0 0.0
        %3977 = vmatpush1.xpose.msra.mxu0 0.0
        %3978 = vmatprep.subr.mxu0 0.0
        %3979 = vmatpush1.xpose.msra.mxu0 %v3946
        %3980 = vmatprep.subr.mxu0 0.0
        %3981 = vmatpush2.xpose.msra.mxu0 0.0
        %3982 = vmatprep.subr.mxu0 0.0
        %3983 = vmatpush2.xpose.msra.mxu0 0.0
        %3984 = vmatprep.subr.mxu0 0.0
        %3985 = vmatpush2.xpose.msra.mxu0 0.0
        %3986 = vmatprep.subr.mxu0 0.0
        %3987 = vmatpush2.xpose.msra.mxu0 0.0
        %3988 = vmatprep.subr.mxu0 0.0
        %3989 = vmatpush2.xpose.msra.mxu0 0.0
        %3990 = vmatprep.subr.mxu0 0.0
        %3991 = vmatpush2.xpose.msra.mxu0 0.0
        %3992 = vmatprep.subr.mxu0 0.0
        %3993 = vmatpush2.xpose.msra.mxu0 0.0
        %3994 = vmatprep.subr.mxu0 0.0
        %3995 = vmatpush2.xpose.msra.mxu0 0.0
        %3996 = vmatprep.subr.mxu0 0.0
        %3997 = vmatpush2.xpose.msra.mxu0 0.0
        %3998 = vmatprep.subr.mxu0 0.0
        %3999 = vmatpush2.xpose.msra.mxu0 0.0
        %4000 = vmatprep.subr.mxu0 0.0
        %4001 = vmatpush2.xpose.msra.mxu0 0.0
        %4002 = vmatprep.subr.mxu0 0.0
        %4003 = vmatpush2.xpose.msra.mxu0 0.0
        %4004 = vmatprep.subr.mxu0 0.0
        %4005 = vmatpush2.xpose.msra.mxu0 0.0
        %4006 = vmatprep.subr.mxu0 0.0
        %4007 = vmatpush2.xpose.msra.mxu0 0.0
        %4008 = vmatprep.subr.mxu0 0.0
        %4009 = vmatpush2.xpose.msra.mxu0 0.0
        %4010 = vmatprep.subr.mxu0 0.0
        %4011 = vmatpush2.xpose.msra.mxu0 0.0
        %4012 = vmatprep.mubr.f32.mxu0 0.0
        %4013 = vmatmul.mubr.f32.gmra.mxu0 %v3943
        %v4014 = vpop.f32.mrf.mxu0
        %v4015 = vadd.f32 0.0, %v4014
        %v4016 = vpop.f32.mrf.mxu0
        %4017 = vdwg.mxu0
        %v4019 = vsel %vm1737, %v1671, 0
        %v4022 = vsel %vm1737, %v1008, 0
        %4024 = vmatprep.subr.mxu0 0.0
        %4025 = vmatpush1.xpose.msra.mxu0 0.0
        %4026 = vmatprep.subr.mxu0 0.0
        %4027 = vmatpush1.xpose.msra.mxu0 0.0
        %4028 = vmatprep.subr.mxu0 0.0
        %4029 = vmatpush1.xpose.msra.mxu0 0.0
        %4030 = vmatprep.subr.mxu0 0.0
        %4031 = vmatpush1.xpose.msra.mxu0 0.0
        %4032 = vmatprep.subr.mxu0 0.0
        %4033 = vmatpush1.xpose.msra.mxu0 0.0
        %4034 = vmatprep.subr.mxu0 0.0
        %4035 = vmatpush1.xpose.msra.mxu0 0.0
        %4036 = vmatprep.subr.mxu0 0.0
        %4037 = vmatpush1.xpose.msra.mxu0 0.0
        %4038 = vmatprep.subr.mxu0 0.0
        %4039 = vmatpush1.xpose.msra.mxu0 0.0
        %4040 = vmatprep.subr.mxu0 0.0
        %4041 = vmatpush1.xpose.msra.mxu0 0.0
        %4042 = vmatprep.subr.mxu0 0.0
        %4043 = vmatpush1.xpose.msra.mxu0 0.0
        %4044 = vmatprep.subr.mxu0 0.0
        %4045 = vmatpush1.xpose.msra.mxu0 0.0
        %4046 = vmatprep.subr.mxu0 0.0
        %4047 = vmatpush1.xpose.msra.mxu0 0.0
        %4048 = vmatprep.subr.mxu0 0.0
        %4049 = vmatpush1.xpose.msra.mxu0 0.0
        %4050 = vmatprep.subr.mxu0 0.0
        %4051 = vmatpush1.xpose.msra.mxu0 0.0
        %4052 = vmatprep.subr.mxu0 0.0
        %4053 = vmatpush1.xpose.msra.mxu0 0.0
        %4054 = vmatprep.subr.mxu0 0.0
        %4055 = vmatpush1.xpose.msra.mxu0 %v4022
        %4056 = vmatprep.subr.mxu0 0.0
        %4057 = vmatpush2.xpose.msra.mxu0 0.0
        %4058 = vmatprep.subr.mxu0 0.0
        %4059 = vmatpush2.xpose.msra.mxu0 0.0
        %4060 = vmatprep.subr.mxu0 0.0
        %4061 = vmatpush2.xpose.msra.mxu0 0.0
        %4062 = vmatprep.subr.mxu0 0.0
        %4063 = vmatpush2.xpose.msra.mxu0 0.0
        %4064 = vmatprep.subr.mxu0 0.0
        %4065 = vmatpush2.xpose.msra.mxu0 0.0
        %4066 = vmatprep.subr.mxu0 0.0
        %4067 = vmatpush2.xpose.msra.mxu0 0.0
        %4068 = vmatprep.subr.mxu0 0.0
        %4069 = vmatpush2.xpose.msra.mxu0 0.0
        %4070 = vmatprep.subr.mxu0 0.0
        %4071 = vmatpush2.xpose.msra.mxu0 0.0
        %4072 = vmatprep.subr.mxu0 0.0
        %4073 = vmatpush2.xpose.msra.mxu0 0.0
        %4074 = vmatprep.subr.mxu0 0.0
        %4075 = vmatpush2.xpose.msra.mxu0 0.0
        %4076 = vmatprep.subr.mxu0 0.0
        %4077 = vmatpush2.xpose.msra.mxu0 0.0
        %4078 = vmatprep.subr.mxu0 0.0
        %4079 = vmatpush2.xpose.msra.mxu0 0.0
        %4080 = vmatprep.subr.mxu0 0.0
        %4081 = vmatpush2.xpose.msra.mxu0 0.0
        %4082 = vmatprep.subr.mxu0 0.0
        %4083 = vmatpush2.xpose.msra.mxu0 0.0
        %4084 = vmatprep.subr.mxu0 0.0
        %4085 = vmatpush2.xpose.msra.mxu0 0.0
        %4086 = vmatprep.subr.mxu0 0.0
        %4087 = vmatpush2.xpose.msra.mxu0 0.0
        %4088 = vmatprep.mubr.f32.mxu0 0.0
        %4089 = vmatmul.mubr.f32.gmra.mxu0 %v4019
        %v4090 = vpop.f32.mrf.mxu0
        %v4091 = vadd.f32 0.0, %v4090
        %v4092 = vpop.f32.mrf.mxu0
        %4093 = vdwg.mxu0
        %v4095 = vsel %vm1737, %v1672, 0
        %v4098 = vsel %vm1737, %v1009, 0
        %4100 = vmatprep.subr.mxu0 0.0
        %4101 = vmatpush1.xpose.msra.mxu0 0.0
        %4102 = vmatprep.subr.mxu0 0.0
        %4103 = vmatpush1.xpose.msra.mxu0 0.0
        %4104 = vmatprep.subr.mxu0 0.0
        %4105 = vmatpush1.xpose.msra.mxu0 0.0
        %4106 = vmatprep.subr.mxu0 0.0
        %4107 = vmatpush1.xpose.msra.mxu0 0.0
        %4108 = vmatprep.subr.mxu0 0.0
        %4109 = vmatpush1.xpose.msra.mxu0 0.0
        %4110 = vmatprep.subr.mxu0 0.0
        %4111 = vmatpush1.xpose.msra.mxu0 0.0
        %4112 = vmatprep.subr.mxu0 0.0
        %4113 = vmatpush1.xpose.msra.mxu0 0.0
        %4114 = vmatprep.subr.mxu0 0.0
        %4115 = vmatpush1.xpose.msra.mxu0 0.0
        %4116 = vmatprep.subr.mxu0 0.0
        %4117 = vmatpush1.xpose.msra.mxu0 0.0
        %4118 = vmatprep.subr.mxu0 0.0
        %4119 = vmatpush1.xpose.msra.mxu0 0.0
        %4120 = vmatprep.subr.mxu0 0.0
        %4121 = vmatpush1.xpose.msra.mxu0 0.0
        %4122 = vmatprep.subr.mxu0 0.0
        %4123 = vmatpush1.xpose.msra.mxu0 0.0
        %4124 = vmatprep.subr.mxu0 0.0
        %4125 = vmatpush1.xpose.msra.mxu0 0.0
        %4126 = vmatprep.subr.mxu0 0.0
        %4127 = vmatpush1.xpose.msra.mxu0 0.0
        %4128 = vmatprep.subr.mxu0 0.0
        %4129 = vmatpush1.xpose.msra.mxu0 0.0
        %4130 = vmatprep.subr.mxu0 0.0
        %4131 = vmatpush1.xpose.msra.mxu0 %v4098
        %4132 = vmatprep.subr.mxu0 0.0
        %4133 = vmatpush2.xpose.msra.mxu0 0.0
        %4134 = vmatprep.subr.mxu0 0.0
        %4135 = vmatpush2.xpose.msra.mxu0 0.0
        %4136 = vmatprep.subr.mxu0 0.0
        %4137 = vmatpush2.xpose.msra.mxu0 0.0
        %4138 = vmatprep.subr.mxu0 0.0
        %4139 = vmatpush2.xpose.msra.mxu0 0.0
        %4140 = vmatprep.subr.mxu0 0.0
        %4141 = vmatpush2.xpose.msra.mxu0 0.0
        %4142 = vmatprep.subr.mxu0 0.0
        %4143 = vmatpush2.xpose.msra.mxu0 0.0
        %4144 = vmatprep.subr.mxu0 0.0
        %4145 = vmatpush2.xpose.msra.mxu0 0.0
        %4146 = vmatprep.subr.mxu0 0.0
        %4147 = vmatpush2.xpose.msra.mxu0 0.0
        %4148 = vmatprep.subr.mxu0 0.0
        %4149 = vmatpush2.xpose.msra.mxu0 0.0
        %4150 = vmatprep.subr.mxu0 0.0
        %4151 = vmatpush2.xpose.msra.mxu0 0.0
        %4152 = vmatprep.subr.mxu0 0.0
        %4153 = vmatpush2.xpose.msra.mxu0 0.0
        %4154 = vmatprep.subr.mxu0 0.0
        %4155 = vmatpush2.xpose.msra.mxu0 0.0
        %4156 = vmatprep.subr.mxu0 0.0
        %4157 = vmatpush2.xpose.msra.mxu0 0.0
        %4158 = vmatprep.subr.mxu0 0.0
        %4159 = vmatpush2.xpose.msra.mxu0 0.0
        %4160 = vmatprep.subr.mxu0 0.0
        %4161 = vmatpush2.xpose.msra.mxu0 0.0
        %4162 = vmatprep.subr.mxu0 0.0
        %4163 = vmatpush2.xpose.msra.mxu0 0.0
        %4164 = vmatprep.mubr.f32.mxu0 0.0
        %4165 = vmatmul.mubr.f32.gmra.mxu0 %v4095
        %v4166 = vpop.f32.mrf.mxu0
        %v4167 = vadd.f32 0.0, %v4166
        %v4168 = vpop.f32.mrf.mxu0
        %4169 = vdwg.mxu0
        %v4171 = vsel %vm1737, %v1673, 0
        %v4174 = vsel %vm1737, %v1705, 0
        %4176 = vmatprep.subr.mxu0 0.0
        %4177 = vmatpush1.xpose.msra.mxu0 0.0
        %4178 = vmatprep.subr.mxu0 0.0
        %4179 = vmatpush1.xpose.msra.mxu0 0.0
        %4180 = vmatprep.subr.mxu0 0.0
        %4181 = vmatpush1.xpose.msra.mxu0 0.0
        %4182 = vmatprep.subr.mxu0 0.0
        %4183 = vmatpush1.xpose.msra.mxu0 0.0
        %4184 = vmatprep.subr.mxu0 0.0
        %4185 = vmatpush1.xpose.msra.mxu0 0.0
        %4186 = vmatprep.subr.mxu0 0.0
        %4187 = vmatpush1.xpose.msra.mxu0 0.0
        %4188 = vmatprep.subr.mxu0 0.0
        %4189 = vmatpush1.xpose.msra.mxu0 0.0
        %4190 = vmatprep.subr.mxu0 0.0
        %4191 = vmatpush1.xpose.msra.mxu0 0.0
        %4192 = vmatprep.subr.mxu0 0.0
        %4193 = vmatpush1.xpose.msra.mxu0 0.0
        %4194 = vmatprep.subr.mxu0 0.0
        %4195 = vmatpush1.xpose.msra.mxu0 0.0
        %4196 = vmatprep.subr.mxu0 0.0
        %4197 = vmatpush1.xpose.msra.mxu0 0.0
        %4198 = vmatprep.subr.mxu0 0.0
        %4199 = vmatpush1.xpose.msra.mxu0 0.0
        %4200 = vmatprep.subr.mxu0 0.0
        %4201 = vmatpush1.xpose.msra.mxu0 0.0
        %4202 = vmatprep.subr.mxu0 0.0
        %4203 = vmatpush1.xpose.msra.mxu0 0.0
        %4204 = vmatprep.subr.mxu0 0.0
        %4205 = vmatpush1.xpose.msra.mxu0 0.0
        %4206 = vmatprep.subr.mxu0 0.0
        %4207 = vmatpush1.xpose.msra.mxu0 %v4174
        %4208 = vmatprep.subr.mxu0 0.0
        %4209 = vmatpush2.xpose.msra.mxu0 0.0
        %4210 = vmatprep.subr.mxu0 0.0
        %4211 = vmatpush2.xpose.msra.mxu0 0.0
        %4212 = vmatprep.subr.mxu0 0.0
        %4213 = vmatpush2.xpose.msra.mxu0 0.0
        %4214 = vmatprep.subr.mxu0 0.0
        %4215 = vmatpush2.xpose.msra.mxu0 0.0
        %4216 = vmatprep.subr.mxu0 0.0
        %4217 = vmatpush2.xpose.msra.mxu0 0.0
        %4218 = vmatprep.subr.mxu0 0.0
        %4219 = vmatpush2.xpose.msra.mxu0 0.0
        %4220 = vmatprep.subr.mxu0 0.0
        %4221 = vmatpush2.xpose.msra.mxu0 0.0
        %4222 = vmatprep.subr.mxu0 0.0
        %4223 = vmatpush2.xpose.msra.mxu0 0.0
        %4224 = vmatprep.subr.mxu0 0.0
        %4225 = vmatpush2.xpose.msra.mxu0 0.0
        %4226 = vmatprep.subr.mxu0 0.0
        %4227 = vmatpush2.xpose.msra.mxu0 0.0
        %4228 = vmatprep.subr.mxu0 0.0
        %4229 = vmatpush2.xpose.msra.mxu0 0.0
        %4230 = vmatprep.subr.mxu0 0.0
        %4231 = vmatpush2.xpose.msra.mxu0 0.0
        %4232 = vmatprep.subr.mxu0 0.0
        %4233 = vmatpush2.xpose.msra.mxu0 0.0
        %4234 = vmatprep.subr.mxu0 0.0
        %4235 = vmatpush2.xpose.msra.mxu0 0.0
        %4236 = vmatprep.subr.mxu0 0.0
        %4237 = vmatpush2.xpose.msra.mxu0 0.0
        %4238 = vmatprep.subr.mxu0 0.0
        %4239 = vmatpush2.xpose.msra.mxu0 0.0
        %4240 = vmatprep.mubr.f32.mxu0 0.0
        %4241 = vmatmul.mubr.f32.gmra.mxu0 %v4171
        %v4242 = vpop.f32.mrf.mxu0
        %v4243 = vadd.f32 0.0, %v4242
        %v4244 = vpop.f32.mrf.mxu0
        %4245 = vdwg.mxu0
        %v4247 = vsel %vm1737, %v1674, 0
        %v4250 = vsel %vm1737, %v1706, 0
        %4252 = vmatprep.subr.mxu0 0.0
        %4253 = vmatpush1.xpose.msra.mxu0 0.0
        %4254 = vmatprep.subr.mxu0 0.0
        %4255 = vmatpush1.xpose.msra.mxu0 0.0
        %4256 = vmatprep.subr.mxu0 0.0
        %4257 = vmatpush1.xpose.msra.mxu0 0.0
        %4258 = vmatprep.subr.mxu0 0.0
        %4259 = vmatpush1.xpose.msra.mxu0 0.0
        %4260 = vmatprep.subr.mxu0 0.0
        %4261 = vmatpush1.xpose.msra.mxu0 0.0
        %4262 = vmatprep.subr.mxu0 0.0
        %4263 = vmatpush1.xpose.msra.mxu0 0.0
        %4264 = vmatprep.subr.mxu0 0.0
        %4265 = vmatpush1.xpose.msra.mxu0 0.0
        %4266 = vmatprep.subr.mxu0 0.0
        %4267 = vmatpush1.xpose.msra.mxu0 0.0
        %4268 = vmatprep.subr.mxu0 0.0
        %4269 = vmatpush1.xpose.msra.mxu0 0.0
        %4270 = vmatprep.subr.mxu0 0.0
        %4271 = vmatpush1.xpose.msra.mxu0 0.0
        %4272 = vmatprep.subr.mxu0 0.0
        %4273 = vmatpush1.xpose.msra.mxu0 0.0
        %4274 = vmatprep.subr.mxu0 0.0
        %4275 = vmatpush1.xpose.msra.mxu0 0.0
        %4276 = vmatprep.subr.mxu0 0.0
        %4277 = vmatpush1.xpose.msra.mxu0 0.0
        %4278 = vmatprep.subr.mxu0 0.0
        %4279 = vmatpush1.xpose.msra.mxu0 0.0
        %4280 = vmatprep.subr.mxu0 0.0
        %4281 = vmatpush1.xpose.msra.mxu0 0.0
        %4282 = vmatprep.subr.mxu0 0.0
        %4283 = vmatpush1.xpose.msra.mxu0 %v4250
        %4284 = vmatprep.subr.mxu0 0.0
        %4285 = vmatpush2.xpose.msra.mxu0 0.0
        %4286 = vmatprep.subr.mxu0 0.0
        %4287 = vmatpush2.xpose.msra.mxu0 0.0
        %4288 = vmatprep.subr.mxu0 0.0
        %4289 = vmatpush2.xpose.msra.mxu0 0.0
        %4290 = vmatprep.subr.mxu0 0.0
        %4291 = vmatpush2.xpose.msra.mxu0 0.0
        %4292 = vmatprep.subr.mxu0 0.0
        %4293 = vmatpush2.xpose.msra.mxu0 0.0
        %4294 = vmatprep.subr.mxu0 0.0
        %4295 = vmatpush2.xpose.msra.mxu0 0.0
        %4296 = vmatprep.subr.mxu0 0.0
        %4297 = vmatpush2.xpose.msra.mxu0 0.0
        %4298 = vmatprep.subr.mxu0 0.0
        %4299 = vmatpush2.xpose.msra.mxu0 0.0
        %4300 = vmatprep.subr.mxu0 0.0
        %4301 = vmatpush2.xpose.msra.mxu0 0.0
        %4302 = vmatprep.subr.mxu0 0.0
        %4303 = vmatpush2.xpose.msra.mxu0 0.0
        %4304 = vmatprep.subr.mxu0 0.0
        %4305 = vmatpush2.xpose.msra.mxu0 0.0
        %4306 = vmatprep.subr.mxu0 0.0
        %4307 = vmatpush2.xpose.msra.mxu0 0.0
        %4308 = vmatprep.subr.mxu0 0.0
        %4309 = vmatpush2.xpose.msra.mxu0 0.0
        %4310 = vmatprep.subr.mxu0 0.0
        %4311 = vmatpush2.xpose.msra.mxu0 0.0
        %4312 = vmatprep.subr.mxu0 0.0
        %4313 = vmatpush2.xpose.msra.mxu0 0.0
        %4314 = vmatprep.subr.mxu0 0.0
        %4315 = vmatpush2.xpose.msra.mxu0 0.0
        %4316 = vmatprep.mubr.f32.mxu0 0.0
        %4317 = vmatmul.mubr.f32.gmra.mxu0 %v4247
        %v4318 = vpop.f32.mrf.mxu0
        %v4319 = vadd.f32 0.0, %v4318
        %v4320 = vpop.f32.mrf.mxu0
        %4321 = vdwg.mxu0
        %v4323 = vsel %vm1737, %v1675, 0
        %v4326 = vsel %vm1737, %v1707, 0
        %4328 = vmatprep.subr.mxu0 0.0
        %4329 = vmatpush1.xpose.msra.mxu0 0.0
        %4330 = vmatprep.subr.mxu0 0.0
        %4331 = vmatpush1.xpose.msra.mxu0 0.0
        %4332 = vmatprep.subr.mxu0 0.0
        %4333 = vmatpush1.xpose.msra.mxu0 0.0
        %4334 = vmatprep.subr.mxu0 0.0
        %4335 = vmatpush1.xpose.msra.mxu0 0.0
        %4336 = vmatprep.subr.mxu0 0.0
        %4337 = vmatpush1.xpose.msra.mxu0 0.0
        %4338 = vmatprep.subr.mxu0 0.0
        %4339 = vmatpush1.xpose.msra.mxu0 0.0
        %4340 = vmatprep.subr.mxu0 0.0
        %4341 = vmatpush1.xpose.msra.mxu0 0.0
        %4342 = vmatprep.subr.mxu0 0.0
        %4343 = vmatpush1.xpose.msra.mxu0 0.0
        %4344 = vmatprep.subr.mxu0 0.0
        %4345 = vmatpush1.xpose.msra.mxu0 0.0
        %4346 = vmatprep.subr.mxu0 0.0
        %4347 = vmatpush1.xpose.msra.mxu0 0.0
        %4348 = vmatprep.subr.mxu0 0.0
        %4349 = vmatpush1.xpose.msra.mxu0 0.0
        %4350 = vmatprep.subr.mxu0 0.0
        %4351 = vmatpush1.xpose.msra.mxu0 0.0
        %4352 = vmatprep.subr.mxu0 0.0
        %4353 = vmatpush1.xpose.msra.mxu0 0.0
        %4354 = vmatprep.subr.mxu0 0.0
        %4355 = vmatpush1.xpose.msra.mxu0 0.0
        %4356 = vmatprep.subr.mxu0 0.0
        %4357 = vmatpush1.xpose.msra.mxu0 0.0
        %4358 = vmatprep.subr.mxu0 0.0
        %4359 = vmatpush1.xpose.msra.mxu0 %v4326
        %4360 = vmatprep.subr.mxu0 0.0
        %4361 = vmatpush2.xpose.msra.mxu0 0.0
        %4362 = vmatprep.subr.mxu0 0.0
        %4363 = vmatpush2.xpose.msra.mxu0 0.0
        %4364 = vmatprep.subr.mxu0 0.0
        %4365 = vmatpush2.xpose.msra.mxu0 0.0
        %4366 = vmatprep.subr.mxu0 0.0
        %4367 = vmatpush2.xpose.msra.mxu0 0.0
        %4368 = vmatprep.subr.mxu0 0.0
        %4369 = vmatpush2.xpose.msra.mxu0 0.0
        %4370 = vmatprep.subr.mxu0 0.0
        %4371 = vmatpush2.xpose.msra.mxu0 0.0
        %4372 = vmatprep.subr.mxu0 0.0
        %4373 = vmatpush2.xpose.msra.mxu0 0.0
        %4374 = vmatprep.subr.mxu0 0.0
        %4375 = vmatpush2.xpose.msra.mxu0 0.0
        %4376 = vmatprep.subr.mxu0 0.0
        %4377 = vmatpush2.xpose.msra.mxu0 0.0
        %4378 = vmatprep.subr.mxu0 0.0
        %4379 = vmatpush2.xpose.msra.mxu0 0.0
        %4380 = vmatprep.subr.mxu0 0.0
        %4381 = vmatpush2.xpose.msra.mxu0 0.0
        %4382 = vmatprep.subr.mxu0 0.0
        %4383 = vmatpush2.xpose.msra.mxu0 0.0
        %4384 = vmatprep.subr.mxu0 0.0
        %4385 = vmatpush2.xpose.msra.mxu0 0.0
        %4386 = vmatprep.subr.mxu0 0.0
        %4387 = vmatpush2.xpose.msra.mxu0 0.0
        %4388 = vmatprep.subr.mxu0 0.0
        %4389 = vmatpush2.xpose.msra.mxu0 0.0
        %4390 = vmatprep.subr.mxu0 0.0
        %4391 = vmatpush2.xpose.msra.mxu0 0.0
        %4392 = vmatprep.mubr.f32.mxu0 0.0
        %4393 = vmatmul.mubr.f32.gmra.mxu0 %v4323
        %v4394 = vpop.f32.mrf.mxu0
        %v4395 = vadd.f32 0.0, %v4394
        %v4396 = vpop.f32.mrf.mxu0
        %4397 = vdwg.mxu0
        %v4399 = vsel %vm1737, %v1676, 0
        %v4402 = vsel %vm1737, %v1708, 0
        %4404 = vmatprep.subr.mxu0 0.0
        %4405 = vmatpush1.xpose.msra.mxu0 0.0
        %4406 = vmatprep.subr.mxu0 0.0
        %4407 = vmatpush1.xpose.msra.mxu0 0.0
        %4408 = vmatprep.subr.mxu0 0.0
        %4409 = vmatpush1.xpose.msra.mxu0 0.0
        %4410 = vmatprep.subr.mxu0 0.0
        %4411 = vmatpush1.xpose.msra.mxu0 0.0
        %4412 = vmatprep.subr.mxu0 0.0
        %4413 = vmatpush1.xpose.msra.mxu0 0.0
        %4414 = vmatprep.subr.mxu0 0.0
        %4415 = vmatpush1.xpose.msra.mxu0 0.0
        %4416 = vmatprep.subr.mxu0 0.0
        %4417 = vmatpush1.xpose.msra.mxu0 0.0
        %4418 = vmatprep.subr.mxu0 0.0
        %4419 = vmatpush1.xpose.msra.mxu0 0.0
        %4420 = vmatprep.subr.mxu0 0.0
        %4421 = vmatpush1.xpose.msra.mxu0 0.0
        %4422 = vmatprep.subr.mxu0 0.0
        %4423 = vmatpush1.xpose.msra.mxu0 0.0
        %4424 = vmatprep.subr.mxu0 0.0
        %4425 = vmatpush1.xpose.msra.mxu0 0.0
        %4426 = vmatprep.subr.mxu0 0.0
        %4427 = vmatpush1.xpose.msra.mxu0 0.0
        %4428 = vmatprep.subr.mxu0 0.0
        %4429 = vmatpush1.xpose.msra.mxu0 0.0
        %4430 = vmatprep.subr.mxu0 0.0
        %4431 = vmatpush1.xpose.msra.mxu0 0.0
        %4432 = vmatprep.subr.mxu0 0.0
        %4433 = vmatpush1.xpose.msra.mxu0 0.0
        %4434 = vmatprep.subr.mxu0 0.0
        %4435 = vmatpush1.xpose.msra.mxu0 %v4402
        %4436 = vmatprep.subr.mxu0 0.0
        %4437 = vmatpush2.xpose.msra.mxu0 0.0
        %4438 = vmatprep.subr.mxu0 0.0
        %4439 = vmatpush2.xpose.msra.mxu0 0.0
        %4440 = vmatprep.subr.mxu0 0.0
        %4441 = vmatpush2.xpose.msra.mxu0 0.0
        %4442 = vmatprep.subr.mxu0 0.0
        %4443 = vmatpush2.xpose.msra.mxu0 0.0
        %4444 = vmatprep.subr.mxu0 0.0
        %4445 = vmatpush2.xpose.msra.mxu0 0.0
        %4446 = vmatprep.subr.mxu0 0.0
        %4447 = vmatpush2.xpose.msra.mxu0 0.0
        %4448 = vmatprep.subr.mxu0 0.0
        %4449 = vmatpush2.xpose.msra.mxu0 0.0
        %4450 = vmatprep.subr.mxu0 0.0
        %4451 = vmatpush2.xpose.msra.mxu0 0.0
        %4452 = vmatprep.subr.mxu0 0.0
        %4453 = vmatpush2.xpose.msra.mxu0 0.0
        %4454 = vmatprep.subr.mxu0 0.0
        %4455 = vmatpush2.xpose.msra.mxu0 0.0
        %4456 = vmatprep.subr.mxu0 0.0
        %4457 = vmatpush2.xpose.msra.mxu0 0.0
        %4458 = vmatprep.subr.mxu0 0.0
        %4459 = vmatpush2.xpose.msra.mxu0 0.0
        %4460 = vmatprep.subr.mxu0 0.0
        %4461 = vmatpush2.xpose.msra.mxu0 0.0
        %4462 = vmatprep.subr.mxu0 0.0
        %4463 = vmatpush2.xpose.msra.mxu0 0.0
        %4464 = vmatprep.subr.mxu0 0.0
        %4465 = vmatpush2.xpose.msra.mxu0 0.0
        %4466 = vmatprep.subr.mxu0 0.0
        %4467 = vmatpush2.xpose.msra.mxu0 0.0
        %4468 = vmatprep.mubr.f32.mxu0 0.0
        %4469 = vmatmul.mubr.f32.gmra.mxu0 %v4399
        %v4470 = vpop.f32.mrf.mxu0
        %v4471 = vadd.f32 0.0, %v4470
        %v4472 = vpop.f32.mrf.mxu0
        %4473 = vdwg.mxu0
        %v4475 = vsel %vm1737, %v1677, 0
        %v4478 = vsel %vm1737, %v1709, 0
        %4480 = vmatprep.subr.mxu0 0.0
        %4481 = vmatpush1.xpose.msra.mxu0 0.0
        %4482 = vmatprep.subr.mxu0 0.0
        %4483 = vmatpush1.xpose.msra.mxu0 0.0
        %4484 = vmatprep.subr.mxu0 0.0
        %4485 = vmatpush1.xpose.msra.mxu0 0.0
        %4486 = vmatprep.subr.mxu0 0.0
        %4487 = vmatpush1.xpose.msra.mxu0 0.0
        %4488 = vmatprep.subr.mxu0 0.0
        %4489 = vmatpush1.xpose.msra.mxu0 0.0
        %4490 = vmatprep.subr.mxu0 0.0
        %4491 = vmatpush1.xpose.msra.mxu0 0.0
        %4492 = vmatprep.subr.mxu0 0.0
        %4493 = vmatpush1.xpose.msra.mxu0 0.0
        %4494 = vmatprep.subr.mxu0 0.0
        %4495 = vmatpush1.xpose.msra.mxu0 0.0
        %4496 = vmatprep.subr.mxu0 0.0
        %4497 = vmatpush1.xpose.msra.mxu0 0.0
        %4498 = vmatprep.subr.mxu0 0.0
        %4499 = vmatpush1.xpose.msra.mxu0 0.0
        %4500 = vmatprep.subr.mxu0 0.0
        %4501 = vmatpush1.xpose.msra.mxu0 0.0
        %4502 = vmatprep.subr.mxu0 0.0
        %4503 = vmatpush1.xpose.msra.mxu0 0.0
        %4504 = vmatprep.subr.mxu0 0.0
        %4505 = vmatpush1.xpose.msra.mxu0 0.0
        %4506 = vmatprep.subr.mxu0 0.0
        %4507 = vmatpush1.xpose.msra.mxu0 0.0
        %4508 = vmatprep.subr.mxu0 0.0
        %4509 = vmatpush1.xpose.msra.mxu0 0.0
        %4510 = vmatprep.subr.mxu0 0.0
        %4511 = vmatpush1.xpose.msra.mxu0 %v4478
        %4512 = vmatprep.subr.mxu0 0.0
        %4513 = vmatpush2.xpose.msra.mxu0 0.0
        %4514 = vmatprep.subr.mxu0 0.0
        %4515 = vmatpush2.xpose.msra.mxu0 0.0
        %4516 = vmatprep.subr.mxu0 0.0
        %4517 = vmatpush2.xpose.msra.mxu0 0.0
        %4518 = vmatprep.subr.mxu0 0.0
        %4519 = vmatpush2.xpose.msra.mxu0 0.0
        %4520 = vmatprep.subr.mxu0 0.0
        %4521 = vmatpush2.xpose.msra.mxu0 0.0
        %4522 = vmatprep.subr.mxu0 0.0
        %4523 = vmatpush2.xpose.msra.mxu0 0.0
        %4524 = vmatprep.subr.mxu0 0.0
        %4525 = vmatpush2.xpose.msra.mxu0 0.0
        %4526 = vmatprep.subr.mxu0 0.0
        %4527 = vmatpush2.xpose.msra.mxu0 0.0
        %4528 = vmatprep.subr.mxu0 0.0
        %4529 = vmatpush2.xpose.msra.mxu0 0.0
        %4530 = vmatprep.subr.mxu0 0.0
        %4531 = vmatpush2.xpose.msra.mxu0 0.0
        %4532 = vmatprep.subr.mxu0 0.0
        %4533 = vmatpush2.xpose.msra.mxu0 0.0
        %4534 = vmatprep.subr.mxu0 0.0
        %4535 = vmatpush2.xpose.msra.mxu0 0.0
        %4536 = vmatprep.subr.mxu0 0.0
        %4537 = vmatpush2.xpose.msra.mxu0 0.0
        %4538 = vmatprep.subr.mxu0 0.0
        %4539 = vmatpush2.xpose.msra.mxu0 0.0
        %4540 = vmatprep.subr.mxu0 0.0
        %4541 = vmatpush2.xpose.msra.mxu0 0.0
        %4542 = vmatprep.subr.mxu0 0.0
        %4543 = vmatpush2.xpose.msra.mxu0 0.0
        %4544 = vmatprep.mubr.f32.mxu0 0.0
        %4545 = vmatmul.mubr.f32.gmra.mxu0 %v4475
        %v4546 = vpop.f32.mrf.mxu0
        %v4547 = vadd.f32 0.0, %v4546
        %v4548 = vpop.f32.mrf.mxu0
        %4549 = vdwg.mxu0
        %v4551 = vsel %vm1737, %v1678, 0
        %v4554 = vsel %vm1737, %v1710, 0
        %4556 = vmatprep.subr.mxu0 0.0
        %4557 = vmatpush1.xpose.msra.mxu0 0.0
        %4558 = vmatprep.subr.mxu0 0.0
        %4559 = vmatpush1.xpose.msra.mxu0 0.0
        %4560 = vmatprep.subr.mxu0 0.0
        %4561 = vmatpush1.xpose.msra.mxu0 0.0
        %4562 = vmatprep.subr.mxu0 0.0
        %4563 = vmatpush1.xpose.msra.mxu0 0.0
        %4564 = vmatprep.subr.mxu0 0.0
        %4565 = vmatpush1.xpose.msra.mxu0 0.0
        %4566 = vmatprep.subr.mxu0 0.0
        %4567 = vmatpush1.xpose.msra.mxu0 0.0
        %4568 = vmatprep.subr.mxu0 0.0
        %4569 = vmatpush1.xpose.msra.mxu0 0.0
        %4570 = vmatprep.subr.mxu0 0.0
        %4571 = vmatpush1.xpose.msra.mxu0 0.0
        %4572 = vmatprep.subr.mxu0 0.0
        %4573 = vmatpush1.xpose.msra.mxu0 0.0
        %4574 = vmatprep.subr.mxu0 0.0
        %4575 = vmatpush1.xpose.msra.mxu0 0.0
        %4576 = vmatprep.subr.mxu0 0.0
        %4577 = vmatpush1.xpose.msra.mxu0 0.0
        %4578 = vmatprep.subr.mxu0 0.0
        %4579 = vmatpush1.xpose.msra.mxu0 0.0
        %4580 = vmatprep.subr.mxu0 0.0
        %4581 = vmatpush1.xpose.msra.mxu0 0.0
        %4582 = vmatprep.subr.mxu0 0.0
        %4583 = vmatpush1.xpose.msra.mxu0 0.0
        %4584 = vmatprep.subr.mxu0 0.0
        %4585 = vmatpush1.xpose.msra.mxu0 0.0
        %4586 = vmatprep.subr.mxu0 0.0
        %4587 = vmatpush1.xpose.msra.mxu0 %v4554
        %4588 = vmatprep.subr.mxu0 0.0
        %4589 = vmatpush2.xpose.msra.mxu0 0.0
        %4590 = vmatprep.subr.mxu0 0.0
        %4591 = vmatpush2.xpose.msra.mxu0 0.0
        %4592 = vmatprep.subr.mxu0 0.0
        %4593 = vmatpush2.xpose.msra.mxu0 0.0
        %4594 = vmatprep.subr.mxu0 0.0
        %4595 = vmatpush2.xpose.msra.mxu0 0.0
        %4596 = vmatprep.subr.mxu0 0.0
        %4597 = vmatpush2.xpose.msra.mxu0 0.0
        %4598 = vmatprep.subr.mxu0 0.0
        %4599 = vmatpush2.xpose.msra.mxu0 0.0
        %4600 = vmatprep.subr.mxu0 0.0
        %4601 = vmatpush2.xpose.msra.mxu0 0.0
        %4602 = vmatprep.subr.mxu0 0.0
        %4603 = vmatpush2.xpose.msra.mxu0 0.0
        %4604 = vmatprep.subr.mxu0 0.0
        %4605 = vmatpush2.xpose.msra.mxu0 0.0
        %4606 = vmatprep.subr.mxu0 0.0
        %4607 = vmatpush2.xpose.msra.mxu0 0.0
        %4608 = vmatprep.subr.mxu0 0.0
        %4609 = vmatpush2.xpose.msra.mxu0 0.0
        %4610 = vmatprep.subr.mxu0 0.0
        %4611 = vmatpush2.xpose.msra.mxu0 0.0
        %4612 = vmatprep.subr.mxu0 0.0
        %4613 = vmatpush2.xpose.msra.mxu0 0.0
        %4614 = vmatprep.subr.mxu0 0.0
        %4615 = vmatpush2.xpose.msra.mxu0 0.0
        %4616 = vmatprep.subr.mxu0 0.0
        %4617 = vmatpush2.xpose.msra.mxu0 0.0
        %4618 = vmatprep.subr.mxu0 0.0
        %4619 = vmatpush2.xpose.msra.mxu0 0.0
        %4620 = vmatprep.mubr.f32.mxu0 0.0
        %4621 = vmatmul.mubr.f32.gmra.mxu0 %v4551
        %v4622 = vpop.f32.mrf.mxu0
        %v4623 = vadd.f32 0.0, %v4622
        %v4624 = vpop.f32.mrf.mxu0
        %4625 = vdwg.mxu0
        %v4627 = vsel %vm1737, %v1679, 0
        %v4630 = vsel %vm1737, %v1711, 0
        %4632 = vmatprep.subr.mxu0 0.0
        %4633 = vmatpush1.xpose.msra.mxu0 0.0
        %4634 = vmatprep.subr.mxu0 0.0
        %4635 = vmatpush1.xpose.msra.mxu0 0.0
        %4636 = vmatprep.subr.mxu0 0.0
        %4637 = vmatpush1.xpose.msra.mxu0 0.0
        %4638 = vmatprep.subr.mxu0 0.0
        %4639 = vmatpush1.xpose.msra.mxu0 0.0
        %4640 = vmatprep.subr.mxu0 0.0
        %4641 = vmatpush1.xpose.msra.mxu0 0.0
        %4642 = vmatprep.subr.mxu0 0.0
        %4643 = vmatpush1.xpose.msra.mxu0 0.0
        %4644 = vmatprep.subr.mxu0 0.0
        %4645 = vmatpush1.xpose.msra.mxu0 0.0
        %4646 = vmatprep.subr.mxu0 0.0
        %4647 = vmatpush1.xpose.msra.mxu0 0.0
        %4648 = vmatprep.subr.mxu0 0.0
        %4649 = vmatpush1.xpose.msra.mxu0 0.0
        %4650 = vmatprep.subr.mxu0 0.0
        %4651 = vmatpush1.xpose.msra.mxu0 0.0
        %4652 = vmatprep.subr.mxu0 0.0
        %4653 = vmatpush1.xpose.msra.mxu0 0.0
        %4654 = vmatprep.subr.mxu0 0.0
        %4655 = vmatpush1.xpose.msra.mxu0 0.0
        %4656 = vmatprep.subr.mxu0 0.0
        %4657 = vmatpush1.xpose.msra.mxu0 0.0
        %4658 = vmatprep.subr.mxu0 0.0
        %4659 = vmatpush1.xpose.msra.mxu0 0.0
        %4660 = vmatprep.subr.mxu0 0.0
        %4661 = vmatpush1.xpose.msra.mxu0 0.0
        %4662 = vmatprep.subr.mxu0 0.0
        %4663 = vmatpush1.xpose.msra.mxu0 %v4630
        %4664 = vmatprep.subr.mxu0 0.0
        %4665 = vmatpush2.xpose.msra.mxu0 0.0
        %4666 = vmatprep.subr.mxu0 0.0
        %4667 = vmatpush2.xpose.msra.mxu0 0.0
        %4668 = vmatprep.subr.mxu0 0.0
        %4669 = vmatpush2.xpose.msra.mxu0 0.0
        %4670 = vmatprep.subr.mxu0 0.0
        %4671 = vmatpush2.xpose.msra.mxu0 0.0
        %4672 = vmatprep.subr.mxu0 0.0
        %4673 = vmatpush2.xpose.msra.mxu0 0.0
        %4674 = vmatprep.subr.mxu0 0.0
        %4675 = vmatpush2.xpose.msra.mxu0 0.0
        %4676 = vmatprep.subr.mxu0 0.0
        %4677 = vmatpush2.xpose.msra.mxu0 0.0
        %4678 = vmatprep.subr.mxu0 0.0
        %4679 = vmatpush2.xpose.msra.mxu0 0.0
        %4680 = vmatprep.subr.mxu0 0.0
        %4681 = vmatpush2.xpose.msra.mxu0 0.0
        %4682 = vmatprep.subr.mxu0 0.0
        %4683 = vmatpush2.xpose.msra.mxu0 0.0
        %4684 = vmatprep.subr.mxu0 0.0
        %4685 = vmatpush2.xpose.msra.mxu0 0.0
        %4686 = vmatprep.subr.mxu0 0.0
        %4687 = vmatpush2.xpose.msra.mxu0 0.0
        %4688 = vmatprep.subr.mxu0 0.0
        %4689 = vmatpush2.xpose.msra.mxu0 0.0
        %4690 = vmatprep.subr.mxu0 0.0
        %4691 = vmatpush2.xpose.msra.mxu0 0.0
        %4692 = vmatprep.subr.mxu0 0.0
        %4693 = vmatpush2.xpose.msra.mxu0 0.0
        %4694 = vmatprep.subr.mxu0 0.0
        %4695 = vmatpush2.xpose.msra.mxu0 0.0
        %4696 = vmatprep.mubr.f32.mxu0 0.0
        %4697 = vmatmul.mubr.f32.gmra.mxu0 %v4627
        %v4698 = vpop.f32.mrf.mxu0
        %v4699 = vadd.f32 0.0, %v4698
        %v4700 = vpop.f32.mrf.mxu0
        %4701 = vdwg.mxu0
        %v4703 = vsel %vm1737, %v1680, 0
        %v4706 = vsel %vm1737, %v1712, 0
        %4708 = vmatprep.subr.mxu0 0.0
        %4709 = vmatpush1.xpose.msra.mxu0 0.0
        %4710 = vmatprep.subr.mxu0 0.0
        %4711 = vmatpush1.xpose.msra.mxu0 0.0
        %4712 = vmatprep.subr.mxu0 0.0
        %4713 = vmatpush1.xpose.msra.mxu0 0.0
        %4714 = vmatprep.subr.mxu0 0.0
        %4715 = vmatpush1.xpose.msra.mxu0 0.0
        %4716 = vmatprep.subr.mxu0 0.0
        %4717 = vmatpush1.xpose.msra.mxu0 0.0
        %4718 = vmatprep.subr.mxu0 0.0
        %4719 = vmatpush1.xpose.msra.mxu0 0.0
        %4720 = vmatprep.subr.mxu0 0.0
        %4721 = vmatpush1.xpose.msra.mxu0 0.0
        %4722 = vmatprep.subr.mxu0 0.0
        %4723 = vmatpush1.xpose.msra.mxu0 0.0
        %4724 = vmatprep.subr.mxu0 0.0
        %4725 = vmatpush1.xpose.msra.mxu0 0.0
        %4726 = vmatprep.subr.mxu0 0.0
        %4727 = vmatpush1.xpose.msra.mxu0 0.0
        %4728 = vmatprep.subr.mxu0 0.0
        %4729 = vmatpush1.xpose.msra.mxu0 0.0
        %4730 = vmatprep.subr.mxu0 0.0
        %4731 = vmatpush1.xpose.msra.mxu0 0.0
        %4732 = vmatprep.subr.mxu0 0.0
        %4733 = vmatpush1.xpose.msra.mxu0 0.0
        %4734 = vmatprep.subr.mxu0 0.0
        %4735 = vmatpush1.xpose.msra.mxu0 0.0
        %4736 = vmatprep.subr.mxu0 0.0
        %4737 = vmatpush1.xpose.msra.mxu0 0.0
        %4738 = vmatprep.subr.mxu0 0.0
        %4739 = vmatpush1.xpose.msra.mxu0 %v4706
        %4740 = vmatprep.subr.mxu0 0.0
        %4741 = vmatpush2.xpose.msra.mxu0 0.0
        %4742 = vmatprep.subr.mxu0 0.0
        %4743 = vmatpush2.xpose.msra.mxu0 0.0
        %4744 = vmatprep.subr.mxu0 0.0
        %4745 = vmatpush2.xpose.msra.mxu0 0.0
        %4746 = vmatprep.subr.mxu0 0.0
        %4747 = vmatpush2.xpose.msra.mxu0 0.0
        %4748 = vmatprep.subr.mxu0 0.0
        %4749 = vmatpush2.xpose.msra.mxu0 0.0
        %4750 = vmatprep.subr.mxu0 0.0
        %4751 = vmatpush2.xpose.msra.mxu0 0.0
        %4752 = vmatprep.subr.mxu0 0.0
        %4753 = vmatpush2.xpose.msra.mxu0 0.0
        %4754 = vmatprep.subr.mxu0 0.0
        %4755 = vmatpush2.xpose.msra.mxu0 0.0
        %4756 = vmatprep.subr.mxu0 0.0
        %4757 = vmatpush2.xpose.msra.mxu0 0.0
        %4758 = vmatprep.subr.mxu0 0.0
        %4759 = vmatpush2.xpose.msra.mxu0 0.0
        %4760 = vmatprep.subr.mxu0 0.0
        %4761 = vmatpush2.xpose.msra.mxu0 0.0
        %4762 = vmatprep.subr.mxu0 0.0
        %4763 = vmatpush2.xpose.msra.mxu0 0.0
        %4764 = vmatprep.subr.mxu0 0.0
        %4765 = vmatpush2.xpose.msra.mxu0 0.0
        %4766 = vmatprep.subr.mxu0 0.0
        %4767 = vmatpush2.xpose.msra.mxu0 0.0
        %4768 = vmatprep.subr.mxu0 0.0
        %4769 = vmatpush2.xpose.msra.mxu0 0.0
        %4770 = vmatprep.subr.mxu0 0.0
        %4771 = vmatpush2.xpose.msra.mxu0 0.0
        %4772 = vmatprep.mubr.f32.mxu0 0.0
        %4773 = vmatmul.mubr.f32.gmra.mxu0 %v4703
        %v4774 = vpop.f32.mrf.mxu0
        %v4775 = vadd.f32 0.0, %v4774
        %v4776 = vpop.f32.mrf.mxu0
        %4777 = vdwg.mxu0
        %v4779 = vsel %vm1737, %v1681, 0
        %v4782 = vsel %vm1737, %v1713, 0
        %4784 = vmatprep.subr.mxu0 0.0
        %4785 = vmatpush1.xpose.msra.mxu0 0.0
        %4786 = vmatprep.subr.mxu0 0.0
        %4787 = vmatpush1.xpose.msra.mxu0 0.0
        %4788 = vmatprep.subr.mxu0 0.0
        %4789 = vmatpush1.xpose.msra.mxu0 0.0
        %4790 = vmatprep.subr.mxu0 0.0
        %4791 = vmatpush1.xpose.msra.mxu0 0.0
        %4792 = vmatprep.subr.mxu0 0.0
        %4793 = vmatpush1.xpose.msra.mxu0 0.0
        %4794 = vmatprep.subr.mxu0 0.0
        %4795 = vmatpush1.xpose.msra.mxu0 0.0
        %4796 = vmatprep.subr.mxu0 0.0
        %4797 = vmatpush1.xpose.msra.mxu0 0.0
        %4798 = vmatprep.subr.mxu0 0.0
        %4799 = vmatpush1.xpose.msra.mxu0 0.0
        %4800 = vmatprep.subr.mxu0 0.0
        %4801 = vmatpush1.xpose.msra.mxu0 0.0
        %4802 = vmatprep.subr.mxu0 0.0
        %4803 = vmatpush1.xpose.msra.mxu0 0.0
        %4804 = vmatprep.subr.mxu0 0.0
        %4805 = vmatpush1.xpose.msra.mxu0 0.0
        %4806 = vmatprep.subr.mxu0 0.0
        %4807 = vmatpush1.xpose.msra.mxu0 0.0
        %4808 = vmatprep.subr.mxu0 0.0
        %4809 = vmatpush1.xpose.msra.mxu0 0.0
        %4810 = vmatprep.subr.mxu0 0.0
        %4811 = vmatpush1.xpose.msra.mxu0 0.0
        %4812 = vmatprep.subr.mxu0 0.0
        %4813 = vmatpush1.xpose.msra.mxu0 0.0
        %4814 = vmatprep.subr.mxu0 0.0
        %4815 = vmatpush1.xpose.msra.mxu0 %v4782
        %4816 = vmatprep.subr.mxu0 0.0
        %4817 = vmatpush2.xpose.msra.mxu0 0.0
        %4818 = vmatprep.subr.mxu0 0.0
        %4819 = vmatpush2.xpose.msra.mxu0 0.0
        %4820 = vmatprep.subr.mxu0 0.0
        %4821 = vmatpush2.xpose.msra.mxu0 0.0
        %4822 = vmatprep.subr.mxu0 0.0
        %4823 = vmatpush2.xpose.msra.mxu0 0.0
        %4824 = vmatprep.subr.mxu0 0.0
        %4825 = vmatpush2.xpose.msra.mxu0 0.0
        %4826 = vmatprep.subr.mxu0 0.0
        %4827 = vmatpush2.xpose.msra.mxu0 0.0
        %4828 = vmatprep.subr.mxu0 0.0
        %4829 = vmatpush2.xpose.msra.mxu0 0.0
        %4830 = vmatprep.subr.mxu0 0.0
        %4831 = vmatpush2.xpose.msra.mxu0 0.0
        %4832 = vmatprep.subr.mxu0 0.0
        %4833 = vmatpush2.xpose.msra.mxu0 0.0
        %4834 = vmatprep.subr.mxu0 0.0
        %4835 = vmatpush2.xpose.msra.mxu0 0.0
        %4836 = vmatprep.subr.mxu0 0.0
        %4837 = vmatpush2.xpose.msra.mxu0 0.0
        %4838 = vmatprep.subr.mxu0 0.0
        %4839 = vmatpush2.xpose.msra.mxu0 0.0
        %4840 = vmatprep.subr.mxu0 0.0
        %4841 = vmatpush2.xpose.msra.mxu0 0.0
        %4842 = vmatprep.subr.mxu0 0.0
        %4843 = vmatpush2.xpose.msra.mxu0 0.0
        %4844 = vmatprep.subr.mxu0 0.0
        %4845 = vmatpush2.xpose.msra.mxu0 0.0
        %4846 = vmatprep.subr.mxu0 0.0
        %4847 = vmatpush2.xpose.msra.mxu0 0.0
        %4848 = vmatprep.mubr.f32.mxu0 0.0
        %4849 = vmatmul.mubr.f32.gmra.mxu0 %v4779
        %v4850 = vpop.f32.mrf.mxu0
        %v4851 = vadd.f32 0.0, %v4850
        %v4852 = vpop.f32.mrf.mxu0
        %4853 = vdwg.mxu0
        %v4855 = vsel %vm1737, %v1682, 0
        %v4858 = vsel %vm1737, %v1714, 0
        %4860 = vmatprep.subr.mxu0 0.0
        %4861 = vmatpush1.xpose.msra.mxu0 0.0
        %4862 = vmatprep.subr.mxu0 0.0
        %4863 = vmatpush1.xpose.msra.mxu0 0.0
        %4864 = vmatprep.subr.mxu0 0.0
        %4865 = vmatpush1.xpose.msra.mxu0 0.0
        %4866 = vmatprep.subr.mxu0 0.0
        %4867 = vmatpush1.xpose.msra.mxu0 0.0
        %4868 = vmatprep.subr.mxu0 0.0
        %4869 = vmatpush1.xpose.msra.mxu0 0.0
        %4870 = vmatprep.subr.mxu0 0.0
        %4871 = vmatpush1.xpose.msra.mxu0 0.0
        %4872 = vmatprep.subr.mxu0 0.0
        %4873 = vmatpush1.xpose.msra.mxu0 0.0
        %4874 = vmatprep.subr.mxu0 0.0
        %4875 = vmatpush1.xpose.msra.mxu0 0.0
        %4876 = vmatprep.subr.mxu0 0.0
        %4877 = vmatpush1.xpose.msra.mxu0 0.0
        %4878 = vmatprep.subr.mxu0 0.0
        %4879 = vmatpush1.xpose.msra.mxu0 0.0
        %4880 = vmatprep.subr.mxu0 0.0
        %4881 = vmatpush1.xpose.msra.mxu0 0.0
        %4882 = vmatprep.subr.mxu0 0.0
        %4883 = vmatpush1.xpose.msra.mxu0 0.0
        %4884 = vmatprep.subr.mxu0 0.0
        %4885 = vmatpush1.xpose.msra.mxu0 0.0
        %4886 = vmatprep.subr.mxu0 0.0
        %4887 = vmatpush1.xpose.msra.mxu0 0.0
        %4888 = vmatprep.subr.mxu0 0.0
        %4889 = vmatpush1.xpose.msra.mxu0 0.0
        %4890 = vmatprep.subr.mxu0 0.0
        %4891 = vmatpush1.xpose.msra.mxu0 %v4858
        %4892 = vmatprep.subr.mxu0 0.0
        %4893 = vmatpush2.xpose.msra.mxu0 0.0
        %4894 = vmatprep.subr.mxu0 0.0
        %4895 = vmatpush2.xpose.msra.mxu0 0.0
        %4896 = vmatprep.subr.mxu0 0.0
        %4897 = vmatpush2.xpose.msra.mxu0 0.0
        %4898 = vmatprep.subr.mxu0 0.0
        %4899 = vmatpush2.xpose.msra.mxu0 0.0
        %4900 = vmatprep.subr.mxu0 0.0
        %4901 = vmatpush2.xpose.msra.mxu0 0.0
        %4902 = vmatprep.subr.mxu0 0.0
        %4903 = vmatpush2.xpose.msra.mxu0 0.0
        %4904 = vmatprep.subr.mxu0 0.0
        %4905 = vmatpush2.xpose.msra.mxu0 0.0
        %4906 = vmatprep.subr.mxu0 0.0
        %4907 = vmatpush2.xpose.msra.mxu0 0.0
        %4908 = vmatprep.subr.mxu0 0.0
        %4909 = vmatpush2.xpose.msra.mxu0 0.0
        %4910 = vmatprep.subr.mxu0 0.0
        %4911 = vmatpush2.xpose.msra.mxu0 0.0
        %4912 = vmatprep.subr.mxu0 0.0
        %4913 = vmatpush2.xpose.msra.mxu0 0.0
        %4914 = vmatprep.subr.mxu0 0.0
        %4915 = vmatpush2.xpose.msra.mxu0 0.0
        %4916 = vmatprep.subr.mxu0 0.0
        %4917 = vmatpush2.xpose.msra.mxu0 0.0
        %4918 = vmatprep.subr.mxu0 0.0
        %4919 = vmatpush2.xpose.msra.mxu0 0.0
        %4920 = vmatprep.subr.mxu0 0.0
        %4921 = vmatpush2.xpose.msra.mxu0 0.0
        %4922 = vmatprep.subr.mxu0 0.0
        %4923 = vmatpush2.xpose.msra.mxu0 0.0
        %4924 = vmatprep.mubr.f32.mxu0 0.0
        %4925 = vmatmul.mubr.f32.gmra.mxu0 %v4855
        %v4926 = vpop.f32.mrf.mxu0
        %v4927 = vadd.f32 0.0, %v4926
        %v4928 = vpop.f32.mrf.mxu0
        %4929 = vdwg.mxu0
        %v4931 = vsel %vm1737, %v1683, 0
        %v4934 = vsel %vm1737, %v1715, 0
        %4936 = vmatprep.subr.mxu0 0.0
        %4937 = vmatpush1.xpose.msra.mxu0 0.0
        %4938 = vmatprep.subr.mxu0 0.0
        %4939 = vmatpush1.xpose.msra.mxu0 0.0
        %4940 = vmatprep.subr.mxu0 0.0
        %4941 = vmatpush1.xpose.msra.mxu0 0.0
        %4942 = vmatprep.subr.mxu0 0.0
        %4943 = vmatpush1.xpose.msra.mxu0 0.0
        %4944 = vmatprep.subr.mxu0 0.0
        %4945 = vmatpush1.xpose.msra.mxu0 0.0
        %4946 = vmatprep.subr.mxu0 0.0
        %4947 = vmatpush1.xpose.msra.mxu0 0.0
        %4948 = vmatprep.subr.mxu0 0.0
        %4949 = vmatpush1.xpose.msra.mxu0 0.0
        %4950 = vmatprep.subr.mxu0 0.0
        %4951 = vmatpush1.xpose.msra.mxu0 0.0
        %4952 = vmatprep.subr.mxu0 0.0
        %4953 = vmatpush1.xpose.msra.mxu0 0.0
        %4954 = vmatprep.subr.mxu0 0.0
        %4955 = vmatpush1.xpose.msra.mxu0 0.0
        %4956 = vmatprep.subr.mxu0 0.0
        %4957 = vmatpush1.xpose.msra.mxu0 0.0
        %4958 = vmatprep.subr.mxu0 0.0
        %4959 = vmatpush1.xpose.msra.mxu0 0.0
        %4960 = vmatprep.subr.mxu0 0.0
        %4961 = vmatpush1.xpose.msra.mxu0 0.0
        %4962 = vmatprep.subr.mxu0 0.0
        %4963 = vmatpush1.xpose.msra.mxu0 0.0
        %4964 = vmatprep.subr.mxu0 0.0
        %4965 = vmatpush1.xpose.msra.mxu0 0.0
        %4966 = vmatprep.subr.mxu0 0.0
        %4967 = vmatpush1.xpose.msra.mxu0 %v4934
        %4968 = vmatprep.subr.mxu0 0.0
        %4969 = vmatpush2.xpose.msra.mxu0 0.0
        %4970 = vmatprep.subr.mxu0 0.0
        %4971 = vmatpush2.xpose.msra.mxu0 0.0
        %4972 = vmatprep.subr.mxu0 0.0
        %4973 = vmatpush2.xpose.msra.mxu0 0.0
        %4974 = vmatprep.subr.mxu0 0.0
        %4975 = vmatpush2.xpose.msra.mxu0 0.0
        %4976 = vmatprep.subr.mxu0 0.0
        %4977 = vmatpush2.xpose.msra.mxu0 0.0
        %4978 = vmatprep.subr.mxu0 0.0
        %4979 = vmatpush2.xpose.msra.mxu0 0.0
        %4980 = vmatprep.subr.mxu0 0.0
        %4981 = vmatpush2.xpose.msra.mxu0 0.0
        %4982 = vmatprep.subr.mxu0 0.0
        %4983 = vmatpush2.xpose.msra.mxu0 0.0
        %4984 = vmatprep.subr.mxu0 0.0
        %4985 = vmatpush2.xpose.msra.mxu0 0.0
        %4986 = vmatprep.subr.mxu0 0.0
        %4987 = vmatpush2.xpose.msra.mxu0 0.0
        %4988 = vmatprep.subr.mxu0 0.0
        %4989 = vmatpush2.xpose.msra.mxu0 0.0
        %4990 = vmatprep.subr.mxu0 0.0
        %4991 = vmatpush2.xpose.msra.mxu0 0.0
        %4992 = vmatprep.subr.mxu0 0.0
        %4993 = vmatpush2.xpose.msra.mxu0 0.0
        %4994 = vmatprep.subr.mxu0 0.0
        %4995 = vmatpush2.xpose.msra.mxu0 0.0
        %4996 = vmatprep.subr.mxu0 0.0
        %4997 = vmatpush2.xpose.msra.mxu0 0.0
        %4998 = vmatprep.subr.mxu0 0.0
        %4999 = vmatpush2.xpose.msra.mxu0 0.0
        %5000 = vmatprep.mubr.f32.mxu0 0.0
        %5001 = vmatmul.mubr.f32.gmra.mxu0 %v4931
        %v5002 = vpop.f32.mrf.mxu0
        %v5003 = vadd.f32 0.0, %v5002
        %v5004 = vpop.f32.mrf.mxu0
        %5005 = vdwg.mxu0
        %v5007 = vsel %vm1737, %v1684, 0
        %v5010 = vsel %vm1737, %v1716, 0
        %5012 = vmatprep.subr.mxu0 0.0
        %5013 = vmatpush1.xpose.msra.mxu0 0.0
        %5014 = vmatprep.subr.mxu0 0.0
        %5015 = vmatpush1.xpose.msra.mxu0 0.0
        %5016 = vmatprep.subr.mxu0 0.0
        %5017 = vmatpush1.xpose.msra.mxu0 0.0
        %5018 = vmatprep.subr.mxu0 0.0
        %5019 = vmatpush1.xpose.msra.mxu0 0.0
        %5020 = vmatprep.subr.mxu0 0.0
        %5021 = vmatpush1.xpose.msra.mxu0 0.0
        %5022 = vmatprep.subr.mxu0 0.0
        %5023 = vmatpush1.xpose.msra.mxu0 0.0
        %5024 = vmatprep.subr.mxu0 0.0
        %5025 = vmatpush1.xpose.msra.mxu0 0.0
        %5026 = vmatprep.subr.mxu0 0.0
        %5027 = vmatpush1.xpose.msra.mxu0 0.0
        %5028 = vmatprep.subr.mxu0 0.0
        %5029 = vmatpush1.xpose.msra.mxu0 0.0
        %5030 = vmatprep.subr.mxu0 0.0
        %5031 = vmatpush1.xpose.msra.mxu0 0.0
        %5032 = vmatprep.subr.mxu0 0.0
        %5033 = vmatpush1.xpose.msra.mxu0 0.0
        %5034 = vmatprep.subr.mxu0 0.0
        %5035 = vmatpush1.xpose.msra.mxu0 0.0
        %5036 = vmatprep.subr.mxu0 0.0
        %5037 = vmatpush1.xpose.msra.mxu0 0.0
        %5038 = vmatprep.subr.mxu0 0.0
        %5039 = vmatpush1.xpose.msra.mxu0 0.0
        %5040 = vmatprep.subr.mxu0 0.0
        %5041 = vmatpush1.xpose.msra.mxu0 0.0
        %5042 = vmatprep.subr.mxu0 0.0
        %5043 = vmatpush1.xpose.msra.mxu0 %v5010
        %5044 = vmatprep.subr.mxu0 0.0
        %5045 = vmatpush2.xpose.msra.mxu0 0.0
        %5046 = vmatprep.subr.mxu0 0.0
        %5047 = vmatpush2.xpose.msra.mxu0 0.0
        %5048 = vmatprep.subr.mxu0 0.0
        %5049 = vmatpush2.xpose.msra.mxu0 0.0
        %5050 = vmatprep.subr.mxu0 0.0
        %5051 = vmatpush2.xpose.msra.mxu0 0.0
        %5052 = vmatprep.subr.mxu0 0.0
        %5053 = vmatpush2.xpose.msra.mxu0 0.0
        %5054 = vmatprep.subr.mxu0 0.0
        %5055 = vmatpush2.xpose.msra.mxu0 0.0
        %5056 = vmatprep.subr.mxu0 0.0
        %5057 = vmatpush2.xpose.msra.mxu0 0.0
        %5058 = vmatprep.subr.mxu0 0.0
        %5059 = vmatpush2.xpose.msra.mxu0 0.0
        %5060 = vmatprep.subr.mxu0 0.0
        %5061 = vmatpush2.xpose.msra.mxu0 0.0
        %5062 = vmatprep.subr.mxu0 0.0
        %5063 = vmatpush2.xpose.msra.mxu0 0.0
        %5064 = vmatprep.subr.mxu0 0.0
        %5065 = vmatpush2.xpose.msra.mxu0 0.0
        %5066 = vmatprep.subr.mxu0 0.0
        %5067 = vmatpush2.xpose.msra.mxu0 0.0
        %5068 = vmatprep.subr.mxu0 0.0
        %5069 = vmatpush2.xpose.msra.mxu0 0.0
        %5070 = vmatprep.subr.mxu0 0.0
        %5071 = vmatpush2.xpose.msra.mxu0 0.0
        %5072 = vmatprep.subr.mxu0 0.0
        %5073 = vmatpush2.xpose.msra.mxu0 0.0
        %5074 = vmatprep.subr.mxu0 0.0
        %5075 = vmatpush2.xpose.msra.mxu0 0.0
        %5076 = vmatprep.mubr.f32.mxu0 0.0
        %5077 = vmatmul.mubr.f32.gmra.mxu0 %v5007
        %v5078 = vpop.f32.mrf.mxu0
        %v5079 = vadd.f32 0.0, %v5078
        %v5080 = vpop.f32.mrf.mxu0
        %5081 = vdwg.mxu0
        %v5083 = vsel %vm1737, %v1685, 0
        %v5086 = vsel %vm1737, %v1717, 0
        %5088 = vmatprep.subr.mxu0 0.0
        %5089 = vmatpush1.xpose.msra.mxu0 0.0
        %5090 = vmatprep.subr.mxu0 0.0
        %5091 = vmatpush1.xpose.msra.mxu0 0.0
        %5092 = vmatprep.subr.mxu0 0.0
        %5093 = vmatpush1.xpose.msra.mxu0 0.0
        %5094 = vmatprep.subr.mxu0 0.0
        %5095 = vmatpush1.xpose.msra.mxu0 0.0
        %5096 = vmatprep.subr.mxu0 0.0
        %5097 = vmatpush1.xpose.msra.mxu0 0.0
        %5098 = vmatprep.subr.mxu0 0.0
        %5099 = vmatpush1.xpose.msra.mxu0 0.0
        %5100 = vmatprep.subr.mxu0 0.0
        %5101 = vmatpush1.xpose.msra.mxu0 0.0
        %5102 = vmatprep.subr.mxu0 0.0
        %5103 = vmatpush1.xpose.msra.mxu0 0.0
        %5104 = vmatprep.subr.mxu0 0.0
        %5105 = vmatpush1.xpose.msra.mxu0 0.0
        %5106 = vmatprep.subr.mxu0 0.0
        %5107 = vmatpush1.xpose.msra.mxu0 0.0
        %5108 = vmatprep.subr.mxu0 0.0
        %5109 = vmatpush1.xpose.msra.mxu0 0.0
        %5110 = vmatprep.subr.mxu0 0.0
        %5111 = vmatpush1.xpose.msra.mxu0 0.0
        %5112 = vmatprep.subr.mxu0 0.0
        %5113 = vmatpush1.xpose.msra.mxu0 0.0
        %5114 = vmatprep.subr.mxu0 0.0
        %5115 = vmatpush1.xpose.msra.mxu0 0.0
        %5116 = vmatprep.subr.mxu0 0.0
        %5117 = vmatpush1.xpose.msra.mxu0 0.0
        %5118 = vmatprep.subr.mxu0 0.0
        %5119 = vmatpush1.xpose.msra.mxu0 %v5086
        %5120 = vmatprep.subr.mxu0 0.0
        %5121 = vmatpush2.xpose.msra.mxu0 0.0
        %5122 = vmatprep.subr.mxu0 0.0
        %5123 = vmatpush2.xpose.msra.mxu0 0.0
        %5124 = vmatprep.subr.mxu0 0.0
        %5125 = vmatpush2.xpose.msra.mxu0 0.0
        %5126 = vmatprep.subr.mxu0 0.0
        %5127 = vmatpush2.xpose.msra.mxu0 0.0
        %5128 = vmatprep.subr.mxu0 0.0
        %5129 = vmatpush2.xpose.msra.mxu0 0.0
        %5130 = vmatprep.subr.mxu0 0.0
        %5131 = vmatpush2.xpose.msra.mxu0 0.0
        %5132 = vmatprep.subr.mxu0 0.0
        %5133 = vmatpush2.xpose.msra.mxu0 0.0
        %5134 = vmatprep.subr.mxu0 0.0
        %5135 = vmatpush2.xpose.msra.mxu0 0.0
        %5136 = vmatprep.subr.mxu0 0.0
        %5137 = vmatpush2.xpose.msra.mxu0 0.0
        %5138 = vmatprep.subr.mxu0 0.0
        %5139 = vmatpush2.xpose.msra.mxu0 0.0
        %5140 = vmatprep.subr.mxu0 0.0
        %5141 = vmatpush2.xpose.msra.mxu0 0.0
        %5142 = vmatprep.subr.mxu0 0.0
        %5143 = vmatpush2.xpose.msra.mxu0 0.0
        %5144 = vmatprep.subr.mxu0 0.0
        %5145 = vmatpush2.xpose.msra.mxu0 0.0
        %5146 = vmatprep.subr.mxu0 0.0
        %5147 = vmatpush2.xpose.msra.mxu0 0.0
        %5148 = vmatprep.subr.mxu0 0.0
        %5149 = vmatpush2.xpose.msra.mxu0 0.0
        %5150 = vmatprep.subr.mxu0 0.0
        %5151 = vmatpush2.xpose.msra.mxu0 0.0
        %5152 = vmatprep.mubr.f32.mxu0 0.0
        %5153 = vmatmul.mubr.f32.gmra.mxu0 %v5083
        %v5154 = vpop.f32.mrf.mxu0
        %v5155 = vadd.f32 0.0, %v5154
        %v5156 = vpop.f32.mrf.mxu0
        %5157 = vdwg.mxu0
        %v5159 = vsel %vm1737, %v1686, 0
        %v5162 = vsel %vm1737, %v1718, 0
        %5164 = vmatprep.subr.mxu0 0.0
        %5165 = vmatpush1.xpose.msra.mxu0 0.0
        %5166 = vmatprep.subr.mxu0 0.0
        %5167 = vmatpush1.xpose.msra.mxu0 0.0
        %5168 = vmatprep.subr.mxu0 0.0
        %5169 = vmatpush1.xpose.msra.mxu0 0.0
        %5170 = vmatprep.subr.mxu0 0.0
        %5171 = vmatpush1.xpose.msra.mxu0 0.0
        %5172 = vmatprep.subr.mxu0 0.0
        %5173 = vmatpush1.xpose.msra.mxu0 0.0
        %5174 = vmatprep.subr.mxu0 0.0
        %5175 = vmatpush1.xpose.msra.mxu0 0.0
        %5176 = vmatprep.subr.mxu0 0.0
        %5177 = vmatpush1.xpose.msra.mxu0 0.0
        %5178 = vmatprep.subr.mxu0 0.0
        %5179 = vmatpush1.xpose.msra.mxu0 0.0
        %5180 = vmatprep.subr.mxu0 0.0
        %5181 = vmatpush1.xpose.msra.mxu0 0.0
        %5182 = vmatprep.subr.mxu0 0.0
        %5183 = vmatpush1.xpose.msra.mxu0 0.0
        %5184 = vmatprep.subr.mxu0 0.0
        %5185 = vmatpush1.xpose.msra.mxu0 0.0
        %5186 = vmatprep.subr.mxu0 0.0
        %5187 = vmatpush1.xpose.msra.mxu0 0.0
        %5188 = vmatprep.subr.mxu0 0.0
        %5189 = vmatpush1.xpose.msra.mxu0 0.0
        %5190 = vmatprep.subr.mxu0 0.0
        %5191 = vmatpush1.xpose.msra.mxu0 0.0
        %5192 = vmatprep.subr.mxu0 0.0
        %5193 = vmatpush1.xpose.msra.mxu0 0.0
        %5194 = vmatprep.subr.mxu0 0.0
        %5195 = vmatpush1.xpose.msra.mxu0 %v5162
        %5196 = vmatprep.subr.mxu0 0.0
        %5197 = vmatpush2.xpose.msra.mxu0 0.0
        %5198 = vmatprep.subr.mxu0 0.0
        %5199 = vmatpush2.xpose.msra.mxu0 0.0
        %5200 = vmatprep.subr.mxu0 0.0
        %5201 = vmatpush2.xpose.msra.mxu0 0.0
        %5202 = vmatprep.subr.mxu0 0.0
        %5203 = vmatpush2.xpose.msra.mxu0 0.0
        %5204 = vmatprep.subr.mxu0 0.0
        %5205 = vmatpush2.xpose.msra.mxu0 0.0
        %5206 = vmatprep.subr.mxu0 0.0
        %5207 = vmatpush2.xpose.msra.mxu0 0.0
        %5208 = vmatprep.subr.mxu0 0.0
        %5209 = vmatpush2.xpose.msra.mxu0 0.0
        %5210 = vmatprep.subr.mxu0 0.0
        %5211 = vmatpush2.xpose.msra.mxu0 0.0
        %5212 = vmatprep.subr.mxu0 0.0
        %5213 = vmatpush2.xpose.msra.mxu0 0.0
        %5214 = vmatprep.subr.mxu0 0.0
        %5215 = vmatpush2.xpose.msra.mxu0 0.0
        %5216 = vmatprep.subr.mxu0 0.0
        %5217 = vmatpush2.xpose.msra.mxu0 0.0
        %5218 = vmatprep.subr.mxu0 0.0
        %5219 = vmatpush2.xpose.msra.mxu0 0.0
        %5220 = vmatprep.subr.mxu0 0.0
        %5221 = vmatpush2.xpose.msra.mxu0 0.0
        %5222 = vmatprep.subr.mxu0 0.0
        %5223 = vmatpush2.xpose.msra.mxu0 0.0
        %5224 = vmatprep.subr.mxu0 0.0
        %5225 = vmatpush2.xpose.msra.mxu0 0.0
        %5226 = vmatprep.subr.mxu0 0.0
        %5227 = vmatpush2.xpose.msra.mxu0 0.0
        %5228 = vmatprep.mubr.f32.mxu0 0.0
        %5229 = vmatmul.mubr.f32.gmra.mxu0 %v5159
        %v5230 = vpop.f32.mrf.mxu0
        %v5231 = vadd.f32 0.0, %v5230
        %v5232 = vpop.f32.mrf.mxu0
        %5233 = vdwg.mxu0
        %v5235 = vsel %vm1737, %v1687, 0
        %v5238 = vsel %vm1737, %v1719, 0
        %5240 = vmatprep.subr.mxu0 0.0
        %5241 = vmatpush1.xpose.msra.mxu0 0.0
        %5242 = vmatprep.subr.mxu0 0.0
        %5243 = vmatpush1.xpose.msra.mxu0 0.0
        %5244 = vmatprep.subr.mxu0 0.0
        %5245 = vmatpush1.xpose.msra.mxu0 0.0
        %5246 = vmatprep.subr.mxu0 0.0
        %5247 = vmatpush1.xpose.msra.mxu0 0.0
        %5248 = vmatprep.subr.mxu0 0.0
        %5249 = vmatpush1.xpose.msra.mxu0 0.0
        %5250 = vmatprep.subr.mxu0 0.0
        %5251 = vmatpush1.xpose.msra.mxu0 0.0
        %5252 = vmatprep.subr.mxu0 0.0
        %5253 = vmatpush1.xpose.msra.mxu0 0.0
        %5254 = vmatprep.subr.mxu0 0.0
        %5255 = vmatpush1.xpose.msra.mxu0 0.0
        %5256 = vmatprep.subr.mxu0 0.0
        %5257 = vmatpush1.xpose.msra.mxu0 0.0
        %5258 = vmatprep.subr.mxu0 0.0
        %5259 = vmatpush1.xpose.msra.mxu0 0.0
        %5260 = vmatprep.subr.mxu0 0.0
        %5261 = vmatpush1.xpose.msra.mxu0 0.0
        %5262 = vmatprep.subr.mxu0 0.0
        %5263 = vmatpush1.xpose.msra.mxu0 0.0
        %5264 = vmatprep.subr.mxu0 0.0
        %5265 = vmatpush1.xpose.msra.mxu0 0.0
        %5266 = vmatprep.subr.mxu0 0.0
        %5267 = vmatpush1.xpose.msra.mxu0 0.0
        %5268 = vmatprep.subr.mxu0 0.0
        %5269 = vmatpush1.xpose.msra.mxu0 0.0
        %5270 = vmatprep.subr.mxu0 0.0
        %5271 = vmatpush1.xpose.msra.mxu0 %v5238
        %5272 = vmatprep.subr.mxu0 0.0
        %5273 = vmatpush2.xpose.msra.mxu0 0.0
        %5274 = vmatprep.subr.mxu0 0.0
        %5275 = vmatpush2.xpose.msra.mxu0 0.0
        %5276 = vmatprep.subr.mxu0 0.0
        %5277 = vmatpush2.xpose.msra.mxu0 0.0
        %5278 = vmatprep.subr.mxu0 0.0
        %5279 = vmatpush2.xpose.msra.mxu0 0.0
        %5280 = vmatprep.subr.mxu0 0.0
        %5281 = vmatpush2.xpose.msra.mxu0 0.0
        %5282 = vmatprep.subr.mxu0 0.0
        %5283 = vmatpush2.xpose.msra.mxu0 0.0
        %5284 = vmatprep.subr.mxu0 0.0
        %5285 = vmatpush2.xpose.msra.mxu0 0.0
        %5286 = vmatprep.subr.mxu0 0.0
        %5287 = vmatpush2.xpose.msra.mxu0 0.0
        %5288 = vmatprep.subr.mxu0 0.0
        %5289 = vmatpush2.xpose.msra.mxu0 0.0
        %5290 = vmatprep.subr.mxu0 0.0
        %5291 = vmatpush2.xpose.msra.mxu0 0.0
        %5292 = vmatprep.subr.mxu0 0.0
        %5293 = vmatpush2.xpose.msra.mxu0 0.0
        %5294 = vmatprep.subr.mxu0 0.0
        %5295 = vmatpush2.xpose.msra.mxu0 0.0
        %5296 = vmatprep.subr.mxu0 0.0
        %5297 = vmatpush2.xpose.msra.mxu0 0.0
        %5298 = vmatprep.subr.mxu0 0.0
        %5299 = vmatpush2.xpose.msra.mxu0 0.0
        %5300 = vmatprep.subr.mxu0 0.0
        %5301 = vmatpush2.xpose.msra.mxu0 0.0
        %5302 = vmatprep.subr.mxu0 0.0
        %5303 = vmatpush2.xpose.msra.mxu0 0.0
        %5304 = vmatprep.mubr.f32.mxu0 0.0
        %5305 = vmatmul.mubr.f32.gmra.mxu0 %v5235
        %v5306 = vpop.f32.mrf.mxu0
        %v5307 = vadd.f32 0.0, %v5306
        %v5308 = vpop.f32.mrf.mxu0
        %5309 = vdwg.mxu0
        %v5311 = vsel %vm1737, %v1688, 0
        %v5314 = vsel %vm1737, %v1720, 0
        %5316 = vmatprep.subr.mxu0 0.0
        %5317 = vmatpush1.xpose.msra.mxu0 0.0
        %5318 = vmatprep.subr.mxu0 0.0
        %5319 = vmatpush1.xpose.msra.mxu0 0.0
        %5320 = vmatprep.subr.mxu0 0.0
        %5321 = vmatpush1.xpose.msra.mxu0 0.0
        %5322 = vmatprep.subr.mxu0 0.0
        %5323 = vmatpush1.xpose.msra.mxu0 0.0
        %5324 = vmatprep.subr.mxu0 0.0
        %5325 = vmatpush1.xpose.msra.mxu0 0.0
        %5326 = vmatprep.subr.mxu0 0.0
        %5327 = vmatpush1.xpose.msra.mxu0 0.0
        %5328 = vmatprep.subr.mxu0 0.0
        %5329 = vmatpush1.xpose.msra.mxu0 0.0
        %5330 = vmatprep.subr.mxu0 0.0
        %5331 = vmatpush1.xpose.msra.mxu0 0.0
        %5332 = vmatprep.subr.mxu0 0.0
        %5333 = vmatpush1.xpose.msra.mxu0 0.0
        %5334 = vmatprep.subr.mxu0 0.0
        %5335 = vmatpush1.xpose.msra.mxu0 0.0
        %5336 = vmatprep.subr.mxu0 0.0
        %5337 = vmatpush1.xpose.msra.mxu0 0.0
        %5338 = vmatprep.subr.mxu0 0.0
        %5339 = vmatpush1.xpose.msra.mxu0 0.0
        %5340 = vmatprep.subr.mxu0 0.0
        %5341 = vmatpush1.xpose.msra.mxu0 0.0
        %5342 = vmatprep.subr.mxu0 0.0
        %5343 = vmatpush1.xpose.msra.mxu0 0.0
        %5344 = vmatprep.subr.mxu0 0.0
        %5345 = vmatpush1.xpose.msra.mxu0 0.0
        %5346 = vmatprep.subr.mxu0 0.0
        %5347 = vmatpush1.xpose.msra.mxu0 %v5314
        %5348 = vmatprep.subr.mxu0 0.0
        %5349 = vmatpush2.xpose.msra.mxu0 0.0
        %5350 = vmatprep.subr.mxu0 0.0
        %5351 = vmatpush2.xpose.msra.mxu0 0.0
        %5352 = vmatprep.subr.mxu0 0.0
        %5353 = vmatpush2.xpose.msra.mxu0 0.0
        %5354 = vmatprep.subr.mxu0 0.0
        %5355 = vmatpush2.xpose.msra.mxu0 0.0
        %5356 = vmatprep.subr.mxu0 0.0
        %5357 = vmatpush2.xpose.msra.mxu0 0.0
        %5358 = vmatprep.subr.mxu0 0.0
        %5359 = vmatpush2.xpose.msra.mxu0 0.0
        %5360 = vmatprep.subr.mxu0 0.0
        %5361 = vmatpush2.xpose.msra.mxu0 0.0
        %5362 = vmatprep.subr.mxu0 0.0
        %5363 = vmatpush2.xpose.msra.mxu0 0.0
        %5364 = vmatprep.subr.mxu0 0.0
        %5365 = vmatpush2.xpose.msra.mxu0 0.0
        %5366 = vmatprep.subr.mxu0 0.0
        %5367 = vmatpush2.xpose.msra.mxu0 0.0
        %5368 = vmatprep.subr.mxu0 0.0
        %5369 = vmatpush2.xpose.msra.mxu0 0.0
        %5370 = vmatprep.subr.mxu0 0.0
        %5371 = vmatpush2.xpose.msra.mxu0 0.0
        %5372 = vmatprep.subr.mxu0 0.0
        %5373 = vmatpush2.xpose.msra.mxu0 0.0
        %5374 = vmatprep.subr.mxu0 0.0
        %5375 = vmatpush2.xpose.msra.mxu0 0.0
        %5376 = vmatprep.subr.mxu0 0.0
        %5377 = vmatpush2.xpose.msra.mxu0 0.0
        %5378 = vmatprep.subr.mxu0 0.0
        %5379 = vmatpush2.xpose.msra.mxu0 0.0
        %5380 = vmatprep.mubr.f32.mxu0 0.0
        %5381 = vmatmul.mubr.f32.gmra.mxu0 %v5311
        %v5382 = vpop.f32.mrf.mxu0
        %v5383 = vadd.f32 0.0, %v5382
        %v5384 = vpop.f32.mrf.mxu0
        %5385 = vdwg.mxu0
        %v5387 = vsel %vm1737, %v1689, 0
        %v5390 = vsel %vm1737, %v1721, 0
        %5392 = vmatprep.subr.mxu0 0.0
        %5393 = vmatpush1.xpose.msra.mxu0 0.0
        %5394 = vmatprep.subr.mxu0 0.0
        %5395 = vmatpush1.xpose.msra.mxu0 0.0
        %5396 = vmatprep.subr.mxu0 0.0
        %5397 = vmatpush1.xpose.msra.mxu0 0.0
        %5398 = vmatprep.subr.mxu0 0.0
        %5399 = vmatpush1.xpose.msra.mxu0 0.0
        %5400 = vmatprep.subr.mxu0 0.0
        %5401 = vmatpush1.xpose.msra.mxu0 0.0
        %5402 = vmatprep.subr.mxu0 0.0
        %5403 = vmatpush1.xpose.msra.mxu0 0.0
        %5404 = vmatprep.subr.mxu0 0.0
        %5405 = vmatpush1.xpose.msra.mxu0 0.0
        %5406 = vmatprep.subr.mxu0 0.0
        %5407 = vmatpush1.xpose.msra.mxu0 0.0
        %5408 = vmatprep.subr.mxu0 0.0
        %5409 = vmatpush1.xpose.msra.mxu0 0.0
        %5410 = vmatprep.subr.mxu0 0.0
        %5411 = vmatpush1.xpose.msra.mxu0 0.0
        %5412 = vmatprep.subr.mxu0 0.0
        %5413 = vmatpush1.xpose.msra.mxu0 0.0
        %5414 = vmatprep.subr.mxu0 0.0
        %5415 = vmatpush1.xpose.msra.mxu0 0.0
        %5416 = vmatprep.subr.mxu0 0.0
        %5417 = vmatpush1.xpose.msra.mxu0 0.0
        %5418 = vmatprep.subr.mxu0 0.0
        %5419 = vmatpush1.xpose.msra.mxu0 0.0
        %5420 = vmatprep.subr.mxu0 0.0
        %5421 = vmatpush1.xpose.msra.mxu0 0.0
        %5422 = vmatprep.subr.mxu0 0.0
        %5423 = vmatpush1.xpose.msra.mxu0 %v5390
        %5424 = vmatprep.subr.mxu0 0.0
        %5425 = vmatpush2.xpose.msra.mxu0 0.0
        %5426 = vmatprep.subr.mxu0 0.0
        %5427 = vmatpush2.xpose.msra.mxu0 0.0
        %5428 = vmatprep.subr.mxu0 0.0
        %5429 = vmatpush2.xpose.msra.mxu0 0.0
        %5430 = vmatprep.subr.mxu0 0.0
        %5431 = vmatpush2.xpose.msra.mxu0 0.0
        %5432 = vmatprep.subr.mxu0 0.0
        %5433 = vmatpush2.xpose.msra.mxu0 0.0
        %5434 = vmatprep.subr.mxu0 0.0
        %5435 = vmatpush2.xpose.msra.mxu0 0.0
        %5436 = vmatprep.subr.mxu0 0.0
        %5437 = vmatpush2.xpose.msra.mxu0 0.0
        %5438 = vmatprep.subr.mxu0 0.0
        %5439 = vmatpush2.xpose.msra.mxu0 0.0
        %5440 = vmatprep.subr.mxu0 0.0
        %5441 = vmatpush2.xpose.msra.mxu0 0.0
        %5442 = vmatprep.subr.mxu0 0.0
        %5443 = vmatpush2.xpose.msra.mxu0 0.0
        %5444 = vmatprep.subr.mxu0 0.0
        %5445 = vmatpush2.xpose.msra.mxu0 0.0
        %5446 = vmatprep.subr.mxu0 0.0
        %5447 = vmatpush2.xpose.msra.mxu0 0.0
        %5448 = vmatprep.subr.mxu0 0.0
        %5449 = vmatpush2.xpose.msra.mxu0 0.0
        %5450 = vmatprep.subr.mxu0 0.0
        %5451 = vmatpush2.xpose.msra.mxu0 0.0
        %5452 = vmatprep.subr.mxu0 0.0
        %5453 = vmatpush2.xpose.msra.mxu0 0.0
        %5454 = vmatprep.subr.mxu0 0.0
        %5455 = vmatpush2.xpose.msra.mxu0 0.0
        %5456 = vmatprep.mubr.f32.mxu0 0.0
        %5457 = vmatmul.mubr.f32.gmra.mxu0 %v5387
        %v5458 = vpop.f32.mrf.mxu0
        %v5459 = vadd.f32 0.0, %v5458
        %v5460 = vpop.f32.mrf.mxu0
        %5461 = vdwg.mxu0
        %v5463 = vsel %vm1737, %v1690, 0
        %v5466 = vsel %vm1737, %v1722, 0
        %5468 = vmatprep.subr.mxu0 0.0
        %5469 = vmatpush1.xpose.msra.mxu0 0.0
        %5470 = vmatprep.subr.mxu0 0.0
        %5471 = vmatpush1.xpose.msra.mxu0 0.0
        %5472 = vmatprep.subr.mxu0 0.0
        %5473 = vmatpush1.xpose.msra.mxu0 0.0
        %5474 = vmatprep.subr.mxu0 0.0
        %5475 = vmatpush1.xpose.msra.mxu0 0.0
        %5476 = vmatprep.subr.mxu0 0.0
        %5477 = vmatpush1.xpose.msra.mxu0 0.0
        %5478 = vmatprep.subr.mxu0 0.0
        %5479 = vmatpush1.xpose.msra.mxu0 0.0
        %5480 = vmatprep.subr.mxu0 0.0
        %5481 = vmatpush1.xpose.msra.mxu0 0.0
        %5482 = vmatprep.subr.mxu0 0.0
        %5483 = vmatpush1.xpose.msra.mxu0 0.0
        %5484 = vmatprep.subr.mxu0 0.0
        %5485 = vmatpush1.xpose.msra.mxu0 0.0
        %5486 = vmatprep.subr.mxu0 0.0
        %5487 = vmatpush1.xpose.msra.mxu0 0.0
        %5488 = vmatprep.subr.mxu0 0.0
        %5489 = vmatpush1.xpose.msra.mxu0 0.0
        %5490 = vmatprep.subr.mxu0 0.0
        %5491 = vmatpush1.xpose.msra.mxu0 0.0
        %5492 = vmatprep.subr.mxu0 0.0
        %5493 = vmatpush1.xpose.msra.mxu0 0.0
        %5494 = vmatprep.subr.mxu0 0.0
        %5495 = vmatpush1.xpose.msra.mxu0 0.0
        %5496 = vmatprep.subr.mxu0 0.0
        %5497 = vmatpush1.xpose.msra.mxu0 0.0
        %5498 = vmatprep.subr.mxu0 0.0
        %5499 = vmatpush1.xpose.msra.mxu0 %v5466
        %5500 = vmatprep.subr.mxu0 0.0
        %5501 = vmatpush2.xpose.msra.mxu0 0.0
        %5502 = vmatprep.subr.mxu0 0.0
        %5503 = vmatpush2.xpose.msra.mxu0 0.0
        %5504 = vmatprep.subr.mxu0 0.0
        %5505 = vmatpush2.xpose.msra.mxu0 0.0
        %5506 = vmatprep.subr.mxu0 0.0
        %5507 = vmatpush2.xpose.msra.mxu0 0.0
        %5508 = vmatprep.subr.mxu0 0.0
        %5509 = vmatpush2.xpose.msra.mxu0 0.0
        %5510 = vmatprep.subr.mxu0 0.0
        %5511 = vmatpush2.xpose.msra.mxu0 0.0
        %5512 = vmatprep.subr.mxu0 0.0
        %5513 = vmatpush2.xpose.msra.mxu0 0.0
        %5514 = vmatprep.subr.mxu0 0.0
        %5515 = vmatpush2.xpose.msra.mxu0 0.0
        %5516 = vmatprep.subr.mxu0 0.0
        %5517 = vmatpush2.xpose.msra.mxu0 0.0
        %5518 = vmatprep.subr.mxu0 0.0
        %5519 = vmatpush2.xpose.msra.mxu0 0.0
        %5520 = vmatprep.subr.mxu0 0.0
        %5521 = vmatpush2.xpose.msra.mxu0 0.0
        %5522 = vmatprep.subr.mxu0 0.0
        %5523 = vmatpush2.xpose.msra.mxu0 0.0
        %5524 = vmatprep.subr.mxu0 0.0
        %5525 = vmatpush2.xpose.msra.mxu0 0.0
        %5526 = vmatprep.subr.mxu0 0.0
        %5527 = vmatpush2.xpose.msra.mxu0 0.0
        %5528 = vmatprep.subr.mxu0 0.0
        %5529 = vmatpush2.xpose.msra.mxu0 0.0
        %5530 = vmatprep.subr.mxu0 0.0
        %5531 = vmatpush2.xpose.msra.mxu0 0.0
        %5532 = vmatprep.mubr.f32.mxu0 0.0
        %5533 = vmatmul.mubr.f32.gmra.mxu0 %v5463
        %v5534 = vpop.f32.mrf.mxu0
        %v5535 = vadd.f32 0.0, %v5534
        %v5536 = vpop.f32.mrf.mxu0
        %5537 = vdwg.mxu0
        %v5539 = vsel %vm1737, %v1691, 0
        %v5542 = vsel %vm1737, %v1723, 0
        %5544 = vmatprep.subr.mxu0 0.0
        %5545 = vmatpush1.xpose.msra.mxu0 0.0
        %5546 = vmatprep.subr.mxu0 0.0
        %5547 = vmatpush1.xpose.msra.mxu0 0.0
        %5548 = vmatprep.subr.mxu0 0.0
        %5549 = vmatpush1.xpose.msra.mxu0 0.0
        %5550 = vmatprep.subr.mxu0 0.0
        %5551 = vmatpush1.xpose.msra.mxu0 0.0
        %5552 = vmatprep.subr.mxu0 0.0
        %5553 = vmatpush1.xpose.msra.mxu0 0.0
        %5554 = vmatprep.subr.mxu0 0.0
        %5555 = vmatpush1.xpose.msra.mxu0 0.0
        %5556 = vmatprep.subr.mxu0 0.0
        %5557 = vmatpush1.xpose.msra.mxu0 0.0
        %5558 = vmatprep.subr.mxu0 0.0
        %5559 = vmatpush1.xpose.msra.mxu0 0.0
        %5560 = vmatprep.subr.mxu0 0.0
        %5561 = vmatpush1.xpose.msra.mxu0 0.0
        %5562 = vmatprep.subr.mxu0 0.0
        %5563 = vmatpush1.xpose.msra.mxu0 0.0
        %5564 = vmatprep.subr.mxu0 0.0
        %5565 = vmatpush1.xpose.msra.mxu0 0.0
        %5566 = vmatprep.subr.mxu0 0.0
        %5567 = vmatpush1.xpose.msra.mxu0 0.0
        %5568 = vmatprep.subr.mxu0 0.0
        %5569 = vmatpush1.xpose.msra.mxu0 0.0
        %5570 = vmatprep.subr.mxu0 0.0
        %5571 = vmatpush1.xpose.msra.mxu0 0.0
        %5572 = vmatprep.subr.mxu0 0.0
        %5573 = vmatpush1.xpose.msra.mxu0 0.0
        %5574 = vmatprep.subr.mxu0 0.0
        %5575 = vmatpush1.xpose.msra.mxu0 %v5542
        %5576 = vmatprep.subr.mxu0 0.0
        %5577 = vmatpush2.xpose.msra.mxu0 0.0
        %5578 = vmatprep.subr.mxu0 0.0
        %5579 = vmatpush2.xpose.msra.mxu0 0.0
        %5580 = vmatprep.subr.mxu0 0.0
        %5581 = vmatpush2.xpose.msra.mxu0 0.0
        %5582 = vmatprep.subr.mxu0 0.0
        %5583 = vmatpush2.xpose.msra.mxu0 0.0
        %5584 = vmatprep.subr.mxu0 0.0
        %5585 = vmatpush2.xpose.msra.mxu0 0.0
        %5586 = vmatprep.subr.mxu0 0.0
        %5587 = vmatpush2.xpose.msra.mxu0 0.0
        %5588 = vmatprep.subr.mxu0 0.0
        %5589 = vmatpush2.xpose.msra.mxu0 0.0
        %5590 = vmatprep.subr.mxu0 0.0
        %5591 = vmatpush2.xpose.msra.mxu0 0.0
        %5592 = vmatprep.subr.mxu0 0.0
        %5593 = vmatpush2.xpose.msra.mxu0 0.0
        %5594 = vmatprep.subr.mxu0 0.0
        %5595 = vmatpush2.xpose.msra.mxu0 0.0
        %5596 = vmatprep.subr.mxu0 0.0
        %5597 = vmatpush2.xpose.msra.mxu0 0.0
        %5598 = vmatprep.subr.mxu0 0.0
        %5599 = vmatpush2.xpose.msra.mxu0 0.0
        %5600 = vmatprep.subr.mxu0 0.0
        %5601 = vmatpush2.xpose.msra.mxu0 0.0
        %5602 = vmatprep.subr.mxu0 0.0
        %5603 = vmatpush2.xpose.msra.mxu0 0.0
        %5604 = vmatprep.subr.mxu0 0.0
        %5605 = vmatpush2.xpose.msra.mxu0 0.0
        %5606 = vmatprep.subr.mxu0 0.0
        %5607 = vmatpush2.xpose.msra.mxu0 0.0
        %5608 = vmatprep.mubr.f32.mxu0 0.0
        %5609 = vmatmul.mubr.f32.gmra.mxu0 %v5539
        %v5610 = vpop.f32.mrf.mxu0
        %v5611 = vadd.f32 0.0, %v5610
        %v5612 = vpop.f32.mrf.mxu0
        %5613 = vdwg.mxu0
        %v5615 = vsel %vm1737, %v1692, 0
        %v5618 = vsel %vm1737, %v1724, 0
        %5620 = vmatprep.subr.mxu0 0.0
        %5621 = vmatpush1.xpose.msra.mxu0 0.0
        %5622 = vmatprep.subr.mxu0 0.0
        %5623 = vmatpush1.xpose.msra.mxu0 0.0
        %5624 = vmatprep.subr.mxu0 0.0
        %5625 = vmatpush1.xpose.msra.mxu0 0.0
        %5626 = vmatprep.subr.mxu0 0.0
        %5627 = vmatpush1.xpose.msra.mxu0 0.0
        %5628 = vmatprep.subr.mxu0 0.0
        %5629 = vmatpush1.xpose.msra.mxu0 0.0
        %5630 = vmatprep.subr.mxu0 0.0
        %5631 = vmatpush1.xpose.msra.mxu0 0.0
        %5632 = vmatprep.subr.mxu0 0.0
        %5633 = vmatpush1.xpose.msra.mxu0 0.0
        %5634 = vmatprep.subr.mxu0 0.0
        %5635 = vmatpush1.xpose.msra.mxu0 0.0
        %5636 = vmatprep.subr.mxu0 0.0
        %5637 = vmatpush1.xpose.msra.mxu0 0.0
        %5638 = vmatprep.subr.mxu0 0.0
        %5639 = vmatpush1.xpose.msra.mxu0 0.0
        %5640 = vmatprep.subr.mxu0 0.0
        %5641 = vmatpush1.xpose.msra.mxu0 0.0
        %5642 = vmatprep.subr.mxu0 0.0
        %5643 = vmatpush1.xpose.msra.mxu0 0.0
        %5644 = vmatprep.subr.mxu0 0.0
        %5645 = vmatpush1.xpose.msra.mxu0 0.0
        %5646 = vmatprep.subr.mxu0 0.0
        %5647 = vmatpush1.xpose.msra.mxu0 0.0
        %5648 = vmatprep.subr.mxu0 0.0
        %5649 = vmatpush1.xpose.msra.mxu0 0.0
        %5650 = vmatprep.subr.mxu0 0.0
        %5651 = vmatpush1.xpose.msra.mxu0 %v5618
        %5652 = vmatprep.subr.mxu0 0.0
        %5653 = vmatpush2.xpose.msra.mxu0 0.0
        %5654 = vmatprep.subr.mxu0 0.0
        %5655 = vmatpush2.xpose.msra.mxu0 0.0
        %5656 = vmatprep.subr.mxu0 0.0
        %5657 = vmatpush2.xpose.msra.mxu0 0.0
        %5658 = vmatprep.subr.mxu0 0.0
        %5659 = vmatpush2.xpose.msra.mxu0 0.0
        %5660 = vmatprep.subr.mxu0 0.0
        %5661 = vmatpush2.xpose.msra.mxu0 0.0
        %5662 = vmatprep.subr.mxu0 0.0
        %5663 = vmatpush2.xpose.msra.mxu0 0.0
        %5664 = vmatprep.subr.mxu0 0.0
        %5665 = vmatpush2.xpose.msra.mxu0 0.0
        %5666 = vmatprep.subr.mxu0 0.0
        %5667 = vmatpush2.xpose.msra.mxu0 0.0
        %5668 = vmatprep.subr.mxu0 0.0
        %5669 = vmatpush2.xpose.msra.mxu0 0.0
        %5670 = vmatprep.subr.mxu0 0.0
        %5671 = vmatpush2.xpose.msra.mxu0 0.0
        %5672 = vmatprep.subr.mxu0 0.0
        %5673 = vmatpush2.xpose.msra.mxu0 0.0
        %5674 = vmatprep.subr.mxu0 0.0
        %5675 = vmatpush2.xpose.msra.mxu0 0.0
        %5676 = vmatprep.subr.mxu0 0.0
        %5677 = vmatpush2.xpose.msra.mxu0 0.0
        %5678 = vmatprep.subr.mxu0 0.0
        %5679 = vmatpush2.xpose.msra.mxu0 0.0
        %5680 = vmatprep.subr.mxu0 0.0
        %5681 = vmatpush2.xpose.msra.mxu0 0.0
        %5682 = vmatprep.subr.mxu0 0.0
        %5683 = vmatpush2.xpose.msra.mxu0 0.0
        %5684 = vmatprep.mubr.f32.mxu0 0.0
        %5685 = vmatmul.mubr.f32.gmra.mxu0 %v5615
        %v5686 = vpop.f32.mrf.mxu0
        %v5687 = vadd.f32 0.0, %v5686
        %v5688 = vpop.f32.mrf.mxu0
        %5689 = vdwg.mxu0
        %v5691 = vsel %vm1737, %v1693, 0
        %v5694 = vsel %vm1737, %v1725, 0
        %5696 = vmatprep.subr.mxu0 0.0
        %5697 = vmatpush1.xpose.msra.mxu0 0.0
        %5698 = vmatprep.subr.mxu0 0.0
        %5699 = vmatpush1.xpose.msra.mxu0 0.0
        %5700 = vmatprep.subr.mxu0 0.0
        %5701 = vmatpush1.xpose.msra.mxu0 0.0
        %5702 = vmatprep.subr.mxu0 0.0
        %5703 = vmatpush1.xpose.msra.mxu0 0.0
        %5704 = vmatprep.subr.mxu0 0.0
        %5705 = vmatpush1.xpose.msra.mxu0 0.0
        %5706 = vmatprep.subr.mxu0 0.0
        %5707 = vmatpush1.xpose.msra.mxu0 0.0
        %5708 = vmatprep.subr.mxu0 0.0
        %5709 = vmatpush1.xpose.msra.mxu0 0.0
        %5710 = vmatprep.subr.mxu0 0.0
        %5711 = vmatpush1.xpose.msra.mxu0 0.0
        %5712 = vmatprep.subr.mxu0 0.0
        %5713 = vmatpush1.xpose.msra.mxu0 0.0
        %5714 = vmatprep.subr.mxu0 0.0
        %5715 = vmatpush1.xpose.msra.mxu0 0.0
        %5716 = vmatprep.subr.mxu0 0.0
        %5717 = vmatpush1.xpose.msra.mxu0 0.0
        %5718 = vmatprep.subr.mxu0 0.0
        %5719 = vmatpush1.xpose.msra.mxu0 0.0
        %5720 = vmatprep.subr.mxu0 0.0
        %5721 = vmatpush1.xpose.msra.mxu0 0.0
        %5722 = vmatprep.subr.mxu0 0.0
        %5723 = vmatpush1.xpose.msra.mxu0 0.0
        %5724 = vmatprep.subr.mxu0 0.0
        %5725 = vmatpush1.xpose.msra.mxu0 0.0
        %5726 = vmatprep.subr.mxu0 0.0
        %5727 = vmatpush1.xpose.msra.mxu0 %v5694
        %5728 = vmatprep.subr.mxu0 0.0
        %5729 = vmatpush2.xpose.msra.mxu0 0.0
        %5730 = vmatprep.subr.mxu0 0.0
        %5731 = vmatpush2.xpose.msra.mxu0 0.0
        %5732 = vmatprep.subr.mxu0 0.0
        %5733 = vmatpush2.xpose.msra.mxu0 0.0
        %5734 = vmatprep.subr.mxu0 0.0
        %5735 = vmatpush2.xpose.msra.mxu0 0.0
        %5736 = vmatprep.subr.mxu0 0.0
        %5737 = vmatpush2.xpose.msra.mxu0 0.0
        %5738 = vmatprep.subr.mxu0 0.0
        %5739 = vmatpush2.xpose.msra.mxu0 0.0
        %5740 = vmatprep.subr.mxu0 0.0
        %5741 = vmatpush2.xpose.msra.mxu0 0.0
        %5742 = vmatprep.subr.mxu0 0.0
        %5743 = vmatpush2.xpose.msra.mxu0 0.0
        %5744 = vmatprep.subr.mxu0 0.0
        %5745 = vmatpush2.xpose.msra.mxu0 0.0
        %5746 = vmatprep.subr.mxu0 0.0
        %5747 = vmatpush2.xpose.msra.mxu0 0.0
        %5748 = vmatprep.subr.mxu0 0.0
        %5749 = vmatpush2.xpose.msra.mxu0 0.0
        %5750 = vmatprep.subr.mxu0 0.0
        %5751 = vmatpush2.xpose.msra.mxu0 0.0
        %5752 = vmatprep.subr.mxu0 0.0
        %5753 = vmatpush2.xpose.msra.mxu0 0.0
        %5754 = vmatprep.subr.mxu0 0.0
        %5755 = vmatpush2.xpose.msra.mxu0 0.0
        %5756 = vmatprep.subr.mxu0 0.0
        %5757 = vmatpush2.xpose.msra.mxu0 0.0
        %5758 = vmatprep.subr.mxu0 0.0
        %5759 = vmatpush2.xpose.msra.mxu0 0.0
        %5760 = vmatprep.mubr.f32.mxu0 0.0
        %5761 = vmatmul.mubr.f32.gmra.mxu0 %v5691
        %v5762 = vpop.f32.mrf.mxu0
        %v5763 = vadd.f32 0.0, %v5762
        %v5764 = vpop.f32.mrf.mxu0
        %5765 = vdwg.mxu0
        %v5767 = vsel %vm1737, %v1694, 0
        %v5770 = vsel %vm1737, %v1726, 0
        %5772 = vmatprep.subr.mxu0 0.0
        %5773 = vmatpush1.xpose.msra.mxu0 0.0
        %5774 = vmatprep.subr.mxu0 0.0
        %5775 = vmatpush1.xpose.msra.mxu0 0.0
        %5776 = vmatprep.subr.mxu0 0.0
        %5777 = vmatpush1.xpose.msra.mxu0 0.0
        %5778 = vmatprep.subr.mxu0 0.0
        %5779 = vmatpush1.xpose.msra.mxu0 0.0
        %5780 = vmatprep.subr.mxu0 0.0
        %5781 = vmatpush1.xpose.msra.mxu0 0.0
        %5782 = vmatprep.subr.mxu0 0.0
        %5783 = vmatpush1.xpose.msra.mxu0 0.0
        %5784 = vmatprep.subr.mxu0 0.0
        %5785 = vmatpush1.xpose.msra.mxu0 0.0
        %5786 = vmatprep.subr.mxu0 0.0
        %5787 = vmatpush1.xpose.msra.mxu0 0.0
        %5788 = vmatprep.subr.mxu0 0.0
        %5789 = vmatpush1.xpose.msra.mxu0 0.0
        %5790 = vmatprep.subr.mxu0 0.0
        %5791 = vmatpush1.xpose.msra.mxu0 0.0
        %5792 = vmatprep.subr.mxu0 0.0
        %5793 = vmatpush1.xpose.msra.mxu0 0.0
        %5794 = vmatprep.subr.mxu0 0.0
        %5795 = vmatpush1.xpose.msra.mxu0 0.0
        %5796 = vmatprep.subr.mxu0 0.0
        %5797 = vmatpush1.xpose.msra.mxu0 0.0
        %5798 = vmatprep.subr.mxu0 0.0
        %5799 = vmatpush1.xpose.msra.mxu0 0.0
        %5800 = vmatprep.subr.mxu0 0.0
        %5801 = vmatpush1.xpose.msra.mxu0 0.0
        %5802 = vmatprep.subr.mxu0 0.0
        %5803 = vmatpush1.xpose.msra.mxu0 %v5770
        %5804 = vmatprep.subr.mxu0 0.0
        %5805 = vmatpush2.xpose.msra.mxu0 0.0
        %5806 = vmatprep.subr.mxu0 0.0
        %5807 = vmatpush2.xpose.msra.mxu0 0.0
        %5808 = vmatprep.subr.mxu0 0.0
        %5809 = vmatpush2.xpose.msra.mxu0 0.0
        %5810 = vmatprep.subr.mxu0 0.0
        %5811 = vmatpush2.xpose.msra.mxu0 0.0
        %5812 = vmatprep.subr.mxu0 0.0
        %5813 = vmatpush2.xpose.msra.mxu0 0.0
        %5814 = vmatprep.subr.mxu0 0.0
        %5815 = vmatpush2.xpose.msra.mxu0 0.0
        %5816 = vmatprep.subr.mxu0 0.0
        %5817 = vmatpush2.xpose.msra.mxu0 0.0
        %5818 = vmatprep.subr.mxu0 0.0
        %5819 = vmatpush2.xpose.msra.mxu0 0.0
        %5820 = vmatprep.subr.mxu0 0.0
        %5821 = vmatpush2.xpose.msra.mxu0 0.0
        %5822 = vmatprep.subr.mxu0 0.0
        %5823 = vmatpush2.xpose.msra.mxu0 0.0
        %5824 = vmatprep.subr.mxu0 0.0
        %5825 = vmatpush2.xpose.msra.mxu0 0.0
        %5826 = vmatprep.subr.mxu0 0.0
        %5827 = vmatpush2.xpose.msra.mxu0 0.0
        %5828 = vmatprep.subr.mxu0 0.0
        %5829 = vmatpush2.xpose.msra.mxu0 0.0
        %5830 = vmatprep.subr.mxu0 0.0
        %5831 = vmatpush2.xpose.msra.mxu0 0.0
        %5832 = vmatprep.subr.mxu0 0.0
        %5833 = vmatpush2.xpose.msra.mxu0 0.0
        %5834 = vmatprep.subr.mxu0 0.0
        %5835 = vmatpush2.xpose.msra.mxu0 0.0
        %5836 = vmatprep.mubr.f32.mxu0 0.0
        %5837 = vmatmul.mubr.f32.gmra.mxu0 %v5767
        %v5838 = vpop.f32.mrf.mxu0
        %v5839 = vadd.f32 0.0, %v5838
        %v5840 = vpop.f32.mrf.mxu0
        %5841 = vdwg.mxu0
        %v5843 = vsel %vm1737, %v1695, 0
        %v5846 = vsel %vm1737, %v1727, 0
        %5848 = vmatprep.subr.mxu0 0.0
        %5849 = vmatpush1.xpose.msra.mxu0 0.0
        %5850 = vmatprep.subr.mxu0 0.0
        %5851 = vmatpush1.xpose.msra.mxu0 0.0
        %5852 = vmatprep.subr.mxu0 0.0
        %5853 = vmatpush1.xpose.msra.mxu0 0.0
        %5854 = vmatprep.subr.mxu0 0.0
        %5855 = vmatpush1.xpose.msra.mxu0 0.0
        %5856 = vmatprep.subr.mxu0 0.0
        %5857 = vmatpush1.xpose.msra.mxu0 0.0
        %5858 = vmatprep.subr.mxu0 0.0
        %5859 = vmatpush1.xpose.msra.mxu0 0.0
        %5860 = vmatprep.subr.mxu0 0.0
        %5861 = vmatpush1.xpose.msra.mxu0 0.0
        %5862 = vmatprep.subr.mxu0 0.0
        %5863 = vmatpush1.xpose.msra.mxu0 0.0
        %5864 = vmatprep.subr.mxu0 0.0
        %5865 = vmatpush1.xpose.msra.mxu0 0.0
        %5866 = vmatprep.subr.mxu0 0.0
        %5867 = vmatpush1.xpose.msra.mxu0 0.0
        %5868 = vmatprep.subr.mxu0 0.0
        %5869 = vmatpush1.xpose.msra.mxu0 0.0
        %5870 = vmatprep.subr.mxu0 0.0
        %5871 = vmatpush1.xpose.msra.mxu0 0.0
        %5872 = vmatprep.subr.mxu0 0.0
        %5873 = vmatpush1.xpose.msra.mxu0 0.0
        %5874 = vmatprep.subr.mxu0 0.0
        %5875 = vmatpush1.xpose.msra.mxu0 0.0
        %5876 = vmatprep.subr.mxu0 0.0
        %5877 = vmatpush1.xpose.msra.mxu0 0.0
        %5878 = vmatprep.subr.mxu0 0.0
        %5879 = vmatpush1.xpose.msra.mxu0 %v5846
        %5880 = vmatprep.subr.mxu0 0.0
        %5881 = vmatpush2.xpose.msra.mxu0 0.0
        %5882 = vmatprep.subr.mxu0 0.0
        %5883 = vmatpush2.xpose.msra.mxu0 0.0
        %5884 = vmatprep.subr.mxu0 0.0
        %5885 = vmatpush2.xpose.msra.mxu0 0.0
        %5886 = vmatprep.subr.mxu0 0.0
        %5887 = vmatpush2.xpose.msra.mxu0 0.0
        %5888 = vmatprep.subr.mxu0 0.0
        %5889 = vmatpush2.xpose.msra.mxu0 0.0
        %5890 = vmatprep.subr.mxu0 0.0
        %5891 = vmatpush2.xpose.msra.mxu0 0.0
        %5892 = vmatprep.subr.mxu0 0.0
        %5893 = vmatpush2.xpose.msra.mxu0 0.0
        %5894 = vmatprep.subr.mxu0 0.0
        %5895 = vmatpush2.xpose.msra.mxu0 0.0
        %5896 = vmatprep.subr.mxu0 0.0
        %5897 = vmatpush2.xpose.msra.mxu0 0.0
        %5898 = vmatprep.subr.mxu0 0.0
        %5899 = vmatpush2.xpose.msra.mxu0 0.0
        %5900 = vmatprep.subr.mxu0 0.0
        %5901 = vmatpush2.xpose.msra.mxu0 0.0
        %5902 = vmatprep.subr.mxu0 0.0
        %5903 = vmatpush2.xpose.msra.mxu0 0.0
        %5904 = vmatprep.subr.mxu0 0.0
        %5905 = vmatpush2.xpose.msra.mxu0 0.0
        %5906 = vmatprep.subr.mxu0 0.0
        %5907 = vmatpush2.xpose.msra.mxu0 0.0
        %5908 = vmatprep.subr.mxu0 0.0
        %5909 = vmatpush2.xpose.msra.mxu0 0.0
        %5910 = vmatprep.subr.mxu0 0.0
        %5911 = vmatpush2.xpose.msra.mxu0 0.0
        %5912 = vmatprep.mubr.f32.mxu0 0.0
        %5913 = vmatmul.mubr.f32.gmra.mxu0 %v5843
        %v5914 = vpop.f32.mrf.mxu0
        %v5915 = vadd.f32 0.0, %v5914
        %v5916 = vpop.f32.mrf.mxu0
        %5917 = vdwg.mxu0
        %v5919 = vsel %vm1737, %v1696, 0
        %v5922 = vsel %vm1737, %v1728, 0
        %5924 = vmatprep.subr.mxu0 0.0
        %5925 = vmatpush1.xpose.msra.mxu0 0.0
        %5926 = vmatprep.subr.mxu0 0.0
        %5927 = vmatpush1.xpose.msra.mxu0 0.0
        %5928 = vmatprep.subr.mxu0 0.0
        %5929 = vmatpush1.xpose.msra.mxu0 0.0
        %5930 = vmatprep.subr.mxu0 0.0
        %5931 = vmatpush1.xpose.msra.mxu0 0.0
        %5932 = vmatprep.subr.mxu0 0.0
        %5933 = vmatpush1.xpose.msra.mxu0 0.0
        %5934 = vmatprep.subr.mxu0 0.0
        %5935 = vmatpush1.xpose.msra.mxu0 0.0
        %5936 = vmatprep.subr.mxu0 0.0
        %5937 = vmatpush1.xpose.msra.mxu0 0.0
        %5938 = vmatprep.subr.mxu0 0.0
        %5939 = vmatpush1.xpose.msra.mxu0 0.0
        %5940 = vmatprep.subr.mxu0 0.0
        %5941 = vmatpush1.xpose.msra.mxu0 0.0
        %5942 = vmatprep.subr.mxu0 0.0
        %5943 = vmatpush1.xpose.msra.mxu0 0.0
        %5944 = vmatprep.subr.mxu0 0.0
        %5945 = vmatpush1.xpose.msra.mxu0 0.0
        %5946 = vmatprep.subr.mxu0 0.0
        %5947 = vmatpush1.xpose.msra.mxu0 0.0
        %5948 = vmatprep.subr.mxu0 0.0
        %5949 = vmatpush1.xpose.msra.mxu0 0.0
        %5950 = vmatprep.subr.mxu0 0.0
        %5951 = vmatpush1.xpose.msra.mxu0 0.0
        %5952 = vmatprep.subr.mxu0 0.0
        %5953 = vmatpush1.xpose.msra.mxu0 0.0
        %5954 = vmatprep.subr.mxu0 0.0
        %5955 = vmatpush1.xpose.msra.mxu0 %v5922
        %5956 = vmatprep.subr.mxu0 0.0
        %5957 = vmatpush2.xpose.msra.mxu0 0.0
        %5958 = vmatprep.subr.mxu0 0.0
        %5959 = vmatpush2.xpose.msra.mxu0 0.0
        %5960 = vmatprep.subr.mxu0 0.0
        %5961 = vmatpush2.xpose.msra.mxu0 0.0
        %5962 = vmatprep.subr.mxu0 0.0
        %5963 = vmatpush2.xpose.msra.mxu0 0.0
        %5964 = vmatprep.subr.mxu0 0.0
        %5965 = vmatpush2.xpose.msra.mxu0 0.0
        %5966 = vmatprep.subr.mxu0 0.0
        %5967 = vmatpush2.xpose.msra.mxu0 0.0
        %5968 = vmatprep.subr.mxu0 0.0
        %5969 = vmatpush2.xpose.msra.mxu0 0.0
        %5970 = vmatprep.subr.mxu0 0.0
        %5971 = vmatpush2.xpose.msra.mxu0 0.0
        %5972 = vmatprep.subr.mxu0 0.0
        %5973 = vmatpush2.xpose.msra.mxu0 0.0
        %5974 = vmatprep.subr.mxu0 0.0
        %5975 = vmatpush2.xpose.msra.mxu0 0.0
        %5976 = vmatprep.subr.mxu0 0.0
        %5977 = vmatpush2.xpose.msra.mxu0 0.0
        %5978 = vmatprep.subr.mxu0 0.0
        %5979 = vmatpush2.xpose.msra.mxu0 0.0
        %5980 = vmatprep.subr.mxu0 0.0
        %5981 = vmatpush2.xpose.msra.mxu0 0.0
        %5982 = vmatprep.subr.mxu0 0.0
        %5983 = vmatpush2.xpose.msra.mxu0 0.0
        %5984 = vmatprep.subr.mxu0 0.0
        %5985 = vmatpush2.xpose.msra.mxu0 0.0
        %5986 = vmatprep.subr.mxu0 0.0
        %5987 = vmatpush2.xpose.msra.mxu0 0.0
        %5988 = vmatprep.mubr.f32.mxu0 0.0
        %5989 = vmatmul.mubr.f32.gmra.mxu0 %v5919
        %v5990 = vpop.f32.mrf.mxu0
        %v5991 = vadd.f32 0.0, %v5990
        %v5992 = vpop.f32.mrf.mxu0
        %5993 = vdwg.mxu0
        %v5995 = vsel %vm1737, %v1697, 0
        %v5998 = vsel %vm1737, %v1729, 0
        %6000 = vmatprep.subr.mxu0 0.0
        %6001 = vmatpush1.xpose.msra.mxu0 0.0
        %6002 = vmatprep.subr.mxu0 0.0
        %6003 = vmatpush1.xpose.msra.mxu0 0.0
        %6004 = vmatprep.subr.mxu0 0.0
        %6005 = vmatpush1.xpose.msra.mxu0 0.0
        %6006 = vmatprep.subr.mxu0 0.0
        %6007 = vmatpush1.xpose.msra.mxu0 0.0
        %6008 = vmatprep.subr.mxu0 0.0
        %6009 = vmatpush1.xpose.msra.mxu0 0.0
        %6010 = vmatprep.subr.mxu0 0.0
        %6011 = vmatpush1.xpose.msra.mxu0 0.0
        %6012 = vmatprep.subr.mxu0 0.0
        %6013 = vmatpush1.xpose.msra.mxu0 0.0
        %6014 = vmatprep.subr.mxu0 0.0
        %6015 = vmatpush1.xpose.msra.mxu0 0.0
        %6016 = vmatprep.subr.mxu0 0.0
        %6017 = vmatpush1.xpose.msra.mxu0 0.0
        %6018 = vmatprep.subr.mxu0 0.0
        %6019 = vmatpush1.xpose.msra.mxu0 0.0
        %6020 = vmatprep.subr.mxu0 0.0
        %6021 = vmatpush1.xpose.msra.mxu0 0.0
        %6022 = vmatprep.subr.mxu0 0.0
        %6023 = vmatpush1.xpose.msra.mxu0 0.0
        %6024 = vmatprep.subr.mxu0 0.0
        %6025 = vmatpush1.xpose.msra.mxu0 0.0
        %6026 = vmatprep.subr.mxu0 0.0
        %6027 = vmatpush1.xpose.msra.mxu0 0.0
        %6028 = vmatprep.subr.mxu0 0.0
        %6029 = vmatpush1.xpose.msra.mxu0 0.0
        %6030 = vmatprep.subr.mxu0 0.0
        %6031 = vmatpush1.xpose.msra.mxu0 %v5998
        %6032 = vmatprep.subr.mxu0 0.0
        %6033 = vmatpush2.xpose.msra.mxu0 0.0
        %6034 = vmatprep.subr.mxu0 0.0
        %6035 = vmatpush2.xpose.msra.mxu0 0.0
        %6036 = vmatprep.subr.mxu0 0.0
        %6037 = vmatpush2.xpose.msra.mxu0 0.0
        %6038 = vmatprep.subr.mxu0 0.0
        %6039 = vmatpush2.xpose.msra.mxu0 0.0
        %6040 = vmatprep.subr.mxu0 0.0
        %6041 = vmatpush2.xpose.msra.mxu0 0.0
        %6042 = vmatprep.subr.mxu0 0.0
        %6043 = vmatpush2.xpose.msra.mxu0 0.0
        %6044 = vmatprep.subr.mxu0 0.0
        %6045 = vmatpush2.xpose.msra.mxu0 0.0
        %6046 = vmatprep.subr.mxu0 0.0
        %6047 = vmatpush2.xpose.msra.mxu0 0.0
        %6048 = vmatprep.subr.mxu0 0.0
        %6049 = vmatpush2.xpose.msra.mxu0 0.0
        %6050 = vmatprep.subr.mxu0 0.0
        %6051 = vmatpush2.xpose.msra.mxu0 0.0
        %6052 = vmatprep.subr.mxu0 0.0
        %6053 = vmatpush2.xpose.msra.mxu0 0.0
        %6054 = vmatprep.subr.mxu0 0.0
        %6055 = vmatpush2.xpose.msra.mxu0 0.0
        %6056 = vmatprep.subr.mxu0 0.0
        %6057 = vmatpush2.xpose.msra.mxu0 0.0
        %6058 = vmatprep.subr.mxu0 0.0
        %6059 = vmatpush2.xpose.msra.mxu0 0.0
        %6060 = vmatprep.subr.mxu0 0.0
        %6061 = vmatpush2.xpose.msra.mxu0 0.0
        %6062 = vmatprep.subr.mxu0 0.0
        %6063 = vmatpush2.xpose.msra.mxu0 0.0
        %6064 = vmatprep.mubr.f32.mxu0 0.0
        %6065 = vmatmul.mubr.f32.gmra.mxu0 %v5995
        %v6066 = vpop.f32.mrf.mxu0
        %v6067 = vadd.f32 0.0, %v6066
        %v6068 = vpop.f32.mrf.mxu0
        %6069 = vdwg.mxu0
        %v6071 = vsel %vm1737, %v1698, 0
        %v6074 = vsel %vm1737, %v1730, 0
        %6076 = vmatprep.subr.mxu0 0.0
        %6077 = vmatpush1.xpose.msra.mxu0 0.0
        %6078 = vmatprep.subr.mxu0 0.0
        %6079 = vmatpush1.xpose.msra.mxu0 0.0
        %6080 = vmatprep.subr.mxu0 0.0
        %6081 = vmatpush1.xpose.msra.mxu0 0.0
        %6082 = vmatprep.subr.mxu0 0.0
        %6083 = vmatpush1.xpose.msra.mxu0 0.0
        %6084 = vmatprep.subr.mxu0 0.0
        %6085 = vmatpush1.xpose.msra.mxu0 0.0
        %6086 = vmatprep.subr.mxu0 0.0
        %6087 = vmatpush1.xpose.msra.mxu0 0.0
        %6088 = vmatprep.subr.mxu0 0.0
        %6089 = vmatpush1.xpose.msra.mxu0 0.0
        %6090 = vmatprep.subr.mxu0 0.0
        %6091 = vmatpush1.xpose.msra.mxu0 0.0
        %6092 = vmatprep.subr.mxu0 0.0
        %6093 = vmatpush1.xpose.msra.mxu0 0.0
        %6094 = vmatprep.subr.mxu0 0.0
        %6095 = vmatpush1.xpose.msra.mxu0 0.0
        %6096 = vmatprep.subr.mxu0 0.0
        %6097 = vmatpush1.xpose.msra.mxu0 0.0
        %6098 = vmatprep.subr.mxu0 0.0
        %6099 = vmatpush1.xpose.msra.mxu0 0.0
        %6100 = vmatprep.subr.mxu0 0.0
        %6101 = vmatpush1.xpose.msra.mxu0 0.0
        %6102 = vmatprep.subr.mxu0 0.0
        %6103 = vmatpush1.xpose.msra.mxu0 0.0
        %6104 = vmatprep.subr.mxu0 0.0
        %6105 = vmatpush1.xpose.msra.mxu0 0.0
        %6106 = vmatprep.subr.mxu0 0.0
        %6107 = vmatpush1.xpose.msra.mxu0 %v6074
        %6108 = vmatprep.subr.mxu0 0.0
        %6109 = vmatpush2.xpose.msra.mxu0 0.0
        %6110 = vmatprep.subr.mxu0 0.0
        %6111 = vmatpush2.xpose.msra.mxu0 0.0
        %6112 = vmatprep.subr.mxu0 0.0
        %6113 = vmatpush2.xpose.msra.mxu0 0.0
        %6114 = vmatprep.subr.mxu0 0.0
        %6115 = vmatpush2.xpose.msra.mxu0 0.0
        %6116 = vmatprep.subr.mxu0 0.0
        %6117 = vmatpush2.xpose.msra.mxu0 0.0
        %6118 = vmatprep.subr.mxu0 0.0
        %6119 = vmatpush2.xpose.msra.mxu0 0.0
        %6120 = vmatprep.subr.mxu0 0.0
        %6121 = vmatpush2.xpose.msra.mxu0 0.0
        %6122 = vmatprep.subr.mxu0 0.0
        %6123 = vmatpush2.xpose.msra.mxu0 0.0
        %6124 = vmatprep.subr.mxu0 0.0
        %6125 = vmatpush2.xpose.msra.mxu0 0.0
        %6126 = vmatprep.subr.mxu0 0.0
        %6127 = vmatpush2.xpose.msra.mxu0 0.0
        %6128 = vmatprep.subr.mxu0 0.0
        %6129 = vmatpush2.xpose.msra.mxu0 0.0
        %6130 = vmatprep.subr.mxu0 0.0
        %6131 = vmatpush2.xpose.msra.mxu0 0.0
        %6132 = vmatprep.subr.mxu0 0.0
        %6133 = vmatpush2.xpose.msra.mxu0 0.0
        %6134 = vmatprep.subr.mxu0 0.0
        %6135 = vmatpush2.xpose.msra.mxu0 0.0
        %6136 = vmatprep.subr.mxu0 0.0
        %6137 = vmatpush2.xpose.msra.mxu0 0.0
        %6138 = vmatprep.subr.mxu0 0.0
        %6139 = vmatpush2.xpose.msra.mxu0 0.0
        %6140 = vmatprep.mubr.f32.mxu0 0.0
        %6141 = vmatmul.mubr.f32.gmra.mxu0 %v6071
        %v6142 = vpop.f32.mrf.mxu0
        %v6143 = vadd.f32 0.0, %v6142
        %v6144 = vpop.f32.mrf.mxu0
        %6145 = vdwg.mxu0
        %v6147 = vsel %vm1737, %v1699, 0
        %v6150 = vsel %vm1737, %v1731, 0
        %6152 = vmatprep.subr.mxu0 0.0
        %6153 = vmatpush1.xpose.msra.mxu0 0.0
        %6154 = vmatprep.subr.mxu0 0.0
        %6155 = vmatpush1.xpose.msra.mxu0 0.0
        %6156 = vmatprep.subr.mxu0 0.0
        %6157 = vmatpush1.xpose.msra.mxu0 0.0
        %6158 = vmatprep.subr.mxu0 0.0
        %6159 = vmatpush1.xpose.msra.mxu0 0.0
        %6160 = vmatprep.subr.mxu0 0.0
        %6161 = vmatpush1.xpose.msra.mxu0 0.0
        %6162 = vmatprep.subr.mxu0 0.0
        %6163 = vmatpush1.xpose.msra.mxu0 0.0
        %6164 = vmatprep.subr.mxu0 0.0
        %6165 = vmatpush1.xpose.msra.mxu0 0.0
        %6166 = vmatprep.subr.mxu0 0.0
        %6167 = vmatpush1.xpose.msra.mxu0 0.0
        %6168 = vmatprep.subr.mxu0 0.0
        %6169 = vmatpush1.xpose.msra.mxu0 0.0
        %6170 = vmatprep.subr.mxu0 0.0
        %6171 = vmatpush1.xpose.msra.mxu0 0.0
        %6172 = vmatprep.subr.mxu0 0.0
        %6173 = vmatpush1.xpose.msra.mxu0 0.0
        %6174 = vmatprep.subr.mxu0 0.0
        %6175 = vmatpush1.xpose.msra.mxu0 0.0
        %6176 = vmatprep.subr.mxu0 0.0
        %6177 = vmatpush1.xpose.msra.mxu0 0.0
        %6178 = vmatprep.subr.mxu0 0.0
        %6179 = vmatpush1.xpose.msra.mxu0 0.0
        %6180 = vmatprep.subr.mxu0 0.0
        %6181 = vmatpush1.xpose.msra.mxu0 0.0
        %6182 = vmatprep.subr.mxu0 0.0
        %6183 = vmatpush1.xpose.msra.mxu0 %v6150
        %6184 = vmatprep.subr.mxu0 0.0
        %6185 = vmatpush2.xpose.msra.mxu0 0.0
        %6186 = vmatprep.subr.mxu0 0.0
        %6187 = vmatpush2.xpose.msra.mxu0 0.0
        %6188 = vmatprep.subr.mxu0 0.0
        %6189 = vmatpush2.xpose.msra.mxu0 0.0
        %6190 = vmatprep.subr.mxu0 0.0
        %6191 = vmatpush2.xpose.msra.mxu0 0.0
        %6192 = vmatprep.subr.mxu0 0.0
        %6193 = vmatpush2.xpose.msra.mxu0 0.0
        %6194 = vmatprep.subr.mxu0 0.0
        %6195 = vmatpush2.xpose.msra.mxu0 0.0
        %6196 = vmatprep.subr.mxu0 0.0
        %6197 = vmatpush2.xpose.msra.mxu0 0.0
        %6198 = vmatprep.subr.mxu0 0.0
        %6199 = vmatpush2.xpose.msra.mxu0 0.0
        %6200 = vmatprep.subr.mxu0 0.0
        %6201 = vmatpush2.xpose.msra.mxu0 0.0
        %6202 = vmatprep.subr.mxu0 0.0
        %6203 = vmatpush2.xpose.msra.mxu0 0.0
        %6204 = vmatprep.subr.mxu0 0.0
        %6205 = vmatpush2.xpose.msra.mxu0 0.0
        %6206 = vmatprep.subr.mxu0 0.0
        %6207 = vmatpush2.xpose.msra.mxu0 0.0
        %6208 = vmatprep.subr.mxu0 0.0
        %6209 = vmatpush2.xpose.msra.mxu0 0.0
        %6210 = vmatprep.subr.mxu0 0.0
        %6211 = vmatpush2.xpose.msra.mxu0 0.0
        %6212 = vmatprep.subr.mxu0 0.0
        %6213 = vmatpush2.xpose.msra.mxu0 0.0
        %6214 = vmatprep.subr.mxu0 0.0
        %6215 = vmatpush2.xpose.msra.mxu0 0.0
        %6216 = vmatprep.mubr.f32.mxu0 0.0
        %6217 = vmatmul.mubr.f32.gmra.mxu0 %v6147
        %v6218 = vpop.f32.mrf.mxu0
        %v6219 = vadd.f32 0.0, %v6218
        %v6220 = vpop.f32.mrf.mxu0
        %6221 = vdwg.mxu0
        %v6223 = vsel %vm1737, %v1700, 0
        %v6226 = vsel %vm1737, %v1732, 0
        %6228 = vmatprep.subr.mxu0 0.0
        %6229 = vmatpush1.xpose.msra.mxu0 0.0
        %6230 = vmatprep.subr.mxu0 0.0
        %6231 = vmatpush1.xpose.msra.mxu0 0.0
        %6232 = vmatprep.subr.mxu0 0.0
        %6233 = vmatpush1.xpose.msra.mxu0 0.0
        %6234 = vmatprep.subr.mxu0 0.0
        %6235 = vmatpush1.xpose.msra.mxu0 0.0
        %6236 = vmatprep.subr.mxu0 0.0
        %6237 = vmatpush1.xpose.msra.mxu0 0.0
        %6238 = vmatprep.subr.mxu0 0.0
        %6239 = vmatpush1.xpose.msra.mxu0 0.0
        %6240 = vmatprep.subr.mxu0 0.0
        %6241 = vmatpush1.xpose.msra.mxu0 0.0
        %6242 = vmatprep.subr.mxu0 0.0
        %6243 = vmatpush1.xpose.msra.mxu0 0.0
        %6244 = vmatprep.subr.mxu0 0.0
        %6245 = vmatpush1.xpose.msra.mxu0 0.0
        %6246 = vmatprep.subr.mxu0 0.0
        %6247 = vmatpush1.xpose.msra.mxu0 0.0
        %6248 = vmatprep.subr.mxu0 0.0
        %6249 = vmatpush1.xpose.msra.mxu0 0.0
        %6250 = vmatprep.subr.mxu0 0.0
        %6251 = vmatpush1.xpose.msra.mxu0 0.0
        %6252 = vmatprep.subr.mxu0 0.0
        %6253 = vmatpush1.xpose.msra.mxu0 0.0
        %6254 = vmatprep.subr.mxu0 0.0
        %6255 = vmatpush1.xpose.msra.mxu0 0.0
        %6256 = vmatprep.subr.mxu0 0.0
        %6257 = vmatpush1.xpose.msra.mxu0 0.0
        %6258 = vmatprep.subr.mxu0 0.0
        %6259 = vmatpush1.xpose.msra.mxu0 %v6226
        %6260 = vmatprep.subr.mxu0 0.0
        %6261 = vmatpush2.xpose.msra.mxu0 0.0
        %6262 = vmatprep.subr.mxu0 0.0
        %6263 = vmatpush2.xpose.msra.mxu0 0.0
        %6264 = vmatprep.subr.mxu0 0.0
        %6265 = vmatpush2.xpose.msra.mxu0 0.0
        %6266 = vmatprep.subr.mxu0 0.0
        %6267 = vmatpush2.xpose.msra.mxu0 0.0
        %6268 = vmatprep.subr.mxu0 0.0
        %6269 = vmatpush2.xpose.msra.mxu0 0.0
        %6270 = vmatprep.subr.mxu0 0.0
        %6271 = vmatpush2.xpose.msra.mxu0 0.0
        %6272 = vmatprep.subr.mxu0 0.0
        %6273 = vmatpush2.xpose.msra.mxu0 0.0
        %6274 = vmatprep.subr.mxu0 0.0
        %6275 = vmatpush2.xpose.msra.mxu0 0.0
        %6276 = vmatprep.subr.mxu0 0.0
        %6277 = vmatpush2.xpose.msra.mxu0 0.0
        %6278 = vmatprep.subr.mxu0 0.0
        %6279 = vmatpush2.xpose.msra.mxu0 0.0
        %6280 = vmatprep.subr.mxu0 0.0
        %6281 = vmatpush2.xpose.msra.mxu0 0.0
        %6282 = vmatprep.subr.mxu0 0.0
        %6283 = vmatpush2.xpose.msra.mxu0 0.0
        %6284 = vmatprep.subr.mxu0 0.0
        %6285 = vmatpush2.xpose.msra.mxu0 0.0
        %6286 = vmatprep.subr.mxu0 0.0
        %6287 = vmatpush2.xpose.msra.mxu0 0.0
        %6288 = vmatprep.subr.mxu0 0.0
        %6289 = vmatpush2.xpose.msra.mxu0 0.0
        %6290 = vmatprep.subr.mxu0 0.0
        %6291 = vmatpush2.xpose.msra.mxu0 0.0
        %6292 = vmatprep.mubr.f32.mxu0 0.0
        %6293 = vmatmul.mubr.f32.gmra.mxu0 %v6223
        %v6294 = vpop.f32.mrf.mxu0
        %v6295 = vadd.f32 0.0, %v6294
        %v6296 = vpop.f32.mrf.mxu0
        %6297 = vdwg.mxu0
        %v6299 = vsel %vm1737, %v1701, 0
        %v6302 = vsel %vm1737, %v1733, 0
        %6304 = vmatprep.subr.mxu0 0.0
        %6305 = vmatpush1.xpose.msra.mxu0 0.0
        %6306 = vmatprep.subr.mxu0 0.0
        %6307 = vmatpush1.xpose.msra.mxu0 0.0
        %6308 = vmatprep.subr.mxu0 0.0
        %6309 = vmatpush1.xpose.msra.mxu0 0.0
        %6310 = vmatprep.subr.mxu0 0.0
        %6311 = vmatpush1.xpose.msra.mxu0 0.0
        %6312 = vmatprep.subr.mxu0 0.0
        %6313 = vmatpush1.xpose.msra.mxu0 0.0
        %6314 = vmatprep.subr.mxu0 0.0
        %6315 = vmatpush1.xpose.msra.mxu0 0.0
        %6316 = vmatprep.subr.mxu0 0.0
        %6317 = vmatpush1.xpose.msra.mxu0 0.0
        %6318 = vmatprep.subr.mxu0 0.0
        %6319 = vmatpush1.xpose.msra.mxu0 0.0
        %6320 = vmatprep.subr.mxu0 0.0
        %6321 = vmatpush1.xpose.msra.mxu0 0.0
        %6322 = vmatprep.subr.mxu0 0.0
        %6323 = vmatpush1.xpose.msra.mxu0 0.0
        %6324 = vmatprep.subr.mxu0 0.0
        %6325 = vmatpush1.xpose.msra.mxu0 0.0
        %6326 = vmatprep.subr.mxu0 0.0
        %6327 = vmatpush1.xpose.msra.mxu0 0.0
        %6328 = vmatprep.subr.mxu0 0.0
        %6329 = vmatpush1.xpose.msra.mxu0 0.0
        %6330 = vmatprep.subr.mxu0 0.0
        %6331 = vmatpush1.xpose.msra.mxu0 0.0
        %6332 = vmatprep.subr.mxu0 0.0
        %6333 = vmatpush1.xpose.msra.mxu0 0.0
        %6334 = vmatprep.subr.mxu0 0.0
        %6335 = vmatpush1.xpose.msra.mxu0 %v6302
        %6336 = vmatprep.subr.mxu0 0.0
        %6337 = vmatpush2.xpose.msra.mxu0 0.0
        %6338 = vmatprep.subr.mxu0 0.0
        %6339 = vmatpush2.xpose.msra.mxu0 0.0
        %6340 = vmatprep.subr.mxu0 0.0
        %6341 = vmatpush2.xpose.msra.mxu0 0.0
        %6342 = vmatprep.subr.mxu0 0.0
        %6343 = vmatpush2.xpose.msra.mxu0 0.0
        %6344 = vmatprep.subr.mxu0 0.0
        %6345 = vmatpush2.xpose.msra.mxu0 0.0
        %6346 = vmatprep.subr.mxu0 0.0
        %6347 = vmatpush2.xpose.msra.mxu0 0.0
        %6348 = vmatprep.subr.mxu0 0.0
        %6349 = vmatpush2.xpose.msra.mxu0 0.0
        %6350 = vmatprep.subr.mxu0 0.0
        %6351 = vmatpush2.xpose.msra.mxu0 0.0
        %6352 = vmatprep.subr.mxu0 0.0
        %6353 = vmatpush2.xpose.msra.mxu0 0.0
        %6354 = vmatprep.subr.mxu0 0.0
        %6355 = vmatpush2.xpose.msra.mxu0 0.0
        %6356 = vmatprep.subr.mxu0 0.0
        %6357 = vmatpush2.xpose.msra.mxu0 0.0
        %6358 = vmatprep.subr.mxu0 0.0
        %6359 = vmatpush2.xpose.msra.mxu0 0.0
        %6360 = vmatprep.subr.mxu0 0.0
        %6361 = vmatpush2.xpose.msra.mxu0 0.0
        %6362 = vmatprep.subr.mxu0 0.0
        %6363 = vmatpush2.xpose.msra.mxu0 0.0
        %6364 = vmatprep.subr.mxu0 0.0
        %6365 = vmatpush2.xpose.msra.mxu0 0.0
        %6366 = vmatprep.subr.mxu0 0.0
        %6367 = vmatpush2.xpose.msra.mxu0 0.0
        %6368 = vmatprep.mubr.f32.mxu0 0.0
        %6369 = vmatmul.mubr.f32.gmra.mxu0 %v6299
        %v6370 = vpop.f32.mrf.mxu0
        %v6371 = vadd.f32 0.0, %v6370
        %v6372 = vpop.f32.mrf.mxu0
        %6373 = vdwg.mxu0
        %v6375 = vsel %vm1737, %v1702, 0
        %v6378 = vsel %vm1737, %v1734, 0
        %6380 = vmatprep.subr.mxu0 0.0
        %6381 = vmatpush1.xpose.msra.mxu0 0.0
        %6382 = vmatprep.subr.mxu0 0.0
        %6383 = vmatpush1.xpose.msra.mxu0 0.0
        %6384 = vmatprep.subr.mxu0 0.0
        %6385 = vmatpush1.xpose.msra.mxu0 0.0
        %6386 = vmatprep.subr.mxu0 0.0
        %6387 = vmatpush1.xpose.msra.mxu0 0.0
        %6388 = vmatprep.subr.mxu0 0.0
        %6389 = vmatpush1.xpose.msra.mxu0 0.0
        %6390 = vmatprep.subr.mxu0 0.0
        %6391 = vmatpush1.xpose.msra.mxu0 0.0
        %6392 = vmatprep.subr.mxu0 0.0
        %6393 = vmatpush1.xpose.msra.mxu0 0.0
        %6394 = vmatprep.subr.mxu0 0.0
        %6395 = vmatpush1.xpose.msra.mxu0 0.0
        %6396 = vmatprep.subr.mxu0 0.0
        %6397 = vmatpush1.xpose.msra.mxu0 0.0
        %6398 = vmatprep.subr.mxu0 0.0
        %6399 = vmatpush1.xpose.msra.mxu0 0.0
        %6400 = vmatprep.subr.mxu0 0.0
        %6401 = vmatpush1.xpose.msra.mxu0 0.0
        %6402 = vmatprep.subr.mxu0 0.0
        %6403 = vmatpush1.xpose.msra.mxu0 0.0
        %6404 = vmatprep.subr.mxu0 0.0
        %6405 = vmatpush1.xpose.msra.mxu0 0.0
        %6406 = vmatprep.subr.mxu0 0.0
        %6407 = vmatpush1.xpose.msra.mxu0 0.0
        %6408 = vmatprep.subr.mxu0 0.0
        %6409 = vmatpush1.xpose.msra.mxu0 0.0
        %6410 = vmatprep.subr.mxu0 0.0
        %6411 = vmatpush1.xpose.msra.mxu0 %v6378
        %6412 = vmatprep.subr.mxu0 0.0
        %6413 = vmatpush2.xpose.msra.mxu0 0.0
        %6414 = vmatprep.subr.mxu0 0.0
        %6415 = vmatpush2.xpose.msra.mxu0 0.0
        %6416 = vmatprep.subr.mxu0 0.0
        %6417 = vmatpush2.xpose.msra.mxu0 0.0
        %6418 = vmatprep.subr.mxu0 0.0
        %6419 = vmatpush2.xpose.msra.mxu0 0.0
        %6420 = vmatprep.subr.mxu0 0.0
        %6421 = vmatpush2.xpose.msra.mxu0 0.0
        %6422 = vmatprep.subr.mxu0 0.0
        %6423 = vmatpush2.xpose.msra.mxu0 0.0
        %6424 = vmatprep.subr.mxu0 0.0
        %6425 = vmatpush2.xpose.msra.mxu0 0.0
        %6426 = vmatprep.subr.mxu0 0.0
        %6427 = vmatpush2.xpose.msra.mxu0 0.0
        %6428 = vmatprep.subr.mxu0 0.0
        %6429 = vmatpush2.xpose.msra.mxu0 0.0
        %6430 = vmatprep.subr.mxu0 0.0
        %6431 = vmatpush2.xpose.msra.mxu0 0.0
        %6432 = vmatprep.subr.mxu0 0.0
        %6433 = vmatpush2.xpose.msra.mxu0 0.0
        %6434 = vmatprep.subr.mxu0 0.0
        %6435 = vmatpush2.xpose.msra.mxu0 0.0
        %6436 = vmatprep.subr.mxu0 0.0
        %6437 = vmatpush2.xpose.msra.mxu0 0.0
        %6438 = vmatprep.subr.mxu0 0.0
        %6439 = vmatpush2.xpose.msra.mxu0 0.0
        %6440 = vmatprep.subr.mxu0 0.0
        %6441 = vmatpush2.xpose.msra.mxu0 0.0
        %6442 = vmatprep.subr.mxu0 0.0
        %6443 = vmatpush2.xpose.msra.mxu0 0.0
        %6444 = vmatprep.mubr.f32.mxu0 0.0
        %6445 = vmatmul.mubr.f32.gmra.mxu0 %v6375
        %v6446 = vpop.f32.mrf.mxu0
        %v6447 = vadd.f32 0.0, %v6446
        %v6448 = vpop.f32.mrf.mxu0
        %6449 = vdwg.mxu0
        %v6451 = vsel %vm1737, %v1703, 0
        %v6454 = vsel %vm1737, %v1735, 0
        %6456 = vmatprep.subr.mxu0 0.0
        %6457 = vmatpush1.xpose.msra.mxu0 0.0
        %6458 = vmatprep.subr.mxu0 0.0
        %6459 = vmatpush1.xpose.msra.mxu0 0.0
        %6460 = vmatprep.subr.mxu0 0.0
        %6461 = vmatpush1.xpose.msra.mxu0 0.0
        %6462 = vmatprep.subr.mxu0 0.0
        %6463 = vmatpush1.xpose.msra.mxu0 0.0
        %6464 = vmatprep.subr.mxu0 0.0
        %6465 = vmatpush1.xpose.msra.mxu0 0.0
        %6466 = vmatprep.subr.mxu0 0.0
        %6467 = vmatpush1.xpose.msra.mxu0 0.0
        %6468 = vmatprep.subr.mxu0 0.0
        %6469 = vmatpush1.xpose.msra.mxu0 0.0
        %6470 = vmatprep.subr.mxu0 0.0
        %6471 = vmatpush1.xpose.msra.mxu0 0.0
        %6472 = vmatprep.subr.mxu0 0.0
        %6473 = vmatpush1.xpose.msra.mxu0 0.0
        %6474 = vmatprep.subr.mxu0 0.0
        %6475 = vmatpush1.xpose.msra.mxu0 0.0
        %6476 = vmatprep.subr.mxu0 0.0
        %6477 = vmatpush1.xpose.msra.mxu0 0.0
        %6478 = vmatprep.subr.mxu0 0.0
        %6479 = vmatpush1.xpose.msra.mxu0 0.0
        %6480 = vmatprep.subr.mxu0 0.0
        %6481 = vmatpush1.xpose.msra.mxu0 0.0
        %6482 = vmatprep.subr.mxu0 0.0
        %6483 = vmatpush1.xpose.msra.mxu0 0.0
        %6484 = vmatprep.subr.mxu0 0.0
        %6485 = vmatpush1.xpose.msra.mxu0 0.0
        %6486 = vmatprep.subr.mxu0 0.0
        %6487 = vmatpush1.xpose.msra.mxu0 %v6454
        %6488 = vmatprep.subr.mxu0 0.0
        %6489 = vmatpush2.xpose.msra.mxu0 0.0
        %6490 = vmatprep.subr.mxu0 0.0
        %6491 = vmatpush2.xpose.msra.mxu0 0.0
        %6492 = vmatprep.subr.mxu0 0.0
        %6493 = vmatpush2.xpose.msra.mxu0 0.0
        %6494 = vmatprep.subr.mxu0 0.0
        %6495 = vmatpush2.xpose.msra.mxu0 0.0
        %6496 = vmatprep.subr.mxu0 0.0
        %6497 = vmatpush2.xpose.msra.mxu0 0.0
        %6498 = vmatprep.subr.mxu0 0.0
        %6499 = vmatpush2.xpose.msra.mxu0 0.0
        %6500 = vmatprep.subr.mxu0 0.0
        %6501 = vmatpush2.xpose.msra.mxu0 0.0
        %6502 = vmatprep.subr.mxu0 0.0
        %6503 = vmatpush2.xpose.msra.mxu0 0.0
        %6504 = vmatprep.subr.mxu0 0.0
        %6505 = vmatpush2.xpose.msra.mxu0 0.0
        %6506 = vmatprep.subr.mxu0 0.0
        %6507 = vmatpush2.xpose.msra.mxu0 0.0
        %6508 = vmatprep.subr.mxu0 0.0
        %6509 = vmatpush2.xpose.msra.mxu0 0.0
        %6510 = vmatprep.subr.mxu0 0.0
        %6511 = vmatpush2.xpose.msra.mxu0 0.0
        %6512 = vmatprep.subr.mxu0 0.0
        %6513 = vmatpush2.xpose.msra.mxu0 0.0
        %6514 = vmatprep.subr.mxu0 0.0
        %6515 = vmatpush2.xpose.msra.mxu0 0.0
        %6516 = vmatprep.subr.mxu0 0.0
        %6517 = vmatpush2.xpose.msra.mxu0 0.0
        %6518 = vmatprep.subr.mxu0 0.0
        %6519 = vmatpush2.xpose.msra.mxu0 0.0
        %6520 = vmatprep.mubr.f32.mxu0 0.0
        %6521 = vmatmul.mubr.f32.gmra.mxu0 %v6451
        %v6522 = vpop.f32.mrf.mxu0
        %v6523 = vadd.f32 0.0, %v6522
        %v6524 = vpop.f32.mrf.mxu0
        %6525 = vdwg.mxu0
        %v6527 = vsel %vm1737, %v1704, 0
        %v6530 = vsel %vm1737, %v1736, 0
        %6532 = vmatprep.subr.mxu0 0.0
        %6533 = vmatpush1.xpose.msra.mxu0 0.0
        %6534 = vmatprep.subr.mxu0 0.0
        %6535 = vmatpush1.xpose.msra.mxu0 0.0
        %6536 = vmatprep.subr.mxu0 0.0
        %6537 = vmatpush1.xpose.msra.mxu0 0.0
        %6538 = vmatprep.subr.mxu0 0.0
        %6539 = vmatpush1.xpose.msra.mxu0 0.0
        %6540 = vmatprep.subr.mxu0 0.0
        %6541 = vmatpush1.xpose.msra.mxu0 0.0
        %6542 = vmatprep.subr.mxu0 0.0
        %6543 = vmatpush1.xpose.msra.mxu0 0.0
        %6544 = vmatprep.subr.mxu0 0.0
        %6545 = vmatpush1.xpose.msra.mxu0 0.0
        %6546 = vmatprep.subr.mxu0 0.0
        %6547 = vmatpush1.xpose.msra.mxu0 0.0
        %6548 = vmatprep.subr.mxu0 0.0
        %6549 = vmatpush1.xpose.msra.mxu0 0.0
        %6550 = vmatprep.subr.mxu0 0.0
        %6551 = vmatpush1.xpose.msra.mxu0 0.0
        %6552 = vmatprep.subr.mxu0 0.0
        %6553 = vmatpush1.xpose.msra.mxu0 0.0
        %6554 = vmatprep.subr.mxu0 0.0
        %6555 = vmatpush1.xpose.msra.mxu0 0.0
        %6556 = vmatprep.subr.mxu0 0.0
        %6557 = vmatpush1.xpose.msra.mxu0 0.0
        %6558 = vmatprep.subr.mxu0 0.0
        %6559 = vmatpush1.xpose.msra.mxu0 0.0
        %6560 = vmatprep.subr.mxu0 0.0
        %6561 = vmatpush1.xpose.msra.mxu0 0.0
        %6562 = vmatprep.subr.mxu0 0.0
        %6563 = vmatpush1.xpose.msra.mxu0 %v6530
        %6564 = vmatprep.subr.mxu0 0.0
        %6565 = vmatpush2.xpose.msra.mxu0 0.0
        %6566 = vmatprep.subr.mxu0 0.0
        %6567 = vmatpush2.xpose.msra.mxu0 0.0
        %6568 = vmatprep.subr.mxu0 0.0
        %6569 = vmatpush2.xpose.msra.mxu0 0.0
        %6570 = vmatprep.subr.mxu0 0.0
        %6571 = vmatpush2.xpose.msra.mxu0 0.0
        %6572 = vmatprep.subr.mxu0 0.0
        %6573 = vmatpush2.xpose.msra.mxu0 0.0
        %6574 = vmatprep.subr.mxu0 0.0
        %6575 = vmatpush2.xpose.msra.mxu0 0.0
        %6576 = vmatprep.subr.mxu0 0.0
        %6577 = vmatpush2.xpose.msra.mxu0 0.0
        %6578 = vmatprep.subr.mxu0 0.0
        %6579 = vmatpush2.xpose.msra.mxu0 0.0
        %6580 = vmatprep.subr.mxu0 0.0
        %6581 = vmatpush2.xpose.msra.mxu0 0.0
        %6582 = vmatprep.subr.mxu0 0.0
        %6583 = vmatpush2.xpose.msra.mxu0 0.0
        %6584 = vmatprep.subr.mxu0 0.0
        %6585 = vmatpush2.xpose.msra.mxu0 0.0
        %6586 = vmatprep.subr.mxu0 0.0
        %6587 = vmatpush2.xpose.msra.mxu0 0.0
        %6588 = vmatprep.subr.mxu0 0.0
        %6589 = vmatpush2.xpose.msra.mxu0 0.0
        %6590 = vmatprep.subr.mxu0 0.0
        %6591 = vmatpush2.xpose.msra.mxu0 0.0
        %6592 = vmatprep.subr.mxu0 0.0
        %6593 = vmatpush2.xpose.msra.mxu0 0.0
        %6594 = vmatprep.subr.mxu0 0.0
        %6595 = vmatpush2.xpose.msra.mxu0 0.0
        %6596 = vmatprep.mubr.f32.mxu0 0.0
        %6597 = vmatmul.mubr.f32.gmra.mxu0 %v6527
        %v6598 = vpop.f32.mrf.mxu0
        %v6599 = vadd.f32 0.0, %v6598
        %v6600 = vpop.f32.mrf.mxu0
        %6601 = vdwg.mxu0
        %v6602 = vmax.f32 %v4243, 1e-24
        %v6603 = vmax.f32 %v4319, 1e-24
        %v6604 = vmax.f32 %v4395, 1e-24
        %v6605 = vmax.f32 %v4471, 1e-24
        %v6606 = vmax.f32 %v4547, 1e-24
        %v6607 = vmax.f32 %v4623, 1e-24
        %v6608 = vmax.f32 %v4699, 1e-24
        %v6609 = vmax.f32 %v4775, 1e-24
        %v6610 = vmax.f32 %v4851, 1e-24
        %v6611 = vmax.f32 %v4927, 1e-24
        %v6612 = vmax.f32 %v5003, 1e-24
        %v6613 = vmax.f32 %v5079, 1e-24
        %v6614 = vmax.f32 %v5155, 1e-24
        %v6615 = vmax.f32 %v5231, 1e-24
        %v6616 = vmax.f32 %v5307, 1e-24
        %v6617 = vmax.f32 %v5383, 1e-24
        %v6618 = vmax.f32 %v5459, 1e-24
        %v6619 = vmax.f32 %v5535, 1e-24
        %v6620 = vmax.f32 %v5611, 1e-24
        %v6621 = vmax.f32 %v5687, 1e-24
        %v6622 = vmax.f32 %v5763, 1e-24
        %v6623 = vmax.f32 %v5839, 1e-24
        %v6624 = vmax.f32 %v5915, 1e-24
        %v6625 = vmax.f32 %v5991, 1e-24
        %v6626 = vmax.f32 %v6067, 1e-24
        %v6627 = vmax.f32 %v6143, 1e-24
        %v6628 = vmax.f32 %v6219, 1e-24
        %v6629 = vmax.f32 %v6295, 1e-24
        %v6630 = vmax.f32 %v6371, 1e-24
        %v6631 = vmax.f32 %v6447, 1e-24
        %v6632 = vmax.f32 %v6523, 1e-24
        %v6633 = vmax.f32 %v6599, 1e-24
        %v6634 = vrsqrt.pop %v6602
        %v6635 = vrsqrt.pop %v6603
        %v6636 = vrsqrt.pop %v6604
        %v6637 = vrsqrt.pop %v6605
        %v6638 = vrsqrt.pop %v6606
        %v6639 = vrsqrt.pop %v6607
        %v6640 = vrsqrt.pop %v6608
        %v6641 = vrsqrt.pop %v6609
        %v6642 = vrsqrt.pop %v6610
        %v6643 = vrsqrt.pop %v6611
        %v6644 = vrsqrt.pop %v6612
        %v6645 = vrsqrt.pop %v6613
        %v6646 = vrsqrt.pop %v6614
        %v6647 = vrsqrt.pop %v6615
        %v6648 = vrsqrt.pop %v6616
        %v6649 = vrsqrt.pop %v6617
        %v6650 = vrsqrt.pop %v6618
        %v6651 = vrsqrt.pop %v6619
        %v6652 = vrsqrt.pop %v6620
        %v6653 = vrsqrt.pop %v6621
        %v6654 = vrsqrt.pop %v6622
        %v6655 = vrsqrt.pop %v6623
        %v6656 = vrsqrt.pop %v6624
        %v6657 = vrsqrt.pop %v6625
        %v6658 = vrsqrt.pop %v6626
        %v6659 = vrsqrt.pop %v6627
        %v6660 = vrsqrt.pop %v6628
        %v6661 = vrsqrt.pop %v6629
        %v6662 = vrsqrt.pop %v6630
        %v6663 = vrsqrt.pop %v6631
        %v6664 = vrsqrt.pop %v6632
        %v6665 = vrsqrt.pop %v6633
        %v6666 = vmul.f32 %v1811, %v6634
        %v6667 = vmul.f32 %v1887, %v6635
        %v6668 = vmul.f32 %v1963, %v6636
        %v6669 = vmul.f32 %v2039, %v6637
        %v6670 = vmul.f32 %v2115, %v6638
        %v6671 = vmul.f32 %v2191, %v6639
        %v6672 = vmul.f32 %v2267, %v6640
        %v6673 = vmul.f32 %v2343, %v6641
        %v6674 = vmul.f32 %v2419, %v6642
        %v6675 = vmul.f32 %v2495, %v6643
        %v6676 = vmul.f32 %v2571, %v6644
        %v6677 = vmul.f32 %v2647, %v6645
        %v6678 = vmul.f32 %v2723, %v6646
        %v6679 = vmul.f32 %v2799, %v6647
        %v6680 = vmul.f32 %v2875, %v6648
        %v6681 = vmul.f32 %v2951, %v6649
        %v6682 = vmul.f32 %v3027, %v6650
        %v6683 = vmul.f32 %v3103, %v6651
        %v6684 = vmul.f32 %v3179, %v6652
        %v6685 = vmul.f32 %v3255, %v6653
        %v6686 = vmul.f32 %v3331, %v6654
        %v6687 = vmul.f32 %v3407, %v6655
        %v6688 = vmul.f32 %v3483, %v6656
        %v6689 = vmul.f32 %v3559, %v6657
        %v6690 = vmul.f32 %v3635, %v6658
        %v6691 = vmul.f32 %v3711, %v6659
        %v6692 = vmul.f32 %v3787, %v6660
        %v6693 = vmul.f32 %v3863, %v6661
        %v6694 = vmul.f32 %v3939, %v6662
        %v6695 = vmul.f32 %v4015, %v6663
        %v6696 = vmul.f32 %v4091, %v6664
        %v6697 = vmul.f32 %v4167, %v6665
        %v6698 = vlaneseq
        %v6699 = vshrl.u32 %v6698, 7
        %v6700 = vlaneseq
        %v6701 = vand.u32 %v6700, 127
        %vm6702 = vcmp.le.s32.totalorder %v6701, %v6699
        %vm6703 = vcmask 64512
        %v6704 = vsel %vm6703, %v6666, -inf
        %6705 = vmax.xlane.f32.xlu0 %v6704
        %v6706 = vpop.xlane.xlu0 %6705
        %v6707 = vsel %vm6703, %v6667, -inf
        %6708 = vmax.xlane.f32.xlu0 %v6707
        %v6709 = vpop.xlane.xlu0 %6708
        %v6710 = vsel %vm6703, %v6668, -inf
        %6711 = vmax.xlane.f32.xlu0 %v6710
        %v6712 = vpop.xlane.xlu0 %6711
        %v6713 = vsel %vm6703, %v6669, -inf
        %6714 = vmax.xlane.f32.xlu0 %v6713
        %v6715 = vpop.xlane.xlu0 %6714
        %v6716 = vsel %vm6703, %v6670, -inf
        %6717 = vmax.xlane.f32.xlu0 %v6716
        %v6718 = vpop.xlane.xlu0 %6717
        %v6719 = vsel %vm6703, %v6671, -inf
        %6720 = vmax.xlane.f32.xlu0 %v6719
        %v6721 = vpop.xlane.xlu0 %6720
        %v6722 = vsel %vm6703, %v6672, -inf
        %6723 = vmax.xlane.f32.xlu0 %v6722
        %v6724 = vpop.xlane.xlu0 %6723
        %v6725 = vsel %vm6703, %v6673, -inf
        %6726 = vmax.xlane.f32.xlu0 %v6725
        %v6727 = vpop.xlane.xlu0 %6726
        %v6728 = vsel %vm6703, %v6674, -inf
        %6729 = vmax.xlane.f32.xlu0 %v6728
        %v6730 = vpop.xlane.xlu0 %6729
        %v6731 = vsel %vm6703, %v6675, -inf
        %6732 = vmax.xlane.f32.xlu0 %v6731
        %v6733 = vpop.xlane.xlu0 %6732
        %v6734 = vsel %vm6703, %v6676, -inf
        %6735 = vmax.xlane.f32.xlu0 %v6734
        %v6736 = vpop.xlane.xlu0 %6735
        %v6737 = vsel %vm6703, %v6677, -inf
        %6738 = vmax.xlane.f32.xlu0 %v6737
        %v6739 = vpop.xlane.xlu0 %6738
        %v6740 = vsel %vm6703, %v6678, -inf
        %6741 = vmax.xlane.f32.xlu0 %v6740
        %v6742 = vpop.xlane.xlu0 %6741
        %v6743 = vsel %vm6703, %v6679, -inf
        %6744 = vmax.xlane.f32.xlu0 %v6743
        %v6745 = vpop.xlane.xlu0 %6744
        %v6746 = vsel %vm6703, %v6680, -inf
        %6747 = vmax.xlane.f32.xlu0 %v6746
        %v6748 = vpop.xlane.xlu0 %6747
        %v6749 = vsel %vm6703, %v6681, -inf
        %6750 = vmax.xlane.f32.xlu0 %v6749
        %v6751 = vpop.xlane.xlu0 %6750
        %v6752 = vsel %vm6703, %v6682, -inf
        %6753 = vmax.xlane.f32.xlu0 %v6752
        %v6754 = vpop.xlane.xlu0 %6753
        %v6755 = vsel %vm6703, %v6683, -inf
        %6756 = vmax.xlane.f32.xlu0 %v6755
        %v6757 = vpop.xlane.xlu0 %6756
        %v6758 = vsel %vm6703, %v6684, -inf
        %6759 = vmax.xlane.f32.xlu0 %v6758
        %v6760 = vpop.xlane.xlu0 %6759
        %v6761 = vsel %vm6703, %v6685, -inf
        %6762 = vmax.xlane.f32.xlu0 %v6761
        %v6763 = vpop.xlane.xlu0 %6762
        %v6764 = vsel %vm6703, %v6686, -inf
        %6765 = vmax.xlane.f32.xlu0 %v6764
        %v6766 = vpop.xlane.xlu0 %6765
        %v6767 = vsel %vm6703, %v6687, -inf
        %6768 = vmax.xlane.f32.xlu0 %v6767
        %v6769 = vpop.xlane.xlu0 %6768
        %v6770 = vsel %vm6703, %v6688, -inf
        %6771 = vmax.xlane.f32.xlu0 %v6770
        %v6772 = vpop.xlane.xlu0 %6771
        %v6773 = vsel %vm6703, %v6689, -inf
        %6774 = vmax.xlane.f32.xlu0 %v6773
        %v6775 = vpop.xlane.xlu0 %6774
        %v6776 = vsel %vm6703, %v6690, -inf
        %6777 = vmax.xlane.f32.xlu0 %v6776
        %v6778 = vpop.xlane.xlu0 %6777
        %v6779 = vsel %vm6703, %v6691, -inf
        %6780 = vmax.xlane.f32.xlu0 %v6779
        %v6781 = vpop.xlane.xlu0 %6780
        %v6782 = vsel %vm6703, %v6692, -inf
        %6783 = vmax.xlane.f32.xlu0 %v6782
        %v6784 = vpop.xlane.xlu0 %6783
        %v6785 = vsel %vm6703, %v6693, -inf
        %6786 = vmax.xlane.f32.xlu0 %v6785
        %v6787 = vpop.xlane.xlu0 %6786
        %v6788 = vsel %vm6703, %v6694, -inf
        %6789 = vmax.xlane.f32.xlu0 %v6788
        %v6790 = vpop.xlane.xlu0 %6789
        %v6791 = vsel %vm6703, %v6695, -inf
        %6792 = vmax.xlane.f32.xlu0 %v6791
        %v6793 = vpop.xlane.xlu0 %6792
        %v6794 = vsel %vm6703, %v6696, -inf
        %6795 = vmax.xlane.f32.xlu0 %v6794
        %v6796 = vpop.xlane.xlu0 %6795
        %v6797 = vsel %vm6703, %v6697, -inf
        %6798 = vmax.xlane.f32.xlu0 %v6797
        %v6799 = vpop.xlane.xlu0 %6798
        %v6800 = vsub.f32 %v6666, %v6706
        %v6801 = vsub.f32 %v6667, %v6709
        %v6802 = vsub.f32 %v6668, %v6712
        %v6803 = vsub.f32 %v6669, %v6715
        %v6804 = vsub.f32 %v6670, %v6718
        %v6805 = vsub.f32 %v6671, %v6721
        %v6806 = vsub.f32 %v6672, %v6724
        %v6807 = vsub.f32 %v6673, %v6727
        %v6808 = vsub.f32 %v6674, %v6730
        %v6809 = vsub.f32 %v6675, %v6733
        %v6810 = vsub.f32 %v6676, %v6736
        %v6811 = vsub.f32 %v6677, %v6739
        %v6812 = vsub.f32 %v6678, %v6742
        %v6813 = vsub.f32 %v6679, %v6745
        %v6814 = vsub.f32 %v6680, %v6748
        %v6815 = vsub.f32 %v6681, %v6751
        %v6816 = vsub.f32 %v6682, %v6754
        %v6817 = vsub.f32 %v6683, %v6757
        %v6818 = vsub.f32 %v6684, %v6760
        %v6819 = vsub.f32 %v6685, %v6763
        %v6820 = vsub.f32 %v6686, %v6766
        %v6821 = vsub.f32 %v6687, %v6769
        %v6822 = vsub.f32 %v6688, %v6772
        %v6823 = vsub.f32 %v6689, %v6775
        %v6824 = vsub.f32 %v6690, %v6778
        %v6825 = vsub.f32 %v6691, %v6781
        %v6826 = vsub.f32 %v6692, %v6784
        %v6827 = vsub.f32 %v6693, %v6787
        %v6828 = vsub.f32 %v6694, %v6790
        %v6829 = vsub.f32 %v6695, %v6793
        %v6830 = vsub.f32 %v6696, %v6796
        %v6831 = vsub.f32 %v6697, %v6799
        %v6832 = vmul.f32 %v6800, 1.442695
        %v6833 = vpow.pop %v6832
        %v6834 = vmul.f32 %v6801, 1.442695
        %v6835 = vpow.pop %v6834
        %v6836 = vmul.f32 %v6802, 1.442695
        %v6837 = vpow.pop %v6836
        %v6838 = vmul.f32 %v6803, 1.442695
        %v6839 = vpow.pop %v6838
        %v6840 = vmul.f32 %v6804, 1.442695
        %v6841 = vpow.pop %v6840
        %v6842 = vmul.f32 %v6805, 1.442695
        %v6843 = vpow.pop %v6842
        %v6844 = vmul.f32 %v6806, 1.442695
        %v6845 = vpow.pop %v6844
        %v6846 = vmul.f32 %v6807, 1.442695
        %v6847 = vpow.pop %v6846
        %v6848 = vmul.f32 %v6808, 1.442695
        %v6849 = vpow.pop %v6848
        %v6850 = vmul.f32 %v6809, 1.442695
        %v6851 = vpow.pop %v6850
        %v6852 = vmul.f32 %v6810, 1.442695
        %v6853 = vpow.pop %v6852
        %v6854 = vmul.f32 %v6811, 1.442695
        %v6855 = vpow.pop %v6854
        %v6856 = vmul.f32 %v6812, 1.442695
        %v6857 = vpow.pop %v6856
        %v6858 = vmul.f32 %v6813, 1.442695
        %v6859 = vpow.pop %v6858
        %v6860 = vmul.f32 %v6814, 1.442695
        %v6861 = vpow.pop %v6860
        %v6862 = vmul.f32 %v6815, 1.442695
        %v6863 = vpow.pop %v6862
        %v6864 = vmul.f32 %v6816, 1.442695
        %v6865 = vpow.pop %v6864
        %v6866 = vmul.f32 %v6817, 1.442695
        %v6867 = vpow.pop %v6866
        %v6868 = vmul.f32 %v6818, 1.442695
        %v6869 = vpow.pop %v6868
        %v6870 = vmul.f32 %v6819, 1.442695
        %v6871 = vpow.pop %v6870
        %v6872 = vmul.f32 %v6820, 1.442695
        %v6873 = vpow.pop %v6872
        %v6874 = vmul.f32 %v6821, 1.442695
        %v6875 = vpow.pop %v6874
        %v6876 = vmul.f32 %v6822, 1.442695
        %v6877 = vpow.pop %v6876
        %v6878 = vmul.f32 %v6823, 1.442695
        %v6879 = vpow.pop %v6878
        %v6880 = vmul.f32 %v6824, 1.442695
        %v6881 = vpow.pop %v6880
        %v6882 = vmul.f32 %v6825, 1.442695
        %v6883 = vpow.pop %v6882
        %v6884 = vmul.f32 %v6826, 1.442695
        %v6885 = vpow.pop %v6884
        %v6886 = vmul.f32 %v6827, 1.442695
        %v6887 = vpow.pop %v6886
        %v6888 = vmul.f32 %v6828, 1.442695
        %v6889 = vpow.pop %v6888
        %v6890 = vmul.f32 %v6829, 1.442695
        %v6891 = vpow.pop %v6890
        %v6892 = vmul.f32 %v6830, 1.442695
        %v6893 = vpow.pop %v6892
        %v6894 = vmul.f32 %v6831, 1.442695
        %v6895 = vpow.pop %v6894
        %v6896 = vsel %vm6702, 1, 0
        %vm6897 = vcmp.eq.s32.totalorder %v6896, 1
        %v6898 = vsel %vm6897, %v6833, 0.0
        %v6899 = vsel %vm6897, %v6835, 0.0
        %v6900 = vsel %vm6897, %v6837, 0.0
        %v6901 = vsel %vm6897, %v6839, 0.0
        %v6902 = vsel %vm6897, %v6841, 0.0
        %v6903 = vsel %vm6897, %v6843, 0.0
        %v6904 = vsel %vm6897, %v6845, 0.0
        %v6905 = vsel %vm6897, %v6847, 0.0
        %v6906 = vsel %vm6897, %v6849, 0.0
        %v6907 = vsel %vm6897, %v6851, 0.0
        %v6908 = vsel %vm6897, %v6853, 0.0
        %v6909 = vsel %vm6897, %v6855, 0.0
        %v6910 = vsel %vm6897, %v6857, 0.0
        %v6911 = vsel %vm6897, %v6859, 0.0
        %v6912 = vsel %vm6897, %v6861, 0.0
        %v6913 = vsel %vm6897, %v6863, 0.0
        %v6914 = vsel %vm6897, %v6865, 0.0
        %v6915 = vsel %vm6897, %v6867, 0.0
        %v6916 = vsel %vm6897, %v6869, 0.0
        %v6917 = vsel %vm6897, %v6871, 0.0
        %v6918 = vsel %vm6897, %v6873, 0.0
        %v6919 = vsel %vm6897, %v6875, 0.0
        %v6920 = vsel %vm6897, %v6877, 0.0
        %v6921 = vsel %vm6897, %v6879, 0.0
        %v6922 = vsel %vm6897, %v6881, 0.0
        %v6923 = vsel %vm6897, %v6883, 0.0
        %v6924 = vsel %vm6897, %v6885, 0.0
        %v6925 = vsel %vm6897, %v6887, 0.0
        %v6926 = vsel %vm6897, %v6889, 0.0
        %v6927 = vsel %vm6897, %v6891, 0.0
        %v6928 = vsel %vm6897, %v6893, 0.0
        %v6929 = vsel %vm6897, %v6895, 0.0
        %v6930 = vsel %vm6703, %v6898, 0.0
        %6931 = vadd.xlane.f32.xlu0 %v6930
        %v6932 = vpop.xlane.xlu0 %6931
        %v6933 = vsel %vm6703, %v6899, 0.0
        %6934 = vadd.xlane.f32.xlu0 %v6933
        %v6935 = vpop.xlane.xlu0 %6934
        %v6936 = vsel %vm6703, %v6900, 0.0
        %6937 = vadd.xlane.f32.xlu0 %v6936
        %v6938 = vpop.xlane.xlu0 %6937
        %v6939 = vsel %vm6703, %v6901, 0.0
        %6940 = vadd.xlane.f32.xlu0 %v6939
        %v6941 = vpop.xlane.xlu0 %6940
        %v6942 = vsel %vm6703, %v6902, 0.0
        %6943 = vadd.xlane.f32.xlu0 %v6942
        %v6944 = vpop.xlane.xlu0 %6943
        %v6945 = vsel %vm6703, %v6903, 0.0
        %6946 = vadd.xlane.f32.xlu0 %v6945
        %v6947 = vpop.xlane.xlu0 %6946
        %v6948 = vsel %vm6703, %v6904, 0.0
        %6949 = vadd.xlane.f32.xlu0 %v6948
        %v6950 = vpop.xlane.xlu0 %6949
        %v6951 = vsel %vm6703, %v6905, 0.0
        %6952 = vadd.xlane.f32.xlu0 %v6951
        %v6953 = vpop.xlane.xlu0 %6952
        %v6954 = vsel %vm6703, %v6906, 0.0
        %6955 = vadd.xlane.f32.xlu0 %v6954
        %v6956 = vpop.xlane.xlu0 %6955
        %v6957 = vsel %vm6703, %v6907, 0.0
        %6958 = vadd.xlane.f32.xlu0 %v6957
        %v6959 = vpop.xlane.xlu0 %6958
        %v6960 = vsel %vm6703, %v6908, 0.0
        %6961 = vadd.xlane.f32.xlu0 %v6960
        %v6962 = vpop.xlane.xlu0 %6961
        %v6963 = vsel %vm6703, %v6909, 0.0
        %6964 = vadd.xlane.f32.xlu0 %v6963
        %v6965 = vpop.xlane.xlu0 %6964
        %v6966 = vsel %vm6703, %v6910, 0.0
        %6967 = vadd.xlane.f32.xlu0 %v6966
        %v6968 = vpop.xlane.xlu0 %6967
        %v6969 = vsel %vm6703, %v6911, 0.0
        %6970 = vadd.xlane.f32.xlu0 %v6969
        %v6971 = vpop.xlane.xlu0 %6970
        %v6972 = vsel %vm6703, %v6912, 0.0
        %6973 = vadd.xlane.f32.xlu0 %v6972
        %v6974 = vpop.xlane.xlu0 %6973
        %v6975 = vsel %vm6703, %v6913, 0.0
        %6976 = vadd.xlane.f32.xlu0 %v6975
        %v6977 = vpop.xlane.xlu0 %6976
        %v6978 = vsel %vm6703, %v6914, 0.0
        %6979 = vadd.xlane.f32.xlu0 %v6978
        %v6980 = vpop.xlane.xlu0 %6979
        %v6981 = vsel %vm6703, %v6915, 0.0
        %6982 = vadd.xlane.f32.xlu0 %v6981
        %v6983 = vpop.xlane.xlu0 %6982
        %v6984 = vsel %vm6703, %v6916, 0.0
        %6985 = vadd.xlane.f32.xlu0 %v6984
        %v6986 = vpop.xlane.xlu0 %6985
        %v6987 = vsel %vm6703, %v6917, 0.0
        %6988 = vadd.xlane.f32.xlu0 %v6987
        %v6989 = vpop.xlane.xlu0 %6988
        %v6990 = vsel %vm6703, %v6918, 0.0
        %6991 = vadd.xlane.f32.xlu0 %v6990
        %v6992 = vpop.xlane.xlu0 %6991
        %v6993 = vsel %vm6703, %v6919, 0.0
        %6994 = vadd.xlane.f32.xlu0 %v6993
        %v6995 = vpop.xlane.xlu0 %6994
        %v6996 = vsel %vm6703, %v6920, 0.0
        %6997 = vadd.xlane.f32.xlu0 %v6996
        %v6998 = vpop.xlane.xlu0 %6997
        %v6999 = vsel %vm6703, %v6921, 0.0
        %7000 = vadd.xlane.f32.xlu0 %v6999
        %v7001 = vpop.xlane.xlu0 %7000
        %v7002 = vsel %vm6703, %v6922, 0.0
        %7003 = vadd.xlane.f32.xlu0 %v7002
        %v7004 = vpop.xlane.xlu0 %7003
        %v7005 = vsel %vm6703, %v6923, 0.0
        %7006 = vadd.xlane.f32.xlu0 %v7005
        %v7007 = vpop.xlane.xlu0 %7006
        %v7008 = vsel %vm6703, %v6924, 0.0
        %7009 = vadd.xlane.f32.xlu0 %v7008
        %v7010 = vpop.xlane.xlu0 %7009
        %v7011 = vsel %vm6703, %v6925, 0.0
        %7012 = vadd.xlane.f32.xlu0 %v7011
        %v7013 = vpop.xlane.xlu0 %7012
        %v7014 = vsel %vm6703, %v6926, 0.0
        %7015 = vadd.xlane.f32.xlu0 %v7014
        %v7016 = vpop.xlane.xlu0 %7015
        %v7017 = vsel %vm6703, %v6927, 0.0
        %7018 = vadd.xlane.f32.xlu0 %v7017
        %v7019 = vpop.xlane.xlu0 %7018
        %v7020 = vsel %vm6703, %v6928, 0.0
        %7021 = vadd.xlane.f32.xlu0 %v7020
        %v7022 = vpop.xlane.xlu0 %7021
        %v7023 = vsel %vm6703, %v6929, 0.0
        %7024 = vadd.xlane.f32.xlu0 %v7023
        %v7025 = vpop.xlane.xlu0 %7024
        %v7026 = vrcp.pop %v6932
        %v7027 = vrcp.pop %v6935
        %v7028 = vrcp.pop %v6938
        %v7029 = vrcp.pop %v6941
        %v7030 = vrcp.pop %v6944
        %v7031 = vrcp.pop %v6947
        %v7032 = vrcp.pop %v6950
        %v7033 = vrcp.pop %v6953
        %v7034 = vrcp.pop %v6956
        %v7035 = vrcp.pop %v6959
        %v7036 = vrcp.pop %v6962
        %v7037 = vrcp.pop %v6965
        %v7038 = vrcp.pop %v6968
        %v7039 = vrcp.pop %v6971
        %v7040 = vrcp.pop %v6974
        %v7041 = vrcp.pop %v6977
        %v7042 = vrcp.pop %v6980
        %v7043 = vrcp.pop %v6983
        %v7044 = vrcp.pop %v6986
        %v7045 = vrcp.pop %v6989
        %v7046 = vrcp.pop %v6992
        %v7047 = vrcp.pop %v6995
        %v7048 = vrcp.pop %v6998
        %v7049 = vrcp.pop %v7001
        %v7050 = vrcp.pop %v7004
        %v7051 = vrcp.pop %v7007
        %v7052 = vrcp.pop %v7010
        %v7053 = vrcp.pop %v7013
        %v7054 = vrcp.pop %v7016
        %v7055 = vrcp.pop %v7019
        %v7056 = vrcp.pop %v7022
        %v7057 = vrcp.pop %v7025
        %v7058 = vmul.f32 %v6932, %v7026
        %v7059 = vmul.f32 %v6935, %v7027
        %v7060 = vmul.f32 %v6938, %v7028
        %v7061 = vmul.f32 %v6941, %v7029
        %v7062 = vmul.f32 %v6944, %v7030
        %v7063 = vmul.f32 %v6947, %v7031
        %v7064 = vmul.f32 %v6950, %v7032
        %v7065 = vmul.f32 %v6953, %v7033
        %v7066 = vmul.f32 %v6956, %v7034
        %v7067 = vmul.f32 %v6959, %v7035
        %v7068 = vmul.f32 %v6962, %v7036
        %v7069 = vmul.f32 %v6965, %v7037
        %v7070 = vmul.f32 %v6968, %v7038
        %v7071 = vmul.f32 %v6971, %v7039
        %v7072 = vmul.f32 %v6974, %v7040
        %v7073 = vmul.f32 %v6977, %v7041
        %v7074 = vmul.f32 %v6980, %v7042
        %v7075 = vmul.f32 %v6983, %v7043
        %v7076 = vmul.f32 %v6986, %v7044
        %v7077 = vmul.f32 %v6989, %v7045
        %v7078 = vmul.f32 %v6992, %v7046
        %v7079 = vmul.f32 %v6995, %v7047
        %v7080 = vmul.f32 %v6998, %v7048
        %v7081 = vmul.f32 %v7001, %v7049
        %v7082 = vmul.f32 %v7004, %v7050
        %v7083 = vmul.f32 %v7007, %v7051
        %v7084 = vmul.f32 %v7010, %v7052
        %v7085 = vmul.f32 %v7013, %v7053
        %v7086 = vmul.f32 %v7016, %v7054
        %v7087 = vmul.f32 %v7019, %v7055
        %v7088 = vmul.f32 %v7022, %v7056
        %v7089 = vmul.f32 %v7025, %v7057
        %v7090 = vsub.f32 2.0, %v7058
        %v7091 = vsub.f32 2.0, %v7059
        %v7092 = vsub.f32 2.0, %v7060
        %v7093 = vsub.f32 2.0, %v7061
        %v7094 = vsub.f32 2.0, %v7062
        %v7095 = vsub.f32 2.0, %v7063
        %v7096 = vsub.f32 2.0, %v7064
        %v7097 = vsub.f32 2.0, %v7065
        %v7098 = vsub.f32 2.0, %v7066
        %v7099 = vsub.f32 2.0, %v7067
        %v7100 = vsub.f32 2.0, %v7068
        %v7101 = vsub.f32 2.0, %v7069
        %v7102 = vsub.f32 2.0, %v7070
        %v7103 = vsub.f32 2.0, %v7071
        %v7104 = vsub.f32 2.0, %v7072
        %v7105 = vsub.f32 2.0, %v7073
        %v7106 = vsub.f32 2.0, %v7074
        %v7107 = vsub.f32 2.0, %v7075
        %v7108 = vsub.f32 2.0, %v7076
        %v7109 = vsub.f32 2.0, %v7077
        %v7110 = vsub.f32 2.0, %v7078
        %v7111 = vsub.f32 2.0, %v7079
        %v7112 = vsub.f32 2.0, %v7080
        %v7113 = vsub.f32 2.0, %v7081
        %v7114 = vsub.f32 2.0, %v7082
        %v7115 = vsub.f32 2.0, %v7083
        %v7116 = vsub.f32 2.0, %v7084
        %v7117 = vsub.f32 2.0, %v7085
        %v7118 = vsub.f32 2.0, %v7086
        %v7119 = vsub.f32 2.0, %v7087
        %v7120 = vsub.f32 2.0, %v7088
        %v7121 = vsub.f32 2.0, %v7089
        %v7122 = vmul.f32 %v7026, %v7090
        %v7123 = vmul.f32 %v7027, %v7091
        %v7124 = vmul.f32 %v7028, %v7092
        %v7125 = vmul.f32 %v7029, %v7093
        %v7126 = vmul.f32 %v7030, %v7094
        %v7127 = vmul.f32 %v7031, %v7095
        %v7128 = vmul.f32 %v7032, %v7096
        %v7129 = vmul.f32 %v7033, %v7097
        %v7130 = vmul.f32 %v7034, %v7098
        %v7131 = vmul.f32 %v7035, %v7099
        %v7132 = vmul.f32 %v7036, %v7100
        %v7133 = vmul.f32 %v7037, %v7101
        %v7134 = vmul.f32 %v7038, %v7102
        %v7135 = vmul.f32 %v7039, %v7103
        %v7136 = vmul.f32 %v7040, %v7104
        %v7137 = vmul.f32 %v7041, %v7105
        %v7138 = vmul.f32 %v7042, %v7106
        %v7139 = vmul.f32 %v7043, %v7107
        %v7140 = vmul.f32 %v7044, %v7108
        %v7141 = vmul.f32 %v7045, %v7109
        %v7142 = vmul.f32 %v7046, %v7110
        %v7143 = vmul.f32 %v7047, %v7111
        %v7144 = vmul.f32 %v7048, %v7112
        %v7145 = vmul.f32 %v7049, %v7113
        %v7146 = vmul.f32 %v7050, %v7114
        %v7147 = vmul.f32 %v7051, %v7115
        %v7148 = vmul.f32 %v7052, %v7116
        %v7149 = vmul.f32 %v7053, %v7117
        %v7150 = vmul.f32 %v7054, %v7118
        %v7151 = vmul.f32 %v7055, %v7119
        %v7152 = vmul.f32 %v7056, %v7120
        %v7153 = vmul.f32 %v7057, %v7121
        %v7154 = vmul.f32 %v6898, %v7122
        %v7155 = vmul.f32 %v6899, %v7123
        %v7156 = vmul.f32 %v6900, %v7124
        %v7157 = vmul.f32 %v6901, %v7125
        %v7158 = vmul.f32 %v6902, %v7126
        %v7159 = vmul.f32 %v6903, %v7127
        %v7160 = vmul.f32 %v6904, %v7128
        %v7161 = vmul.f32 %v6905, %v7129
        %v7162 = vmul.f32 %v6906, %v7130
        %v7163 = vmul.f32 %v6907, %v7131
        %v7164 = vmul.f32 %v6908, %v7132
        %v7165 = vmul.f32 %v6909, %v7133
        %v7166 = vmul.f32 %v6910, %v7134
        %v7167 = vmul.f32 %v6911, %v7135
        %v7168 = vmul.f32 %v6912, %v7136
        %v7169 = vmul.f32 %v6913, %v7137
        %v7170 = vmul.f32 %v6914, %v7138
        %v7171 = vmul.f32 %v6915, %v7139
        %v7172 = vmul.f32 %v6916, %v7140
        %v7173 = vmul.f32 %v6917, %v7141
        %v7174 = vmul.f32 %v6918, %v7142
        %v7175 = vmul.f32 %v6919, %v7143
        %v7176 = vmul.f32 %v6920, %v7144
        %v7177 = vmul.f32 %v6921, %v7145
        %v7178 = vmul.f32 %v6922, %v7146
        %v7179 = vmul.f32 %v6923, %v7147
        %v7180 = vmul.f32 %v6924, %v7148
        %v7181 = vmul.f32 %v6925, %v7149
        %v7182 = vmul.f32 %v6926, %v7150
        %v7183 = vmul.f32 %v6927, %v7151
        %v7184 = vmul.f32 %v6928, %v7152
        %v7185 = vmul.f32 %v6929, %v7153
        %v7187 = vsel %vm6703, %v7154, 0
        %7189 = vmatprep.subr.mxu0 0.0
        %7190 = vmatpush1.msra.mxu0 0.0
        %7191 = vmatprep.subr.mxu0 0.0
        %7192 = vmatpush1.msra.mxu0 0.0
        %7193 = vmatprep.subr.mxu0 0.0
        %7194 = vmatpush1.msra.mxu0 0.0
        %7195 = vmatprep.subr.mxu0 0.0
        %7196 = vmatpush1.msra.mxu0 0.0
        %7197 = vmatprep.subr.mxu0 0.0
        %7198 = vmatpush1.msra.mxu0 0.0
        %7199 = vmatprep.subr.mxu0 0.0
        %7200 = vmatpush1.msra.mxu0 0.0
        %7201 = vmatprep.subr.mxu0 0.0
        %7202 = vmatpush1.msra.mxu0 0.0
        %7203 = vmatprep.subr.mxu0 0.0
        %7204 = vmatpush1.msra.mxu0 0.0
        %7205 = vmatprep.subr.mxu0 0.0
        %7206 = vmatpush1.msra.mxu0 0.0
        %7207 = vmatprep.subr.mxu0 0.0
        %7208 = vmatpush1.msra.mxu0 0.0
        %7209 = vmatprep.subr.mxu0 0.0
        %7210 = vmatpush1.msra.mxu0 0.0
        %7211 = vmatprep.subr.mxu0 0.0
        %7212 = vmatpush1.msra.mxu0 0.0
        %7213 = vmatprep.subr.mxu0 0.0
        %7214 = vmatpush1.msra.mxu0 0.0
        %7215 = vmatprep.subr.mxu0 0.0
        %7216 = vmatpush1.msra.mxu0 0.0
        %7217 = vmatprep.subr.mxu0 0.0
        %7218 = vmatpush1.msra.mxu0 0.0
        %7219 = vmatprep.subr.mxu0 0.0
        %7220 = vmatpush1.msra.mxu0 %v321
        %7221 = vmatprep.subr.mxu0 0.0
        %7222 = vmatpush2.msra.mxu0 0.0
        %7223 = vmatprep.subr.mxu0 0.0
        %7224 = vmatpush2.msra.mxu0 0.0
        %7225 = vmatprep.subr.mxu0 0.0
        %7226 = vmatpush2.msra.mxu0 0.0
        %7227 = vmatprep.subr.mxu0 0.0
        %7228 = vmatpush2.msra.mxu0 0.0
        %7229 = vmatprep.subr.mxu0 0.0
        %7230 = vmatpush2.msra.mxu0 0.0
        %7231 = vmatprep.subr.mxu0 0.0
        %7232 = vmatpush2.msra.mxu0 0.0
        %7233 = vmatprep.subr.mxu0 0.0
        %7234 = vmatpush2.msra.mxu0 0.0
        %7235 = vmatprep.subr.mxu0 0.0
        %7236 = vmatpush2.msra.mxu0 0.0
        %7237 = vmatprep.subr.mxu0 0.0
        %7238 = vmatpush2.msra.mxu0 0.0
        %7239 = vmatprep.subr.mxu0 0.0
        %7240 = vmatpush2.msra.mxu0 0.0
        %7241 = vmatprep.subr.mxu0 0.0
        %7242 = vmatpush2.msra.mxu0 0.0
        %7243 = vmatprep.subr.mxu0 0.0
        %7244 = vmatpush2.msra.mxu0 0.0
        %7245 = vmatprep.subr.mxu0 0.0
        %7246 = vmatpush2.msra.mxu0 0.0
        %7247 = vmatprep.subr.mxu0 0.0
        %7248 = vmatpush2.msra.mxu0 0.0
        %7249 = vmatprep.subr.mxu0 0.0
        %7250 = vmatpush2.msra.mxu0 0.0
        %7251 = vmatprep.subr.mxu0 0.0
        %7252 = vmatpush2.msra.mxu0 0.0
        %7253 = vmatprep.mubr.f32.mxu0 0.0
        %7254 = vmatmul.mubr.f32.gmra.mxu0 %v7187
        %v7255 = vpop.f32.mrf.mxu0
        %v7256 = vadd.f32 0.0, %v7255
        %v7257 = vpop.f32.mrf.mxu0
        %7258 = vdwg.mxu0
        %v7260 = vsel %vm6703, %v7155, 0
        %7262 = vmatprep.subr.mxu0 0.0
        %7263 = vmatpush1.msra.mxu0 0.0
        %7264 = vmatprep.subr.mxu0 0.0
        %7265 = vmatpush1.msra.mxu0 0.0
        %7266 = vmatprep.subr.mxu0 0.0
        %7267 = vmatpush1.msra.mxu0 0.0
        %7268 = vmatprep.subr.mxu0 0.0
        %7269 = vmatpush1.msra.mxu0 0.0
        %7270 = vmatprep.subr.mxu0 0.0
        %7271 = vmatpush1.msra.mxu0 0.0
        %7272 = vmatprep.subr.mxu0 0.0
        %7273 = vmatpush1.msra.mxu0 0.0
        %7274 = vmatprep.subr.mxu0 0.0
        %7275 = vmatpush1.msra.mxu0 0.0
        %7276 = vmatprep.subr.mxu0 0.0
        %7277 = vmatpush1.msra.mxu0 0.0
        %7278 = vmatprep.subr.mxu0 0.0
        %7279 = vmatpush1.msra.mxu0 0.0
        %7280 = vmatprep.subr.mxu0 0.0
        %7281 = vmatpush1.msra.mxu0 0.0
        %7282 = vmatprep.subr.mxu0 0.0
        %7283 = vmatpush1.msra.mxu0 0.0
        %7284 = vmatprep.subr.mxu0 0.0
        %7285 = vmatpush1.msra.mxu0 0.0
        %7286 = vmatprep.subr.mxu0 0.0
        %7287 = vmatpush1.msra.mxu0 0.0
        %7288 = vmatprep.subr.mxu0 0.0
        %7289 = vmatpush1.msra.mxu0 0.0
        %7290 = vmatprep.subr.mxu0 0.0
        %7291 = vmatpush1.msra.mxu0 0.0
        %7292 = vmatprep.subr.mxu0 0.0
        %7293 = vmatpush1.msra.mxu0 %v322
        %7294 = vmatprep.subr.mxu0 0.0
        %7295 = vmatpush2.msra.mxu0 0.0
        %7296 = vmatprep.subr.mxu0 0.0
        %7297 = vmatpush2.msra.mxu0 0.0
        %7298 = vmatprep.subr.mxu0 0.0
        %7299 = vmatpush2.msra.mxu0 0.0
        %7300 = vmatprep.subr.mxu0 0.0
        %7301 = vmatpush2.msra.mxu0 0.0
        %7302 = vmatprep.subr.mxu0 0.0
        %7303 = vmatpush2.msra.mxu0 0.0
        %7304 = vmatprep.subr.mxu0 0.0
        %7305 = vmatpush2.msra.mxu0 0.0
        %7306 = vmatprep.subr.mxu0 0.0
        %7307 = vmatpush2.msra.mxu0 0.0
        %7308 = vmatprep.subr.mxu0 0.0
        %7309 = vmatpush2.msra.mxu0 0.0
        %7310 = vmatprep.subr.mxu0 0.0
        %7311 = vmatpush2.msra.mxu0 0.0
        %7312 = vmatprep.subr.mxu0 0.0
        %7313 = vmatpush2.msra.mxu0 0.0
        %7314 = vmatprep.subr.mxu0 0.0
        %7315 = vmatpush2.msra.mxu0 0.0
        %7316 = vmatprep.subr.mxu0 0.0
        %7317 = vmatpush2.msra.mxu0 0.0
        %7318 = vmatprep.subr.mxu0 0.0
        %7319 = vmatpush2.msra.mxu0 0.0
        %7320 = vmatprep.subr.mxu0 0.0
        %7321 = vmatpush2.msra.mxu0 0.0
        %7322 = vmatprep.subr.mxu0 0.0
        %7323 = vmatpush2.msra.mxu0 0.0
        %7324 = vmatprep.subr.mxu0 0.0
        %7325 = vmatpush2.msra.mxu0 0.0
        %7326 = vmatprep.mubr.f32.mxu0 0.0
        %7327 = vmatmul.mubr.f32.gmra.mxu0 %v7260
        %v7328 = vpop.f32.mrf.mxu0
        %v7329 = vadd.f32 0.0, %v7328
        %v7330 = vpop.f32.mrf.mxu0
        %7331 = vdwg.mxu0
        %v7333 = vsel %vm6703, %v7156, 0
        %7335 = vmatprep.subr.mxu0 0.0
        %7336 = vmatpush1.msra.mxu0 0.0
        %7337 = vmatprep.subr.mxu0 0.0
        %7338 = vmatpush1.msra.mxu0 0.0
        %7339 = vmatprep.subr.mxu0 0.0
        %7340 = vmatpush1.msra.mxu0 0.0
        %7341 = vmatprep.subr.mxu0 0.0
        %7342 = vmatpush1.msra.mxu0 0.0
        %7343 = vmatprep.subr.mxu0 0.0
        %7344 = vmatpush1.msra.mxu0 0.0
        %7345 = vmatprep.subr.mxu0 0.0
        %7346 = vmatpush1.msra.mxu0 0.0
        %7347 = vmatprep.subr.mxu0 0.0
        %7348 = vmatpush1.msra.mxu0 0.0
        %7349 = vmatprep.subr.mxu0 0.0
        %7350 = vmatpush1.msra.mxu0 0.0
        %7351 = vmatprep.subr.mxu0 0.0
        %7352 = vmatpush1.msra.mxu0 0.0
        %7353 = vmatprep.subr.mxu0 0.0
        %7354 = vmatpush1.msra.mxu0 0.0
        %7355 = vmatprep.subr.mxu0 0.0
        %7356 = vmatpush1.msra.mxu0 0.0
        %7357 = vmatprep.subr.mxu0 0.0
        %7358 = vmatpush1.msra.mxu0 0.0
        %7359 = vmatprep.subr.mxu0 0.0
        %7360 = vmatpush1.msra.mxu0 0.0
        %7361 = vmatprep.subr.mxu0 0.0
        %7362 = vmatpush1.msra.mxu0 0.0
        %7363 = vmatprep.subr.mxu0 0.0
        %7364 = vmatpush1.msra.mxu0 0.0
        %7365 = vmatprep.subr.mxu0 0.0
        %7366 = vmatpush1.msra.mxu0 %v323
        %7367 = vmatprep.subr.mxu0 0.0
        %7368 = vmatpush2.msra.mxu0 0.0
        %7369 = vmatprep.subr.mxu0 0.0
        %7370 = vmatpush2.msra.mxu0 0.0
        %7371 = vmatprep.subr.mxu0 0.0
        %7372 = vmatpush2.msra.mxu0 0.0
        %7373 = vmatprep.subr.mxu0 0.0
        %7374 = vmatpush2.msra.mxu0 0.0
        %7375 = vmatprep.subr.mxu0 0.0
        %7376 = vmatpush2.msra.mxu0 0.0
        %7377 = vmatprep.subr.mxu0 0.0
        %7378 = vmatpush2.msra.mxu0 0.0
        %7379 = vmatprep.subr.mxu0 0.0
        %7380 = vmatpush2.msra.mxu0 0.0
        %7381 = vmatprep.subr.mxu0 0.0
        %7382 = vmatpush2.msra.mxu0 0.0
        %7383 = vmatprep.subr.mxu0 0.0
        %7384 = vmatpush2.msra.mxu0 0.0
        %7385 = vmatprep.subr.mxu0 0.0
        %7386 = vmatpush2.msra.mxu0 0.0
        %7387 = vmatprep.subr.mxu0 0.0
        %7388 = vmatpush2.msra.mxu0 0.0
        %7389 = vmatprep.subr.mxu0 0.0
        %7390 = vmatpush2.msra.mxu0 0.0
        %7391 = vmatprep.subr.mxu0 0.0
        %7392 = vmatpush2.msra.mxu0 0.0
        %7393 = vmatprep.subr.mxu0 0.0
        %7394 = vmatpush2.msra.mxu0 0.0
        %7395 = vmatprep.subr.mxu0 0.0
        %7396 = vmatpush2.msra.mxu0 0.0
        %7397 = vmatprep.subr.mxu0 0.0
        %7398 = vmatpush2.msra.mxu0 0.0
        %7399 = vmatprep.mubr.f32.mxu0 0.0
        %7400 = vmatmul.mubr.f32.gmra.mxu0 %v7333
        %v7401 = vpop.f32.mrf.mxu0
        %v7402 = vadd.f32 0.0, %v7401
        %v7403 = vpop.f32.mrf.mxu0
        %7404 = vdwg.mxu0
        %v7406 = vsel %vm6703, %v7157, 0
        %7408 = vmatprep.subr.mxu0 0.0
        %7409 = vmatpush1.msra.mxu0 0.0
        %7410 = vmatprep.subr.mxu0 0.0
        %7411 = vmatpush1.msra.mxu0 0.0
        %7412 = vmatprep.subr.mxu0 0.0
        %7413 = vmatpush1.msra.mxu0 0.0
        %7414 = vmatprep.subr.mxu0 0.0
        %7415 = vmatpush1.msra.mxu0 0.0
        %7416 = vmatprep.subr.mxu0 0.0
        %7417 = vmatpush1.msra.mxu0 0.0
        %7418 = vmatprep.subr.mxu0 0.0
        %7419 = vmatpush1.msra.mxu0 0.0
        %7420 = vmatprep.subr.mxu0 0.0
        %7421 = vmatpush1.msra.mxu0 0.0
        %7422 = vmatprep.subr.mxu0 0.0
        %7423 = vmatpush1.msra.mxu0 0.0
        %7424 = vmatprep.subr.mxu0 0.0
        %7425 = vmatpush1.msra.mxu0 0.0
        %7426 = vmatprep.subr.mxu0 0.0
        %7427 = vmatpush1.msra.mxu0 0.0
        %7428 = vmatprep.subr.mxu0 0.0
        %7429 = vmatpush1.msra.mxu0 0.0
        %7430 = vmatprep.subr.mxu0 0.0
        %7431 = vmatpush1.msra.mxu0 0.0
        %7432 = vmatprep.subr.mxu0 0.0
        %7433 = vmatpush1.msra.mxu0 0.0
        %7434 = vmatprep.subr.mxu0 0.0
        %7435 = vmatpush1.msra.mxu0 0.0
        %7436 = vmatprep.subr.mxu0 0.0
        %7437 = vmatpush1.msra.mxu0 0.0
        %7438 = vmatprep.subr.mxu0 0.0
        %7439 = vmatpush1.msra.mxu0 %v324
        %7440 = vmatprep.subr.mxu0 0.0
        %7441 = vmatpush2.msra.mxu0 0.0
        %7442 = vmatprep.subr.mxu0 0.0
        %7443 = vmatpush2.msra.mxu0 0.0
        %7444 = vmatprep.subr.mxu0 0.0
        %7445 = vmatpush2.msra.mxu0 0.0
        %7446 = vmatprep.subr.mxu0 0.0
        %7447 = vmatpush2.msra.mxu0 0.0
        %7448 = vmatprep.subr.mxu0 0.0
        %7449 = vmatpush2.msra.mxu0 0.0
        %7450 = vmatprep.subr.mxu0 0.0
        %7451 = vmatpush2.msra.mxu0 0.0
        %7452 = vmatprep.subr.mxu0 0.0
        %7453 = vmatpush2.msra.mxu0 0.0
        %7454 = vmatprep.subr.mxu0 0.0
        %7455 = vmatpush2.msra.mxu0 0.0
        %7456 = vmatprep.subr.mxu0 0.0
        %7457 = vmatpush2.msra.mxu0 0.0
        %7458 = vmatprep.subr.mxu0 0.0
        %7459 = vmatpush2.msra.mxu0 0.0
        %7460 = vmatprep.subr.mxu0 0.0
        %7461 = vmatpush2.msra.mxu0 0.0
        %7462 = vmatprep.subr.mxu0 0.0
        %7463 = vmatpush2.msra.mxu0 0.0
        %7464 = vmatprep.subr.mxu0 0.0
        %7465 = vmatpush2.msra.mxu0 0.0
        %7466 = vmatprep.subr.mxu0 0.0
        %7467 = vmatpush2.msra.mxu0 0.0
        %7468 = vmatprep.subr.mxu0 0.0
        %7469 = vmatpush2.msra.mxu0 0.0
        %7470 = vmatprep.subr.mxu0 0.0
        %7471 = vmatpush2.msra.mxu0 0.0
        %7472 = vmatprep.mubr.f32.mxu0 0.0
        %7473 = vmatmul.mubr.f32.gmra.mxu0 %v7406
        %v7474 = vpop.f32.mrf.mxu0
        %v7475 = vadd.f32 0.0, %v7474
        %v7476 = vpop.f32.mrf.mxu0
        %7477 = vdwg.mxu0
        %v7479 = vsel %vm6703, %v7158, 0
        %7481 = vmatprep.subr.mxu0 0.0
        %7482 = vmatpush1.msra.mxu0 0.0
        %7483 = vmatprep.subr.mxu0 0.0
        %7484 = vmatpush1.msra.mxu0 0.0
        %7485 = vmatprep.subr.mxu0 0.0
        %7486 = vmatpush1.msra.mxu0 0.0
        %7487 = vmatprep.subr.mxu0 0.0
        %7488 = vmatpush1.msra.mxu0 0.0
        %7489 = vmatprep.subr.mxu0 0.0
        %7490 = vmatpush1.msra.mxu0 0.0
        %7491 = vmatprep.subr.mxu0 0.0
        %7492 = vmatpush1.msra.mxu0 0.0
        %7493 = vmatprep.subr.mxu0 0.0
        %7494 = vmatpush1.msra.mxu0 0.0
        %7495 = vmatprep.subr.mxu0 0.0
        %7496 = vmatpush1.msra.mxu0 0.0
        %7497 = vmatprep.subr.mxu0 0.0
        %7498 = vmatpush1.msra.mxu0 0.0
        %7499 = vmatprep.subr.mxu0 0.0
        %7500 = vmatpush1.msra.mxu0 0.0
        %7501 = vmatprep.subr.mxu0 0.0
        %7502 = vmatpush1.msra.mxu0 0.0
        %7503 = vmatprep.subr.mxu0 0.0
        %7504 = vmatpush1.msra.mxu0 0.0
        %7505 = vmatprep.subr.mxu0 0.0
        %7506 = vmatpush1.msra.mxu0 0.0
        %7507 = vmatprep.subr.mxu0 0.0
        %7508 = vmatpush1.msra.mxu0 0.0
        %7509 = vmatprep.subr.mxu0 0.0
        %7510 = vmatpush1.msra.mxu0 0.0
        %7511 = vmatprep.subr.mxu0 0.0
        %7512 = vmatpush1.msra.mxu0 %v325
        %7513 = vmatprep.subr.mxu0 0.0
        %7514 = vmatpush2.msra.mxu0 0.0
        %7515 = vmatprep.subr.mxu0 0.0
        %7516 = vmatpush2.msra.mxu0 0.0
        %7517 = vmatprep.subr.mxu0 0.0
        %7518 = vmatpush2.msra.mxu0 0.0
        %7519 = vmatprep.subr.mxu0 0.0
        %7520 = vmatpush2.msra.mxu0 0.0
        %7521 = vmatprep.subr.mxu0 0.0
        %7522 = vmatpush2.msra.mxu0 0.0
        %7523 = vmatprep.subr.mxu0 0.0
        %7524 = vmatpush2.msra.mxu0 0.0
        %7525 = vmatprep.subr.mxu0 0.0
        %7526 = vmatpush2.msra.mxu0 0.0
        %7527 = vmatprep.subr.mxu0 0.0
        %7528 = vmatpush2.msra.mxu0 0.0
        %7529 = vmatprep.subr.mxu0 0.0
        %7530 = vmatpush2.msra.mxu0 0.0
        %7531 = vmatprep.subr.mxu0 0.0
        %7532 = vmatpush2.msra.mxu0 0.0
        %7533 = vmatprep.subr.mxu0 0.0
        %7534 = vmatpush2.msra.mxu0 0.0
        %7535 = vmatprep.subr.mxu0 0.0
        %7536 = vmatpush2.msra.mxu0 0.0
        %7537 = vmatprep.subr.mxu0 0.0
        %7538 = vmatpush2.msra.mxu0 0.0
        %7539 = vmatprep.subr.mxu0 0.0
        %7540 = vmatpush2.msra.mxu0 0.0
        %7541 = vmatprep.subr.mxu0 0.0
        %7542 = vmatpush2.msra.mxu0 0.0
        %7543 = vmatprep.subr.mxu0 0.0
        %7544 = vmatpush2.msra.mxu0 0.0
        %7545 = vmatprep.mubr.f32.mxu0 0.0
        %7546 = vmatmul.mubr.f32.gmra.mxu0 %v7479
        %v7547 = vpop.f32.mrf.mxu0
        %v7548 = vadd.f32 0.0, %v7547
        %v7549 = vpop.f32.mrf.mxu0
        %7550 = vdwg.mxu0
        %v7552 = vsel %vm6703, %v7159, 0
        %7554 = vmatprep.subr.mxu0 0.0
        %7555 = vmatpush1.msra.mxu0 0.0
        %7556 = vmatprep.subr.mxu0 0.0
        %7557 = vmatpush1.msra.mxu0 0.0
        %7558 = vmatprep.subr.mxu0 0.0
        %7559 = vmatpush1.msra.mxu0 0.0
        %7560 = vmatprep.subr.mxu0 0.0
        %7561 = vmatpush1.msra.mxu0 0.0
        %7562 = vmatprep.subr.mxu0 0.0
        %7563 = vmatpush1.msra.mxu0 0.0
        %7564 = vmatprep.subr.mxu0 0.0
        %7565 = vmatpush1.msra.mxu0 0.0
        %7566 = vmatprep.subr.mxu0 0.0
        %7567 = vmatpush1.msra.mxu0 0.0
        %7568 = vmatprep.subr.mxu0 0.0
        %7569 = vmatpush1.msra.mxu0 0.0
        %7570 = vmatprep.subr.mxu0 0.0
        %7571 = vmatpush1.msra.mxu0 0.0
        %7572 = vmatprep.subr.mxu0 0.0
        %7573 = vmatpush1.msra.mxu0 0.0
        %7574 = vmatprep.subr.mxu0 0.0
        %7575 = vmatpush1.msra.mxu0 0.0
        %7576 = vmatprep.subr.mxu0 0.0
        %7577 = vmatpush1.msra.mxu0 0.0
        %7578 = vmatprep.subr.mxu0 0.0
        %7579 = vmatpush1.msra.mxu0 0.0
        %7580 = vmatprep.subr.mxu0 0.0
        %7581 = vmatpush1.msra.mxu0 0.0
        %7582 = vmatprep.subr.mxu0 0.0
        %7583 = vmatpush1.msra.mxu0 0.0
        %7584 = vmatprep.subr.mxu0 0.0
        %7585 = vmatpush1.msra.mxu0 %v326
        %7586 = vmatprep.subr.mxu0 0.0
        %7587 = vmatpush2.msra.mxu0 0.0
        %7588 = vmatprep.subr.mxu0 0.0
        %7589 = vmatpush2.msra.mxu0 0.0
        %7590 = vmatprep.subr.mxu0 0.0
        %7591 = vmatpush2.msra.mxu0 0.0
        %7592 = vmatprep.subr.mxu0 0.0
        %7593 = vmatpush2.msra.mxu0 0.0
        %7594 = vmatprep.subr.mxu0 0.0
        %7595 = vmatpush2.msra.mxu0 0.0
        %7596 = vmatprep.subr.mxu0 0.0
        %7597 = vmatpush2.msra.mxu0 0.0
        %7598 = vmatprep.subr.mxu0 0.0
        %7599 = vmatpush2.msra.mxu0 0.0
        %7600 = vmatprep.subr.mxu0 0.0
        %7601 = vmatpush2.msra.mxu0 0.0
        %7602 = vmatprep.subr.mxu0 0.0
        %7603 = vmatpush2.msra.mxu0 0.0
        %7604 = vmatprep.subr.mxu0 0.0
        %7605 = vmatpush2.msra.mxu0 0.0
        %7606 = vmatprep.subr.mxu0 0.0
        %7607 = vmatpush2.msra.mxu0 0.0
        %7608 = vmatprep.subr.mxu0 0.0
        %7609 = vmatpush2.msra.mxu0 0.0
        %7610 = vmatprep.subr.mxu0 0.0
        %7611 = vmatpush2.msra.mxu0 0.0
        %7612 = vmatprep.subr.mxu0 0.0
        %7613 = vmatpush2.msra.mxu0 0.0
        %7614 = vmatprep.subr.mxu0 0.0
        %7615 = vmatpush2.msra.mxu0 0.0
        %7616 = vmatprep.subr.mxu0 0.0
        %7617 = vmatpush2.msra.mxu0 0.0
        %7618 = vmatprep.mubr.f32.mxu0 0.0
        %7619 = vmatmul.mubr.f32.gmra.mxu0 %v7552
        %v7620 = vpop.f32.mrf.mxu0
        %v7621 = vadd.f32 0.0, %v7620
        %v7622 = vpop.f32.mrf.mxu0
        %7623 = vdwg.mxu0
        %v7625 = vsel %vm6703, %v7160, 0
        %7627 = vmatprep.subr.mxu0 0.0
        %7628 = vmatpush1.msra.mxu0 0.0
        %7629 = vmatprep.subr.mxu0 0.0
        %7630 = vmatpush1.msra.mxu0 0.0
        %7631 = vmatprep.subr.mxu0 0.0
        %7632 = vmatpush1.msra.mxu0 0.0
        %7633 = vmatprep.subr.mxu0 0.0
        %7634 = vmatpush1.msra.mxu0 0.0
        %7635 = vmatprep.subr.mxu0 0.0
        %7636 = vmatpush1.msra.mxu0 0.0
        %7637 = vmatprep.subr.mxu0 0.0
        %7638 = vmatpush1.msra.mxu0 0.0
        %7639 = vmatprep.subr.mxu0 0.0
        %7640 = vmatpush1.msra.mxu0 0.0
        %7641 = vmatprep.subr.mxu0 0.0
        %7642 = vmatpush1.msra.mxu0 0.0
        %7643 = vmatprep.subr.mxu0 0.0
        %7644 = vmatpush1.msra.mxu0 0.0
        %7645 = vmatprep.subr.mxu0 0.0
        %7646 = vmatpush1.msra.mxu0 0.0
        %7647 = vmatprep.subr.mxu0 0.0
        %7648 = vmatpush1.msra.mxu0 0.0
        %7649 = vmatprep.subr.mxu0 0.0
        %7650 = vmatpush1.msra.mxu0 0.0
        %7651 = vmatprep.subr.mxu0 0.0
        %7652 = vmatpush1.msra.mxu0 0.0
        %7653 = vmatprep.subr.mxu0 0.0
        %7654 = vmatpush1.msra.mxu0 0.0
        %7655 = vmatprep.subr.mxu0 0.0
        %7656 = vmatpush1.msra.mxu0 0.0
        %7657 = vmatprep.subr.mxu0 0.0
        %7658 = vmatpush1.msra.mxu0 %v327
        %7659 = vmatprep.subr.mxu0 0.0
        %7660 = vmatpush2.msra.mxu0 0.0
        %7661 = vmatprep.subr.mxu0 0.0
        %7662 = vmatpush2.msra.mxu0 0.0
        %7663 = vmatprep.subr.mxu0 0.0
        %7664 = vmatpush2.msra.mxu0 0.0
        %7665 = vmatprep.subr.mxu0 0.0
        %7666 = vmatpush2.msra.mxu0 0.0
        %7667 = vmatprep.subr.mxu0 0.0
        %7668 = vmatpush2.msra.mxu0 0.0
        %7669 = vmatprep.subr.mxu0 0.0
        %7670 = vmatpush2.msra.mxu0 0.0
        %7671 = vmatprep.subr.mxu0 0.0
        %7672 = vmatpush2.msra.mxu0 0.0
        %7673 = vmatprep.subr.mxu0 0.0
        %7674 = vmatpush2.msra.mxu0 0.0
        %7675 = vmatprep.subr.mxu0 0.0
        %7676 = vmatpush2.msra.mxu0 0.0
        %7677 = vmatprep.subr.mxu0 0.0
        %7678 = vmatpush2.msra.mxu0 0.0
        %7679 = vmatprep.subr.mxu0 0.0
        %7680 = vmatpush2.msra.mxu0 0.0
        %7681 = vmatprep.subr.mxu0 0.0
        %7682 = vmatpush2.msra.mxu0 0.0
        %7683 = vmatprep.subr.mxu0 0.0
        %7684 = vmatpush2.msra.mxu0 0.0
        %7685 = vmatprep.subr.mxu0 0.0
        %7686 = vmatpush2.msra.mxu0 0.0
        %7687 = vmatprep.subr.mxu0 0.0
        %7688 = vmatpush2.msra.mxu0 0.0
        %7689 = vmatprep.subr.mxu0 0.0
        %7690 = vmatpush2.msra.mxu0 0.0
        %7691 = vmatprep.mubr.f32.mxu0 0.0
        %7692 = vmatmul.mubr.f32.gmra.mxu0 %v7625
        %v7693 = vpop.f32.mrf.mxu0
        %v7694 = vadd.f32 0.0, %v7693
        %v7695 = vpop.f32.mrf.mxu0
        %7696 = vdwg.mxu0
        %v7698 = vsel %vm6703, %v7161, 0
        %7700 = vmatprep.subr.mxu0 0.0
        %7701 = vmatpush1.msra.mxu0 0.0
        %7702 = vmatprep.subr.mxu0 0.0
        %7703 = vmatpush1.msra.mxu0 0.0
        %7704 = vmatprep.subr.mxu0 0.0
        %7705 = vmatpush1.msra.mxu0 0.0
        %7706 = vmatprep.subr.mxu0 0.0
        %7707 = vmatpush1.msra.mxu0 0.0
        %7708 = vmatprep.subr.mxu0 0.0
        %7709 = vmatpush1.msra.mxu0 0.0
        %7710 = vmatprep.subr.mxu0 0.0
        %7711 = vmatpush1.msra.mxu0 0.0
        %7712 = vmatprep.subr.mxu0 0.0
        %7713 = vmatpush1.msra.mxu0 0.0
        %7714 = vmatprep.subr.mxu0 0.0
        %7715 = vmatpush1.msra.mxu0 0.0
        %7716 = vmatprep.subr.mxu0 0.0
        %7717 = vmatpush1.msra.mxu0 0.0
        %7718 = vmatprep.subr.mxu0 0.0
        %7719 = vmatpush1.msra.mxu0 0.0
        %7720 = vmatprep.subr.mxu0 0.0
        %7721 = vmatpush1.msra.mxu0 0.0
        %7722 = vmatprep.subr.mxu0 0.0
        %7723 = vmatpush1.msra.mxu0 0.0
        %7724 = vmatprep.subr.mxu0 0.0
        %7725 = vmatpush1.msra.mxu0 0.0
        %7726 = vmatprep.subr.mxu0 0.0
        %7727 = vmatpush1.msra.mxu0 0.0
        %7728 = vmatprep.subr.mxu0 0.0
        %7729 = vmatpush1.msra.mxu0 0.0
        %7730 = vmatprep.subr.mxu0 0.0
        %7731 = vmatpush1.msra.mxu0 %v328
        %7732 = vmatprep.subr.mxu0 0.0
        %7733 = vmatpush2.msra.mxu0 0.0
        %7734 = vmatprep.subr.mxu0 0.0
        %7735 = vmatpush2.msra.mxu0 0.0
        %7736 = vmatprep.subr.mxu0 0.0
        %7737 = vmatpush2.msra.mxu0 0.0
        %7738 = vmatprep.subr.mxu0 0.0
        %7739 = vmatpush2.msra.mxu0 0.0
        %7740 = vmatprep.subr.mxu0 0.0
        %7741 = vmatpush2.msra.mxu0 0.0
        %7742 = vmatprep.subr.mxu0 0.0
        %7743 = vmatpush2.msra.mxu0 0.0
        %7744 = vmatprep.subr.mxu0 0.0
        %7745 = vmatpush2.msra.mxu0 0.0
        %7746 = vmatprep.subr.mxu0 0.0
        %7747 = vmatpush2.msra.mxu0 0.0
        %7748 = vmatprep.subr.mxu0 0.0
        %7749 = vmatpush2.msra.mxu0 0.0
        %7750 = vmatprep.subr.mxu0 0.0
        %7751 = vmatpush2.msra.mxu0 0.0
        %7752 = vmatprep.subr.mxu0 0.0
        %7753 = vmatpush2.msra.mxu0 0.0
        %7754 = vmatprep.subr.mxu0 0.0
        %7755 = vmatpush2.msra.mxu0 0.0
        %7756 = vmatprep.subr.mxu0 0.0
        %7757 = vmatpush2.msra.mxu0 0.0
        %7758 = vmatprep.subr.mxu0 0.0
        %7759 = vmatpush2.msra.mxu0 0.0
        %7760 = vmatprep.subr.mxu0 0.0
        %7761 = vmatpush2.msra.mxu0 0.0
        %7762 = vmatprep.subr.mxu0 0.0
        %7763 = vmatpush2.msra.mxu0 0.0
        %7764 = vmatprep.mubr.f32.mxu0 0.0
        %7765 = vmatmul.mubr.f32.gmra.mxu0 %v7698
        %v7766 = vpop.f32.mrf.mxu0
        %v7767 = vadd.f32 0.0, %v7766
        %v7768 = vpop.f32.mrf.mxu0
        %7769 = vdwg.mxu0
        %v7771 = vsel %vm6703, %v7162, 0
        %7773 = vmatprep.subr.mxu0 0.0
        %7774 = vmatpush1.msra.mxu0 0.0
        %7775 = vmatprep.subr.mxu0 0.0
        %7776 = vmatpush1.msra.mxu0 0.0
        %7777 = vmatprep.subr.mxu0 0.0
        %7778 = vmatpush1.msra.mxu0 0.0
        %7779 = vmatprep.subr.mxu0 0.0
        %7780 = vmatpush1.msra.mxu0 0.0
        %7781 = vmatprep.subr.mxu0 0.0
        %7782 = vmatpush1.msra.mxu0 0.0
        %7783 = vmatprep.subr.mxu0 0.0
        %7784 = vmatpush1.msra.mxu0 0.0
        %7785 = vmatprep.subr.mxu0 0.0
        %7786 = vmatpush1.msra.mxu0 0.0
        %7787 = vmatprep.subr.mxu0 0.0
        %7788 = vmatpush1.msra.mxu0 0.0
        %7789 = vmatprep.subr.mxu0 0.0
        %7790 = vmatpush1.msra.mxu0 0.0
        %7791 = vmatprep.subr.mxu0 0.0
        %7792 = vmatpush1.msra.mxu0 0.0
        %7793 = vmatprep.subr.mxu0 0.0
        %7794 = vmatpush1.msra.mxu0 0.0
        %7795 = vmatprep.subr.mxu0 0.0
        %7796 = vmatpush1.msra.mxu0 0.0
        %7797 = vmatprep.subr.mxu0 0.0
        %7798 = vmatpush1.msra.mxu0 0.0
        %7799 = vmatprep.subr.mxu0 0.0
        %7800 = vmatpush1.msra.mxu0 0.0
        %7801 = vmatprep.subr.mxu0 0.0
        %7802 = vmatpush1.msra.mxu0 0.0
        %7803 = vmatprep.subr.mxu0 0.0
        %7804 = vmatpush1.msra.mxu0 %v329
        %7805 = vmatprep.subr.mxu0 0.0
        %7806 = vmatpush2.msra.mxu0 0.0
        %7807 = vmatprep.subr.mxu0 0.0
        %7808 = vmatpush2.msra.mxu0 0.0
        %7809 = vmatprep.subr.mxu0 0.0
        %7810 = vmatpush2.msra.mxu0 0.0
        %7811 = vmatprep.subr.mxu0 0.0
        %7812 = vmatpush2.msra.mxu0 0.0
        %7813 = vmatprep.subr.mxu0 0.0
        %7814 = vmatpush2.msra.mxu0 0.0
        %7815 = vmatprep.subr.mxu0 0.0
        %7816 = vmatpush2.msra.mxu0 0.0
        %7817 = vmatprep.subr.mxu0 0.0
        %7818 = vmatpush2.msra.mxu0 0.0
        %7819 = vmatprep.subr.mxu0 0.0
        %7820 = vmatpush2.msra.mxu0 0.0
        %7821 = vmatprep.subr.mxu0 0.0
        %7822 = vmatpush2.msra.mxu0 0.0
        %7823 = vmatprep.subr.mxu0 0.0
        %7824 = vmatpush2.msra.mxu0 0.0
        %7825 = vmatprep.subr.mxu0 0.0
        %7826 = vmatpush2.msra.mxu0 0.0
        %7827 = vmatprep.subr.mxu0 0.0
        %7828 = vmatpush2.msra.mxu0 0.0
        %7829 = vmatprep.subr.mxu0 0.0
        %7830 = vmatpush2.msra.mxu0 0.0
        %7831 = vmatprep.subr.mxu0 0.0
        %7832 = vmatpush2.msra.mxu0 0.0
        %7833 = vmatprep.subr.mxu0 0.0
        %7834 = vmatpush2.msra.mxu0 0.0
        %7835 = vmatprep.subr.mxu0 0.0
        %7836 = vmatpush2.msra.mxu0 0.0
        %7837 = vmatprep.mubr.f32.mxu0 0.0
        %7838 = vmatmul.mubr.f32.gmra.mxu0 %v7771
        %v7839 = vpop.f32.mrf.mxu0
        %v7840 = vadd.f32 0.0, %v7839
        %v7841 = vpop.f32.mrf.mxu0
        %7842 = vdwg.mxu0
        %v7844 = vsel %vm6703, %v7163, 0
        %7846 = vmatprep.subr.mxu0 0.0
        %7847 = vmatpush1.msra.mxu0 0.0
        %7848 = vmatprep.subr.mxu0 0.0
        %7849 = vmatpush1.msra.mxu0 0.0
        %7850 = vmatprep.subr.mxu0 0.0
        %7851 = vmatpush1.msra.mxu0 0.0
        %7852 = vmatprep.subr.mxu0 0.0
        %7853 = vmatpush1.msra.mxu0 0.0
        %7854 = vmatprep.subr.mxu0 0.0
        %7855 = vmatpush1.msra.mxu0 0.0
        %7856 = vmatprep.subr.mxu0 0.0
        %7857 = vmatpush1.msra.mxu0 0.0
        %7858 = vmatprep.subr.mxu0 0.0
        %7859 = vmatpush1.msra.mxu0 0.0
        %7860 = vmatprep.subr.mxu0 0.0
        %7861 = vmatpush1.msra.mxu0 0.0
        %7862 = vmatprep.subr.mxu0 0.0
        %7863 = vmatpush1.msra.mxu0 0.0
        %7864 = vmatprep.subr.mxu0 0.0
        %7865 = vmatpush1.msra.mxu0 0.0
        %7866 = vmatprep.subr.mxu0 0.0
        %7867 = vmatpush1.msra.mxu0 0.0
        %7868 = vmatprep.subr.mxu0 0.0
        %7869 = vmatpush1.msra.mxu0 0.0
        %7870 = vmatprep.subr.mxu0 0.0
        %7871 = vmatpush1.msra.mxu0 0.0
        %7872 = vmatprep.subr.mxu0 0.0
        %7873 = vmatpush1.msra.mxu0 0.0
        %7874 = vmatprep.subr.mxu0 0.0
        %7875 = vmatpush1.msra.mxu0 0.0
        %7876 = vmatprep.subr.mxu0 0.0
        %7877 = vmatpush1.msra.mxu0 %v330
        %7878 = vmatprep.subr.mxu0 0.0
        %7879 = vmatpush2.msra.mxu0 0.0
        %7880 = vmatprep.subr.mxu0 0.0
        %7881 = vmatpush2.msra.mxu0 0.0
        %7882 = vmatprep.subr.mxu0 0.0
        %7883 = vmatpush2.msra.mxu0 0.0
        %7884 = vmatprep.subr.mxu0 0.0
        %7885 = vmatpush2.msra.mxu0 0.0
        %7886 = vmatprep.subr.mxu0 0.0
        %7887 = vmatpush2.msra.mxu0 0.0
        %7888 = vmatprep.subr.mxu0 0.0
        %7889 = vmatpush2.msra.mxu0 0.0
        %7890 = vmatprep.subr.mxu0 0.0
        %7891 = vmatpush2.msra.mxu0 0.0
        %7892 = vmatprep.subr.mxu0 0.0
        %7893 = vmatpush2.msra.mxu0 0.0
        %7894 = vmatprep.subr.mxu0 0.0
        %7895 = vmatpush2.msra.mxu0 0.0
        %7896 = vmatprep.subr.mxu0 0.0
        %7897 = vmatpush2.msra.mxu0 0.0
        %7898 = vmatprep.subr.mxu0 0.0
        %7899 = vmatpush2.msra.mxu0 0.0
        %7900 = vmatprep.subr.mxu0 0.0
        %7901 = vmatpush2.msra.mxu0 0.0
        %7902 = vmatprep.subr.mxu0 0.0
        %7903 = vmatpush2.msra.mxu0 0.0
        %7904 = vmatprep.subr.mxu0 0.0
        %7905 = vmatpush2.msra.mxu0 0.0
        %7906 = vmatprep.subr.mxu0 0.0
        %7907 = vmatpush2.msra.mxu0 0.0
        %7908 = vmatprep.subr.mxu0 0.0
        %7909 = vmatpush2.msra.mxu0 0.0
        %7910 = vmatprep.mubr.f32.mxu0 0.0
        %7911 = vmatmul.mubr.f32.gmra.mxu0 %v7844
        %v7912 = vpop.f32.mrf.mxu0
        %v7913 = vadd.f32 0.0, %v7912
        %v7914 = vpop.f32.mrf.mxu0
        %7915 = vdwg.mxu0
        %v7917 = vsel %vm6703, %v7164, 0
        %7919 = vmatprep.subr.mxu0 0.0
        %7920 = vmatpush1.msra.mxu0 0.0
        %7921 = vmatprep.subr.mxu0 0.0
        %7922 = vmatpush1.msra.mxu0 0.0
        %7923 = vmatprep.subr.mxu0 0.0
        %7924 = vmatpush1.msra.mxu0 0.0
        %7925 = vmatprep.subr.mxu0 0.0
        %7926 = vmatpush1.msra.mxu0 0.0
        %7927 = vmatprep.subr.mxu0 0.0
        %7928 = vmatpush1.msra.mxu0 0.0
        %7929 = vmatprep.subr.mxu0 0.0
        %7930 = vmatpush1.msra.mxu0 0.0
        %7931 = vmatprep.subr.mxu0 0.0
        %7932 = vmatpush1.msra.mxu0 0.0
        %7933 = vmatprep.subr.mxu0 0.0
        %7934 = vmatpush1.msra.mxu0 0.0
        %7935 = vmatprep.subr.mxu0 0.0
        %7936 = vmatpush1.msra.mxu0 0.0
        %7937 = vmatprep.subr.mxu0 0.0
        %7938 = vmatpush1.msra.mxu0 0.0
        %7939 = vmatprep.subr.mxu0 0.0
        %7940 = vmatpush1.msra.mxu0 0.0
        %7941 = vmatprep.subr.mxu0 0.0
        %7942 = vmatpush1.msra.mxu0 0.0
        %7943 = vmatprep.subr.mxu0 0.0
        %7944 = vmatpush1.msra.mxu0 0.0
        %7945 = vmatprep.subr.mxu0 0.0
        %7946 = vmatpush1.msra.mxu0 0.0
        %7947 = vmatprep.subr.mxu0 0.0
        %7948 = vmatpush1.msra.mxu0 0.0
        %7949 = vmatprep.subr.mxu0 0.0
        %7950 = vmatpush1.msra.mxu0 %v331
        %7951 = vmatprep.subr.mxu0 0.0
        %7952 = vmatpush2.msra.mxu0 0.0
        %7953 = vmatprep.subr.mxu0 0.0
        %7954 = vmatpush2.msra.mxu0 0.0
        %7955 = vmatprep.subr.mxu0 0.0
        %7956 = vmatpush2.msra.mxu0 0.0
        %7957 = vmatprep.subr.mxu0 0.0
        %7958 = vmatpush2.msra.mxu0 0.0
        %7959 = vmatprep.subr.mxu0 0.0
        %7960 = vmatpush2.msra.mxu0 0.0
        %7961 = vmatprep.subr.mxu0 0.0
        %7962 = vmatpush2.msra.mxu0 0.0
        %7963 = vmatprep.subr.mxu0 0.0
        %7964 = vmatpush2.msra.mxu0 0.0
        %7965 = vmatprep.subr.mxu0 0.0
        %7966 = vmatpush2.msra.mxu0 0.0
        %7967 = vmatprep.subr.mxu0 0.0
        %7968 = vmatpush2.msra.mxu0 0.0
        %7969 = vmatprep.subr.mxu0 0.0
        %7970 = vmatpush2.msra.mxu0 0.0
        %7971 = vmatprep.subr.mxu0 0.0
        %7972 = vmatpush2.msra.mxu0 0.0
        %7973 = vmatprep.subr.mxu0 0.0
        %7974 = vmatpush2.msra.mxu0 0.0
        %7975 = vmatprep.subr.mxu0 0.0
        %7976 = vmatpush2.msra.mxu0 0.0
        %7977 = vmatprep.subr.mxu0 0.0
        %7978 = vmatpush2.msra.mxu0 0.0
        %7979 = vmatprep.subr.mxu0 0.0
        %7980 = vmatpush2.msra.mxu0 0.0
        %7981 = vmatprep.subr.mxu0 0.0
        %7982 = vmatpush2.msra.mxu0 0.0
        %7983 = vmatprep.mubr.f32.mxu0 0.0
        %7984 = vmatmul.mubr.f32.gmra.mxu0 %v7917
        %v7985 = vpop.f32.mrf.mxu0
        %v7986 = vadd.f32 0.0, %v7985
        %v7987 = vpop.f32.mrf.mxu0
        %7988 = vdwg.mxu0
        %v7990 = vsel %vm6703, %v7165, 0
        %7992 = vmatprep.subr.mxu0 0.0
        %7993 = vmatpush1.msra.mxu0 0.0
        %7994 = vmatprep.subr.mxu0 0.0
        %7995 = vmatpush1.msra.mxu0 0.0
        %7996 = vmatprep.subr.mxu0 0.0
        %7997 = vmatpush1.msra.mxu0 0.0
        %7998 = vmatprep.subr.mxu0 0.0
        %7999 = vmatpush1.msra.mxu0 0.0
        %8000 = vmatprep.subr.mxu0 0.0
        %8001 = vmatpush1.msra.mxu0 0.0
        %8002 = vmatprep.subr.mxu0 0.0
        %8003 = vmatpush1.msra.mxu0 0.0
        %8004 = vmatprep.subr.mxu0 0.0
        %8005 = vmatpush1.msra.mxu0 0.0
        %8006 = vmatprep.subr.mxu0 0.0
        %8007 = vmatpush1.msra.mxu0 0.0
        %8008 = vmatprep.subr.mxu0 0.0
        %8009 = vmatpush1.msra.mxu0 0.0
        %8010 = vmatprep.subr.mxu0 0.0
        %8011 = vmatpush1.msra.mxu0 0.0
        %8012 = vmatprep.subr.mxu0 0.0
        %8013 = vmatpush1.msra.mxu0 0.0
        %8014 = vmatprep.subr.mxu0 0.0
        %8015 = vmatpush1.msra.mxu0 0.0
        %8016 = vmatprep.subr.mxu0 0.0
        %8017 = vmatpush1.msra.mxu0 0.0
        %8018 = vmatprep.subr.mxu0 0.0
        %8019 = vmatpush1.msra.mxu0 0.0
        %8020 = vmatprep.subr.mxu0 0.0
        %8021 = vmatpush1.msra.mxu0 0.0
        %8022 = vmatprep.subr.mxu0 0.0
        %8023 = vmatpush1.msra.mxu0 %v332
        %8024 = vmatprep.subr.mxu0 0.0
        %8025 = vmatpush2.msra.mxu0 0.0
        %8026 = vmatprep.subr.mxu0 0.0
        %8027 = vmatpush2.msra.mxu0 0.0
        %8028 = vmatprep.subr.mxu0 0.0
        %8029 = vmatpush2.msra.mxu0 0.0
        %8030 = vmatprep.subr.mxu0 0.0
        %8031 = vmatpush2.msra.mxu0 0.0
        %8032 = vmatprep.subr.mxu0 0.0
        %8033 = vmatpush2.msra.mxu0 0.0
        %8034 = vmatprep.subr.mxu0 0.0
        %8035 = vmatpush2.msra.mxu0 0.0
        %8036 = vmatprep.subr.mxu0 0.0
        %8037 = vmatpush2.msra.mxu0 0.0
        %8038 = vmatprep.subr.mxu0 0.0
        %8039 = vmatpush2.msra.mxu0 0.0
        %8040 = vmatprep.subr.mxu0 0.0
        %8041 = vmatpush2.msra.mxu0 0.0
        %8042 = vmatprep.subr.mxu0 0.0
        %8043 = vmatpush2.msra.mxu0 0.0
        %8044 = vmatprep.subr.mxu0 0.0
        %8045 = vmatpush2.msra.mxu0 0.0
        %8046 = vmatprep.subr.mxu0 0.0
        %8047 = vmatpush2.msra.mxu0 0.0
        %8048 = vmatprep.subr.mxu0 0.0
        %8049 = vmatpush2.msra.mxu0 0.0
        %8050 = vmatprep.subr.mxu0 0.0
        %8051 = vmatpush2.msra.mxu0 0.0
        %8052 = vmatprep.subr.mxu0 0.0
        %8053 = vmatpush2.msra.mxu0 0.0
        %8054 = vmatprep.subr.mxu0 0.0
        %8055 = vmatpush2.msra.mxu0 0.0
        %8056 = vmatprep.mubr.f32.mxu0 0.0
        %8057 = vmatmul.mubr.f32.gmra.mxu0 %v7990
        %v8058 = vpop.f32.mrf.mxu0
        %v8059 = vadd.f32 0.0, %v8058
        %v8060 = vpop.f32.mrf.mxu0
        %8061 = vdwg.mxu0
        %v8063 = vsel %vm6703, %v7166, 0
        %8065 = vmatprep.subr.mxu0 0.0
        %8066 = vmatpush1.msra.mxu0 0.0
        %8067 = vmatprep.subr.mxu0 0.0
        %8068 = vmatpush1.msra.mxu0 0.0
        %8069 = vmatprep.subr.mxu0 0.0
        %8070 = vmatpush1.msra.mxu0 0.0
        %8071 = vmatprep.subr.mxu0 0.0
        %8072 = vmatpush1.msra.mxu0 0.0
        %8073 = vmatprep.subr.mxu0 0.0
        %8074 = vmatpush1.msra.mxu0 0.0
        %8075 = vmatprep.subr.mxu0 0.0
        %8076 = vmatpush1.msra.mxu0 0.0
        %8077 = vmatprep.subr.mxu0 0.0
        %8078 = vmatpush1.msra.mxu0 0.0
        %8079 = vmatprep.subr.mxu0 0.0
        %8080 = vmatpush1.msra.mxu0 0.0
        %8081 = vmatprep.subr.mxu0 0.0
        %8082 = vmatpush1.msra.mxu0 0.0
        %8083 = vmatprep.subr.mxu0 0.0
        %8084 = vmatpush1.msra.mxu0 0.0
        %8085 = vmatprep.subr.mxu0 0.0
        %8086 = vmatpush1.msra.mxu0 0.0
        %8087 = vmatprep.subr.mxu0 0.0
        %8088 = vmatpush1.msra.mxu0 0.0
        %8089 = vmatprep.subr.mxu0 0.0
        %8090 = vmatpush1.msra.mxu0 0.0
        %8091 = vmatprep.subr.mxu0 0.0
        %8092 = vmatpush1.msra.mxu0 0.0
        %8093 = vmatprep.subr.mxu0 0.0
        %8094 = vmatpush1.msra.mxu0 0.0
        %8095 = vmatprep.subr.mxu0 0.0
        %8096 = vmatpush1.msra.mxu0 %v333
        %8097 = vmatprep.subr.mxu0 0.0
        %8098 = vmatpush2.msra.mxu0 0.0
        %8099 = vmatprep.subr.mxu0 0.0
        %8100 = vmatpush2.msra.mxu0 0.0
        %8101 = vmatprep.subr.mxu0 0.0
        %8102 = vmatpush2.msra.mxu0 0.0
        %8103 = vmatprep.subr.mxu0 0.0
        %8104 = vmatpush2.msra.mxu0 0.0
        %8105 = vmatprep.subr.mxu0 0.0
        %8106 = vmatpush2.msra.mxu0 0.0
        %8107 = vmatprep.subr.mxu0 0.0
        %8108 = vmatpush2.msra.mxu0 0.0
        %8109 = vmatprep.subr.mxu0 0.0
        %8110 = vmatpush2.msra.mxu0 0.0
        %8111 = vmatprep.subr.mxu0 0.0
        %8112 = vmatpush2.msra.mxu0 0.0
        %8113 = vmatprep.subr.mxu0 0.0
        %8114 = vmatpush2.msra.mxu0 0.0
        %8115 = vmatprep.subr.mxu0 0.0
        %8116 = vmatpush2.msra.mxu0 0.0
        %8117 = vmatprep.subr.mxu0 0.0
        %8118 = vmatpush2.msra.mxu0 0.0
        %8119 = vmatprep.subr.mxu0 0.0
        %8120 = vmatpush2.msra.mxu0 0.0
        %8121 = vmatprep.subr.mxu0 0.0
        %8122 = vmatpush2.msra.mxu0 0.0
        %8123 = vmatprep.subr.mxu0 0.0
        %8124 = vmatpush2.msra.mxu0 0.0
        %8125 = vmatprep.subr.mxu0 0.0
        %8126 = vmatpush2.msra.mxu0 0.0
        %8127 = vmatprep.subr.mxu0 0.0
        %8128 = vmatpush2.msra.mxu0 0.0
        %8129 = vmatprep.mubr.f32.mxu0 0.0
        %8130 = vmatmul.mubr.f32.gmra.mxu0 %v8063
        %v8131 = vpop.f32.mrf.mxu0
        %v8132 = vadd.f32 0.0, %v8131
        %v8133 = vpop.f32.mrf.mxu0
        %8134 = vdwg.mxu0
        %v8136 = vsel %vm6703, %v7167, 0
        %8138 = vmatprep.subr.mxu0 0.0
        %8139 = vmatpush1.msra.mxu0 0.0
        %8140 = vmatprep.subr.mxu0 0.0
        %8141 = vmatpush1.msra.mxu0 0.0
        %8142 = vmatprep.subr.mxu0 0.0
        %8143 = vmatpush1.msra.mxu0 0.0
        %8144 = vmatprep.subr.mxu0 0.0
        %8145 = vmatpush1.msra.mxu0 0.0
        %8146 = vmatprep.subr.mxu0 0.0
        %8147 = vmatpush1.msra.mxu0 0.0
        %8148 = vmatprep.subr.mxu0 0.0
        %8149 = vmatpush1.msra.mxu0 0.0
        %8150 = vmatprep.subr.mxu0 0.0
        %8151 = vmatpush1.msra.mxu0 0.0
        %8152 = vmatprep.subr.mxu0 0.0
        %8153 = vmatpush1.msra.mxu0 0.0
        %8154 = vmatprep.subr.mxu0 0.0
        %8155 = vmatpush1.msra.mxu0 0.0
        %8156 = vmatprep.subr.mxu0 0.0
        %8157 = vmatpush1.msra.mxu0 0.0
        %8158 = vmatprep.subr.mxu0 0.0
        %8159 = vmatpush1.msra.mxu0 0.0
        %8160 = vmatprep.subr.mxu0 0.0
        %8161 = vmatpush1.msra.mxu0 0.0
        %8162 = vmatprep.subr.mxu0 0.0
        %8163 = vmatpush1.msra.mxu0 0.0
        %8164 = vmatprep.subr.mxu0 0.0
        %8165 = vmatpush1.msra.mxu0 0.0
        %8166 = vmatprep.subr.mxu0 0.0
        %8167 = vmatpush1.msra.mxu0 0.0
        %8168 = vmatprep.subr.mxu0 0.0
        %8169 = vmatpush1.msra.mxu0 %v334
        %8170 = vmatprep.subr.mxu0 0.0
        %8171 = vmatpush2.msra.mxu0 0.0
        %8172 = vmatprep.subr.mxu0 0.0
        %8173 = vmatpush2.msra.mxu0 0.0
        %8174 = vmatprep.subr.mxu0 0.0
        %8175 = vmatpush2.msra.mxu0 0.0
        %8176 = vmatprep.subr.mxu0 0.0
        %8177 = vmatpush2.msra.mxu0 0.0
        %8178 = vmatprep.subr.mxu0 0.0
        %8179 = vmatpush2.msra.mxu0 0.0
        %8180 = vmatprep.subr.mxu0 0.0
        %8181 = vmatpush2.msra.mxu0 0.0
        %8182 = vmatprep.subr.mxu0 0.0
        %8183 = vmatpush2.msra.mxu0 0.0
        %8184 = vmatprep.subr.mxu0 0.0
        %8185 = vmatpush2.msra.mxu0 0.0
        %8186 = vmatprep.subr.mxu0 0.0
        %8187 = vmatpush2.msra.mxu0 0.0
        %8188 = vmatprep.subr.mxu0 0.0
        %8189 = vmatpush2.msra.mxu0 0.0
        %8190 = vmatprep.subr.mxu0 0.0
        %8191 = vmatpush2.msra.mxu0 0.0
        %8192 = vmatprep.subr.mxu0 0.0
        %8193 = vmatpush2.msra.mxu0 0.0
        %8194 = vmatprep.subr.mxu0 0.0
        %8195 = vmatpush2.msra.mxu0 0.0
        %8196 = vmatprep.subr.mxu0 0.0
        %8197 = vmatpush2.msra.mxu0 0.0
        %8198 = vmatprep.subr.mxu0 0.0
        %8199 = vmatpush2.msra.mxu0 0.0
        %8200 = vmatprep.subr.mxu0 0.0
        %8201 = vmatpush2.msra.mxu0 0.0
        %8202 = vmatprep.mubr.f32.mxu0 0.0
        %8203 = vmatmul.mubr.f32.gmra.mxu0 %v8136
        %v8204 = vpop.f32.mrf.mxu0
        %v8205 = vadd.f32 0.0, %v8204
        %v8206 = vpop.f32.mrf.mxu0
        %8207 = vdwg.mxu0
        %v8209 = vsel %vm6703, %v7168, 0
        %8211 = vmatprep.subr.mxu0 0.0
        %8212 = vmatpush1.msra.mxu0 0.0
        %8213 = vmatprep.subr.mxu0 0.0
        %8214 = vmatpush1.msra.mxu0 0.0
        %8215 = vmatprep.subr.mxu0 0.0
        %8216 = vmatpush1.msra.mxu0 0.0
        %8217 = vmatprep.subr.mxu0 0.0
        %8218 = vmatpush1.msra.mxu0 0.0
        %8219 = vmatprep.subr.mxu0 0.0
        %8220 = vmatpush1.msra.mxu0 0.0
        %8221 = vmatprep.subr.mxu0 0.0
        %8222 = vmatpush1.msra.mxu0 0.0
        %8223 = vmatprep.subr.mxu0 0.0
        %8224 = vmatpush1.msra.mxu0 0.0
        %8225 = vmatprep.subr.mxu0 0.0
        %8226 = vmatpush1.msra.mxu0 0.0
        %8227 = vmatprep.subr.mxu0 0.0
        %8228 = vmatpush1.msra.mxu0 0.0
        %8229 = vmatprep.subr.mxu0 0.0
        %8230 = vmatpush1.msra.mxu0 0.0
        %8231 = vmatprep.subr.mxu0 0.0
        %8232 = vmatpush1.msra.mxu0 0.0
        %8233 = vmatprep.subr.mxu0 0.0
        %8234 = vmatpush1.msra.mxu0 0.0
        %8235 = vmatprep.subr.mxu0 0.0
        %8236 = vmatpush1.msra.mxu0 0.0
        %8237 = vmatprep.subr.mxu0 0.0
        %8238 = vmatpush1.msra.mxu0 0.0
        %8239 = vmatprep.subr.mxu0 0.0
        %8240 = vmatpush1.msra.mxu0 0.0
        %8241 = vmatprep.subr.mxu0 0.0
        %8242 = vmatpush1.msra.mxu0 %v335
        %8243 = vmatprep.subr.mxu0 0.0
        %8244 = vmatpush2.msra.mxu0 0.0
        %8245 = vmatprep.subr.mxu0 0.0
        %8246 = vmatpush2.msra.mxu0 0.0
        %8247 = vmatprep.subr.mxu0 0.0
        %8248 = vmatpush2.msra.mxu0 0.0
        %8249 = vmatprep.subr.mxu0 0.0
        %8250 = vmatpush2.msra.mxu0 0.0
        %8251 = vmatprep.subr.mxu0 0.0
        %8252 = vmatpush2.msra.mxu0 0.0
        %8253 = vmatprep.subr.mxu0 0.0
        %8254 = vmatpush2.msra.mxu0 0.0
        %8255 = vmatprep.subr.mxu0 0.0
        %8256 = vmatpush2.msra.mxu0 0.0
        %8257 = vmatprep.subr.mxu0 0.0
        %8258 = vmatpush2.msra.mxu0 0.0
        %8259 = vmatprep.subr.mxu0 0.0
        %8260 = vmatpush2.msra.mxu0 0.0
        %8261 = vmatprep.subr.mxu0 0.0
        %8262 = vmatpush2.msra.mxu0 0.0
        %8263 = vmatprep.subr.mxu0 0.0
        %8264 = vmatpush2.msra.mxu0 0.0
        %8265 = vmatprep.subr.mxu0 0.0
        %8266 = vmatpush2.msra.mxu0 0.0
        %8267 = vmatprep.subr.mxu0 0.0
        %8268 = vmatpush2.msra.mxu0 0.0
        %8269 = vmatprep.subr.mxu0 0.0
        %8270 = vmatpush2.msra.mxu0 0.0
        %8271 = vmatprep.subr.mxu0 0.0
        %8272 = vmatpush2.msra.mxu0 0.0
        %8273 = vmatprep.subr.mxu0 0.0
        %8274 = vmatpush2.msra.mxu0 0.0
        %8275 = vmatprep.mubr.f32.mxu0 0.0
        %8276 = vmatmul.mubr.f32.gmra.mxu0 %v8209
        %v8277 = vpop.f32.mrf.mxu0
        %v8278 = vadd.f32 0.0, %v8277
        %v8279 = vpop.f32.mrf.mxu0
        %8280 = vdwg.mxu0
        %v8282 = vsel %vm6703, %v7169, 0
        %8284 = vmatprep.subr.mxu0 0.0
        %8285 = vmatpush1.msra.mxu0 0.0
        %8286 = vmatprep.subr.mxu0 0.0
        %8287 = vmatpush1.msra.mxu0 0.0
        %8288 = vmatprep.subr.mxu0 0.0
        %8289 = vmatpush1.msra.mxu0 0.0
        %8290 = vmatprep.subr.mxu0 0.0
        %8291 = vmatpush1.msra.mxu0 0.0
        %8292 = vmatprep.subr.mxu0 0.0
        %8293 = vmatpush1.msra.mxu0 0.0
        %8294 = vmatprep.subr.mxu0 0.0
        %8295 = vmatpush1.msra.mxu0 0.0
        %8296 = vmatprep.subr.mxu0 0.0
        %8297 = vmatpush1.msra.mxu0 0.0
        %8298 = vmatprep.subr.mxu0 0.0
        %8299 = vmatpush1.msra.mxu0 0.0
        %8300 = vmatprep.subr.mxu0 0.0
        %8301 = vmatpush1.msra.mxu0 0.0
        %8302 = vmatprep.subr.mxu0 0.0
        %8303 = vmatpush1.msra.mxu0 0.0
        %8304 = vmatprep.subr.mxu0 0.0
        %8305 = vmatpush1.msra.mxu0 0.0
        %8306 = vmatprep.subr.mxu0 0.0
        %8307 = vmatpush1.msra.mxu0 0.0
        %8308 = vmatprep.subr.mxu0 0.0
        %8309 = vmatpush1.msra.mxu0 0.0
        %8310 = vmatprep.subr.mxu0 0.0
        %8311 = vmatpush1.msra.mxu0 0.0
        %8312 = vmatprep.subr.mxu0 0.0
        %8313 = vmatpush1.msra.mxu0 0.0
        %8314 = vmatprep.subr.mxu0 0.0
        %8315 = vmatpush1.msra.mxu0 %v336
        %8316 = vmatprep.subr.mxu0 0.0
        %8317 = vmatpush2.msra.mxu0 0.0
        %8318 = vmatprep.subr.mxu0 0.0
        %8319 = vmatpush2.msra.mxu0 0.0
        %8320 = vmatprep.subr.mxu0 0.0
        %8321 = vmatpush2.msra.mxu0 0.0
        %8322 = vmatprep.subr.mxu0 0.0
        %8323 = vmatpush2.msra.mxu0 0.0
        %8324 = vmatprep.subr.mxu0 0.0
        %8325 = vmatpush2.msra.mxu0 0.0
        %8326 = vmatprep.subr.mxu0 0.0
        %8327 = vmatpush2.msra.mxu0 0.0
        %8328 = vmatprep.subr.mxu0 0.0
        %8329 = vmatpush2.msra.mxu0 0.0
        %8330 = vmatprep.subr.mxu0 0.0
        %8331 = vmatpush2.msra.mxu0 0.0
        %8332 = vmatprep.subr.mxu0 0.0
        %8333 = vmatpush2.msra.mxu0 0.0
        %8334 = vmatprep.subr.mxu0 0.0
        %8335 = vmatpush2.msra.mxu0 0.0
        %8336 = vmatprep.subr.mxu0 0.0
        %8337 = vmatpush2.msra.mxu0 0.0
        %8338 = vmatprep.subr.mxu0 0.0
        %8339 = vmatpush2.msra.mxu0 0.0
        %8340 = vmatprep.subr.mxu0 0.0
        %8341 = vmatpush2.msra.mxu0 0.0
        %8342 = vmatprep.subr.mxu0 0.0
        %8343 = vmatpush2.msra.mxu0 0.0
        %8344 = vmatprep.subr.mxu0 0.0
        %8345 = vmatpush2.msra.mxu0 0.0
        %8346 = vmatprep.subr.mxu0 0.0
        %8347 = vmatpush2.msra.mxu0 0.0
        %8348 = vmatprep.mubr.f32.mxu0 0.0
        %8349 = vmatmul.mubr.f32.gmra.mxu0 %v8282
        %v8350 = vpop.f32.mrf.mxu0
        %v8351 = vadd.f32 0.0, %v8350
        %v8352 = vpop.f32.mrf.mxu0
        %8353 = vdwg.mxu0
        %v8355 = vsel %vm6703, %v7170, 0
        %8357 = vmatprep.subr.mxu0 0.0
        %8358 = vmatpush1.msra.mxu0 0.0
        %8359 = vmatprep.subr.mxu0 0.0
        %8360 = vmatpush1.msra.mxu0 0.0
        %8361 = vmatprep.subr.mxu0 0.0
        %8362 = vmatpush1.msra.mxu0 0.0
        %8363 = vmatprep.subr.mxu0 0.0
        %8364 = vmatpush1.msra.mxu0 0.0
        %8365 = vmatprep.subr.mxu0 0.0
        %8366 = vmatpush1.msra.mxu0 0.0
        %8367 = vmatprep.subr.mxu0 0.0
        %8368 = vmatpush1.msra.mxu0 0.0
        %8369 = vmatprep.subr.mxu0 0.0
        %8370 = vmatpush1.msra.mxu0 0.0
        %8371 = vmatprep.subr.mxu0 0.0
        %8372 = vmatpush1.msra.mxu0 0.0
        %8373 = vmatprep.subr.mxu0 0.0
        %8374 = vmatpush1.msra.mxu0 0.0
        %8375 = vmatprep.subr.mxu0 0.0
        %8376 = vmatpush1.msra.mxu0 0.0
        %8377 = vmatprep.subr.mxu0 0.0
        %8378 = vmatpush1.msra.mxu0 0.0
        %8379 = vmatprep.subr.mxu0 0.0
        %8380 = vmatpush1.msra.mxu0 0.0
        %8381 = vmatprep.subr.mxu0 0.0
        %8382 = vmatpush1.msra.mxu0 0.0
        %8383 = vmatprep.subr.mxu0 0.0
        %8384 = vmatpush1.msra.mxu0 0.0
        %8385 = vmatprep.subr.mxu0 0.0
        %8386 = vmatpush1.msra.mxu0 0.0
        %8387 = vmatprep.subr.mxu0 0.0
        %8388 = vmatpush1.msra.mxu0 %v337
        %8389 = vmatprep.subr.mxu0 0.0
        %8390 = vmatpush2.msra.mxu0 0.0
        %8391 = vmatprep.subr.mxu0 0.0
        %8392 = vmatpush2.msra.mxu0 0.0
        %8393 = vmatprep.subr.mxu0 0.0
        %8394 = vmatpush2.msra.mxu0 0.0
        %8395 = vmatprep.subr.mxu0 0.0
        %8396 = vmatpush2.msra.mxu0 0.0
        %8397 = vmatprep.subr.mxu0 0.0
        %8398 = vmatpush2.msra.mxu0 0.0
        %8399 = vmatprep.subr.mxu0 0.0
        %8400 = vmatpush2.msra.mxu0 0.0
        %8401 = vmatprep.subr.mxu0 0.0
        %8402 = vmatpush2.msra.mxu0 0.0
        %8403 = vmatprep.subr.mxu0 0.0
        %8404 = vmatpush2.msra.mxu0 0.0
        %8405 = vmatprep.subr.mxu0 0.0
        %8406 = vmatpush2.msra.mxu0 0.0
        %8407 = vmatprep.subr.mxu0 0.0
        %8408 = vmatpush2.msra.mxu0 0.0
        %8409 = vmatprep.subr.mxu0 0.0
        %8410 = vmatpush2.msra.mxu0 0.0
        %8411 = vmatprep.subr.mxu0 0.0
        %8412 = vmatpush2.msra.mxu0 0.0
        %8413 = vmatprep.subr.mxu0 0.0
        %8414 = vmatpush2.msra.mxu0 0.0
        %8415 = vmatprep.subr.mxu0 0.0
        %8416 = vmatpush2.msra.mxu0 0.0
        %8417 = vmatprep.subr.mxu0 0.0
        %8418 = vmatpush2.msra.mxu0 0.0
        %8419 = vmatprep.subr.mxu0 0.0
        %8420 = vmatpush2.msra.mxu0 0.0
        %8421 = vmatprep.mubr.f32.mxu0 0.0
        %8422 = vmatmul.mubr.f32.gmra.mxu0 %v8355
        %v8423 = vpop.f32.mrf.mxu0
        %v8424 = vadd.f32 0.0, %v8423
        %v8425 = vpop.f32.mrf.mxu0
        %8426 = vdwg.mxu0
        %v8428 = vsel %vm6703, %v7171, 0
        %8430 = vmatprep.subr.mxu0 0.0
        %8431 = vmatpush1.msra.mxu0 0.0
        %8432 = vmatprep.subr.mxu0 0.0
        %8433 = vmatpush1.msra.mxu0 0.0
        %8434 = vmatprep.subr.mxu0 0.0
        %8435 = vmatpush1.msra.mxu0 0.0
        %8436 = vmatprep.subr.mxu0 0.0
        %8437 = vmatpush1.msra.mxu0 0.0
        %8438 = vmatprep.subr.mxu0 0.0
        %8439 = vmatpush1.msra.mxu0 0.0
        %8440 = vmatprep.subr.mxu0 0.0
        %8441 = vmatpush1.msra.mxu0 0.0
        %8442 = vmatprep.subr.mxu0 0.0
        %8443 = vmatpush1.msra.mxu0 0.0
        %8444 = vmatprep.subr.mxu0 0.0
        %8445 = vmatpush1.msra.mxu0 0.0
        %8446 = vmatprep.subr.mxu0 0.0
        %8447 = vmatpush1.msra.mxu0 0.0
        %8448 = vmatprep.subr.mxu0 0.0
        %8449 = vmatpush1.msra.mxu0 0.0
        %8450 = vmatprep.subr.mxu0 0.0
        %8451 = vmatpush1.msra.mxu0 0.0
        %8452 = vmatprep.subr.mxu0 0.0
        %8453 = vmatpush1.msra.mxu0 0.0
        %8454 = vmatprep.subr.mxu0 0.0
        %8455 = vmatpush1.msra.mxu0 0.0
        %8456 = vmatprep.subr.mxu0 0.0
        %8457 = vmatpush1.msra.mxu0 0.0
        %8458 = vmatprep.subr.mxu0 0.0
        %8459 = vmatpush1.msra.mxu0 0.0
        %8460 = vmatprep.subr.mxu0 0.0
        %8461 = vmatpush1.msra.mxu0 %v338
        %8462 = vmatprep.subr.mxu0 0.0
        %8463 = vmatpush2.msra.mxu0 0.0
        %8464 = vmatprep.subr.mxu0 0.0
        %8465 = vmatpush2.msra.mxu0 0.0
        %8466 = vmatprep.subr.mxu0 0.0
        %8467 = vmatpush2.msra.mxu0 0.0
        %8468 = vmatprep.subr.mxu0 0.0
        %8469 = vmatpush2.msra.mxu0 0.0
        %8470 = vmatprep.subr.mxu0 0.0
        %8471 = vmatpush2.msra.mxu0 0.0
        %8472 = vmatprep.subr.mxu0 0.0
        %8473 = vmatpush2.msra.mxu0 0.0
        %8474 = vmatprep.subr.mxu0 0.0
        %8475 = vmatpush2.msra.mxu0 0.0
        %8476 = vmatprep.subr.mxu0 0.0
        %8477 = vmatpush2.msra.mxu0 0.0
        %8478 = vmatprep.subr.mxu0 0.0
        %8479 = vmatpush2.msra.mxu0 0.0
        %8480 = vmatprep.subr.mxu0 0.0
        %8481 = vmatpush2.msra.mxu0 0.0
        %8482 = vmatprep.subr.mxu0 0.0
        %8483 = vmatpush2.msra.mxu0 0.0
        %8484 = vmatprep.subr.mxu0 0.0
        %8485 = vmatpush2.msra.mxu0 0.0
        %8486 = vmatprep.subr.mxu0 0.0
        %8487 = vmatpush2.msra.mxu0 0.0
        %8488 = vmatprep.subr.mxu0 0.0
        %8489 = vmatpush2.msra.mxu0 0.0
        %8490 = vmatprep.subr.mxu0 0.0
        %8491 = vmatpush2.msra.mxu0 0.0
        %8492 = vmatprep.subr.mxu0 0.0
        %8493 = vmatpush2.msra.mxu0 0.0
        %8494 = vmatprep.mubr.f32.mxu0 0.0
        %8495 = vmatmul.mubr.f32.gmra.mxu0 %v8428
        %v8496 = vpop.f32.mrf.mxu0
        %v8497 = vadd.f32 0.0, %v8496
        %v8498 = vpop.f32.mrf.mxu0
        %8499 = vdwg.mxu0
        %v8501 = vsel %vm6703, %v7172, 0
        %8503 = vmatprep.subr.mxu0 0.0
        %8504 = vmatpush1.msra.mxu0 0.0
        %8505 = vmatprep.subr.mxu0 0.0
        %8506 = vmatpush1.msra.mxu0 0.0
        %8507 = vmatprep.subr.mxu0 0.0
        %8508 = vmatpush1.msra.mxu0 0.0
        %8509 = vmatprep.subr.mxu0 0.0
        %8510 = vmatpush1.msra.mxu0 0.0
        %8511 = vmatprep.subr.mxu0 0.0
        %8512 = vmatpush1.msra.mxu0 0.0
        %8513 = vmatprep.subr.mxu0 0.0
        %8514 = vmatpush1.msra.mxu0 0.0
        %8515 = vmatprep.subr.mxu0 0.0
        %8516 = vmatpush1.msra.mxu0 0.0
        %8517 = vmatprep.subr.mxu0 0.0
        %8518 = vmatpush1.msra.mxu0 0.0
        %8519 = vmatprep.subr.mxu0 0.0
        %8520 = vmatpush1.msra.mxu0 0.0
        %8521 = vmatprep.subr.mxu0 0.0
        %8522 = vmatpush1.msra.mxu0 0.0
        %8523 = vmatprep.subr.mxu0 0.0
        %8524 = vmatpush1.msra.mxu0 0.0
        %8525 = vmatprep.subr.mxu0 0.0
        %8526 = vmatpush1.msra.mxu0 0.0
        %8527 = vmatprep.subr.mxu0 0.0
        %8528 = vmatpush1.msra.mxu0 0.0
        %8529 = vmatprep.subr.mxu0 0.0
        %8530 = vmatpush1.msra.mxu0 0.0
        %8531 = vmatprep.subr.mxu0 0.0
        %8532 = vmatpush1.msra.mxu0 0.0
        %8533 = vmatprep.subr.mxu0 0.0
        %8534 = vmatpush1.msra.mxu0 %v339
        %8535 = vmatprep.subr.mxu0 0.0
        %8536 = vmatpush2.msra.mxu0 0.0
        %8537 = vmatprep.subr.mxu0 0.0
        %8538 = vmatpush2.msra.mxu0 0.0
        %8539 = vmatprep.subr.mxu0 0.0
        %8540 = vmatpush2.msra.mxu0 0.0
        %8541 = vmatprep.subr.mxu0 0.0
        %8542 = vmatpush2.msra.mxu0 0.0
        %8543 = vmatprep.subr.mxu0 0.0
        %8544 = vmatpush2.msra.mxu0 0.0
        %8545 = vmatprep.subr.mxu0 0.0
        %8546 = vmatpush2.msra.mxu0 0.0
        %8547 = vmatprep.subr.mxu0 0.0
        %8548 = vmatpush2.msra.mxu0 0.0
        %8549 = vmatprep.subr.mxu0 0.0
        %8550 = vmatpush2.msra.mxu0 0.0
        %8551 = vmatprep.subr.mxu0 0.0
        %8552 = vmatpush2.msra.mxu0 0.0
        %8553 = vmatprep.subr.mxu0 0.0
        %8554 = vmatpush2.msra.mxu0 0.0
        %8555 = vmatprep.subr.mxu0 0.0
        %8556 = vmatpush2.msra.mxu0 0.0
        %8557 = vmatprep.subr.mxu0 0.0
        %8558 = vmatpush2.msra.mxu0 0.0
        %8559 = vmatprep.subr.mxu0 0.0
        %8560 = vmatpush2.msra.mxu0 0.0
        %8561 = vmatprep.subr.mxu0 0.0
        %8562 = vmatpush2.msra.mxu0 0.0
        %8563 = vmatprep.subr.mxu0 0.0
        %8564 = vmatpush2.msra.mxu0 0.0
        %8565 = vmatprep.subr.mxu0 0.0
        %8566 = vmatpush2.msra.mxu0 0.0
        %8567 = vmatprep.mubr.f32.mxu0 0.0
        %8568 = vmatmul.mubr.f32.gmra.mxu0 %v8501
        %v8569 = vpop.f32.mrf.mxu0
        %v8570 = vadd.f32 0.0, %v8569
        %v8571 = vpop.f32.mrf.mxu0
        %8572 = vdwg.mxu0
        %v8574 = vsel %vm6703, %v7173, 0
        %8576 = vmatprep.subr.mxu0 0.0
        %8577 = vmatpush1.msra.mxu0 0.0
        %8578 = vmatprep.subr.mxu0 0.0
        %8579 = vmatpush1.msra.mxu0 0.0
        %8580 = vmatprep.subr.mxu0 0.0
        %8581 = vmatpush1.msra.mxu0 0.0
        %8582 = vmatprep.subr.mxu0 0.0
        %8583 = vmatpush1.msra.mxu0 0.0
        %8584 = vmatprep.subr.mxu0 0.0
        %8585 = vmatpush1.msra.mxu0 0.0
        %8586 = vmatprep.subr.mxu0 0.0
        %8587 = vmatpush1.msra.mxu0 0.0
        %8588 = vmatprep.subr.mxu0 0.0
        %8589 = vmatpush1.msra.mxu0 0.0
        %8590 = vmatprep.subr.mxu0 0.0
        %8591 = vmatpush1.msra.mxu0 0.0
        %8592 = vmatprep.subr.mxu0 0.0
        %8593 = vmatpush1.msra.mxu0 0.0
        %8594 = vmatprep.subr.mxu0 0.0
        %8595 = vmatpush1.msra.mxu0 0.0
        %8596 = vmatprep.subr.mxu0 0.0
        %8597 = vmatpush1.msra.mxu0 0.0
        %8598 = vmatprep.subr.mxu0 0.0
        %8599 = vmatpush1.msra.mxu0 0.0
        %8600 = vmatprep.subr.mxu0 0.0
        %8601 = vmatpush1.msra.mxu0 0.0
        %8602 = vmatprep.subr.mxu0 0.0
        %8603 = vmatpush1.msra.mxu0 0.0
        %8604 = vmatprep.subr.mxu0 0.0
        %8605 = vmatpush1.msra.mxu0 0.0
        %8606 = vmatprep.subr.mxu0 0.0
        %8607 = vmatpush1.msra.mxu0 %v340
        %8608 = vmatprep.subr.mxu0 0.0
        %8609 = vmatpush2.msra.mxu0 0.0
        %8610 = vmatprep.subr.mxu0 0.0
        %8611 = vmatpush2.msra.mxu0 0.0
        %8612 = vmatprep.subr.mxu0 0.0
        %8613 = vmatpush2.msra.mxu0 0.0
        %8614 = vmatprep.subr.mxu0 0.0
        %8615 = vmatpush2.msra.mxu0 0.0
        %8616 = vmatprep.subr.mxu0 0.0
        %8617 = vmatpush2.msra.mxu0 0.0
        %8618 = vmatprep.subr.mxu0 0.0
        %8619 = vmatpush2.msra.mxu0 0.0
        %8620 = vmatprep.subr.mxu0 0.0
        %8621 = vmatpush2.msra.mxu0 0.0
        %8622 = vmatprep.subr.mxu0 0.0
        %8623 = vmatpush2.msra.mxu0 0.0
        %8624 = vmatprep.subr.mxu0 0.0
        %8625 = vmatpush2.msra.mxu0 0.0
        %8626 = vmatprep.subr.mxu0 0.0
        %8627 = vmatpush2.msra.mxu0 0.0
        %8628 = vmatprep.subr.mxu0 0.0
        %8629 = vmatpush2.msra.mxu0 0.0
        %8630 = vmatprep.subr.mxu0 0.0
        %8631 = vmatpush2.msra.mxu0 0.0
        %8632 = vmatprep.subr.mxu0 0.0
        %8633 = vmatpush2.msra.mxu0 0.0
        %8634 = vmatprep.subr.mxu0 0.0
        %8635 = vmatpush2.msra.mxu0 0.0
        %8636 = vmatprep.subr.mxu0 0.0
        %8637 = vmatpush2.msra.mxu0 0.0
        %8638 = vmatprep.subr.mxu0 0.0
        %8639 = vmatpush2.msra.mxu0 0.0
        %8640 = vmatprep.mubr.f32.mxu0 0.0
        %8641 = vmatmul.mubr.f32.gmra.mxu0 %v8574
        %v8642 = vpop.f32.mrf.mxu0
        %v8643 = vadd.f32 0.0, %v8642
        %v8644 = vpop.f32.mrf.mxu0
        %8645 = vdwg.mxu0
        %v8647 = vsel %vm6703, %v7174, 0
        %8649 = vmatprep.subr.mxu0 0.0
        %8650 = vmatpush1.msra.mxu0 0.0
        %8651 = vmatprep.subr.mxu0 0.0
        %8652 = vmatpush1.msra.mxu0 0.0
        %8653 = vmatprep.subr.mxu0 0.0
        %8654 = vmatpush1.msra.mxu0 0.0
        %8655 = vmatprep.subr.mxu0 0.0
        %8656 = vmatpush1.msra.mxu0 0.0
        %8657 = vmatprep.subr.mxu0 0.0
        %8658 = vmatpush1.msra.mxu0 0.0
        %8659 = vmatprep.subr.mxu0 0.0
        %8660 = vmatpush1.msra.mxu0 0.0
        %8661 = vmatprep.subr.mxu0 0.0
        %8662 = vmatpush1.msra.mxu0 0.0
        %8663 = vmatprep.subr.mxu0 0.0
        %8664 = vmatpush1.msra.mxu0 0.0
        %8665 = vmatprep.subr.mxu0 0.0
        %8666 = vmatpush1.msra.mxu0 0.0
        %8667 = vmatprep.subr.mxu0 0.0
        %8668 = vmatpush1.msra.mxu0 0.0
        %8669 = vmatprep.subr.mxu0 0.0
        %8670 = vmatpush1.msra.mxu0 0.0
        %8671 = vmatprep.subr.mxu0 0.0
        %8672 = vmatpush1.msra.mxu0 0.0
        %8673 = vmatprep.subr.mxu0 0.0
        %8674 = vmatpush1.msra.mxu0 0.0
        %8675 = vmatprep.subr.mxu0 0.0
        %8676 = vmatpush1.msra.mxu0 0.0
        %8677 = vmatprep.subr.mxu0 0.0
        %8678 = vmatpush1.msra.mxu0 0.0
        %8679 = vmatprep.subr.mxu0 0.0
        %8680 = vmatpush1.msra.mxu0 %v341
        %8681 = vmatprep.subr.mxu0 0.0
        %8682 = vmatpush2.msra.mxu0 0.0
        %8683 = vmatprep.subr.mxu0 0.0
        %8684 = vmatpush2.msra.mxu0 0.0
        %8685 = vmatprep.subr.mxu0 0.0
        %8686 = vmatpush2.msra.mxu0 0.0
        %8687 = vmatprep.subr.mxu0 0.0
        %8688 = vmatpush2.msra.mxu0 0.0
        %8689 = vmatprep.subr.mxu0 0.0
        %8690 = vmatpush2.msra.mxu0 0.0
        %8691 = vmatprep.subr.mxu0 0.0
        %8692 = vmatpush2.msra.mxu0 0.0
        %8693 = vmatprep.subr.mxu0 0.0
        %8694 = vmatpush2.msra.mxu0 0.0
        %8695 = vmatprep.subr.mxu0 0.0
        %8696 = vmatpush2.msra.mxu0 0.0
        %8697 = vmatprep.subr.mxu0 0.0
        %8698 = vmatpush2.msra.mxu0 0.0
        %8699 = vmatprep.subr.mxu0 0.0
        %8700 = vmatpush2.msra.mxu0 0.0
        %8701 = vmatprep.subr.mxu0 0.0
        %8702 = vmatpush2.msra.mxu0 0.0
        %8703 = vmatprep.subr.mxu0 0.0
        %8704 = vmatpush2.msra.mxu0 0.0
        %8705 = vmatprep.subr.mxu0 0.0
        %8706 = vmatpush2.msra.mxu0 0.0
        %8707 = vmatprep.subr.mxu0 0.0
        %8708 = vmatpush2.msra.mxu0 0.0
        %8709 = vmatprep.subr.mxu0 0.0
        %8710 = vmatpush2.msra.mxu0 0.0
        %8711 = vmatprep.subr.mxu0 0.0
        %8712 = vmatpush2.msra.mxu0 0.0
        %8713 = vmatprep.mubr.f32.mxu0 0.0
        %8714 = vmatmul.mubr.f32.gmra.mxu0 %v8647
        %v8715 = vpop.f32.mrf.mxu0
        %v8716 = vadd.f32 0.0, %v8715
        %v8717 = vpop.f32.mrf.mxu0
        %8718 = vdwg.mxu0
        %v8720 = vsel %vm6703, %v7175, 0
        %8722 = vmatprep.subr.mxu0 0.0
        %8723 = vmatpush1.msra.mxu0 0.0
        %8724 = vmatprep.subr.mxu0 0.0
        %8725 = vmatpush1.msra.mxu0 0.0
        %8726 = vmatprep.subr.mxu0 0.0
        %8727 = vmatpush1.msra.mxu0 0.0
        %8728 = vmatprep.subr.mxu0 0.0
        %8729 = vmatpush1.msra.mxu0 0.0
        %8730 = vmatprep.subr.mxu0 0.0
        %8731 = vmatpush1.msra.mxu0 0.0
        %8732 = vmatprep.subr.mxu0 0.0
        %8733 = vmatpush1.msra.mxu0 0.0
        %8734 = vmatprep.subr.mxu0 0.0
        %8735 = vmatpush1.msra.mxu0 0.0
        %8736 = vmatprep.subr.mxu0 0.0
        %8737 = vmatpush1.msra.mxu0 0.0
        %8738 = vmatprep.subr.mxu0 0.0
        %8739 = vmatpush1.msra.mxu0 0.0
        %8740 = vmatprep.subr.mxu0 0.0
        %8741 = vmatpush1.msra.mxu0 0.0
        %8742 = vmatprep.subr.mxu0 0.0
        %8743 = vmatpush1.msra.mxu0 0.0
        %8744 = vmatprep.subr.mxu0 0.0
        %8745 = vmatpush1.msra.mxu0 0.0
        %8746 = vmatprep.subr.mxu0 0.0
        %8747 = vmatpush1.msra.mxu0 0.0
        %8748 = vmatprep.subr.mxu0 0.0
        %8749 = vmatpush1.msra.mxu0 0.0
        %8750 = vmatprep.subr.mxu0 0.0
        %8751 = vmatpush1.msra.mxu0 0.0
        %8752 = vmatprep.subr.mxu0 0.0
        %8753 = vmatpush1.msra.mxu0 %v342
        %8754 = vmatprep.subr.mxu0 0.0
        %8755 = vmatpush2.msra.mxu0 0.0
        %8756 = vmatprep.subr.mxu0 0.0
        %8757 = vmatpush2.msra.mxu0 0.0
        %8758 = vmatprep.subr.mxu0 0.0
        %8759 = vmatpush2.msra.mxu0 0.0
        %8760 = vmatprep.subr.mxu0 0.0
        %8761 = vmatpush2.msra.mxu0 0.0
        %8762 = vmatprep.subr.mxu0 0.0
        %8763 = vmatpush2.msra.mxu0 0.0
        %8764 = vmatprep.subr.mxu0 0.0
        %8765 = vmatpush2.msra.mxu0 0.0
        %8766 = vmatprep.subr.mxu0 0.0
        %8767 = vmatpush2.msra.mxu0 0.0
        %8768 = vmatprep.subr.mxu0 0.0
        %8769 = vmatpush2.msra.mxu0 0.0
        %8770 = vmatprep.subr.mxu0 0.0
        %8771 = vmatpush2.msra.mxu0 0.0
        %8772 = vmatprep.subr.mxu0 0.0
        %8773 = vmatpush2.msra.mxu0 0.0
        %8774 = vmatprep.subr.mxu0 0.0
        %8775 = vmatpush2.msra.mxu0 0.0
        %8776 = vmatprep.subr.mxu0 0.0
        %8777 = vmatpush2.msra.mxu0 0.0
        %8778 = vmatprep.subr.mxu0 0.0
        %8779 = vmatpush2.msra.mxu0 0.0
        %8780 = vmatprep.subr.mxu0 0.0
        %8781 = vmatpush2.msra.mxu0 0.0
        %8782 = vmatprep.subr.mxu0 0.0
        %8783 = vmatpush2.msra.mxu0 0.0
        %8784 = vmatprep.subr.mxu0 0.0
        %8785 = vmatpush2.msra.mxu0 0.0
        %8786 = vmatprep.mubr.f32.mxu0 0.0
        %8787 = vmatmul.mubr.f32.gmra.mxu0 %v8720
        %v8788 = vpop.f32.mrf.mxu0
        %v8789 = vadd.f32 0.0, %v8788
        %v8790 = vpop.f32.mrf.mxu0
        %8791 = vdwg.mxu0
        %v8793 = vsel %vm6703, %v7176, 0
        %8795 = vmatprep.subr.mxu0 0.0
        %8796 = vmatpush1.msra.mxu0 0.0
        %8797 = vmatprep.subr.mxu0 0.0
        %8798 = vmatpush1.msra.mxu0 0.0
        %8799 = vmatprep.subr.mxu0 0.0
        %8800 = vmatpush1.msra.mxu0 0.0
        %8801 = vmatprep.subr.mxu0 0.0
        %8802 = vmatpush1.msra.mxu0 0.0
        %8803 = vmatprep.subr.mxu0 0.0
        %8804 = vmatpush1.msra.mxu0 0.0
        %8805 = vmatprep.subr.mxu0 0.0
        %8806 = vmatpush1.msra.mxu0 0.0
        %8807 = vmatprep.subr.mxu0 0.0
        %8808 = vmatpush1.msra.mxu0 0.0
        %8809 = vmatprep.subr.mxu0 0.0
        %8810 = vmatpush1.msra.mxu0 0.0
        %8811 = vmatprep.subr.mxu0 0.0
        %8812 = vmatpush1.msra.mxu0 0.0
        %8813 = vmatprep.subr.mxu0 0.0
        %8814 = vmatpush1.msra.mxu0 0.0
        %8815 = vmatprep.subr.mxu0 0.0
        %8816 = vmatpush1.msra.mxu0 0.0
        %8817 = vmatprep.subr.mxu0 0.0
        %8818 = vmatpush1.msra.mxu0 0.0
        %8819 = vmatprep.subr.mxu0 0.0
        %8820 = vmatpush1.msra.mxu0 0.0
        %8821 = vmatprep.subr.mxu0 0.0
        %8822 = vmatpush1.msra.mxu0 0.0
        %8823 = vmatprep.subr.mxu0 0.0
        %8824 = vmatpush1.msra.mxu0 0.0
        %8825 = vmatprep.subr.mxu0 0.0
        %8826 = vmatpush1.msra.mxu0 %v343
        %8827 = vmatprep.subr.mxu0 0.0
        %8828 = vmatpush2.msra.mxu0 0.0
        %8829 = vmatprep.subr.mxu0 0.0
        %8830 = vmatpush2.msra.mxu0 0.0
        %8831 = vmatprep.subr.mxu0 0.0
        %8832 = vmatpush2.msra.mxu0 0.0
        %8833 = vmatprep.subr.mxu0 0.0
        %8834 = vmatpush2.msra.mxu0 0.0
        %8835 = vmatprep.subr.mxu0 0.0
        %8836 = vmatpush2.msra.mxu0 0.0
        %8837 = vmatprep.subr.mxu0 0.0
        %8838 = vmatpush2.msra.mxu0 0.0
        %8839 = vmatprep.subr.mxu0 0.0
        %8840 = vmatpush2.msra.mxu0 0.0
        %8841 = vmatprep.subr.mxu0 0.0
        %8842 = vmatpush2.msra.mxu0 0.0
        %8843 = vmatprep.subr.mxu0 0.0
        %8844 = vmatpush2.msra.mxu0 0.0
        %8845 = vmatprep.subr.mxu0 0.0
        %8846 = vmatpush2.msra.mxu0 0.0
        %8847 = vmatprep.subr.mxu0 0.0
        %8848 = vmatpush2.msra.mxu0 0.0
        %8849 = vmatprep.subr.mxu0 0.0
        %8850 = vmatpush2.msra.mxu0 0.0
        %8851 = vmatprep.subr.mxu0 0.0
        %8852 = vmatpush2.msra.mxu0 0.0
        %8853 = vmatprep.subr.mxu0 0.0
        %8854 = vmatpush2.msra.mxu0 0.0
        %8855 = vmatprep.subr.mxu0 0.0
        %8856 = vmatpush2.msra.mxu0 0.0
        %8857 = vmatprep.subr.mxu0 0.0
        %8858 = vmatpush2.msra.mxu0 0.0
        %8859 = vmatprep.mubr.f32.mxu0 0.0
        %8860 = vmatmul.mubr.f32.gmra.mxu0 %v8793
        %v8861 = vpop.f32.mrf.mxu0
        %v8862 = vadd.f32 0.0, %v8861
        %v8863 = vpop.f32.mrf.mxu0
        %8864 = vdwg.mxu0
        %v8866 = vsel %vm6703, %v7177, 0
        %8868 = vmatprep.subr.mxu0 0.0
        %8869 = vmatpush1.msra.mxu0 0.0
        %8870 = vmatprep.subr.mxu0 0.0
        %8871 = vmatpush1.msra.mxu0 0.0
        %8872 = vmatprep.subr.mxu0 0.0
        %8873 = vmatpush1.msra.mxu0 0.0
        %8874 = vmatprep.subr.mxu0 0.0
        %8875 = vmatpush1.msra.mxu0 0.0
        %8876 = vmatprep.subr.mxu0 0.0
        %8877 = vmatpush1.msra.mxu0 0.0
        %8878 = vmatprep.subr.mxu0 0.0
        %8879 = vmatpush1.msra.mxu0 0.0
        %8880 = vmatprep.subr.mxu0 0.0
        %8881 = vmatpush1.msra.mxu0 0.0
        %8882 = vmatprep.subr.mxu0 0.0
        %8883 = vmatpush1.msra.mxu0 0.0
        %8884 = vmatprep.subr.mxu0 0.0
        %8885 = vmatpush1.msra.mxu0 0.0
        %8886 = vmatprep.subr.mxu0 0.0
        %8887 = vmatpush1.msra.mxu0 0.0
        %8888 = vmatprep.subr.mxu0 0.0
        %8889 = vmatpush1.msra.mxu0 0.0
        %8890 = vmatprep.subr.mxu0 0.0
        %8891 = vmatpush1.msra.mxu0 0.0
        %8892 = vmatprep.subr.mxu0 0.0
        %8893 = vmatpush1.msra.mxu0 0.0
        %8894 = vmatprep.subr.mxu0 0.0
        %8895 = vmatpush1.msra.mxu0 0.0
        %8896 = vmatprep.subr.mxu0 0.0
        %8897 = vmatpush1.msra.mxu0 0.0
        %8898 = vmatprep.subr.mxu0 0.0
        %8899 = vmatpush1.msra.mxu0 %v344
        %8900 = vmatprep.subr.mxu0 0.0
        %8901 = vmatpush2.msra.mxu0 0.0
        %8902 = vmatprep.subr.mxu0 0.0
        %8903 = vmatpush2.msra.mxu0 0.0
        %8904 = vmatprep.subr.mxu0 0.0
        %8905 = vmatpush2.msra.mxu0 0.0
        %8906 = vmatprep.subr.mxu0 0.0
        %8907 = vmatpush2.msra.mxu0 0.0
        %8908 = vmatprep.subr.mxu0 0.0
        %8909 = vmatpush2.msra.mxu0 0.0
        %8910 = vmatprep.subr.mxu0 0.0
        %8911 = vmatpush2.msra.mxu0 0.0
        %8912 = vmatprep.subr.mxu0 0.0
        %8913 = vmatpush2.msra.mxu0 0.0
        %8914 = vmatprep.subr.mxu0 0.0
        %8915 = vmatpush2.msra.mxu0 0.0
        %8916 = vmatprep.subr.mxu0 0.0
        %8917 = vmatpush2.msra.mxu0 0.0
        %8918 = vmatprep.subr.mxu0 0.0
        %8919 = vmatpush2.msra.mxu0 0.0
        %8920 = vmatprep.subr.mxu0 0.0
        %8921 = vmatpush2.msra.mxu0 0.0
        %8922 = vmatprep.subr.mxu0 0.0
        %8923 = vmatpush2.msra.mxu0 0.0
        %8924 = vmatprep.subr.mxu0 0.0
        %8925 = vmatpush2.msra.mxu0 0.0
        %8926 = vmatprep.subr.mxu0 0.0
        %8927 = vmatpush2.msra.mxu0 0.0
        %8928 = vmatprep.subr.mxu0 0.0
        %8929 = vmatpush2.msra.mxu0 0.0
        %8930 = vmatprep.subr.mxu0 0.0
        %8931 = vmatpush2.msra.mxu0 0.0
        %8932 = vmatprep.mubr.f32.mxu0 0.0
        %8933 = vmatmul.mubr.f32.gmra.mxu0 %v8866
        %v8934 = vpop.f32.mrf.mxu0
        %v8935 = vadd.f32 0.0, %v8934
        %v8936 = vpop.f32.mrf.mxu0
        %8937 = vdwg.mxu0
        %v8939 = vsel %vm6703, %v7178, 0
        %8941 = vmatprep.subr.mxu0 0.0
        %8942 = vmatpush1.msra.mxu0 0.0
        %8943 = vmatprep.subr.mxu0 0.0
        %8944 = vmatpush1.msra.mxu0 0.0
        %8945 = vmatprep.subr.mxu0 0.0
        %8946 = vmatpush1.msra.mxu0 0.0
        %8947 = vmatprep.subr.mxu0 0.0
        %8948 = vmatpush1.msra.mxu0 0.0
        %8949 = vmatprep.subr.mxu0 0.0
        %8950 = vmatpush1.msra.mxu0 0.0
        %8951 = vmatprep.subr.mxu0 0.0
        %8952 = vmatpush1.msra.mxu0 0.0
        %8953 = vmatprep.subr.mxu0 0.0
        %8954 = vmatpush1.msra.mxu0 0.0
        %8955 = vmatprep.subr.mxu0 0.0
        %8956 = vmatpush1.msra.mxu0 0.0
        %8957 = vmatprep.subr.mxu0 0.0
        %8958 = vmatpush1.msra.mxu0 0.0
        %8959 = vmatprep.subr.mxu0 0.0
        %8960 = vmatpush1.msra.mxu0 0.0
        %8961 = vmatprep.subr.mxu0 0.0
        %8962 = vmatpush1.msra.mxu0 0.0
        %8963 = vmatprep.subr.mxu0 0.0
        %8964 = vmatpush1.msra.mxu0 0.0
        %8965 = vmatprep.subr.mxu0 0.0
        %8966 = vmatpush1.msra.mxu0 0.0
        %8967 = vmatprep.subr.mxu0 0.0
        %8968 = vmatpush1.msra.mxu0 0.0
        %8969 = vmatprep.subr.mxu0 0.0
        %8970 = vmatpush1.msra.mxu0 0.0
        %8971 = vmatprep.subr.mxu0 0.0
        %8972 = vmatpush1.msra.mxu0 %v345
        %8973 = vmatprep.subr.mxu0 0.0
        %8974 = vmatpush2.msra.mxu0 0.0
        %8975 = vmatprep.subr.mxu0 0.0
        %8976 = vmatpush2.msra.mxu0 0.0
        %8977 = vmatprep.subr.mxu0 0.0
        %8978 = vmatpush2.msra.mxu0 0.0
        %8979 = vmatprep.subr.mxu0 0.0
        %8980 = vmatpush2.msra.mxu0 0.0
        %8981 = vmatprep.subr.mxu0 0.0
        %8982 = vmatpush2.msra.mxu0 0.0
        %8983 = vmatprep.subr.mxu0 0.0
        %8984 = vmatpush2.msra.mxu0 0.0
        %8985 = vmatprep.subr.mxu0 0.0
        %8986 = vmatpush2.msra.mxu0 0.0
        %8987 = vmatprep.subr.mxu0 0.0
        %8988 = vmatpush2.msra.mxu0 0.0
        %8989 = vmatprep.subr.mxu0 0.0
        %8990 = vmatpush2.msra.mxu0 0.0
        %8991 = vmatprep.subr.mxu0 0.0
        %8992 = vmatpush2.msra.mxu0 0.0
        %8993 = vmatprep.subr.mxu0 0.0
        %8994 = vmatpush2.msra.mxu0 0.0
        %8995 = vmatprep.subr.mxu0 0.0
        %8996 = vmatpush2.msra.mxu0 0.0
        %8997 = vmatprep.subr.mxu0 0.0
        %8998 = vmatpush2.msra.mxu0 0.0
        %8999 = vmatprep.subr.mxu0 0.0
        %9000 = vmatpush2.msra.mxu0 0.0
        %9001 = vmatprep.subr.mxu0 0.0
        %9002 = vmatpush2.msra.mxu0 0.0
        %9003 = vmatprep.subr.mxu0 0.0
        %9004 = vmatpush2.msra.mxu0 0.0
        %9005 = vmatprep.mubr.f32.mxu0 0.0
        %9006 = vmatmul.mubr.f32.gmra.mxu0 %v8939
        %v9007 = vpop.f32.mrf.mxu0
        %v9008 = vadd.f32 0.0, %v9007
        %v9009 = vpop.f32.mrf.mxu0
        %9010 = vdwg.mxu0
        %v9012 = vsel %vm6703, %v7179, 0
        %9014 = vmatprep.subr.mxu0 0.0
        %9015 = vmatpush1.msra.mxu0 0.0
        %9016 = vmatprep.subr.mxu0 0.0
        %9017 = vmatpush1.msra.mxu0 0.0
        %9018 = vmatprep.subr.mxu0 0.0
        %9019 = vmatpush1.msra.mxu0 0.0
        %9020 = vmatprep.subr.mxu0 0.0
        %9021 = vmatpush1.msra.mxu0 0.0
        %9022 = vmatprep.subr.mxu0 0.0
        %9023 = vmatpush1.msra.mxu0 0.0
        %9024 = vmatprep.subr.mxu0 0.0
        %9025 = vmatpush1.msra.mxu0 0.0
        %9026 = vmatprep.subr.mxu0 0.0
        %9027 = vmatpush1.msra.mxu0 0.0
        %9028 = vmatprep.subr.mxu0 0.0
        %9029 = vmatpush1.msra.mxu0 0.0
        %9030 = vmatprep.subr.mxu0 0.0
        %9031 = vmatpush1.msra.mxu0 0.0
        %9032 = vmatprep.subr.mxu0 0.0
        %9033 = vmatpush1.msra.mxu0 0.0
        %9034 = vmatprep.subr.mxu0 0.0
        %9035 = vmatpush1.msra.mxu0 0.0
        %9036 = vmatprep.subr.mxu0 0.0
        %9037 = vmatpush1.msra.mxu0 0.0
        %9038 = vmatprep.subr.mxu0 0.0
        %9039 = vmatpush1.msra.mxu0 0.0
        %9040 = vmatprep.subr.mxu0 0.0
        %9041 = vmatpush1.msra.mxu0 0.0
        %9042 = vmatprep.subr.mxu0 0.0
        %9043 = vmatpush1.msra.mxu0 0.0
        %9044 = vmatprep.subr.mxu0 0.0
        %9045 = vmatpush1.msra.mxu0 %v346
        %9046 = vmatprep.subr.mxu0 0.0
        %9047 = vmatpush2.msra.mxu0 0.0
        %9048 = vmatprep.subr.mxu0 0.0
        %9049 = vmatpush2.msra.mxu0 0.0
        %9050 = vmatprep.subr.mxu0 0.0
        %9051 = vmatpush2.msra.mxu0 0.0
        %9052 = vmatprep.subr.mxu0 0.0
        %9053 = vmatpush2.msra.mxu0 0.0
        %9054 = vmatprep.subr.mxu0 0.0
        %9055 = vmatpush2.msra.mxu0 0.0
        %9056 = vmatprep.subr.mxu0 0.0
        %9057 = vmatpush2.msra.mxu0 0.0
        %9058 = vmatprep.subr.mxu0 0.0
        %9059 = vmatpush2.msra.mxu0 0.0
        %9060 = vmatprep.subr.mxu0 0.0
        %9061 = vmatpush2.msra.mxu0 0.0
        %9062 = vmatprep.subr.mxu0 0.0
        %9063 = vmatpush2.msra.mxu0 0.0
        %9064 = vmatprep.subr.mxu0 0.0
        %9065 = vmatpush2.msra.mxu0 0.0
        %9066 = vmatprep.subr.mxu0 0.0
        %9067 = vmatpush2.msra.mxu0 0.0
        %9068 = vmatprep.subr.mxu0 0.0
        %9069 = vmatpush2.msra.mxu0 0.0
        %9070 = vmatprep.subr.mxu0 0.0
        %9071 = vmatpush2.msra.mxu0 0.0
        %9072 = vmatprep.subr.mxu0 0.0
        %9073 = vmatpush2.msra.mxu0 0.0
        %9074 = vmatprep.subr.mxu0 0.0
        %9075 = vmatpush2.msra.mxu0 0.0
        %9076 = vmatprep.subr.mxu0 0.0
        %9077 = vmatpush2.msra.mxu0 0.0
        %9078 = vmatprep.mubr.f32.mxu0 0.0
        %9079 = vmatmul.mubr.f32.gmra.mxu0 %v9012
        %v9080 = vpop.f32.mrf.mxu0
        %v9081 = vadd.f32 0.0, %v9080
        %v9082 = vpop.f32.mrf.mxu0
        %9083 = vdwg.mxu0
        %v9085 = vsel %vm6703, %v7180, 0
        %9087 = vmatprep.subr.mxu0 0.0
        %9088 = vmatpush1.msra.mxu0 0.0
        %9089 = vmatprep.subr.mxu0 0.0
        %9090 = vmatpush1.msra.mxu0 0.0
        %9091 = vmatprep.subr.mxu0 0.0
        %9092 = vmatpush1.msra.mxu0 0.0
        %9093 = vmatprep.subr.mxu0 0.0
        %9094 = vmatpush1.msra.mxu0 0.0
        %9095 = vmatprep.subr.mxu0 0.0
        %9096 = vmatpush1.msra.mxu0 0.0
        %9097 = vmatprep.subr.mxu0 0.0
        %9098 = vmatpush1.msra.mxu0 0.0
        %9099 = vmatprep.subr.mxu0 0.0
        %9100 = vmatpush1.msra.mxu0 0.0
        %9101 = vmatprep.subr.mxu0 0.0
        %9102 = vmatpush1.msra.mxu0 0.0
        %9103 = vmatprep.subr.mxu0 0.0
        %9104 = vmatpush1.msra.mxu0 0.0
        %9105 = vmatprep.subr.mxu0 0.0
        %9106 = vmatpush1.msra.mxu0 0.0
        %9107 = vmatprep.subr.mxu0 0.0
        %9108 = vmatpush1.msra.mxu0 0.0
        %9109 = vmatprep.subr.mxu0 0.0
        %9110 = vmatpush1.msra.mxu0 0.0
        %9111 = vmatprep.subr.mxu0 0.0
        %9112 = vmatpush1.msra.mxu0 0.0
        %9113 = vmatprep.subr.mxu0 0.0
        %9114 = vmatpush1.msra.mxu0 0.0
        %9115 = vmatprep.subr.mxu0 0.0
        %9116 = vmatpush1.msra.mxu0 0.0
        %9117 = vmatprep.subr.mxu0 0.0
        %9118 = vmatpush1.msra.mxu0 %v347
        %9119 = vmatprep.subr.mxu0 0.0
        %9120 = vmatpush2.msra.mxu0 0.0
        %9121 = vmatprep.subr.mxu0 0.0
        %9122 = vmatpush2.msra.mxu0 0.0
        %9123 = vmatprep.subr.mxu0 0.0
        %9124 = vmatpush2.msra.mxu0 0.0
        %9125 = vmatprep.subr.mxu0 0.0
        %9126 = vmatpush2.msra.mxu0 0.0
        %9127 = vmatprep.subr.mxu0 0.0
        %9128 = vmatpush2.msra.mxu0 0.0
        %9129 = vmatprep.subr.mxu0 0.0
        %9130 = vmatpush2.msra.mxu0 0.0
        %9131 = vmatprep.subr.mxu0 0.0
        %9132 = vmatpush2.msra.mxu0 0.0
        %9133 = vmatprep.subr.mxu0 0.0
        %9134 = vmatpush2.msra.mxu0 0.0
        %9135 = vmatprep.subr.mxu0 0.0
        %9136 = vmatpush2.msra.mxu0 0.0
        %9137 = vmatprep.subr.mxu0 0.0
        %9138 = vmatpush2.msra.mxu0 0.0
        %9139 = vmatprep.subr.mxu0 0.0
        %9140 = vmatpush2.msra.mxu0 0.0
        %9141 = vmatprep.subr.mxu0 0.0
        %9142 = vmatpush2.msra.mxu0 0.0
        %9143 = vmatprep.subr.mxu0 0.0
        %9144 = vmatpush2.msra.mxu0 0.0
        %9145 = vmatprep.subr.mxu0 0.0
        %9146 = vmatpush2.msra.mxu0 0.0
        %9147 = vmatprep.subr.mxu0 0.0
        %9148 = vmatpush2.msra.mxu0 0.0
        %9149 = vmatprep.subr.mxu0 0.0
        %9150 = vmatpush2.msra.mxu0 0.0
        %9151 = vmatprep.mubr.f32.mxu0 0.0
        %9152 = vmatmul.mubr.f32.gmra.mxu0 %v9085
        %v9153 = vpop.f32.mrf.mxu0
        %v9154 = vadd.f32 0.0, %v9153
        %v9155 = vpop.f32.mrf.mxu0
        %9156 = vdwg.mxu0
        %v9158 = vsel %vm6703, %v7181, 0
        %9160 = vmatprep.subr.mxu0 0.0
        %9161 = vmatpush1.msra.mxu0 0.0
        %9162 = vmatprep.subr.mxu0 0.0
        %9163 = vmatpush1.msra.mxu0 0.0
        %9164 = vmatprep.subr.mxu0 0.0
        %9165 = vmatpush1.msra.mxu0 0.0
        %9166 = vmatprep.subr.mxu0 0.0
        %9167 = vmatpush1.msra.mxu0 0.0
        %9168 = vmatprep.subr.mxu0 0.0
        %9169 = vmatpush1.msra.mxu0 0.0
        %9170 = vmatprep.subr.mxu0 0.0
        %9171 = vmatpush1.msra.mxu0 0.0
        %9172 = vmatprep.subr.mxu0 0.0
        %9173 = vmatpush1.msra.mxu0 0.0
        %9174 = vmatprep.subr.mxu0 0.0
        %9175 = vmatpush1.msra.mxu0 0.0
        %9176 = vmatprep.subr.mxu0 0.0
        %9177 = vmatpush1.msra.mxu0 0.0
        %9178 = vmatprep.subr.mxu0 0.0
        %9179 = vmatpush1.msra.mxu0 0.0
        %9180 = vmatprep.subr.mxu0 0.0
        %9181 = vmatpush1.msra.mxu0 0.0
        %9182 = vmatprep.subr.mxu0 0.0
        %9183 = vmatpush1.msra.mxu0 0.0
        %9184 = vmatprep.subr.mxu0 0.0
        %9185 = vmatpush1.msra.mxu0 0.0
        %9186 = vmatprep.subr.mxu0 0.0
        %9187 = vmatpush1.msra.mxu0 0.0
        %9188 = vmatprep.subr.mxu0 0.0
        %9189 = vmatpush1.msra.mxu0 0.0
        %9190 = vmatprep.subr.mxu0 0.0
        %9191 = vmatpush1.msra.mxu0 %v348
        %9192 = vmatprep.subr.mxu0 0.0
        %9193 = vmatpush2.msra.mxu0 0.0
        %9194 = vmatprep.subr.mxu0 0.0
        %9195 = vmatpush2.msra.mxu0 0.0
        %9196 = vmatprep.subr.mxu0 0.0
        %9197 = vmatpush2.msra.mxu0 0.0
        %9198 = vmatprep.subr.mxu0 0.0
        %9199 = vmatpush2.msra.mxu0 0.0
        %9200 = vmatprep.subr.mxu0 0.0
        %9201 = vmatpush2.msra.mxu0 0.0
        %9202 = vmatprep.subr.mxu0 0.0
        %9203 = vmatpush2.msra.mxu0 0.0
        %9204 = vmatprep.subr.mxu0 0.0
        %9205 = vmatpush2.msra.mxu0 0.0
        %9206 = vmatprep.subr.mxu0 0.0
        %9207 = vmatpush2.msra.mxu0 0.0
        %9208 = vmatprep.subr.mxu0 0.0
        %9209 = vmatpush2.msra.mxu0 0.0
        %9210 = vmatprep.subr.mxu0 0.0
        %9211 = vmatpush2.msra.mxu0 0.0
        %9212 = vmatprep.subr.mxu0 0.0
        %9213 = vmatpush2.msra.mxu0 0.0
        %9214 = vmatprep.subr.mxu0 0.0
        %9215 = vmatpush2.msra.mxu0 0.0
        %9216 = vmatprep.subr.mxu0 0.0
        %9217 = vmatpush2.msra.mxu0 0.0
        %9218 = vmatprep.subr.mxu0 0.0
        %9219 = vmatpush2.msra.mxu0 0.0
        %9220 = vmatprep.subr.mxu0 0.0
        %9221 = vmatpush2.msra.mxu0 0.0
        %9222 = vmatprep.subr.mxu0 0.0
        %9223 = vmatpush2.msra.mxu0 0.0
        %9224 = vmatprep.mubr.f32.mxu0 0.0
        %9225 = vmatmul.mubr.f32.gmra.mxu0 %v9158
        %v9226 = vpop.f32.mrf.mxu0
        %v9227 = vadd.f32 0.0, %v9226
        %v9228 = vpop.f32.mrf.mxu0
        %9229 = vdwg.mxu0
        %v9231 = vsel %vm6703, %v7182, 0
        %9233 = vmatprep.subr.mxu0 0.0
        %9234 = vmatpush1.msra.mxu0 0.0
        %9235 = vmatprep.subr.mxu0 0.0
        %9236 = vmatpush1.msra.mxu0 0.0
        %9237 = vmatprep.subr.mxu0 0.0
        %9238 = vmatpush1.msra.mxu0 0.0
        %9239 = vmatprep.subr.mxu0 0.0
        %9240 = vmatpush1.msra.mxu0 0.0
        %9241 = vmatprep.subr.mxu0 0.0
        %9242 = vmatpush1.msra.mxu0 0.0
        %9243 = vmatprep.subr.mxu0 0.0
        %9244 = vmatpush1.msra.mxu0 0.0
        %9245 = vmatprep.subr.mxu0 0.0
        %9246 = vmatpush1.msra.mxu0 0.0
        %9247 = vmatprep.subr.mxu0 0.0
        %9248 = vmatpush1.msra.mxu0 0.0
        %9249 = vmatprep.subr.mxu0 0.0
        %9250 = vmatpush1.msra.mxu0 0.0
        %9251 = vmatprep.subr.mxu0 0.0
        %9252 = vmatpush1.msra.mxu0 0.0
        %9253 = vmatprep.subr.mxu0 0.0
        %9254 = vmatpush1.msra.mxu0 0.0
        %9255 = vmatprep.subr.mxu0 0.0
        %9256 = vmatpush1.msra.mxu0 0.0
        %9257 = vmatprep.subr.mxu0 0.0
        %9258 = vmatpush1.msra.mxu0 0.0
        %9259 = vmatprep.subr.mxu0 0.0
        %9260 = vmatpush1.msra.mxu0 0.0
        %9261 = vmatprep.subr.mxu0 0.0
        %9262 = vmatpush1.msra.mxu0 0.0
        %9263 = vmatprep.subr.mxu0 0.0
        %9264 = vmatpush1.msra.mxu0 %v349
        %9265 = vmatprep.subr.mxu0 0.0
        %9266 = vmatpush2.msra.mxu0 0.0
        %9267 = vmatprep.subr.mxu0 0.0
        %9268 = vmatpush2.msra.mxu0 0.0
        %9269 = vmatprep.subr.mxu0 0.0
        %9270 = vmatpush2.msra.mxu0 0.0
        %9271 = vmatprep.subr.mxu0 0.0
        %9272 = vmatpush2.msra.mxu0 0.0
        %9273 = vmatprep.subr.mxu0 0.0
        %9274 = vmatpush2.msra.mxu0 0.0
        %9275 = vmatprep.subr.mxu0 0.0
        %9276 = vmatpush2.msra.mxu0 0.0
        %9277 = vmatprep.subr.mxu0 0.0
        %9278 = vmatpush2.msra.mxu0 0.0
        %9279 = vmatprep.subr.mxu0 0.0
        %9280 = vmatpush2.msra.mxu0 0.0
        %9281 = vmatprep.subr.mxu0 0.0
        %9282 = vmatpush2.msra.mxu0 0.0
        %9283 = vmatprep.subr.mxu0 0.0
        %9284 = vmatpush2.msra.mxu0 0.0
        %9285 = vmatprep.subr.mxu0 0.0
        %9286 = vmatpush2.msra.mxu0 0.0
        %9287 = vmatprep.subr.mxu0 0.0
        %9288 = vmatpush2.msra.mxu0 0.0
        %9289 = vmatprep.subr.mxu0 0.0
        %9290 = vmatpush2.msra.mxu0 0.0
        %9291 = vmatprep.subr.mxu0 0.0
        %9292 = vmatpush2.msra.mxu0 0.0
        %9293 = vmatprep.subr.mxu0 0.0
        %9294 = vmatpush2.msra.mxu0 0.0
        %9295 = vmatprep.subr.mxu0 0.0
        %9296 = vmatpush2.msra.mxu0 0.0
        %9297 = vmatprep.mubr.f32.mxu0 0.0
        %9298 = vmatmul.mubr.f32.gmra.mxu0 %v9231
        %v9299 = vpop.f32.mrf.mxu0
        %v9300 = vadd.f32 0.0, %v9299
        %v9301 = vpop.f32.mrf.mxu0
        %9302 = vdwg.mxu0
        %v9304 = vsel %vm6703, %v7183, 0
        %9306 = vmatprep.subr.mxu0 0.0
        %9307 = vmatpush1.msra.mxu0 0.0
        %9308 = vmatprep.subr.mxu0 0.0
        %9309 = vmatpush1.msra.mxu0 0.0
        %9310 = vmatprep.subr.mxu0 0.0
        %9311 = vmatpush1.msra.mxu0 0.0
        %9312 = vmatprep.subr.mxu0 0.0
        %9313 = vmatpush1.msra.mxu0 0.0
        %9314 = vmatprep.subr.mxu0 0.0
        %9315 = vmatpush1.msra.mxu0 0.0
        %9316 = vmatprep.subr.mxu0 0.0
        %9317 = vmatpush1.msra.mxu0 0.0
        %9318 = vmatprep.subr.mxu0 0.0
        %9319 = vmatpush1.msra.mxu0 0.0
        %9320 = vmatprep.subr.mxu0 0.0
        %9321 = vmatpush1.msra.mxu0 0.0
        %9322 = vmatprep.subr.mxu0 0.0
        %9323 = vmatpush1.msra.mxu0 0.0
        %9324 = vmatprep.subr.mxu0 0.0
        %9325 = vmatpush1.msra.mxu0 0.0
        %9326 = vmatprep.subr.mxu0 0.0
        %9327 = vmatpush1.msra.mxu0 0.0
        %9328 = vmatprep.subr.mxu0 0.0
        %9329 = vmatpush1.msra.mxu0 0.0
        %9330 = vmatprep.subr.mxu0 0.0
        %9331 = vmatpush1.msra.mxu0 0.0
        %9332 = vmatprep.subr.mxu0 0.0
        %9333 = vmatpush1.msra.mxu0 0.0
        %9334 = vmatprep.subr.mxu0 0.0
        %9335 = vmatpush1.msra.mxu0 0.0
        %9336 = vmatprep.subr.mxu0 0.0
        %9337 = vmatpush1.msra.mxu0 %v350
        %9338 = vmatprep.subr.mxu0 0.0
        %9339 = vmatpush2.msra.mxu0 0.0
        %9340 = vmatprep.subr.mxu0 0.0
        %9341 = vmatpush2.msra.mxu0 0.0
        %9342 = vmatprep.subr.mxu0 0.0
        %9343 = vmatpush2.msra.mxu0 0.0
        %9344 = vmatprep.subr.mxu0 0.0
        %9345 = vmatpush2.msra.mxu0 0.0
        %9346 = vmatprep.subr.mxu0 0.0
        %9347 = vmatpush2.msra.mxu0 0.0
        %9348 = vmatprep.subr.mxu0 0.0
        %9349 = vmatpush2.msra.mxu0 0.0
        %9350 = vmatprep.subr.mxu0 0.0
        %9351 = vmatpush2.msra.mxu0 0.0
        %9352 = vmatprep.subr.mxu0 0.0
        %9353 = vmatpush2.msra.mxu0 0.0
        %9354 = vmatprep.subr.mxu0 0.0
        %9355 = vmatpush2.msra.mxu0 0.0
        %9356 = vmatprep.subr.mxu0 0.0
        %9357 = vmatpush2.msra.mxu0 0.0
        %9358 = vmatprep.subr.mxu0 0.0
        %9359 = vmatpush2.msra.mxu0 0.0
        %9360 = vmatprep.subr.mxu0 0.0
        %9361 = vmatpush2.msra.mxu0 0.0
        %9362 = vmatprep.subr.mxu0 0.0
        %9363 = vmatpush2.msra.mxu0 0.0
        %9364 = vmatprep.subr.mxu0 0.0
        %9365 = vmatpush2.msra.mxu0 0.0
        %9366 = vmatprep.subr.mxu0 0.0
        %9367 = vmatpush2.msra.mxu0 0.0
        %9368 = vmatprep.subr.mxu0 0.0
        %9369 = vmatpush2.msra.mxu0 0.0
        %9370 = vmatprep.mubr.f32.mxu0 0.0
        %9371 = vmatmul.mubr.f32.gmra.mxu0 %v9304
        %v9372 = vpop.f32.mrf.mxu0
        %v9373 = vadd.f32 0.0, %v9372
        %v9374 = vpop.f32.mrf.mxu0
        %9375 = vdwg.mxu0
        %v9377 = vsel %vm6703, %v7184, 0
        %9379 = vmatprep.subr.mxu0 0.0
        %9380 = vmatpush1.msra.mxu0 0.0
        %9381 = vmatprep.subr.mxu0 0.0
        %9382 = vmatpush1.msra.mxu0 0.0
        %9383 = vmatprep.subr.mxu0 0.0
        %9384 = vmatpush1.msra.mxu0 0.0
        %9385 = vmatprep.subr.mxu0 0.0
        %9386 = vmatpush1.msra.mxu0 0.0
        %9387 = vmatprep.subr.mxu0 0.0
        %9388 = vmatpush1.msra.mxu0 0.0
        %9389 = vmatprep.subr.mxu0 0.0
        %9390 = vmatpush1.msra.mxu0 0.0
        %9391 = vmatprep.subr.mxu0 0.0
        %9392 = vmatpush1.msra.mxu0 0.0
        %9393 = vmatprep.subr.mxu0 0.0
        %9394 = vmatpush1.msra.mxu0 0.0
        %9395 = vmatprep.subr.mxu0 0.0
        %9396 = vmatpush1.msra.mxu0 0.0
        %9397 = vmatprep.subr.mxu0 0.0
        %9398 = vmatpush1.msra.mxu0 0.0
        %9399 = vmatprep.subr.mxu0 0.0
        %9400 = vmatpush1.msra.mxu0 0.0
        %9401 = vmatprep.subr.mxu0 0.0
        %9402 = vmatpush1.msra.mxu0 0.0
        %9403 = vmatprep.subr.mxu0 0.0
        %9404 = vmatpush1.msra.mxu0 0.0
        %9405 = vmatprep.subr.mxu0 0.0
        %9406 = vmatpush1.msra.mxu0 0.0
        %9407 = vmatprep.subr.mxu0 0.0
        %9408 = vmatpush1.msra.mxu0 0.0
        %9409 = vmatprep.subr.mxu0 0.0
        %9410 = vmatpush1.msra.mxu0 %v351
        %9411 = vmatprep.subr.mxu0 0.0
        %9412 = vmatpush2.msra.mxu0 0.0
        %9413 = vmatprep.subr.mxu0 0.0
        %9414 = vmatpush2.msra.mxu0 0.0
        %9415 = vmatprep.subr.mxu0 0.0
        %9416 = vmatpush2.msra.mxu0 0.0
        %9417 = vmatprep.subr.mxu0 0.0
        %9418 = vmatpush2.msra.mxu0 0.0
        %9419 = vmatprep.subr.mxu0 0.0
        %9420 = vmatpush2.msra.mxu0 0.0
        %9421 = vmatprep.subr.mxu0 0.0
        %9422 = vmatpush2.msra.mxu0 0.0
        %9423 = vmatprep.subr.mxu0 0.0
        %9424 = vmatpush2.msra.mxu0 0.0
        %9425 = vmatprep.subr.mxu0 0.0
        %9426 = vmatpush2.msra.mxu0 0.0
        %9427 = vmatprep.subr.mxu0 0.0
        %9428 = vmatpush2.msra.mxu0 0.0
        %9429 = vmatprep.subr.mxu0 0.0
        %9430 = vmatpush2.msra.mxu0 0.0
        %9431 = vmatprep.subr.mxu0 0.0
        %9432 = vmatpush2.msra.mxu0 0.0
        %9433 = vmatprep.subr.mxu0 0.0
        %9434 = vmatpush2.msra.mxu0 0.0
        %9435 = vmatprep.subr.mxu0 0.0
        %9436 = vmatpush2.msra.mxu0 0.0
        %9437 = vmatprep.subr.mxu0 0.0
        %9438 = vmatpush2.msra.mxu0 0.0
        %9439 = vmatprep.subr.mxu0 0.0
        %9440 = vmatpush2.msra.mxu0 0.0
        %9441 = vmatprep.subr.mxu0 0.0
        %9442 = vmatpush2.msra.mxu0 0.0
        %9443 = vmatprep.mubr.f32.mxu0 0.0
        %9444 = vmatmul.mubr.f32.gmra.mxu0 %v9377
        %v9445 = vpop.f32.mrf.mxu0
        %v9446 = vadd.f32 0.0, %v9445
        %v9447 = vpop.f32.mrf.mxu0
        %9448 = vdwg.mxu0
        %v9450 = vsel %vm6703, %v7185, 0
        %9452 = vmatprep.subr.mxu0 0.0
        %9453 = vmatpush1.msra.mxu0 0.0
        %9454 = vmatprep.subr.mxu0 0.0
        %9455 = vmatpush1.msra.mxu0 0.0
        %9456 = vmatprep.subr.mxu0 0.0
        %9457 = vmatpush1.msra.mxu0 0.0
        %9458 = vmatprep.subr.mxu0 0.0
        %9459 = vmatpush1.msra.mxu0 0.0
        %9460 = vmatprep.subr.mxu0 0.0
        %9461 = vmatpush1.msra.mxu0 0.0
        %9462 = vmatprep.subr.mxu0 0.0
        %9463 = vmatpush1.msra.mxu0 0.0
        %9464 = vmatprep.subr.mxu0 0.0
        %9465 = vmatpush1.msra.mxu0 0.0
        %9466 = vmatprep.subr.mxu0 0.0
        %9467 = vmatpush1.msra.mxu0 0.0
        %9468 = vmatprep.subr.mxu0 0.0
        %9469 = vmatpush1.msra.mxu0 0.0
        %9470 = vmatprep.subr.mxu0 0.0
        %9471 = vmatpush1.msra.mxu0 0.0
        %9472 = vmatprep.subr.mxu0 0.0
        %9473 = vmatpush1.msra.mxu0 0.0
        %9474 = vmatprep.subr.mxu0 0.0
        %9475 = vmatpush1.msra.mxu0 0.0
        %9476 = vmatprep.subr.mxu0 0.0
        %9477 = vmatpush1.msra.mxu0 0.0
        %9478 = vmatprep.subr.mxu0 0.0
        %9479 = vmatpush1.msra.mxu0 0.0
        %9480 = vmatprep.subr.mxu0 0.0
        %9481 = vmatpush1.msra.mxu0 0.0
        %9482 = vmatprep.subr.mxu0 0.0
        %9483 = vmatpush1.msra.mxu0 %v352
        %9484 = vmatprep.subr.mxu0 0.0
        %9485 = vmatpush2.msra.mxu0 0.0
        %9486 = vmatprep.subr.mxu0 0.0
        %9487 = vmatpush2.msra.mxu0 0.0
        %9488 = vmatprep.subr.mxu0 0.0
        %9489 = vmatpush2.msra.mxu0 0.0
        %9490 = vmatprep.subr.mxu0 0.0
        %9491 = vmatpush2.msra.mxu0 0.0
        %9492 = vmatprep.subr.mxu0 0.0
        %9493 = vmatpush2.msra.mxu0 0.0
        %9494 = vmatprep.subr.mxu0 0.0
        %9495 = vmatpush2.msra.mxu0 0.0
        %9496 = vmatprep.subr.mxu0 0.0
        %9497 = vmatpush2.msra.mxu0 0.0
        %9498 = vmatprep.subr.mxu0 0.0
        %9499 = vmatpush2.msra.mxu0 0.0
        %9500 = vmatprep.subr.mxu0 0.0
        %9501 = vmatpush2.msra.mxu0 0.0
        %9502 = vmatprep.subr.mxu0 0.0
        %9503 = vmatpush2.msra.mxu0 0.0
        %9504 = vmatprep.subr.mxu0 0.0
        %9505 = vmatpush2.msra.mxu0 0.0
        %9506 = vmatprep.subr.mxu0 0.0
        %9507 = vmatpush2.msra.mxu0 0.0
        %9508 = vmatprep.subr.mxu0 0.0
        %9509 = vmatpush2.msra.mxu0 0.0
        %9510 = vmatprep.subr.mxu0 0.0
        %9511 = vmatpush2.msra.mxu0 0.0
        %9512 = vmatprep.subr.mxu0 0.0
        %9513 = vmatpush2.msra.mxu0 0.0
        %9514 = vmatprep.subr.mxu0 0.0
        %9515 = vmatpush2.msra.mxu0 0.0
        %9516 = vmatprep.mubr.f32.mxu0 0.0
        %9517 = vmatmul.mubr.f32.gmra.mxu0 %v9450
        %v9518 = vpop.f32.mrf.mxu0
        %v9519 = vadd.f32 0.0, %v9518
        %v9520 = vpop.f32.mrf.mxu0
        %9521 = vdwg.mxu0
        %9522 = vst.msk [vmem:[%s312] sm:$0xff] %vm400, %v7256
        %9523 = vst.msk [vmem:[%s312 + $0x8] sm:$0xff] %vm400, %v7329
        %9524 = vst.msk [vmem:[%s312 + $0x10] sm:$0xff] %vm400, %v7402
        %9525 = vst.msk [vmem:[%s312 + $0x18] sm:$0xff] %vm400, %v7475
        %9526 = vst.msk [vmem:[%s312 + $0x20] sm:$0xff] %vm400, %v7548
        %9527 = vst.msk [vmem:[%s312 + $0x28] sm:$0xff] %vm400, %v7621
        %9528 = vst.msk [vmem:[%s312 + $0x30] sm:$0xff] %vm400, %v7694
        %9529 = vst.msk [vmem:[%s312 + $0x38] sm:$0xff] %vm400, %v7767
        %9530 = vst.msk [vmem:[%s312 + $0x40] sm:$0xff] %vm400, %v7840
        %9531 = vst.msk [vmem:[%s312 + $0x48] sm:$0xff] %vm400, %v7913
        %9532 = vst.msk [vmem:[%s312 + $0x50] sm:$0xff] %vm400, %v7986
        %9533 = vst.msk [vmem:[%s312 + $0x58] sm:$0xff] %vm400, %v8059
        %9534 = vst.msk [vmem:[%s312 + $0x60] sm:$0xff] %vm400, %v8132
        %9535 = vst.msk [vmem:[%s312 + $0x68] sm:$0xff] %vm400, %v8205
        %9536 = vst.msk [vmem:[%s312 + $0x70] sm:$0xff] %vm400, %v8278
        %9537 = vst.msk [vmem:[%s312 + $0x78] sm:$0xff] %vm400, %v8351
        %9538 = vst.msk [vmem:[%s312 + $0x80] sm:$0xff] %vm400, %v8424
        %9539 = vst.msk [vmem:[%s312 + $0x88] sm:$0xff] %vm400, %v8497
        %9540 = vst.msk [vmem:[%s312 + $0x90] sm:$0xff] %vm400, %v8570
        %9541 = vst.msk [vmem:[%s312 + $0x98] sm:$0xff] %vm400, %v8643
        %9542 = vst.msk [vmem:[%s312 + $0xa0] sm:$0xff] %vm400, %v8716
        %9543 = vst.msk [vmem:[%s312 + $0xa8] sm:$0xff] %vm400, %v8789
        %9544 = vst.msk [vmem:[%s312 + $0xb0] sm:$0xff] %vm400, %v8862
        %9545 = vst.msk [vmem:[%s312 + $0xb8] sm:$0xff] %vm400, %v8935
        %9546 = vst.msk [vmem:[%s312 + $0xc0] sm:$0xff] %vm400, %v9008
        %9547 = vst.msk [vmem:[%s312 + $0xc8] sm:$0xff] %vm400, %v9081
        %9548 = vst.msk [vmem:[%s312 + $0xd0] sm:$0xff] %vm400, %v9154
        %9549 = vst.msk [vmem:[%s312 + $0xd8] sm:$0xff] %vm400, %v9227
        %9550 = vst.msk [vmem:[%s312 + $0xe0] sm:$0xff] %vm400, %v9300
        %9551 = vst.msk [vmem:[%s312 + $0xe8] sm:$0xff] %vm400, %v9373
        %9552 = vst.msk [vmem:[%s312 + $0xf0] sm:$0xff] %vm400, %v9446
        %9553 = vst.msk [vmem:[%s312 + $0xf8] sm:$0xff] %vm400, %v9519
        %s9554 = sand.u32 %s189, 1
        %s9555 = scalar_lea.sflag [#allocation4], %s9554
        %s9556 = sand.u32 %s189, 1
        %s9557 = smul.addr %s9556, 256
        %s9558 = scalar_lea.vmem [#allocation5], %s9557
        // Predicated region
        $region53: #{h_att_forward.1} parent=47 // pred_check
          %p9559 = pneg %p199
        $region54: #{h_att_forward.1} parent=47 // pred_check_branch
          %9561 = sbr.rel (%p9559) target = $region56
        $region55: #{h_att_forward.1} parent=47 // pred_region
          %s9562 = smul.u32 32, %s24
          %s9564 = ssub.s32 4096, 4096
          %9565 = vsyncadd %s9555, %s9564
          %s9566 = smul.addr %s9562, 128
          %s9567 = scalar_lea.hbm %s7, %s9566
          %s9568 = sshll.u32 %s9558, 4
          %s9569 = int_to_ptr.vmem [resolvable:$true] %s9568
          %9574 = dma.vmem_to_hbm [thread:$0]  %s9569, 4096, %s9567, %s9555, 128, 128, 8
        $region56: #{h_att_forward.1} parent=47 // pred_fallthru
          _
      $region48: #{h_att_forward.1} parent=5 // pred_fallthru
        _
      %p9575 = scmp.le.s32.totalorder 2, %s19
      // Predicated region
      $region57: #{h_att_forward.1} parent=5 // pred_check
        %p9576 = pneg %p9575
      $region58: #{h_att_forward.1} parent=5 // pred_check_branch
        %9578 = sbr.rel (%p9576) target = $region60
      $region59: #{h_att_forward.1} parent=5 // pred_region
        %s9579 = ssub.s32 %s19, 2
        // Predicated region
        $region61: #{h_att_forward.1} parent=59 // pred_check
          %p9580 = pneg %p205
        $region62: #{h_att_forward.1} parent=59 // pred_check_branch
          %9582 = sbr.rel (%p9580) target = $region64
        $region63: #{h_att_forward.1} parent=59 // pred_region
          %s9583 = sand.u32 %s190, 1
          %s9584 = scalar_lea.sflag [#allocation4], %s9583
          %s9585 = sand.u32 %s190, 1
          %s9586 = smul.addr %s9585, 256
          %s9587 = scalar_lea.vmem [#allocation5], %s9586
          %9588 = dma.done %s9584, 4096
        $region64: #{h_att_forward.1} parent=59 // pred_fallthru
          _
      $region60: #{h_att_forward.1} parent=5 // pred_fallthru
        _
    $region6: #{h_att_forward.1} parent=1 // loop_footer
      %s23 = sadd.s32 1, %s19
    $region7: #{h_att_forward.1} parent=1 // loop_footer_branch
      %18 = sbr.rel target = $region3
    $region8: #{h_att_forward.1} parent=1 // loop_exit
      _
    %9589 = vsyncpa [#allocation3], 1
    %s9590 = scalar_lea.sflag [#allocation3], 1
    %9591 = vsyncpa %s9590, 1
    %9592 = vsyncpa [#allocation4], 1
    %s9593 = scalar_lea.sflag [#allocation4], 1
    %9594 = vsyncpa %s9593, 1

</llo_original>
